<compile_context>
chip_gen: v7x
topology: tpu7x:2x2x1
jax: 0.10.0
libtpu: 0.0.40
codegen_flags: <defaults>
</compile_context>

<pallas_src>
import functools

import jax
import jax.numpy as jnp
from jax.experimental import pallas as pl
from jax.experimental.pallas import tpu as pltpu

_BN_EPS = 1e-5


def _round_up(x, m):
    return (x + m - 1) // m * m


# ---------------------------------------------------------------------------
# Fused FFM kernel: conv3x3 + BN + ReLU + conv1x1 + sigmoid gate + residual
# ---------------------------------------------------------------------------

def _ffm_kernel(xa_ref, xb_ref, w3a_ref, w3b_ref, scale_ref, bias_ref,
                w1_ref, b1_ref, o_ref, *, th, wp):
    """One grid step = one row-block of one image.

    xa_ref / xb_ref : (1, (th+3)*wp, C_half) bf16 — zero-padded rows of one
        input map, flattened row-major (wp = W + 2).  Tap (dy, dx) of the 3x3
        conv is a contiguous flat shift of dy*wp + dx rows, so the conv is a
        9-tap sum of plain 2-D slices fed to the MXU (no im2col, no reshape).
    w3a_ref / w3b_ref : (9, C_half, Coutp) bf16 per-tap weights.
    Epilogue (VMEM-local, single HBM write of the bf16 result):
        x   = relu(acc * bn_scale + bn_bias)     # folded eval-mode BN + bias
        psi = sigmoid(x @ W_1x1 + b_1x1)         # W_1x1 resident in VMEM
        out = x * psi + x
    """
    m = th * wp
    coutp = o_ref.shape[-1]
    acc = jnp.zeros((m, coutp), jnp.float32)
    for t in range(9):
        shift = (t // 3) * wp + (t % 3)
        acc += jnp.dot(xa_ref[0, shift:shift + m, :], w3a_ref[t],
                       preferred_element_type=jnp.float32)
        acc += jnp.dot(xb_ref[0, shift:shift + m, :], w3b_ref[t],
                       preferred_element_type=jnp.float32)
    # Folded eval-mode BatchNorm (+ conv bias) and ReLU, in f32.
    x = jnp.maximum(acc * scale_ref[...] + bias_ref[...], 0.0)
    # 1x1 conv + sigmoid + gate + residual, fully fused.
    logits = jnp.dot(x.astype(jnp.bfloat16), w1_ref[...],
                     preferred_element_type=jnp.float32) + b1_ref[...]
    psi = jax.nn.sigmoid(logits)
    o_ref[0] = (x * psi + x).astype(o_ref.dtype)


# ---------------------------------------------------------------------------
# Host-side tiling / data preparation
# ---------------------------------------------------------------------------

def _row_block_size(h, w, coutp):
    """Rows of the image processed per grid step.

    Targets a large M tile (amortizes per-step overhead) while capping the f32
    accumulator at ~2 MiB so the whole double-buffered footprint stays far
    below VMEM on every TPU generation (v7x included).
    """
    wp = w + 2
    max_rows = max(wp, (2 * 1024 * 1024) // (4 * coutp))
    return max(1, min(h, max_rows // wp))


def _prep_input(m, th, nblk):
    """(N, H, W, C) bf16 -> (N*nblk, (th+3)*(W+2), C) flattened padded blocks.

    Each block holds th+3 zero-padded image rows (1 top halo + th rows + 2
    bottom rows: conv halo plus slack for the discarded wrap columns),
    flattened row-major so the kernel's taps are contiguous flat shifts.
    """
    n, h, w, c = m.shape
    hp = nblk * th
    p = jnp.pad(m, ((0, 0), (1, hp - h + 2), (1, 1), (0, 0)))   # (N, hp+3, W+2, C)
    if nblk == 1:
        blocks = p[:, None]                                     # (N, 1, th+3, W+2, C)
    else:
        idx = jnp.arange(nblk)[:, None] * th + jnp.arange(th + 3)[None, :]
        blocks = p[:, idx]                                      # (N, nblk, th+3, W+2, C)
    return blocks.reshape(n * nblk, (th + 3) * (w + 2), c)


# ---------------------------------------------------------------------------
# FFM module
# ---------------------------------------------------------------------------

def ffm_apply(params, m1, m2):
    """FFM forward in NHWC.  m1 / m2: (N, H, W, F_int // 2) each (bf16 ok)."""
    n, h, w, c1 = m1.shape
    c2 = m2.shape[-1]
    w3 = params["wx"]["w"]                         # (Cout, C1+C2, 3, 3) OIHW
    cout = w3.shape[0]
    assert w3.shape[1] == c1 + c2
    coutp = _round_up(cout, 128)                   # lane-dense output stores
    wp = w + 2

    th = _row_block_size(h, w, coutp)
    nblk = pl.cdiv(h, th)
    if n * nblk < 2 and h > 1:                     # keep both v7x TCs busy
        nblk = 2
        th = pl.cdiv(h, 2)
    mout = th * wp
    lb = (th + 3) * wp

    # Inputs: padded + row-blocked + flattened, per map (concat never built).
    xa = _prep_input(m1.astype(jnp.bfloat16), th, nblk)
    xb = _prep_input(m2.astype(jnp.bfloat16), th, nblk)

    # 3x3 weights, split per input map, per-tap layout (9, C_half, Coutp).
    def tap_weights(wpart):
        c = wpart.shape[1]
        wt = jnp.transpose(wpart, (2, 3, 1, 0)).reshape(9, c, cout)
        return jnp.pad(wt, ((0, 0), (0, 0), (0, coutp - cout))).astype(jnp.bfloat16)

    w3a = tap_weights(w3[:, :c1])
    w3b = tap_weights(w3[:, c1:])

    # Folded eval-mode BN (+ conv bias).
    bn = params["bn"]
    scale = bn["gamma"] / jnp.sqrt(bn["var"] + _BN_EPS)
    bias = (params["wx"]["b"] - bn["mean"]) * scale + bn["beta"]
    scale = jnp.pad(scale, (0, coutp - cout)).reshape(1, coutp).astype(jnp.float32)
    bias = jnp.pad(bias, (0, coutp - cout)).reshape(1, coutp).astype(jnp.float32)

    # 1x1 conv weight / bias (kept resident in VMEM inside the kernel).
    w1 = params["w1x1"]["w"].reshape(cout, cout).T               # (Cin, Cout)
    w1 = jnp.pad(w1, ((0, coutp - cout), (0, coutp - cout))).astype(jnp.bfloat16)
    b1 = jnp.pad(params["w1x1"]["b"],
                 (0, coutp - cout)).reshape(1, coutp).astype(jnp.float32)

    kernel = functools.partial(_ffm_kernel, th=th, wp=wp)
    out = pl.pallas_call(
        kernel,
        out_shape=jax.ShapeDtypeStruct((n * nblk, mout, coutp), jnp.bfloat16),
        grid_spec=pltpu.PrefetchScalarGridSpec(
            num_scalar_prefetch=0,
            grid=(n * nblk,),
            in_specs=[
                pl.BlockSpec((1, lb, c1), lambda g: (g, 0, 0)),
                pl.BlockSpec((1, lb, c2), lambda g: (g, 0, 0)),
                pl.BlockSpec((9, c1, coutp), lambda g: (0, 0, 0)),
                pl.BlockSpec((9, c2, coutp), lambda g: (0, 0, 0)),
                pl.BlockSpec((1, coutp), lambda g: (0, 0)),
                pl.BlockSpec((1, coutp), lambda g: (0, 0)),
                pl.BlockSpec((coutp, coutp), lambda g: (0, 0)),
                pl.BlockSpec((1, coutp), lambda g: (0, 0)),
            ],
            out_specs=pl.BlockSpec((1, mout, coutp), lambda g: (g, 0, 0)),
        ),
        compiler_params=pltpu.CompilerParams(
            dimension_semantics=("parallel",),
            vmem_limit_bytes=32 * 1024 * 1024,
        ),
    )(xa, xb, w3a, w3b, scale, bias, w1, b1)

    # Drop wrap columns / padded rows / padded channels; stay in bf16.
    out = out.reshape(n, nblk * th, wp, coutp)[:, :h, :w, :cout]
    return out


def ffm_forward(params, map_1_fm, map_2_fm):
    """Host-facing FFM forward.  Inputs / output are NCHW (PyTorch layout)."""
    # Boundary transposes run in bf16 (half the traffic of f32).
    m1 = jnp.transpose(map_1_fm.astype(jnp.bfloat16), (0, 2, 3, 1))
    m2 = jnp.transpose(map_2_fm.astype(jnp.bfloat16), (0, 2, 3, 1))
    out = ffm_apply(params, m1, m2)                              # NHWC bf16
    return jnp.transpose(out, (0, 3, 1, 2)).astype(jnp.float32)  # NCHW f32


# ---------------------------------------------------------------------------
# Deterministic parameter init + pure-JAX f32 reference
# ---------------------------------------------------------------------------

def init_params(f_int, key):
    keys = list(jax.random.split(key, 10))

    def take():
        return keys.pop()

    def conv(cout, cin, k):
        return {"w": 0.05 * jax.random.normal(take(), (cout, cin, k, k), jnp.float32),
                "b": 0.05 * jax.random.normal(take(), (cout,), jnp.float32)}

    def bn(c):
        return {"gamma": 1.0 + 0.1 * jax.random.normal(take(), (c,), jnp.float32),
                "beta": 0.1 * jax.random.normal(take(), (c,), jnp.float32),
                "mean": 0.1 * jax.random.normal(take(), (c,), jnp.float32),
                "var": 0.5 + jax.random.uniform(take(), (c,), jnp.float32)}

    return {
        "wx": conv(f_int, f_int, 3),    # W_x conv3x3
        "bn": bn(f_int),                # W_x BatchNorm (eval-mode stats)
        "w1x1": conv(f_int, f_int, 1),  # W_1x1
        # NOTE: the module's self.batch_norm is never used in forward().
        # TODO(synk): train-mode BatchNorm (batch statistics) is not implemented;
        # eval-mode running stats are folded into the fused epilogue instead.
    }


def _ffm_reference(params, map_1_fm, map_2_fm):
    """Pure-JAX f32 reference of the PyTorch FFM forward (eval mode)."""
    x = jnp.concatenate([map_1_fm, map_2_fm], axis=1)
    dn = ("NCHW", "OIHW", "NCHW")
    rs = lambda v: v.reshape(1, -1, 1, 1)
    y = jax.lax.conv_general_dilated(x, params["wx"]["w"], (1, 1),
                                     ((1, 1), (1, 1)), dimension_numbers=dn)
    y = y + rs(params["wx"]["b"])
    bn = params["bn"]
    y = (y - rs(bn["mean"])) / jnp.sqrt(rs(bn["var"]) + _BN_EPS)
    y = y * rs(bn["gamma"]) + rs(bn["beta"])
    y = jnp.maximum(y, 0.0)
    psi = jax.lax.conv_general_dilated(y, params["w1x1"]["w"], (1, 1),
                                       ((0, 0), (0, 0)), dimension_numbers=dn)
    psi = jax.nn.sigmoid(psi + rs(params["w1x1"]["b"]))
    return y * psi + y


# ---------------------------------------------------------------------------
# Demo
# ---------------------------------------------------------------------------

if __name__ == "__main__":
    B, F_INT, S = 2, 32, 16
    C_HALF = F_INT // 2

    key = jax.random.PRNGKey(0)
    k1, k2, kp = jax.random.split(key, 3)
    map_1 = jax.random.normal(k1, (B, C_HALF, S, S), jnp.float32)   # NCHW
    map_2 = jax.random.normal(k2, (B, C_HALF, S, S), jnp.float32)   # NCHW

    params = init_params(F_INT, kp)

    out = jax.jit(ffm_forward)(params, map_1, map_2)
    out = jax.block_until_ready(out)
    assert out.shape == (B, F_INT, S, S), out.shape

    ref = _ffm_reference(params, map_1, map_2)
    # bf16 compute path: check mixed (absolute + relative) error vs f32 ref.
    err = float(jnp.max(jnp.abs(out - ref) / (1.0 + jnp.abs(ref))))
    assert err < 2.5e-2, f"error vs f32 reference = {err}"

    print("KERNEL_OK")
</pallas_src>

<mosaic_0001>
module attributes {stable_mosaic.version = 11 : i64} {
  func.func @_ffm_kernel(%arg0: i32, %arg1: memref<1x342x16xbf16, #tpu.memory_space<vmem>>, %arg2: memref<1x342x16xbf16, #tpu.memory_space<vmem>>, %arg3: memref<9x16x128xbf16, #tpu.memory_space<vmem>>, %arg4: memref<9x16x128xbf16, #tpu.memory_space<vmem>>, %arg5: memref<1x128xf32, #tpu.memory_space<vmem>>, %arg6: memref<1x128xf32, #tpu.memory_space<vmem>>, %arg7: memref<128x128xbf16, #tpu.memory_space<vmem>>, %arg8: memref<1x128xf32, #tpu.memory_space<vmem>>, %arg9: memref<1x288x128xbf16, #tpu.memory_space<vmem>>) attributes {dimension_semantics = [#tpu.dimension_semantics<parallel>], iteration_bounds = array<i64: 2>, scalar_prefetch = 0 : i64, scratch_operands = 0 : i64, tpu.core_type = #tpu.core_type<tc>, window_params = [{transform_indices = @transform_0, window_bounds = array<i64: 1, 342, 16>}, {transform_indices = @transform_1, window_bounds = array<i64: 1, 342, 16>}, {pipeline_mode = #tpu.pipeline_mode<synchronous>, transform_indices = @transform_2, window_bounds = array<i64: 9, 16, 128>}, {pipeline_mode = #tpu.pipeline_mode<synchronous>, transform_indices = @transform_3, window_bounds = array<i64: 9, 16, 128>}, {pipeline_mode = #tpu.pipeline_mode<synchronous>, transform_indices = @transform_4, window_bounds = array<i64: 1, 128>}, {pipeline_mode = #tpu.pipeline_mode<synchronous>, transform_indices = @transform_5, window_bounds = array<i64: 1, 128>}, {pipeline_mode = #tpu.pipeline_mode<synchronous>, transform_indices = @transform_6, window_bounds = array<i64: 128, 128>}, {pipeline_mode = #tpu.pipeline_mode<synchronous>, transform_indices = @transform_7, window_bounds = array<i64: 1, 128>}, {transform_indices = @transform_8, window_bounds = array<i64: 1, 288, 128>}]} {
    %cst = arith.constant 0.000000e+00 : f32
    %0 = vector.broadcast %cst : f32 to vector<288x128xf32>
    %c0 = arith.constant 0 : index
    %c0_0 = arith.constant 0 : index
    %c0_1 = arith.constant 0 : index
    %1 = vector.load %arg1[%c0, %c0_0, %c0_1] : memref<1x342x16xbf16, #tpu.memory_space<vmem>>, vector<1x288x16xbf16>
    %2 = vector.shape_cast %1 : vector<1x288x16xbf16> to vector<288x16xbf16>
    %c0_2 = arith.constant 0 : index
    %c0_3 = arith.constant 0 : index
    %c0_4 = arith.constant 0 : index
    %3 = vector.load %arg3[%c0_2, %c0_3, %c0_4] : memref<9x16x128xbf16, #tpu.memory_space<vmem>>, vector<1x16x128xbf16>
    %4 = vector.shape_cast %3 : vector<1x16x128xbf16> to vector<16x128xbf16>
    %cst_5 = arith.constant dense<0.000000e+00> : vector<288x128xf32>
    %5 = tpu.matmul %2, %4, %cst_5 {dimension_numbers = #tpu.dot_dimension_numbers<[1], [0], [0], [1], [0, 0, 1, 1], [], []>} : vector<288x16xbf16>, vector<16x128xbf16>, vector<288x128xf32> -> vector<288x128xf32>
    %6 = arith.addf %0, %5 : vector<288x128xf32>
    %c0_6 = arith.constant 0 : index
    %c0_7 = arith.constant 0 : index
    %c0_8 = arith.constant 0 : index
    %7 = vector.load %arg2[%c0_6, %c0_7, %c0_8] : memref<1x342x16xbf16, #tpu.memory_space<vmem>>, vector<1x288x16xbf16>
    %8 = vector.shape_cast %7 : vector<1x288x16xbf16> to vector<288x16xbf16>
    %c0_9 = arith.constant 0 : index
    %c0_10 = arith.constant 0 : index
    %c0_11 = arith.constant 0 : index
    %9 = vector.load %arg4[%c0_9, %c0_10, %c0_11] : memref<9x16x128xbf16, #tpu.memory_space<vmem>>, vector<1x16x128xbf16>
    %10 = vector.shape_cast %9 : vector<1x16x128xbf16> to vector<16x128xbf16>
    %cst_12 = arith.constant dense<0.000000e+00> : vector<288x128xf32>
    %11 = tpu.matmul %8, %10, %cst_12 {dimension_numbers = #tpu.dot_dimension_numbers<[1], [0], [0], [1], [0, 0, 1, 1], [], []>} : vector<288x16xbf16>, vector<16x128xbf16>, vector<288x128xf32> -> vector<288x128xf32>
    %12 = arith.addf %6, %11 : vector<288x128xf32>
    %c0_13 = arith.constant 0 : index
    %c1 = arith.constant 1 : index
    %c0_14 = arith.constant 0 : index
    %13 = vector.load %arg1[%c0_13, %c1, %c0_14] : memref<1x342x16xbf16, #tpu.memory_space<vmem>>, vector<1x288x16xbf16>
    %14 = vector.shape_cast %13 : vector<1x288x16xbf16> to vector<288x16xbf16>
    %c1_15 = arith.constant 1 : index
    %c0_16 = arith.constant 0 : index
    %c0_17 = arith.constant 0 : index
    %15 = vector.load %arg3[%c1_15, %c0_16, %c0_17] : memref<9x16x128xbf16, #tpu.memory_space<vmem>>, vector<1x16x128xbf16>
    %16 = vector.shape_cast %15 : vector<1x16x128xbf16> to vector<16x128xbf16>
    %cst_18 = arith.constant dense<0.000000e+00> : vector<288x128xf32>
    %17 = tpu.matmul %14, %16, %cst_18 {dimension_numbers = #tpu.dot_dimension_numbers<[1], [0], [0], [1], [0, 0, 1, 1], [], []>} : vector<288x16xbf16>, vector<16x128xbf16>, vector<288x128xf32> -> vector<288x128xf32>
    %18 = arith.addf %12, %17 : vector<288x128xf32>
    %c0_19 = arith.constant 0 : index
    %c1_20 = arith.constant 1 : index
    %c0_21 = arith.constant 0 : index
    %19 = vector.load %arg2[%c0_19, %c1_20, %c0_21] : memref<1x342x16xbf16, #tpu.memory_space<vmem>>, vector<1x288x16xbf16>
    %20 = vector.shape_cast %19 : vector<1x288x16xbf16> to vector<288x16xbf16>
    %c1_22 = arith.constant 1 : index
    %c0_23 = arith.constant 0 : index
    %c0_24 = arith.constant 0 : index
    %21 = vector.load %arg4[%c1_22, %c0_23, %c0_24] : memref<9x16x128xbf16, #tpu.memory_space<vmem>>, vector<1x16x128xbf16>
    %22 = vector.shape_cast %21 : vector<1x16x128xbf16> to vector<16x128xbf16>
    %cst_25 = arith.constant dense<0.000000e+00> : vector<288x128xf32>
    %23 = tpu.matmul %20, %22, %cst_25 {dimension_numbers = #tpu.dot_dimension_numbers<[1], [0], [0], [1], [0, 0, 1, 1], [], []>} : vector<288x16xbf16>, vector<16x128xbf16>, vector<288x128xf32> -> vector<288x128xf32>
    %24 = arith.addf %18, %23 : vector<288x128xf32>
    %c0_26 = arith.constant 0 : index
    %c2 = arith.constant 2 : index
    %c0_27 = arith.constant 0 : index
    %25 = vector.load %arg1[%c0_26, %c2, %c0_27] : memref<1x342x16xbf16, #tpu.memory_space<vmem>>, vector<1x288x16xbf16>
    %26 = vector.shape_cast %25 : vector<1x288x16xbf16> to vector<288x16xbf16>
    %c2_28 = arith.constant 2 : index
    %c0_29 = arith.constant 0 : index
    %c0_30 = arith.constant 0 : index
    %27 = vector.load %arg3[%c2_28, %c0_29, %c0_30] : memref<9x16x128xbf16, #tpu.memory_space<vmem>>, vector<1x16x128xbf16>
    %28 = vector.shape_cast %27 : vector<1x16x128xbf16> to vector<16x128xbf16>
    %cst_31 = arith.constant dense<0.000000e+00> : vector<288x128xf32>
    %29 = tpu.matmul %26, %28, %cst_31 {dimension_numbers = #tpu.dot_dimension_numbers<[1], [0], [0], [1], [0, 0, 1, 1], [], []>} : vector<288x16xbf16>, vector<16x128xbf16>, vector<288x128xf32> -> vector<288x128xf32>
    %30 = arith.addf %24, %29 : vector<288x128xf32>
    %c0_32 = arith.constant 0 : index
    %c2_33 = arith.constant 2 : index
    %c0_34 = arith.constant 0 : index
    %31 = vector.load %arg2[%c0_32, %c2_33, %c0_34] : memref<1x342x16xbf16, #tpu.memory_space<vmem>>, vector<1x288x16xbf16>
    %32 = vector.shape_cast %31 : vector<1x288x16xbf16> to vector<288x16xbf16>
    %c2_35 = arith.constant 2 : index
    %c0_36 = arith.constant 0 : index
    %c0_37 = arith.constant 0 : index
    %33 = vector.load %arg4[%c2_35, %c0_36, %c0_37] : memref<9x16x128xbf16, #tpu.memory_space<vmem>>, vector<1x16x128xbf16>
    %34 = vector.shape_cast %33 : vector<1x16x128xbf16> to vector<16x128xbf16>
    %cst_38 = arith.constant dense<0.000000e+00> : vector<288x128xf32>
    %35 = tpu.matmul %32, %34, %cst_38 {dimension_numbers = #tpu.dot_dimension_numbers<[1], [0], [0], [1], [0, 0, 1, 1], [], []>} : vector<288x16xbf16>, vector<16x128xbf16>, vector<288x128xf32> -> vector<288x128xf32>
    %36 = arith.addf %30, %35 : vector<288x128xf32>
    %c0_39 = arith.constant 0 : index
    %c18 = arith.constant 18 : index
    %c0_40 = arith.constant 0 : index
    %37 = vector.load %arg1[%c0_39, %c18, %c0_40] : memref<1x342x16xbf16, #tpu.memory_space<vmem>>, vector<1x288x16xbf16>
    %38 = vector.shape_cast %37 : vector<1x288x16xbf16> to vector<288x16xbf16>
    %c3 = arith.constant 3 : index
    %c0_41 = arith.constant 0 : index
    %c0_42 = arith.constant 0 : index
    %39 = vector.load %arg3[%c3, %c0_41, %c0_42] : memref<9x16x128xbf16, #tpu.memory_space<vmem>>, vector<1x16x128xbf16>
    %40 = vector.shape_cast %39 : vector<1x16x128xbf16> to vector<16x128xbf16>
    %cst_43 = arith.constant dense<0.000000e+00> : vector<288x128xf32>
    %41 = tpu.matmul %38, %40, %cst_43 {dimension_numbers = #tpu.dot_dimension_numbers<[1], [0], [0], [1], [0, 0, 1, 1], [], []>} : vector<288x16xbf16>, vector<16x128xbf16>, vector<288x128xf32> -> vector<288x128xf32>
    %42 = arith.addf %36, %41 : vector<288x128xf32>
    %c0_44 = arith.constant 0 : index
    %c18_45 = arith.constant 18 : index
    %c0_46 = arith.constant 0 : index
    %43 = vector.load %arg2[%c0_44, %c18_45, %c0_46] : memref<1x342x16xbf16, #tpu.memory_space<vmem>>, vector<1x288x16xbf16>
    %44 = vector.shape_cast %43 : vector<1x288x16xbf16> to vector<288x16xbf16>
    %c3_47 = arith.constant 3 : index
    %c0_48 = arith.constant 0 : index
    %c0_49 = arith.constant 0 : index
    %45 = vector.load %arg4[%c3_47, %c0_48, %c0_49] : memref<9x16x128xbf16, #tpu.memory_space<vmem>>, vector<1x16x128xbf16>
    %46 = vector.shape_cast %45 : vector<1x16x128xbf16> to vector<16x128xbf16>
    %cst_50 = arith.constant dense<0.000000e+00> : vector<288x128xf32>
    %47 = tpu.matmul %44, %46, %cst_50 {dimension_numbers = #tpu.dot_dimension_numbers<[1], [0], [0], [1], [0, 0, 1, 1], [], []>} : vector<288x16xbf16>, vector<16x128xbf16>, vector<288x128xf32> -> vector<288x128xf32>
    %48 = arith.addf %42, %47 : vector<288x128xf32>
    %c0_51 = arith.constant 0 : index
    %c19 = arith.constant 19 : index
    %c0_52 = arith.constant 0 : index
    %49 = vector.load %arg1[%c0_51, %c19, %c0_52] : memref<1x342x16xbf16, #tpu.memory_space<vmem>>, vector<1x288x16xbf16>
    %50 = vector.shape_cast %49 : vector<1x288x16xbf16> to vector<288x16xbf16>
    %c4 = arith.constant 4 : index
    %c0_53 = arith.constant 0 : index
    %c0_54 = arith.constant 0 : index
    %51 = vector.load %arg3[%c4, %c0_53, %c0_54] : memref<9x16x128xbf16, #tpu.memory_space<vmem>>, vector<1x16x128xbf16>
    %52 = vector.shape_cast %51 : vector<1x16x128xbf16> to vector<16x128xbf16>
    %cst_55 = arith.constant dense<0.000000e+00> : vector<288x128xf32>
    %53 = tpu.matmul %50, %52, %cst_55 {dimension_numbers = #tpu.dot_dimension_numbers<[1], [0], [0], [1], [0, 0, 1, 1], [], []>} : vector<288x16xbf16>, vector<16x128xbf16>, vector<288x128xf32> -> vector<288x128xf32>
    %54 = arith.addf %48, %53 : vector<288x128xf32>
    %c0_56 = arith.constant 0 : index
    %c19_57 = arith.constant 19 : index
    %c0_58 = arith.constant 0 : index
    %55 = vector.load %arg2[%c0_56, %c19_57, %c0_58] : memref<1x342x16xbf16, #tpu.memory_space<vmem>>, vector<1x288x16xbf16>
    %56 = vector.shape_cast %55 : vector<1x288x16xbf16> to vector<288x16xbf16>
    %c4_59 = arith.constant 4 : index
    %c0_60 = arith.constant 0 : index
    %c0_61 = arith.constant 0 : index
    %57 = vector.load %arg4[%c4_59, %c0_60, %c0_61] : memref<9x16x128xbf16, #tpu.memory_space<vmem>>, vector<1x16x128xbf16>
    %58 = vector.shape_cast %57 : vector<1x16x128xbf16> to vector<16x128xbf16>
    %cst_62 = arith.constant dense<0.000000e+00> : vector<288x128xf32>
    %59 = tpu.matmul %56, %58, %cst_62 {dimension_numbers = #tpu.dot_dimension_numbers<[1], [0], [0], [1], [0, 0, 1, 1], [], []>} : vector<288x16xbf16>, vector<16x128xbf16>, vector<288x128xf32> -> vector<288x128xf32>
    %60 = arith.addf %54, %59 : vector<288x128xf32>
    %c0_63 = arith.constant 0 : index
    %c20 = arith.constant 20 : index
    %c0_64 = arith.constant 0 : index
    %61 = vector.load %arg1[%c0_63, %c20, %c0_64] : memref<1x342x16xbf16, #tpu.memory_space<vmem>>, vector<1x288x16xbf16>
    %62 = vector.shape_cast %61 : vector<1x288x16xbf16> to vector<288x16xbf16>
    %c5 = arith.constant 5 : index
    %c0_65 = arith.constant 0 : index
    %c0_66 = arith.constant 0 : index
    %63 = vector.load %arg3[%c5, %c0_65, %c0_66] : memref<9x16x128xbf16, #tpu.memory_space<vmem>>, vector<1x16x128xbf16>
    %64 = vector.shape_cast %63 : vector<1x16x128xbf16> to vector<16x128xbf16>
    %cst_67 = arith.constant dense<0.000000e+00> : vector<288x128xf32>
    %65 = tpu.matmul %62, %64, %cst_67 {dimension_numbers = #tpu.dot_dimension_numbers<[1], [0], [0], [1], [0, 0, 1, 1], [], []>} : vector<288x16xbf16>, vector<16x128xbf16>, vector<288x128xf32> -> vector<288x128xf32>
    %66 = arith.addf %60, %65 : vector<288x128xf32>
    %c0_68 = arith.constant 0 : index
    %c20_69 = arith.constant 20 : index
    %c0_70 = arith.constant 0 : index
    %67 = vector.load %arg2[%c0_68, %c20_69, %c0_70] : memref<1x342x16xbf16, #tpu.memory_space<vmem>>, vector<1x288x16xbf16>
    %68 = vector.shape_cast %67 : vector<1x288x16xbf16> to vector<288x16xbf16>
    %c5_71 = arith.constant 5 : index
    %c0_72 = arith.constant 0 : index
    %c0_73 = arith.constant 0 : index
    %69 = vector.load %arg4[%c5_71, %c0_72, %c0_73] : memref<9x16x128xbf16, #tpu.memory_space<vmem>>, vector<1x16x128xbf16>
    %70 = vector.shape_cast %69 : vector<1x16x128xbf16> to vector<16x128xbf16>
    %cst_74 = arith.constant dense<0.000000e+00> : vector<288x128xf32>
    %71 = tpu.matmul %68, %70, %cst_74 {dimension_numbers = #tpu.dot_dimension_numbers<[1], [0], [0], [1], [0, 0, 1, 1], [], []>} : vector<288x16xbf16>, vector<16x128xbf16>, vector<288x128xf32> -> vector<288x128xf32>
    %72 = arith.addf %66, %71 : vector<288x128xf32>
    %c0_75 = arith.constant 0 : index
    %c36 = arith.constant 36 : index
    %c0_76 = arith.constant 0 : index
    %73 = vector.load %arg1[%c0_75, %c36, %c0_76] : memref<1x342x16xbf16, #tpu.memory_space<vmem>>, vector<1x288x16xbf16>
    %74 = vector.shape_cast %73 : vector<1x288x16xbf16> to vector<288x16xbf16>
    %c6 = arith.constant 6 : index
    %c0_77 = arith.constant 0 : index
    %c0_78 = arith.constant 0 : index
    %75 = vector.load %arg3[%c6, %c0_77, %c0_78] : memref<9x16x128xbf16, #tpu.memory_space<vmem>>, vector<1x16x128xbf16>
    %76 = vector.shape_cast %75 : vector<1x16x128xbf16> to vector<16x128xbf16>
    %cst_79 = arith.constant dense<0.000000e+00> : vector<288x128xf32>
    %77 = tpu.matmul %74, %76, %cst_79 {dimension_numbers = #tpu.dot_dimension_numbers<[1], [0], [0], [1], [0, 0, 1, 1], [], []>} : vector<288x16xbf16>, vector<16x128xbf16>, vector<288x128xf32> -> vector<288x128xf32>
    %78 = arith.addf %72, %77 : vector<288x128xf32>
    %c0_80 = arith.constant 0 : index
    %c36_81 = arith.constant 36 : index
    %c0_82 = arith.constant 0 : index
    %79 = vector.load %arg2[%c0_80, %c36_81, %c0_82] : memref<1x342x16xbf16, #tpu.memory_space<vmem>>, vector<1x288x16xbf16>
    %80 = vector.shape_cast %79 : vector<1x288x16xbf16> to vector<288x16xbf16>
    %c6_83 = arith.constant 6 : index
    %c0_84 = arith.constant 0 : index
    %c0_85 = arith.constant 0 : index
    %81 = vector.load %arg4[%c6_83, %c0_84, %c0_85] : memref<9x16x128xbf16, #tpu.memory_space<vmem>>, vector<1x16x128xbf16>
    %82 = vector.shape_cast %81 : vector<1x16x128xbf16> to vector<16x128xbf16>
    %cst_86 = arith.constant dense<0.000000e+00> : vector<288x128xf32>
    %83 = tpu.matmul %80, %82, %cst_86 {dimension_numbers = #tpu.dot_dimension_numbers<[1], [0], [0], [1], [0, 0, 1, 1], [], []>} : vector<288x16xbf16>, vector<16x128xbf16>, vector<288x128xf32> -> vector<288x128xf32>
    %84 = arith.addf %78, %83 : vector<288x128xf32>
    %c0_87 = arith.constant 0 : index
    %c37 = arith.constant 37 : index
    %c0_88 = arith.constant 0 : index
    %85 = vector.load %arg1[%c0_87, %c37, %c0_88] : memref<1x342x16xbf16, #tpu.memory_space<vmem>>, vector<1x288x16xbf16>
    %86 = vector.shape_cast %85 : vector<1x288x16xbf16> to vector<288x16xbf16>
    %c7 = arith.constant 7 : index
    %c0_89 = arith.constant 0 : index
    %c0_90 = arith.constant 0 : index
    %87 = vector.load %arg3[%c7, %c0_89, %c0_90] : memref<9x16x128xbf16, #tpu.memory_space<vmem>>, vector<1x16x128xbf16>
    %88 = vector.shape_cast %87 : vector<1x16x128xbf16> to vector<16x128xbf16>
    %cst_91 = arith.constant dense<0.000000e+00> : vector<288x128xf32>
    %89 = tpu.matmul %86, %88, %cst_91 {dimension_numbers = #tpu.dot_dimension_numbers<[1], [0], [0], [1], [0, 0, 1, 1], [], []>} : vector<288x16xbf16>, vector<16x128xbf16>, vector<288x128xf32> -> vector<288x128xf32>
    %90 = arith.addf %84, %89 : vector<288x128xf32>
    %c0_92 = arith.constant 0 : index
    %c37_93 = arith.constant 37 : index
    %c0_94 = arith.constant 0 : index
    %91 = vector.load %arg2[%c0_92, %c37_93, %c0_94] : memref<1x342x16xbf16, #tpu.memory_space<vmem>>, vector<1x288x16xbf16>
    %92 = vector.shape_cast %91 : vector<1x288x16xbf16> to vector<288x16xbf16>
    %c7_95 = arith.constant 7 : index
    %c0_96 = arith.constant 0 : index
    %c0_97 = arith.constant 0 : index
    %93 = vector.load %arg4[%c7_95, %c0_96, %c0_97] : memref<9x16x128xbf16, #tpu.memory_space<vmem>>, vector<1x16x128xbf16>
    %94 = vector.shape_cast %93 : vector<1x16x128xbf16> to vector<16x128xbf16>
    %cst_98 = arith.constant dense<0.000000e+00> : vector<288x128xf32>
    %95 = tpu.matmul %92, %94, %cst_98 {dimension_numbers = #tpu.dot_dimension_numbers<[1], [0], [0], [1], [0, 0, 1, 1], [], []>} : vector<288x16xbf16>, vector<16x128xbf16>, vector<288x128xf32> -> vector<288x128xf32>
    %96 = arith.addf %90, %95 : vector<288x128xf32>
    %c0_99 = arith.constant 0 : index
    %c38 = arith.constant 38 : index
    %c0_100 = arith.constant 0 : index
    %97 = vector.load %arg1[%c0_99, %c38, %c0_100] : memref<1x342x16xbf16, #tpu.memory_space<vmem>>, vector<1x288x16xbf16>
    %98 = vector.shape_cast %97 : vector<1x288x16xbf16> to vector<288x16xbf16>
    %c8 = arith.constant 8 : index
    %c0_101 = arith.constant 0 : index
    %c0_102 = arith.constant 0 : index
    %99 = vector.load %arg3[%c8, %c0_101, %c0_102] : memref<9x16x128xbf16, #tpu.memory_space<vmem>>, vector<1x16x128xbf16>
    %100 = vector.shape_cast %99 : vector<1x16x128xbf16> to vector<16x128xbf16>
    %cst_103 = arith.constant dense<0.000000e+00> : vector<288x128xf32>
    %101 = tpu.matmul %98, %100, %cst_103 {dimension_numbers = #tpu.dot_dimension_numbers<[1], [0], [0], [1], [0, 0, 1, 1], [], []>} : vector<288x16xbf16>, vector<16x128xbf16>, vector<288x128xf32> -> vector<288x128xf32>
    %102 = arith.addf %96, %101 : vector<288x128xf32>
    %c0_104 = arith.constant 0 : index
    %c38_105 = arith.constant 38 : index
    %c0_106 = arith.constant 0 : index
    %103 = vector.load %arg2[%c0_104, %c38_105, %c0_106] : memref<1x342x16xbf16, #tpu.memory_space<vmem>>, vector<1x288x16xbf16>
    %104 = vector.shape_cast %103 : vector<1x288x16xbf16> to vector<288x16xbf16>
    %c8_107 = arith.constant 8 : index
    %c0_108 = arith.constant 0 : index
    %c0_109 = arith.constant 0 : index
    %105 = vector.load %arg4[%c8_107, %c0_108, %c0_109] : memref<9x16x128xbf16, #tpu.memory_space<vmem>>, vector<1x16x128xbf16>
    %106 = vector.shape_cast %105 : vector<1x16x128xbf16> to vector<16x128xbf16>
    %cst_110 = arith.constant dense<0.000000e+00> : vector<288x128xf32>
    %107 = tpu.matmul %104, %106, %cst_110 {dimension_numbers = #tpu.dot_dimension_numbers<[1], [0], [0], [1], [0, 0, 1, 1], [], []>} : vector<288x16xbf16>, vector<16x128xbf16>, vector<288x128xf32> -> vector<288x128xf32>
    %108 = arith.addf %102, %107 : vector<288x128xf32>
    %c0_111 = arith.constant 0 : index
    %c0_112 = arith.constant 0 : index
    %109 = vector.load %arg5[%c0_111, %c0_112] : memref<1x128xf32, #tpu.memory_space<vmem>>, vector<1x128xf32>
    %110 = vector.broadcast %109 : vector<1x128xf32> to vector<288x128xf32>
    %111 = arith.mulf %108, %110 : vector<288x128xf32>
    %c0_113 = arith.constant 0 : index
    %c0_114 = arith.constant 0 : index
    %112 = vector.load %arg6[%c0_113, %c0_114] : memref<1x128xf32, #tpu.memory_space<vmem>>, vector<1x128xf32>
    %113 = vector.broadcast %112 : vector<1x128xf32> to vector<288x128xf32>
    %114 = arith.addf %111, %113 : vector<288x128xf32>
    %cst_115 = arith.constant 0.000000e+00 : f32
    %115 = vector.broadcast %cst_115 : f32 to vector<288x128xf32>
    %116 = arith.maximumf %114, %115 : vector<288x128xf32>
    %117 = arith.truncf %116 : vector<288x128xf32> to vector<288x128xbf16>
    %c0_116 = arith.constant 0 : index
    %c0_117 = arith.constant 0 : index
    %118 = vector.load %arg7[%c0_116, %c0_117] : memref<128x128xbf16, #tpu.memory_space<vmem>>, vector<128x128xbf16>
    %cst_118 = arith.constant dense<0.000000e+00> : vector<288x128xf32>
    %119 = tpu.matmul %117, %118, %cst_118 {dimension_numbers = #tpu.dot_dimension_numbers<[1], [0], [0], [1], [0, 0, 1, 1], [], []>} : vector<288x128xbf16>, vector<128x128xbf16>, vector<288x128xf32> -> vector<288x128xf32>
    %c0_119 = arith.constant 0 : index
    %c0_120 = arith.constant 0 : index
    %120 = vector.load %arg8[%c0_119, %c0_120] : memref<1x128xf32, #tpu.memory_space<vmem>>, vector<1x128xf32>
    %121 = vector.broadcast %120 : vector<1x128xf32> to vector<288x128xf32>
    %122 = arith.addf %119, %121 : vector<288x128xf32>
    %123 = arith.negf %122 : vector<288x128xf32>
    %124 = math.exp %123 : vector<288x128xf32>
    %cst_121 = arith.constant 1.000000e+00 : f32
    %125 = vector.broadcast %cst_121 : f32 to vector<288x128xf32>
    %126 = arith.addf %125, %124 : vector<288x128xf32>
    %127 = arith.divf %125, %126 : vector<288x128xf32>
    %128 = arith.mulf %116, %127 : vector<288x128xf32>
    %129 = arith.addf %128, %116 : vector<288x128xf32>
    %130 = arith.truncf %129 : vector<288x128xf32> to vector<288x128xbf16>
    %c0_122 = arith.constant 0 : index
    %c0_123 = arith.constant 0 : index
    %c0_124 = arith.constant 0 : index
    %131 = vector.load %arg9[%c0_122, %c0_123, %c0_124] : memref<1x288x128xbf16, #tpu.memory_space<vmem>>, vector<1x288x128xbf16>
    %132 = vector.shape_cast %131 : vector<1x288x128xbf16> to vector<288x128xbf16>
    %133 = vector.shape_cast %130 : vector<288x128xbf16> to vector<1x288x128xbf16>
    tpu.vector_store %arg9[%c0_122, %c0_123, %c0_124], %133 {strides = array<i32>} : memref<1x288x128xbf16, #tpu.memory_space<vmem>>, vector<1x288x128xbf16>,
    return
  }
  func.func @transform_0(%arg0: i32) -> (i32, i32, i32) {
    %c0_i32 = arith.constant 0 : i32
    %c0_i32_0 = arith.constant 0 : i32
    %c0_i32_1 = arith.constant 0 : i32
    return %arg0, %c0_i32, %c0_i32_0 : i32, i32, i32
  }
  func.func @transform_1(%arg0: i32) -> (i32, i32, i32) {
    %c0_i32 = arith.constant 0 : i32
    %c0_i32_0 = arith.constant 0 : i32
    %c0_i32_1 = arith.constant 0 : i32
    return %arg0, %c0_i32, %c0_i32_0 : i32, i32, i32
  }
  func.func @transform_2(%arg0: i32) -> (i32, i32, i32) {
    %c0_i32 = arith.constant 0 : i32
    %c0_i32_0 = arith.constant 0 : i32
    %c0_i32_1 = arith.constant 0 : i32
    %c0_i32_2 = arith.constant 0 : i32
    return %c0_i32, %c0_i32_0, %c0_i32_1 : i32, i32, i32
  }
  func.func @transform_3(%arg0: i32) -> (i32, i32, i32) {
    %c0_i32 = arith.constant 0 : i32
    %c0_i32_0 = arith.constant 0 : i32
    %c0_i32_1 = arith.constant 0 : i32
    %c0_i32_2 = arith.constant 0 : i32
    return %c0_i32, %c0_i32_0, %c0_i32_1 : i32, i32, i32
  }
  func.func @transform_4(%arg0: i32) -> (i32, i32) {
    %c0_i32 = arith.constant 0 : i32
    %c0_i32_0 = arith.constant 0 : i32
    %c0_i32_1 = arith.constant 0 : i32
    return %c0_i32, %c0_i32_0 : i32, i32
  }
  func.func @transform_5(%arg0: i32) -> (i32, i32) {
    %c0_i32 = arith.constant 0 : i32
    %c0_i32_0 = arith.constant 0 : i32
    %c0_i32_1 = arith.constant 0 : i32
    return %c0_i32, %c0_i32_0 : i32, i32
  }
  func.func @transform_6(%arg0: i32) -> (i32, i32) {
    %c0_i32 = arith.constant 0 : i32
    %c0_i32_0 = arith.constant 0 : i32
    %c0_i32_1 = arith.constant 0 : i32
    return %c0_i32, %c0_i32_0 : i32, i32
  }
  func.func @transform_7(%arg0: i32) -> (i32, i32) {
    %c0_i32 = arith.constant 0 : i32
    %c0_i32_0 = arith.constant 0 : i32
    %c0_i32_1 = arith.constant 0 : i32
    return %c0_i32, %c0_i32_0 : i32, i32
  }
  func.func @transform_8(%arg0: i32) -> (i32, i32, i32) {
    %c0_i32 = arith.constant 0 : i32
    %c0_i32_0 = arith.constant 0 : i32
    %c0_i32_1 = arith.constant 0 : i32
    return %arg0, %c0_i32, %c0_i32_0 : i32, i32, i32
  }
}

</mosaic_0001>

<llo_original>
// kernel: ffm_forward.1
$region0: #{ffm_forward.1}
  #allocation0 [shape = 'u32[]', space=smem, size = 0x4, offset = 0x4, fixed_abs, tag = 'smem constant byte address 0x4 - core index']
  #allocation1 [shape = 'u32[144,128]{1,0:T(1,128)}', space=vmem, size = 0x12000, scoped, tag = 'internal scratch']
  %s0 = inlined_call_operand.vmem [shape: bf16[2,342,16], index: 0, kind: input, shape index: {}]
  %s1 = inlined_call_operand.vmem [shape: bf16[2,342,16], index: 1, kind: input, shape index: {}]
  %s2 = inlined_call_operand.vmem [shape: bf16[9,16,128], index: 2, kind: input, shape index: {}]
  %s3 = inlined_call_operand.vmem [shape: bf16[9,16,128], index: 3, kind: input, shape index: {}]
  %s4 = inlined_call_operand.vmem [shape: f32[1,128], index: 4, kind: input, shape index: {}]
  %s5 = inlined_call_operand.vmem [shape: f32[1,128], index: 5, kind: input, shape index: {}]
  %s6 = inlined_call_operand.vmem [shape: bf16[128,128], index: 6, kind: input, shape index: {}]
  %s7 = inlined_call_operand.vmem [shape: f32[1,128], index: 7, kind: input, shape index: {}]
  %s8 = inlined_call_operand.vmem [shape: bf16[2,288,128], index: 8, kind: output, shape index: {}]
  %s9 = sld [smem:[#allocation0]]
  $region65: #{ffm_forward.1} parent=0
    _
  %s11 = ssub.s32 1, %s9
  %s12 = scalar_select 0, %s11, %s9
  loop: start=0, step=1, limit=4
  $region2: #{ffm_forward.1} parent=0 // loop_pre_header
    _
  $region3: #{ffm_forward.1} parent=0 // loop_header
    %s14 = sphi 0, %s18
    %p15 = scmp.ge.s32.totalorder %s14, 4
    %s24 = sphi 0, %s26
    %s27 = sphi 0, %s24
    %s28 = sphi 0, %s27
    %s44 = sphi 0, %s28
    %s50 = sphi 0, %s52
    %s53 = sphi 0, %s50
    %s54 = sphi 0, %s53
    %s70 = sphi 0, %s54
    %s74 = sphi 0, %s74
    %s76 = sphi 0, %s74
    %s77 = sphi 0, %s76
    %s91 = sphi 0, %s77
    %s95 = sphi 0, %s95
    %s97 = sphi 0, %s95
    %s98 = sphi 0, %s97
    %s112 = sphi 0, %s98
    %s116 = sphi 0, %s116
    %s118 = sphi 0, %s116
    %s119 = sphi 0, %s118
    %s133 = sphi 0, %s119
    %s137 = sphi 0, %s137
    %s139 = sphi 0, %s137
    %s140 = sphi 0, %s139
    %s154 = sphi 0, %s140
    %s158 = sphi 0, %s158
    %s160 = sphi 0, %s158
    %s161 = sphi 0, %s160
    %s175 = sphi 0, %s161
    %s179 = sphi 0, %s179
    %s181 = sphi 0, %s179
    %s182 = sphi 0, %s181
    %s196 = sphi 0, %s182
    %s202 = sphi 0, %s204
    %s205 = sphi 0, %s202
    %s206 = sphi 0, %s205
    %s222 = sphi 0, %s206
  $region4: #{ffm_forward.1} parent=0 // loop_header_branch
    %17 = sbr.rel (%p15) target = $region8
  $region5: #{ffm_forward.1} parent=0 // loop_body
    %s19 = ssub.s32 %s14, 1
    %s20 = ssub.s32 %s14, 2
    %s21 = sadd.s32 %s14, 1
    %s22 = ssub.s32 %s14, %s21
    %p23 = scmp.eq.s32.totalorder %s22, 0
    %s25 = sadd.s32 %s24, 1
    %s26 = scalar_select %p23, %s24, %s25
    %p29 = pneg %p23
    %p30 = scmp.eq.s32.totalorder %s14, 1
    %p31 = por %p29, %p30
    %p32 = scmp.ne.s32.totalorder %s24, %s27
    %p33 = scmp.eq.s32.totalorder %s14, 0
    %p34 = por %p32, %p33
    %p35 = scmp.ne.s32.totalorder %s24, %s27
    %p36 = scmp.eq.s32.totalorder %s19, 1
    %p37 = por %p35, %p36
    %p38 = scmp.ne.s32.totalorder %s27, %s28
    %p39 = scmp.eq.s32.totalorder %s19, 0
    %p40 = por %p38, %p39
    %p41 = scmp.ne.s32.totalorder %s27, %s28
    %p42 = scmp.eq.s32.totalorder %s20, 1
    %p43 = por %p41, %p42
    %p45 = scmp.ne.s32.totalorder %s28, %s44
    %p46 = scmp.eq.s32.totalorder %s20, 0
    %p47 = por %p45, %p46
    %s48 = ssub.s32 %s14, %s21
    %p49 = scmp.eq.s32.totalorder %s48, 0
    %s51 = sadd.s32 %s50, 1
    %s52 = scalar_select %p49, %s50, %s51
    %p55 = pneg %p49
    %p56 = scmp.eq.s32.totalorder %s14, 1
    %p57 = por %p55, %p56
    %p58 = scmp.ne.s32.totalorder %s50, %s53
    %p59 = scmp.eq.s32.totalorder %s14, 0
    %p60 = por %p58, %p59
    %p61 = scmp.ne.s32.totalorder %s50, %s53
    %p62 = scmp.eq.s32.totalorder %s19, 1
    %p63 = por %p61, %p62
    %p64 = scmp.ne.s32.totalorder %s53, %s54
    %p65 = scmp.eq.s32.totalorder %s19, 0
    %p66 = por %p64, %p65
    %p67 = scmp.ne.s32.totalorder %s53, %s54
    %p68 = scmp.eq.s32.totalorder %s20, 1
    %p69 = por %p67, %p68
    %p71 = scmp.ne.s32.totalorder %s54, %s70
    %p72 = scmp.eq.s32.totalorder %s20, 0
    %p73 = por %p71, %p72
    %s75 = sadd.s32 %s74, 1
    %p78 = scmp.eq.s32.totalorder %s14, 1
    %p79 = scmp.ne.s32.totalorder %s74, %s76
    %p80 = scmp.eq.s32.totalorder %s14, 0
    %p81 = por %p79, %p80
    %p82 = scmp.ne.s32.totalorder %s74, %s76
    %p83 = scmp.eq.s32.totalorder %s19, 1
    %p84 = por %p82, %p83
    %p85 = scmp.ne.s32.totalorder %s76, %s77
    %p86 = scmp.eq.s32.totalorder %s19, 0
    %p87 = por %p85, %p86
    %p88 = scmp.ne.s32.totalorder %s76, %s77
    %p89 = scmp.eq.s32.totalorder %s20, 1
    %p90 = por %p88, %p89
    %p92 = scmp.ne.s32.totalorder %s77, %s91
    %p93 = scmp.eq.s32.totalorder %s20, 0
    %p94 = por %p92, %p93
    %s96 = sadd.s32 %s95, 1
    %p99 = scmp.eq.s32.totalorder %s14, 1
    %p100 = scmp.ne.s32.totalorder %s95, %s97
    %p101 = scmp.eq.s32.totalorder %s14, 0
    %p102 = por %p100, %p101
    %p103 = scmp.ne.s32.totalorder %s95, %s97
    %p104 = scmp.eq.s32.totalorder %s19, 1
    %p105 = por %p103, %p104
    %p106 = scmp.ne.s32.totalorder %s97, %s98
    %p107 = scmp.eq.s32.totalorder %s19, 0
    %p108 = por %p106, %p107
    %p109 = scmp.ne.s32.totalorder %s97, %s98
    %p110 = scmp.eq.s32.totalorder %s20, 1
    %p111 = por %p109, %p110
    %p113 = scmp.ne.s32.totalorder %s98, %s112
    %p114 = scmp.eq.s32.totalorder %s20, 0
    %p115 = por %p113, %p114
    %s117 = sadd.s32 %s116, 1
    %p120 = scmp.eq.s32.totalorder %s14, 1
    %p121 = scmp.ne.s32.totalorder %s116, %s118
    %p122 = scmp.eq.s32.totalorder %s14, 0
    %p123 = por %p121, %p122
    %p124 = scmp.ne.s32.totalorder %s116, %s118
    %p125 = scmp.eq.s32.totalorder %s19, 1
    %p126 = por %p124, %p125
    %p127 = scmp.ne.s32.totalorder %s118, %s119
    %p128 = scmp.eq.s32.totalorder %s19, 0
    %p129 = por %p127, %p128
    %p130 = scmp.ne.s32.totalorder %s118, %s119
    %p131 = scmp.eq.s32.totalorder %s20, 1
    %p132 = por %p130, %p131
    %p134 = scmp.ne.s32.totalorder %s119, %s133
    %p135 = scmp.eq.s32.totalorder %s20, 0
    %p136 = por %p134, %p135
    %s138 = sadd.s32 %s137, 1
    %p141 = scmp.eq.s32.totalorder %s14, 1
    %p142 = scmp.ne.s32.totalorder %s137, %s139
    %p143 = scmp.eq.s32.totalorder %s14, 0
    %p144 = por %p142, %p143
    %p145 = scmp.ne.s32.totalorder %s137, %s139
    %p146 = scmp.eq.s32.totalorder %s19, 1
    %p147 = por %p145, %p146
    %p148 = scmp.ne.s32.totalorder %s139, %s140
    %p149 = scmp.eq.s32.totalorder %s19, 0
    %p150 = por %p148, %p149
    %p151 = scmp.ne.s32.totalorder %s139, %s140
    %p152 = scmp.eq.s32.totalorder %s20, 1
    %p153 = por %p151, %p152
    %p155 = scmp.ne.s32.totalorder %s140, %s154
    %p156 = scmp.eq.s32.totalorder %s20, 0
    %p157 = por %p155, %p156
    %s159 = sadd.s32 %s158, 1
    %p162 = scmp.eq.s32.totalorder %s14, 1
    %p163 = scmp.ne.s32.totalorder %s158, %s160
    %p164 = scmp.eq.s32.totalorder %s14, 0
    %p165 = por %p163, %p164
    %p166 = scmp.ne.s32.totalorder %s158, %s160
    %p167 = scmp.eq.s32.totalorder %s19, 1
    %p168 = por %p166, %p167
    %p169 = scmp.ne.s32.totalorder %s160, %s161
    %p170 = scmp.eq.s32.totalorder %s19, 0
    %p171 = por %p169, %p170
    %p172 = scmp.ne.s32.totalorder %s160, %s161
    %p173 = scmp.eq.s32.totalorder %s20, 1
    %p174 = por %p172, %p173
    %p176 = scmp.ne.s32.totalorder %s161, %s175
    %p177 = scmp.eq.s32.totalorder %s20, 0
    %p178 = por %p176, %p177
    %s180 = sadd.s32 %s179, 1
    %p183 = scmp.eq.s32.totalorder %s14, 1
    %p184 = scmp.ne.s32.totalorder %s179, %s181
    %p185 = scmp.eq.s32.totalorder %s14, 0
    %p186 = por %p184, %p185
    %p187 = scmp.ne.s32.totalorder %s179, %s181
    %p188 = scmp.eq.s32.totalorder %s19, 1
    %p189 = por %p187, %p188
    %p190 = scmp.ne.s32.totalorder %s181, %s182
    %p191 = scmp.eq.s32.totalorder %s19, 0
    %p192 = por %p190, %p191
    %p193 = scmp.ne.s32.totalorder %s181, %s182
    %p194 = scmp.eq.s32.totalorder %s20, 1
    %p195 = por %p193, %p194
    %p197 = scmp.ne.s32.totalorder %s182, %s196
    %p198 = scmp.eq.s32.totalorder %s20, 0
    %p199 = por %p197, %p198
    %s200 = ssub.s32 %s14, %s21
    %p201 = scmp.eq.s32.totalorder %s200, 0
    %s203 = sadd.s32 %s202, 1
    %s204 = scalar_select %p201, %s202, %s203
    %p207 = pneg %p201
    %p208 = scmp.eq.s32.totalorder %s14, 1
    %p209 = por %p207, %p208
    %p210 = scmp.ne.s32.totalorder %s202, %s205
    %p211 = scmp.eq.s32.totalorder %s14, 0
    %p212 = por %p210, %p211
    %p213 = scmp.ne.s32.totalorder %s202, %s205
    %p214 = scmp.eq.s32.totalorder %s19, 1
    %p215 = por %p213, %p214
    %p216 = scmp.ne.s32.totalorder %s205, %s206
    %p217 = scmp.eq.s32.totalorder %s19, 0
    %p218 = por %p216, %p217
    %p219 = scmp.ne.s32.totalorder %s205, %s206
    %p220 = scmp.eq.s32.totalorder %s20, 1
    %p221 = por %p219, %p220
    %p223 = scmp.ne.s32.totalorder %s206, %s222
    %p224 = scmp.eq.s32.totalorder %s20, 0
    %p225 = por %p223, %p224
    %p226 = scmp.le.s32.totalorder 1, %s14
    %p227 = scmp.lt.s32.totalorder %s14, 3
    %p228 = pnand %p226, %p227
    %p229 = pneg %p228
    // Predicated region
    $region9: #{ffm_forward.1} parent=5 // pred_check
      _
    $region10: #{ffm_forward.1} parent=5 // pred_check_branch
      %231 = sbr.rel (%p228) target = $region12
    $region11: #{ffm_forward.1} parent=5 // pred_region
      %s232 = ssub.s32 %s14, 1
      // Predicated region
      $region13: #{ffm_forward.1} parent=11 // pred_check
        %p233 = pneg %p87
      $region14: #{ffm_forward.1} parent=11 // pred_check_branch
        %235 = sbr.rel (%p233) target = $region16
      $region15: #{ffm_forward.1} parent=11 // pred_region
        _
      $region16: #{ffm_forward.1} parent=11 // pred_fallthru
        _
      // Predicated region
      $region17: #{ffm_forward.1} parent=11 // pred_check
        %p236 = pneg %p108
      $region18: #{ffm_forward.1} parent=11 // pred_check_branch
        %238 = sbr.rel (%p236) target = $region20
      $region19: #{ffm_forward.1} parent=11 // pred_region
        _
      $region20: #{ffm_forward.1} parent=11 // pred_fallthru
        _
      // Predicated region
      $region21: #{ffm_forward.1} parent=11 // pred_check
        %p239 = pneg %p129
      $region22: #{ffm_forward.1} parent=11 // pred_check_branch
        %241 = sbr.rel (%p239) target = $region24
      $region23: #{ffm_forward.1} parent=11 // pred_region
        _
      $region24: #{ffm_forward.1} parent=11 // pred_fallthru
        _
      // Predicated region
      $region25: #{ffm_forward.1} parent=11 // pred_check
        %p242 = pneg %p150
      $region26: #{ffm_forward.1} parent=11 // pred_check_branch
        %244 = sbr.rel (%p242) target = $region28
      $region27: #{ffm_forward.1} parent=11 // pred_region
        _
      $region28: #{ffm_forward.1} parent=11 // pred_fallthru
        _
      // Predicated region
      $region29: #{ffm_forward.1} parent=11 // pred_check
        %p245 = pneg %p171
      $region30: #{ffm_forward.1} parent=11 // pred_check_branch
        %247 = sbr.rel (%p245) target = $region32
      $region31: #{ffm_forward.1} parent=11 // pred_region
        _
      $region32: #{ffm_forward.1} parent=11 // pred_fallthru
        _
      // Predicated region
      $region33: #{ffm_forward.1} parent=11 // pred_check
        %p248 = pneg %p192
      $region34: #{ffm_forward.1} parent=11 // pred_check_branch
        %250 = sbr.rel (%p248) target = $region36
      $region35: #{ffm_forward.1} parent=11 // pred_region
        _
      $region36: #{ffm_forward.1} parent=11 // pred_fallthru
        _
    $region12: #{ffm_forward.1} parent=5 // pred_fallthru
      _
    %p251 = scmp.lt.s32.totalorder %s14, 2
    // Predicated region
    $region37: #{ffm_forward.1} parent=5 // pred_check
      %p252 = pneg %p251
    $region38: #{ffm_forward.1} parent=5 // pred_check_branch
      %254 = sbr.rel (%p252) target = $region40
    $region39: #{ffm_forward.1} parent=5 // pred_region
      // Predicated region
      $region41: #{ffm_forward.1} parent=39 // pred_check
        %p255 = pneg %p34
      $region42: #{ffm_forward.1} parent=39 // pred_check_branch
        %257 = sbr.rel (%p255) target = $region44
      $region43: #{ffm_forward.1} parent=39 // pred_region
        %p258 = scmp.lt.s32.totalorder %s14, 1
        %s259 = scalar_select %p258, %s14, 1
        %s260 = smul.addr %s259, 43
        %s261 = smul.addr %s260, 4
        %s262 = scalar_lea.vmem %s0, %s261
      $region44: #{ffm_forward.1} parent=39 // pred_fallthru
        _
      // Predicated region
      $region45: #{ffm_forward.1} parent=39 // pred_check
        %p263 = pneg %p60
      $region46: #{ffm_forward.1} parent=39 // pred_check_branch
        %265 = sbr.rel (%p263) target = $region48
      $region47: #{ffm_forward.1} parent=39 // pred_region
        %p266 = scmp.lt.s32.totalorder %s14, 1
        %s267 = scalar_select %p266, %s14, 1
        %s268 = smul.addr %s267, 43
        %s269 = smul.addr %s268, 4
        %s270 = scalar_lea.vmem %s1, %s269
      $region48: #{ffm_forward.1} parent=39 // pred_fallthru
        _
    $region40: #{ffm_forward.1} parent=5 // pred_fallthru
      _
    %p271 = scmp.le.s32.totalorder 1, %s14
    %p272 = scmp.lt.s32.totalorder %s14, 3
    %p273 = pnand %p271, %p272
    %p274 = pneg %p273
    // Predicated region
    $region49: #{ffm_forward.1} parent=5 // pred_check
      _
    $region50: #{ffm_forward.1} parent=5 // pred_check_branch
      %276 = sbr.rel (%p273) target = $region52
    $region51: #{ffm_forward.1} parent=5 // pred_region
      %s277 = ssub.s32 %s14, 1
      %p278 = scmp.lt.s32.totalorder %s19, 1
      %s279 = scalar_select %p278, %s19, 1
      %s280 = smul.addr %s279, 43
      %s281 = smul.addr %s280, 4
      %s282 = scalar_lea.vmem %s0, %s281
      %p283 = pneg %p40
      %p284 = pneg %p37
      %p285 = scmp.lt.s32.totalorder %s19, 1
      %s286 = scalar_select %p285, %s19, 1
      %s287 = smul.addr %s286, 43
      %s288 = smul.addr %s287, 4
      %s289 = scalar_lea.vmem %s1, %s288
      %p290 = pneg %p66
      %p291 = pneg %p63
      %p292 = pneg %p87
      %p293 = pneg %p84
      %p294 = pneg %p108
      %p295 = pneg %p105
      %p296 = pneg %p129
      %p297 = pneg %p126
      %p298 = pneg %p150
      %p299 = pneg %p147
      %p300 = pneg %p171
      %p301 = pneg %p168
      %p302 = pneg %p192
      %p303 = pneg %p189
      %p304 = pneg %p218
      %p305 = pneg %p215
      %p306 = scmp.lt.s32.totalorder %s19, 1
      %s307 = scalar_select %p306, %s19, 1
      %s308 = smul.addr %s307, 36
      %s309 = smul.addr %s308, 4
      %s310 = scalar_lea.vmem %s8, %s309
      %p311 = scmp.lt.s32.totalorder %s19, 1
      %s312 = scalar_select %p311, %s19, 1
      %s313 = smul.addr %s312, 43
      %s314 = smul.addr %s313, 4
      %s315 = scalar_lea.vmem %s0, %s314
      %p316 = scmp.lt.s32.totalorder %s19, 1
      %s317 = scalar_select %p316, %s19, 1
      %s318 = smul.addr %s317, 43
      %s319 = smul.addr %s318, 4
      %s320 = scalar_lea.vmem %s1, %s319
      %p321 = scmp.lt.s32.totalorder %s19, 1
      %s322 = scalar_select %p321, %s19, 1
      %s323 = smul.addr %s322, 36
      %s324 = smul.addr %s323, 4
      %s325 = scalar_lea.vmem %s8, %s324
      %v327 = vld [vmem:[%s315] sm:$0xf]
      %v328 = vld [vmem:[%s315 + $0x4] sm:$0xf]
      %v329 = vld [vmem:[%s315 + $0x8] sm:$0xf]
      %v330 = vld [vmem:[%s315 + $0xc] sm:$0xf]
      %v331 = vld [vmem:[%s315 + $0x10] sm:$0xf]
      %v332 = vld [vmem:[%s315 + $0x14] sm:$0xf]
      %v333 = vld [vmem:[%s315 + $0x18] sm:$0xf]
      %v334 = vld [vmem:[%s315 + $0x1c] sm:$0xf]
      %v335 = vld [vmem:[%s315 + $0x20] sm:$0xf]
      %v336 = vld [vmem:[%s315 + $0x24] sm:$0xf]
      %v337 = vld [vmem:[%s315 + $0x28] sm:$0xf]
      %v338 = vld [vmem:[%s315 + $0x2c] sm:$0xf]
      %v339 = vld [vmem:[%s315 + $0x30] sm:$0xf]
      %v340 = vld [vmem:[%s315 + $0x34] sm:$0xf]
      %v341 = vld [vmem:[%s315 + $0x38] sm:$0xf]
      %v342 = vld [vmem:[%s315 + $0x3c] sm:$0xf]
      %v343 = vld [vmem:[%s315 + $0x40] sm:$0xf]
      %v344 = vld [vmem:[%s315 + $0x44] sm:$0xf]
      %v345 = vld [vmem:[%s315 + $0x48] sm:$0xf]
      %v346 = vld [vmem:[%s315 + $0x4c] sm:$0xf]
      %v347 = vld [vmem:[%s315 + $0x50] sm:$0xf]
      %v348 = vld [vmem:[%s315 + $0x54] sm:$0xf]
      %v349 = vld [vmem:[%s315 + $0x58] sm:$0xf]
      %v350 = vld [vmem:[%s315 + $0x5c] sm:$0xf]
      %v351 = vld [vmem:[%s315 + $0x60] sm:$0xf]
      %v352 = vld [vmem:[%s315 + $0x64] sm:$0xf]
      %v353 = vld [vmem:[%s315 + $0x68] sm:$0xf]
      %v354 = vld [vmem:[%s315 + $0x6c] sm:$0xf]
      %v355 = vld [vmem:[%s315 + $0x70] sm:$0xf]
      %v356 = vld [vmem:[%s315 + $0x74] sm:$0xf]
      %v357 = vld [vmem:[%s315 + $0x78] sm:$0xf]
      %v358 = vld [vmem:[%s315 + $0x7c] sm:$0xf]
      %v359 = vld [vmem:[%s315 + $0x80] sm:$0xf]
      %v360 = vld [vmem:[%s315 + $0x84] sm:$0xf]
      %v361 = vld [vmem:[%s315 + $0x88] sm:$0xf]
      %v362 = vld [vmem:[%s315 + $0x8c] sm:$0xf]
      %v363 = vld [vmem:[%s2] sm:$0xf]
      %v364 = vld [vmem:[%s2 + $0x4] sm:$0xf]
      %v365 = vld [vmem:[%s320] sm:$0xf]
      %v366 = vld [vmem:[%s320 + $0x4] sm:$0xf]
      %v367 = vld [vmem:[%s320 + $0x8] sm:$0xf]
      %v368 = vld [vmem:[%s320 + $0xc] sm:$0xf]
      %v369 = vld [vmem:[%s320 + $0x10] sm:$0xf]
      %v370 = vld [vmem:[%s320 + $0x14] sm:$0xf]
      %v371 = vld [vmem:[%s320 + $0x18] sm:$0xf]
      %v372 = vld [vmem:[%s320 + $0x1c] sm:$0xf]
      %v373 = vld [vmem:[%s320 + $0x20] sm:$0xf]
      %v374 = vld [vmem:[%s320 + $0x24] sm:$0xf]
      %v375 = vld [vmem:[%s320 + $0x28] sm:$0xf]
      %v376 = vld [vmem:[%s320 + $0x2c] sm:$0xf]
      %v377 = vld [vmem:[%s320 + $0x30] sm:$0xf]
      %v378 = vld [vmem:[%s320 + $0x34] sm:$0xf]
      %v379 = vld [vmem:[%s320 + $0x38] sm:$0xf]
      %v380 = vld [vmem:[%s320 + $0x3c] sm:$0xf]
      %v381 = vld [vmem:[%s320 + $0x40] sm:$0xf]
      %v382 = vld [vmem:[%s320 + $0x44] sm:$0xf]
      %v383 = vld [vmem:[%s320 + $0x48] sm:$0xf]
      %v384 = vld [vmem:[%s320 + $0x4c] sm:$0xf]
      %v385 = vld [vmem:[%s320 + $0x50] sm:$0xf]
      %v386 = vld [vmem:[%s320 + $0x54] sm:$0xf]
      %v387 = vld [vmem:[%s320 + $0x58] sm:$0xf]
      %v388 = vld [vmem:[%s320 + $0x5c] sm:$0xf]
      %v389 = vld [vmem:[%s320 + $0x60] sm:$0xf]
      %v390 = vld [vmem:[%s320 + $0x64] sm:$0xf]
      %v391 = vld [vmem:[%s320 + $0x68] sm:$0xf]
      %v392 = vld [vmem:[%s320 + $0x6c] sm:$0xf]
      %v393 = vld [vmem:[%s320 + $0x70] sm:$0xf]
      %v394 = vld [vmem:[%s320 + $0x74] sm:$0xf]
      %v395 = vld [vmem:[%s320 + $0x78] sm:$0xf]
      %v396 = vld [vmem:[%s320 + $0x7c] sm:$0xf]
      %v397 = vld [vmem:[%s320 + $0x80] sm:$0xf]
      %v398 = vld [vmem:[%s320 + $0x84] sm:$0xf]
      %v399 = vld [vmem:[%s320 + $0x88] sm:$0xf]
      %v400 = vld [vmem:[%s320 + $0x8c] sm:$0xf]
      %v401 = vld [vmem:[%s3] sm:$0xf]
      %v402 = vld [vmem:[%s3 + $0x4] sm:$0xf]
      %v439 = vunpack.c.l.b16 %v365
      %v440 = vunpack.c.l.b16 %v366
      %v441 = vunpack.c.l.b16 %v367
      %v442 = vunpack.c.l.b16 %v368
      %v443 = vunpack.c.l.b16 %v369
      %v444 = vunpack.c.l.b16 %v370
      %v445 = vunpack.c.l.b16 %v371
      %v446 = vunpack.c.l.b16 %v372
      %v447 = vunpack.c.l.b16 %v373
      %v448 = vunpack.c.l.b16 %v374
      %v449 = vunpack.c.l.b16 %v375
      %v450 = vunpack.c.l.b16 %v376
      %v451 = vunpack.c.l.b16 %v377
      %v452 = vunpack.c.l.b16 %v378
      %v453 = vunpack.c.l.b16 %v379
      %v454 = vunpack.c.l.b16 %v380
      %v455 = vunpack.c.l.b16 %v381
      %v456 = vunpack.c.l.b16 %v382
      %v457 = vunpack.c.l.b16 %v383
      %v458 = vunpack.c.l.b16 %v384
      %v459 = vunpack.c.l.b16 %v385
      %v460 = vunpack.c.l.b16 %v386
      %v461 = vunpack.c.l.b16 %v387
      %v462 = vunpack.c.l.b16 %v388
      %v463 = vunpack.c.l.b16 %v389
      %v464 = vunpack.c.l.b16 %v390
      %v465 = vunpack.c.l.b16 %v391
      %v466 = vunpack.c.l.b16 %v392
      %v467 = vunpack.c.l.b16 %v393
      %v468 = vunpack.c.l.b16 %v394
      %v469 = vunpack.c.l.b16 %v395
      %v470 = vunpack.c.l.b16 %v396
      %v471 = vunpack.c.l.b16 %v397
      %v472 = vunpack.c.l.b16 %v398
      %v473 = vunpack.c.l.b16 %v399
      %v474 = vunpack.c.l.b16 %v400
      %v475 = vpack.c.b16 %v440, %v439
      %v476 = vpack.c.b16 %v442, %v441
      %v477 = vpack.c.b16 %v444, %v443
      %v478 = vpack.c.b16 %v446, %v445
      %v479 = vpack.c.b16 %v448, %v447
      %v480 = vpack.c.b16 %v450, %v449
      %v481 = vpack.c.b16 %v452, %v451
      %v482 = vpack.c.b16 %v454, %v453
      %v483 = vpack.c.b16 %v456, %v455
      %v484 = vpack.c.b16 %v458, %v457
      %v485 = vpack.c.b16 %v460, %v459
      %v486 = vpack.c.b16 %v462, %v461
      %v487 = vpack.c.b16 %v464, %v463
      %v488 = vpack.c.b16 %v466, %v465
      %v489 = vpack.c.b16 %v468, %v467
      %v490 = vpack.c.b16 %v470, %v469
      %v491 = vpack.c.b16 %v472, %v471
      %v492 = vpack.c.b16 %v474, %v473
      %v495 = vunpack.c.l.b16 %v401
      %v496 = vunpack.c.l.b16 %v402
      %v497 = vpack.c.b16 %v496, %v495
      %vm499 = vcmask 130048
      %v501 = vsel %vm499, %v475, 0
      %v504 = vsel %vm499, %v476, 0
      %v507 = vsel %vm499, %v477, 0
      %v510 = vsel %vm499, %v478, 0
      %v513 = vsel %vm499, %v479, 0
      %v516 = vsel %vm499, %v480, 0
      %v519 = vsel %vm499, %v481, 0
      %v522 = vsel %vm499, %v482, 0
      %v525 = vsel %vm499, %v483, 0
      %v528 = vsel %vm499, %v484, 0
      %v531 = vsel %vm499, %v485, 0
      %v534 = vsel %vm499, %v486, 0
      %v537 = vsel %vm499, %v487, 0
      %v540 = vsel %vm499, %v488, 0
      %v543 = vsel %vm499, %v489, 0
      %v546 = vsel %vm499, %v490, 0
      %v549 = vsel %vm499, %v491, 0
      %v552 = vsel %vm499, %v492, 0
      %554 = vmatprep.subr.bf16.mxu0 0
      %555 = vmatpush1.bf16.msra.mxu0 %v497
      %556 = vmatprep.subr.bf16.mxu0 0
      %557 = vmatpush1.bf16.msra.mxu0 0
      %558 = vmatprep.subr.bf16.mxu0 0
      %559 = vmatpush1.bf16.msra.mxu0 0
      %560 = vmatprep.subr.bf16.mxu0 0
      %561 = vmatpush1.bf16.msra.mxu0 0
      %562 = vmatprep.subr.bf16.mxu0 0
      %563 = vmatpush1.bf16.msra.mxu0 0
      %564 = vmatprep.subr.bf16.mxu0 0
      %565 = vmatpush1.bf16.msra.mxu0 0
      %566 = vmatprep.subr.bf16.mxu0 0
      %567 = vmatpush1.bf16.msra.mxu0 0
      %568 = vmatprep.subr.bf16.mxu0 0
      %569 = vmatpush1.bf16.msra.mxu0 0
      %570 = vmatprep.subr.bf16.mxu0 0
      %571 = vmatpush1.bf16.msra.mxu0 0
      %572 = vmatprep.subr.bf16.mxu0 0
      %573 = vmatpush1.bf16.msra.mxu0 0
      %574 = vmatprep.subr.bf16.mxu0 0
      %575 = vmatpush1.bf16.msra.mxu0 0
      %576 = vmatprep.subr.bf16.mxu0 0
      %577 = vmatpush1.bf16.msra.mxu0 0
      %578 = vmatprep.subr.bf16.mxu0 0
      %579 = vmatpush1.bf16.msra.mxu0 0
      %580 = vmatprep.subr.bf16.mxu0 0
      %581 = vmatpush1.bf16.msra.mxu0 0
      %582 = vmatprep.subr.bf16.mxu0 0
      %583 = vmatpush1.bf16.msra.mxu0 0
      %584 = vmatprep.subr.bf16.mxu0 0
      %585 = vmatpush1.bf16.msra.mxu0 0
      %586 = vmatprep.mubr.bf16.mxu0 0
      %587 = vmatmul.mubr.bf16.gmra.mrb[0].mxu0 %v501
      %v588 = vpop.f32.mrb[0].mxu0
      %v589 = vadd.f32 0.0, %v588
      %v590 = vpop.f32.mrb[0].mxu0
      %v591 = vpop.f32.mrb[0].mxu0
      %v592 = vadd.f32 0.0, %v591
      %v593 = vpop.f32.mrb[0].mxu0
      %594 = vmatprep.mubr.bf16.mxu0 0
      %595 = vmatmul.mubr.bf16.gmra.mrb[0].mxu0 %v504
      %v596 = vpop.f32.mrb[0].mxu0
      %v597 = vadd.f32 0.0, %v596
      %v598 = vpop.f32.mrb[0].mxu0
      %v599 = vpop.f32.mrb[0].mxu0
      %v600 = vadd.f32 0.0, %v599
      %v601 = vpop.f32.mrb[0].mxu0
      %602 = vmatprep.mubr.bf16.mxu0 0
      %603 = vmatmul.mubr.bf16.gmra.mrb[0].mxu0 %v507
      %v604 = vpop.f32.mrb[0].mxu0
      %v605 = vadd.f32 0.0, %v604
      %v606 = vpop.f32.mrb[0].mxu0
      %v607 = vpop.f32.mrb[0].mxu0
      %v608 = vadd.f32 0.0, %v607
      %v609 = vpop.f32.mrb[0].mxu0
      %610 = vmatprep.mubr.bf16.mxu0 0
      %611 = vmatmul.mubr.bf16.gmra.mrb[0].mxu0 %v510
      %v612 = vpop.f32.mrb[0].mxu0
      %v613 = vadd.f32 0.0, %v612
      %v614 = vpop.f32.mrb[0].mxu0
      %v615 = vpop.f32.mrb[0].mxu0
      %v616 = vadd.f32 0.0, %v615
      %v617 = vpop.f32.mrb[0].mxu0
      %618 = vmatprep.mubr.bf16.mxu0 0
      %619 = vmatmul.mubr.bf16.gmra.mrb[0].mxu0 %v513
      %v620 = vpop.f32.mrb[0].mxu0
      %v621 = vadd.f32 0.0, %v620
      %v622 = vpop.f32.mrb[0].mxu0
      %v623 = vpop.f32.mrb[0].mxu0
      %v624 = vadd.f32 0.0, %v623
      %v625 = vpop.f32.mrb[0].mxu0
      %626 = vmatprep.mubr.bf16.mxu0 0
      %627 = vmatmul.mubr.bf16.gmra.mrb[0].mxu0 %v516
      %v628 = vpop.f32.mrb[0].mxu0
      %v629 = vadd.f32 0.0, %v628
      %v630 = vpop.f32.mrb[0].mxu0
      %v631 = vpop.f32.mrb[0].mxu0
      %v632 = vadd.f32 0.0, %v631
      %v633 = vpop.f32.mrb[0].mxu0
      %634 = vmatprep.mubr.bf16.mxu0 0
      %635 = vmatmul.mubr.bf16.gmra.mrb[0].mxu0 %v519
      %v636 = vpop.f32.mrb[0].mxu0
      %v637 = vadd.f32 0.0, %v636
      %v638 = vpop.f32.mrb[0].mxu0
      %v639 = vpop.f32.mrb[0].mxu0
      %v640 = vadd.f32 0.0, %v639
      %v641 = vpop.f32.mrb[0].mxu0
      %642 = vmatprep.mubr.bf16.mxu0 0
      %643 = vmatmul.mubr.bf16.gmra.mrb[0].mxu0 %v522
      %v644 = vpop.f32.mrb[0].mxu0
      %v645 = vadd.f32 0.0, %v644
      %v646 = vpop.f32.mrb[0].mxu0
      %v647 = vpop.f32.mrb[0].mxu0
      %v648 = vadd.f32 0.0, %v647
      %v649 = vpop.f32.mrb[0].mxu0
      %650 = vmatprep.mubr.bf16.mxu0 0
      %651 = vmatmul.mubr.bf16.gmra.mrb[0].mxu0 %v525
      %v652 = vpop.f32.mrb[0].mxu0
      %v653 = vadd.f32 0.0, %v652
      %v654 = vpop.f32.mrb[0].mxu0
      %v655 = vpop.f32.mrb[0].mxu0
      %v656 = vadd.f32 0.0, %v655
      %v657 = vpop.f32.mrb[0].mxu0
      %658 = vmatprep.mubr.bf16.mxu0 0
      %659 = vmatmul.mubr.bf16.gmra.mrb[0].mxu0 %v528
      %v660 = vpop.f32.mrb[0].mxu0
      %v661 = vadd.f32 0.0, %v660
      %v662 = vpop.f32.mrb[0].mxu0
      %v663 = vpop.f32.mrb[0].mxu0
      %v664 = vadd.f32 0.0, %v663
      %v665 = vpop.f32.mrb[0].mxu0
      %666 = vmatprep.mubr.bf16.mxu0 0
      %667 = vmatmul.mubr.bf16.gmra.mrb[0].mxu0 %v531
      %v668 = vpop.f32.mrb[0].mxu0
      %v669 = vadd.f32 0.0, %v668
      %v670 = vpop.f32.mrb[0].mxu0
      %v671 = vpop.f32.mrb[0].mxu0
      %v672 = vadd.f32 0.0, %v671
      %v673 = vpop.f32.mrb[0].mxu0
      %674 = vmatprep.mubr.bf16.mxu0 0
      %675 = vmatmul.mubr.bf16.gmra.mrb[0].mxu0 %v534
      %v676 = vpop.f32.mrb[0].mxu0
      %v677 = vadd.f32 0.0, %v676
      %v678 = vpop.f32.mrb[0].mxu0
      %v679 = vpop.f32.mrb[0].mxu0
      %v680 = vadd.f32 0.0, %v679
      %v681 = vpop.f32.mrb[0].mxu0
      %682 = vmatprep.mubr.bf16.mxu0 0
      %683 = vmatmul.mubr.bf16.gmra.mrb[0].mxu0 %v537
      %v684 = vpop.f32.mrb[0].mxu0
      %v685 = vadd.f32 0.0, %v684
      %v686 = vpop.f32.mrb[0].mxu0
      %v687 = vpop.f32.mrb[0].mxu0
      %v688 = vadd.f32 0.0, %v687
      %v689 = vpop.f32.mrb[0].mxu0
      %690 = vmatprep.mubr.bf16.mxu0 0
      %691 = vmatmul.mubr.bf16.gmra.mrb[0].mxu0 %v540
      %v692 = vpop.f32.mrb[0].mxu0
      %v693 = vadd.f32 0.0, %v692
      %v694 = vpop.f32.mrb[0].mxu0
      %v695 = vpop.f32.mrb[0].mxu0
      %v696 = vadd.f32 0.0, %v695
      %v697 = vpop.f32.mrb[0].mxu0
      %698 = vmatprep.mubr.bf16.mxu0 0
      %699 = vmatmul.mubr.bf16.gmra.mrb[0].mxu0 %v543
      %v700 = vpop.f32.mrb[0].mxu0
      %v701 = vadd.f32 0.0, %v700
      %v702 = vpop.f32.mrb[0].mxu0
      %v703 = vpop.f32.mrb[0].mxu0
      %v704 = vadd.f32 0.0, %v703
      %v705 = vpop.f32.mrb[0].mxu0
      %706 = vmatprep.mubr.bf16.mxu0 0
      %707 = vmatmul.mubr.bf16.gmra.mrb[0].mxu0 %v546
      %v708 = vpop.f32.mrb[0].mxu0
      %v709 = vadd.f32 0.0, %v708
      %v710 = vpop.f32.mrb[0].mxu0
      %v711 = vpop.f32.mrb[0].mxu0
      %v712 = vadd.f32 0.0, %v711
      %v713 = vpop.f32.mrb[0].mxu0
      %714 = vmatprep.mubr.bf16.mxu0 0
      %715 = vmatmul.mubr.bf16.gmra.mrb[0].mxu0 %v549
      %v716 = vpop.f32.mrb[0].mxu0
      %v717 = vadd.f32 0.0, %v716
      %v718 = vpop.f32.mrb[0].mxu0
      %v719 = vpop.f32.mrb[0].mxu0
      %v720 = vadd.f32 0.0, %v719
      %v721 = vpop.f32.mrb[0].mxu0
      %722 = vmatprep.mubr.bf16.mxu0 0
      %723 = vmatmul.mubr.bf16.gmra.mrb[0].mxu0 %v552
      %v724 = vpop.f32.mrb[0].mxu0
      %v725 = vadd.f32 0.0, %v724
      %v726 = vpop.f32.mrb[0].mxu0
      %v727 = vpop.f32.mrb[0].mxu0
      %v728 = vadd.f32 0.0, %v727
      %v729 = vpop.f32.mrb[0].mxu0
      %730 = vdwg.mxu0
      %v767 = vunpack.c.l.b16 %v327
      %v768 = vunpack.c.l.b16 %v328
      %v769 = vunpack.c.l.b16 %v329
      %v770 = vunpack.c.l.b16 %v330
      %v771 = vunpack.c.l.b16 %v331
      %v772 = vunpack.c.l.b16 %v332
      %v773 = vunpack.c.l.b16 %v333
      %v774 = vunpack.c.l.b16 %v334
      %v775 = vunpack.c.l.b16 %v335
      %v776 = vunpack.c.l.b16 %v336
      %v777 = vunpack.c.l.b16 %v337
      %v778 = vunpack.c.l.b16 %v338
      %v779 = vunpack.c.l.b16 %v339
      %v780 = vunpack.c.l.b16 %v340
      %v781 = vunpack.c.l.b16 %v341
      %v782 = vunpack.c.l.b16 %v342
      %v783 = vunpack.c.l.b16 %v343
      %v784 = vunpack.c.l.b16 %v344
      %v785 = vunpack.c.l.b16 %v345
      %v786 = vunpack.c.l.b16 %v346
      %v787 = vunpack.c.l.b16 %v347
      %v788 = vunpack.c.l.b16 %v348
      %v789 = vunpack.c.l.b16 %v349
      %v790 = vunpack.c.l.b16 %v350
      %v791 = vunpack.c.l.b16 %v351
      %v792 = vunpack.c.l.b16 %v352
      %v793 = vunpack.c.l.b16 %v353
      %v794 = vunpack.c.l.b16 %v354
      %v795 = vunpack.c.l.b16 %v355
      %v796 = vunpack.c.l.b16 %v356
      %v797 = vunpack.c.l.b16 %v357
      %v798 = vunpack.c.l.b16 %v358
      %v799 = vunpack.c.l.b16 %v359
      %v800 = vunpack.c.l.b16 %v360
      %v801 = vunpack.c.l.b16 %v361
      %v802 = vunpack.c.l.b16 %v362
      %v803 = vpack.c.b16 %v768, %v767
      %v804 = vpack.c.b16 %v770, %v769
      %v805 = vpack.c.b16 %v772, %v771
      %v806 = vpack.c.b16 %v774, %v773
      %v807 = vpack.c.b16 %v776, %v775
      %v808 = vpack.c.b16 %v778, %v777
      %v809 = vpack.c.b16 %v780, %v779
      %v810 = vpack.c.b16 %v782, %v781
      %v811 = vpack.c.b16 %v784, %v783
      %v812 = vpack.c.b16 %v786, %v785
      %v813 = vpack.c.b16 %v788, %v787
      %v814 = vpack.c.b16 %v790, %v789
      %v815 = vpack.c.b16 %v792, %v791
      %v816 = vpack.c.b16 %v794, %v793
      %v817 = vpack.c.b16 %v796, %v795
      %v818 = vpack.c.b16 %v798, %v797
      %v819 = vpack.c.b16 %v800, %v799
      %v820 = vpack.c.b16 %v802, %v801
      %v823 = vunpack.c.l.b16 %v363
      %v824 = vunpack.c.l.b16 %v364
      %v825 = vpack.c.b16 %v824, %v823
      %v828 = vsel %vm499, %v803, 0
      %v831 = vsel %vm499, %v804, 0
      %v834 = vsel %vm499, %v805, 0
      %v837 = vsel %vm499, %v806, 0
      %v840 = vsel %vm499, %v807, 0
      %v843 = vsel %vm499, %v808, 0
      %v846 = vsel %vm499, %v809, 0
      %v849 = vsel %vm499, %v810, 0
      %v852 = vsel %vm499, %v811, 0
      %v855 = vsel %vm499, %v812, 0
      %v858 = vsel %vm499, %v813, 0
      %v861 = vsel %vm499, %v814, 0
      %v864 = vsel %vm499, %v815, 0
      %v867 = vsel %vm499, %v816, 0
      %v870 = vsel %vm499, %v817, 0
      %v873 = vsel %vm499, %v818, 0
      %v876 = vsel %vm499, %v819, 0
      %v879 = vsel %vm499, %v820, 0
      %881 = vmatprep.subr.bf16.mxu0 0
      %882 = vmatpush1.bf16.msra.mxu0 %v825
      %883 = vmatprep.subr.bf16.mxu0 0
      %884 = vmatpush1.bf16.msra.mxu0 0
      %885 = vmatprep.subr.bf16.mxu0 0
      %886 = vmatpush1.bf16.msra.mxu0 0
      %887 = vmatprep.subr.bf16.mxu0 0
      %888 = vmatpush1.bf16.msra.mxu0 0
      %889 = vmatprep.subr.bf16.mxu0 0
      %890 = vmatpush1.bf16.msra.mxu0 0
      %891 = vmatprep.subr.bf16.mxu0 0
      %892 = vmatpush1.bf16.msra.mxu0 0
      %893 = vmatprep.subr.bf16.mxu0 0
      %894 = vmatpush1.bf16.msra.mxu0 0
      %895 = vmatprep.subr.bf16.mxu0 0
      %896 = vmatpush1.bf16.msra.mxu0 0
      %897 = vmatprep.subr.bf16.mxu0 0
      %898 = vmatpush1.bf16.msra.mxu0 0
      %899 = vmatprep.subr.bf16.mxu0 0
      %900 = vmatpush1.bf16.msra.mxu0 0
      %901 = vmatprep.subr.bf16.mxu0 0
      %902 = vmatpush1.bf16.msra.mxu0 0
      %903 = vmatprep.subr.bf16.mxu0 0
      %904 = vmatpush1.bf16.msra.mxu0 0
      %905 = vmatprep.subr.bf16.mxu0 0
      %906 = vmatpush1.bf16.msra.mxu0 0
      %907 = vmatprep.subr.bf16.mxu0 0
      %908 = vmatpush1.bf16.msra.mxu0 0
      %909 = vmatprep.subr.bf16.mxu0 0
      %910 = vmatpush1.bf16.msra.mxu0 0
      %911 = vmatprep.subr.bf16.mxu0 0
      %912 = vmatpush1.bf16.msra.mxu0 0
      %913 = vmatprep.mubr.bf16.mxu0 0
      %914 = vmatmul.mubr.bf16.gmra.mrb[0].mxu0 %v828
      %v915 = vpop.f32.mrb[0].mxu0
      %v916 = vadd.f32 %v589, %v915
      %v917 = vpop.f32.mrb[0].mxu0
      %v918 = vpop.f32.mrb[0].mxu0
      %v919 = vadd.f32 %v592, %v918
      %v920 = vpop.f32.mrb[0].mxu0
      %921 = vmatprep.mubr.bf16.mxu0 0
      %922 = vmatmul.mubr.bf16.gmra.mrb[0].mxu0 %v831
      %v923 = vpop.f32.mrb[0].mxu0
      %v924 = vadd.f32 %v597, %v923
      %v925 = vpop.f32.mrb[0].mxu0
      %v926 = vpop.f32.mrb[0].mxu0
      %v927 = vadd.f32 %v600, %v926
      %v928 = vpop.f32.mrb[0].mxu0
      %929 = vmatprep.mubr.bf16.mxu0 0
      %930 = vmatmul.mubr.bf16.gmra.mrb[0].mxu0 %v834
      %v931 = vpop.f32.mrb[0].mxu0
      %v932 = vadd.f32 %v605, %v931
      %v933 = vpop.f32.mrb[0].mxu0
      %v934 = vpop.f32.mrb[0].mxu0
      %v935 = vadd.f32 %v608, %v934
      %v936 = vpop.f32.mrb[0].mxu0
      %937 = vmatprep.mubr.bf16.mxu0 0
      %938 = vmatmul.mubr.bf16.gmra.mrb[0].mxu0 %v837
      %v939 = vpop.f32.mrb[0].mxu0
      %v940 = vadd.f32 %v613, %v939
      %v941 = vpop.f32.mrb[0].mxu0
      %v942 = vpop.f32.mrb[0].mxu0
      %v943 = vadd.f32 %v616, %v942
      %v944 = vpop.f32.mrb[0].mxu0
      %945 = vmatprep.mubr.bf16.mxu0 0
      %946 = vmatmul.mubr.bf16.gmra.mrb[0].mxu0 %v840
      %v947 = vpop.f32.mrb[0].mxu0
      %v948 = vadd.f32 %v621, %v947
      %v949 = vpop.f32.mrb[0].mxu0
      %v950 = vpop.f32.mrb[0].mxu0
      %v951 = vadd.f32 %v624, %v950
      %v952 = vpop.f32.mrb[0].mxu0
      %953 = vmatprep.mubr.bf16.mxu0 0
      %954 = vmatmul.mubr.bf16.gmra.mrb[0].mxu0 %v843
      %v955 = vpop.f32.mrb[0].mxu0
      %v956 = vadd.f32 %v629, %v955
      %v957 = vpop.f32.mrb[0].mxu0
      %v958 = vpop.f32.mrb[0].mxu0
      %v959 = vadd.f32 %v632, %v958
      %v960 = vpop.f32.mrb[0].mxu0
      %961 = vmatprep.mubr.bf16.mxu0 0
      %962 = vmatmul.mubr.bf16.gmra.mrb[0].mxu0 %v846
      %v963 = vpop.f32.mrb[0].mxu0
      %v964 = vadd.f32 %v637, %v963
      %v965 = vpop.f32.mrb[0].mxu0
      %v966 = vpop.f32.mrb[0].mxu0
      %v967 = vadd.f32 %v640, %v966
      %v968 = vpop.f32.mrb[0].mxu0
      %969 = vmatprep.mubr.bf16.mxu0 0
      %970 = vmatmul.mubr.bf16.gmra.mrb[0].mxu0 %v849
      %v971 = vpop.f32.mrb[0].mxu0
      %v972 = vadd.f32 %v645, %v971
      %v973 = vpop.f32.mrb[0].mxu0
      %v974 = vpop.f32.mrb[0].mxu0
      %v975 = vadd.f32 %v648, %v974
      %v976 = vpop.f32.mrb[0].mxu0
      %977 = vmatprep.mubr.bf16.mxu0 0
      %978 = vmatmul.mubr.bf16.gmra.mrb[0].mxu0 %v852
      %v979 = vpop.f32.mrb[0].mxu0
      %v980 = vadd.f32 %v653, %v979
      %v981 = vpop.f32.mrb[0].mxu0
      %v982 = vpop.f32.mrb[0].mxu0
      %v983 = vadd.f32 %v656, %v982
      %v984 = vpop.f32.mrb[0].mxu0
      %985 = vmatprep.mubr.bf16.mxu0 0
      %986 = vmatmul.mubr.bf16.gmra.mrb[0].mxu0 %v855
      %v987 = vpop.f32.mrb[0].mxu0
      %v988 = vadd.f32 %v661, %v987
      %v989 = vpop.f32.mrb[0].mxu0
      %v990 = vpop.f32.mrb[0].mxu0
      %v991 = vadd.f32 %v664, %v990
      %v992 = vpop.f32.mrb[0].mxu0
      %993 = vmatprep.mubr.bf16.mxu0 0
      %994 = vmatmul.mubr.bf16.gmra.mrb[0].mxu0 %v858
      %v995 = vpop.f32.mrb[0].mxu0
      %v996 = vadd.f32 %v669, %v995
      %v997 = vpop.f32.mrb[0].mxu0
      %v998 = vpop.f32.mrb[0].mxu0
      %v999 = vadd.f32 %v672, %v998
      %v1000 = vpop.f32.mrb[0].mxu0
      %1001 = vmatprep.mubr.bf16.mxu0 0
      %1002 = vmatmul.mubr.bf16.gmra.mrb[0].mxu0 %v861
      %v1003 = vpop.f32.mrb[0].mxu0
      %v1004 = vadd.f32 %v677, %v1003
      %v1005 = vpop.f32.mrb[0].mxu0
      %v1006 = vpop.f32.mrb[0].mxu0
      %v1007 = vadd.f32 %v680, %v1006
      %v1008 = vpop.f32.mrb[0].mxu0
      %1009 = vmatprep.mubr.bf16.mxu0 0
      %1010 = vmatmul.mubr.bf16.gmra.mrb[0].mxu0 %v864
      %v1011 = vpop.f32.mrb[0].mxu0
      %v1012 = vadd.f32 %v685, %v1011
      %v1013 = vpop.f32.mrb[0].mxu0
      %v1014 = vpop.f32.mrb[0].mxu0
      %v1015 = vadd.f32 %v688, %v1014
      %v1016 = vpop.f32.mrb[0].mxu0
      %1017 = vmatprep.mubr.bf16.mxu0 0
      %1018 = vmatmul.mubr.bf16.gmra.mrb[0].mxu0 %v867
      %v1019 = vpop.f32.mrb[0].mxu0
      %v1020 = vadd.f32 %v693, %v1019
      %v1021 = vpop.f32.mrb[0].mxu0
      %v1022 = vpop.f32.mrb[0].mxu0
      %v1023 = vadd.f32 %v696, %v1022
      %v1024 = vpop.f32.mrb[0].mxu0
      %1025 = vmatprep.mubr.bf16.mxu0 0
      %1026 = vmatmul.mubr.bf16.gmra.mrb[0].mxu0 %v870
      %v1027 = vpop.f32.mrb[0].mxu0
      %v1028 = vadd.f32 %v701, %v1027
      %v1029 = vpop.f32.mrb[0].mxu0
      %v1030 = vpop.f32.mrb[0].mxu0
      %v1031 = vadd.f32 %v704, %v1030
      %v1032 = vpop.f32.mrb[0].mxu0
      %1033 = vmatprep.mubr.bf16.mxu0 0
      %1034 = vmatmul.mubr.bf16.gmra.mrb[0].mxu0 %v873
      %v1035 = vpop.f32.mrb[0].mxu0
      %v1036 = vadd.f32 %v709, %v1035
      %v1037 = vpop.f32.mrb[0].mxu0
      %v1038 = vpop.f32.mrb[0].mxu0
      %v1039 = vadd.f32 %v712, %v1038
      %v1040 = vpop.f32.mrb[0].mxu0
      %1041 = vmatprep.mubr.bf16.mxu0 0
      %1042 = vmatmul.mubr.bf16.gmra.mrb[0].mxu0 %v876
      %v1043 = vpop.f32.mrb[0].mxu0
      %v1044 = vadd.f32 %v717, %v1043
      %v1045 = vpop.f32.mrb[0].mxu0
      %v1046 = vpop.f32.mrb[0].mxu0
      %v1047 = vadd.f32 %v720, %v1046
      %v1048 = vpop.f32.mrb[0].mxu0
      %1049 = vmatprep.mubr.bf16.mxu0 0
      %1050 = vmatmul.mubr.bf16.gmra.mrb[0].mxu0 %v879
      %v1051 = vpop.f32.mrb[0].mxu0
      %v1052 = vadd.f32 %v725, %v1051
      %v1053 = vpop.f32.mrb[0].mxu0
      %v1054 = vpop.f32.mrb[0].mxu0
      %v1055 = vadd.f32 %v728, %v1054
      %v1056 = vpop.f32.mrb[0].mxu0
      %1057 = vdwg.mxu0
      %v1058 = vld [vmem:[%s315] sm:$0xf]
      %v1059 = vld [vmem:[%s315 + $0x4] sm:$0xf]
      %v1060 = vld [vmem:[%s315 + $0x8] sm:$0xf]
      %v1061 = vld [vmem:[%s315 + $0xc] sm:$0xf]
      %v1062 = vld [vmem:[%s315 + $0x10] sm:$0xf]
      %v1063 = vld [vmem:[%s315 + $0x14] sm:$0xf]
      %v1064 = vld [vmem:[%s315 + $0x18] sm:$0xf]
      %v1065 = vld [vmem:[%s315 + $0x1c] sm:$0xf]
      %v1066 = vld [vmem:[%s315 + $0x20] sm:$0xf]
      %v1067 = vld [vmem:[%s315 + $0x24] sm:$0xf]
      %v1068 = vld [vmem:[%s315 + $0x28] sm:$0xf]
      %v1069 = vld [vmem:[%s315 + $0x2c] sm:$0xf]
      %v1070 = vld [vmem:[%s315 + $0x30] sm:$0xf]
      %v1071 = vld [vmem:[%s315 + $0x34] sm:$0xf]
      %v1072 = vld [vmem:[%s315 + $0x38] sm:$0xf]
      %v1073 = vld [vmem:[%s315 + $0x3c] sm:$0xf]
      %v1074 = vld [vmem:[%s315 + $0x40] sm:$0xf]
      %v1075 = vld [vmem:[%s315 + $0x44] sm:$0xf]
      %v1076 = vld [vmem:[%s315 + $0x48] sm:$0xf]
      %v1077 = vld [vmem:[%s315 + $0x4c] sm:$0xf]
      %v1078 = vld [vmem:[%s315 + $0x50] sm:$0xf]
      %v1079 = vld [vmem:[%s315 + $0x54] sm:$0xf]
      %v1080 = vld [vmem:[%s315 + $0x58] sm:$0xf]
      %v1081 = vld [vmem:[%s315 + $0x5c] sm:$0xf]
      %v1082 = vld [vmem:[%s315 + $0x60] sm:$0xf]
      %v1083 = vld [vmem:[%s315 + $0x64] sm:$0xf]
      %v1084 = vld [vmem:[%s315 + $0x68] sm:$0xf]
      %v1085 = vld [vmem:[%s315 + $0x6c] sm:$0xf]
      %v1086 = vld [vmem:[%s315 + $0x70] sm:$0xf]
      %v1087 = vld [vmem:[%s315 + $0x74] sm:$0xf]
      %v1088 = vld [vmem:[%s315 + $0x78] sm:$0xf]
      %v1089 = vld [vmem:[%s315 + $0x7c] sm:$0xf]
      %v1090 = vld [vmem:[%s315 + $0x80] sm:$0xf]
      %v1091 = vld [vmem:[%s315 + $0x84] sm:$0xf]
      %v1092 = vld [vmem:[%s315 + $0x88] sm:$0xf]
      %v1093 = vld [vmem:[%s315 + $0x8c] sm:$0xf]
      %v1094 = vld [vmem:[%s315 + $0x90] sm:$0x1]
      %s1095 = scalar_lea.vmem %s2, 8
      %v1096 = vld [vmem:[%s1095] sm:$0xf]
      %v1097 = vld [vmem:[%s1095 + $0x4] sm:$0xf]
      %v1135 = vunpack.c.l.b16 %v1058
      %v1136 = vunpack.c.l.b16 %v1059
      %v1137 = vunpack.c.l.b16 %v1060
      %v1138 = vunpack.c.l.b16 %v1061
      %v1139 = vunpack.c.l.b16 %v1062
      %v1140 = vunpack.c.l.b16 %v1063
      %v1141 = vunpack.c.l.b16 %v1064
      %v1142 = vunpack.c.l.b16 %v1065
      %v1143 = vunpack.c.l.b16 %v1066
      %v1144 = vunpack.c.l.b16 %v1067
      %v1145 = vunpack.c.l.b16 %v1068
      %v1146 = vunpack.c.l.b16 %v1069
      %v1147 = vunpack.c.l.b16 %v1070
      %v1148 = vunpack.c.l.b16 %v1071
      %v1149 = vunpack.c.l.b16 %v1072
      %v1150 = vunpack.c.l.b16 %v1073
      %v1151 = vunpack.c.l.b16 %v1074
      %v1152 = vunpack.c.l.b16 %v1075
      %v1153 = vunpack.c.l.b16 %v1076
      %v1154 = vunpack.c.l.b16 %v1077
      %v1155 = vunpack.c.l.b16 %v1078
      %v1156 = vunpack.c.l.b16 %v1079
      %v1157 = vunpack.c.l.b16 %v1080
      %v1158 = vunpack.c.l.b16 %v1081
      %v1159 = vunpack.c.l.b16 %v1082
      %v1160 = vunpack.c.l.b16 %v1083
      %v1161 = vunpack.c.l.b16 %v1084
      %v1162 = vunpack.c.l.b16 %v1085
      %v1163 = vunpack.c.l.b16 %v1086
      %v1164 = vunpack.c.l.b16 %v1087
      %v1165 = vunpack.c.l.b16 %v1088
      %v1166 = vunpack.c.l.b16 %v1089
      %v1167 = vunpack.c.l.b16 %v1090
      %v1168 = vunpack.c.l.b16 %v1091
      %v1169 = vunpack.c.l.b16 %v1092
      %v1170 = vunpack.c.l.b16 %v1093
      %v1171 = vunpack.c.l.b16 %v1094
      %v1172 = vpack.c.b16 %v1136, %v1135
      %v1173 = vpack.c.b16 %v1138, %v1137
      %v1174 = vpack.c.b16 %v1140, %v1139
      %v1175 = vpack.c.b16 %v1142, %v1141
      %v1176 = vpack.c.b16 %v1144, %v1143
      %v1177 = vpack.c.b16 %v1146, %v1145
      %v1178 = vpack.c.b16 %v1148, %v1147
      %v1179 = vpack.c.b16 %v1150, %v1149
      %v1180 = vpack.c.b16 %v1152, %v1151
      %v1181 = vpack.c.b16 %v1154, %v1153
      %v1182 = vpack.c.b16 %v1156, %v1155
      %v1183 = vpack.c.b16 %v1158, %v1157
      %v1184 = vpack.c.b16 %v1160, %v1159
      %v1185 = vpack.c.b16 %v1162, %v1161
      %v1186 = vpack.c.b16 %v1164, %v1163
      %v1187 = vpack.c.b16 %v1166, %v1165
      %v1188 = vpack.c.b16 %v1168, %v1167
      %v1189 = vpack.c.b16 %v1170, %v1169
      %v1190 = vpack.c.b16 %v1171, %v1171
      %vm1191 = vsmask.f32 7424
      %v1193 = vshrl.u32 %v1172, 16
      %v1195 = vshll.u32 %v1172, 16
      %v1197 = vrot.slane %v1195, 1
      %v1198 = vor.u32 %v1193, %v1197
      %v1200 = vshll.u32 %v1173, 16
      %v1202 = vrot.slane %v1200, 1
      %v1203 = vsel %vm1191, %v1198, %v1202
      %v1204 = vshrl.u32 %v1173, 16
      %v1206 = vor.u32 %v1204, %v1202
      %v1208 = vshll.u32 %v1174, 16
      %v1210 = vrot.slane %v1208, 1
      %v1211 = vsel %vm1191, %v1206, %v1210
      %v1212 = vshrl.u32 %v1174, 16
      %v1214 = vor.u32 %v1212, %v1210
      %v1216 = vshll.u32 %v1175, 16
      %v1218 = vrot.slane %v1216, 1
      %v1219 = vsel %vm1191, %v1214, %v1218
      %v1220 = vshrl.u32 %v1175, 16
      %v1222 = vor.u32 %v1220, %v1218
      %v1224 = vshll.u32 %v1176, 16
      %v1226 = vrot.slane %v1224, 1
      %v1227 = vsel %vm1191, %v1222, %v1226
      %v1228 = vshrl.u32 %v1176, 16
      %v1230 = vor.u32 %v1228, %v1226
      %v1232 = vshll.u32 %v1177, 16
      %v1234 = vrot.slane %v1232, 1
      %v1235 = vsel %vm1191, %v1230, %v1234
      %v1236 = vshrl.u32 %v1177, 16
      %v1238 = vor.u32 %v1236, %v1234
      %v1240 = vshll.u32 %v1178, 16
      %v1242 = vrot.slane %v1240, 1
      %v1243 = vsel %vm1191, %v1238, %v1242
      %v1244 = vshrl.u32 %v1178, 16
      %v1246 = vor.u32 %v1244, %v1242
      %v1248 = vshll.u32 %v1179, 16
      %v1250 = vrot.slane %v1248, 1
      %v1251 = vsel %vm1191, %v1246, %v1250
      %v1252 = vshrl.u32 %v1179, 16
      %v1254 = vor.u32 %v1252, %v1250
      %v1256 = vshll.u32 %v1180, 16
      %v1258 = vrot.slane %v1256, 1
      %v1259 = vsel %vm1191, %v1254, %v1258
      %v1260 = vshrl.u32 %v1180, 16
      %v1262 = vor.u32 %v1260, %v1258
      %v1264 = vshll.u32 %v1181, 16
      %v1266 = vrot.slane %v1264, 1
      %v1267 = vsel %vm1191, %v1262, %v1266
      %v1268 = vshrl.u32 %v1181, 16
      %v1270 = vor.u32 %v1268, %v1266
      %v1272 = vshll.u32 %v1182, 16
      %v1274 = vrot.slane %v1272, 1
      %v1275 = vsel %vm1191, %v1270, %v1274
      %v1276 = vshrl.u32 %v1182, 16
      %v1278 = vor.u32 %v1276, %v1274
      %v1280 = vshll.u32 %v1183, 16
      %v1282 = vrot.slane %v1280, 1
      %v1283 = vsel %vm1191, %v1278, %v1282
      %v1284 = vshrl.u32 %v1183, 16
      %v1286 = vor.u32 %v1284, %v1282
      %v1288 = vshll.u32 %v1184, 16
      %v1290 = vrot.slane %v1288, 1
      %v1291 = vsel %vm1191, %v1286, %v1290
      %v1292 = vshrl.u32 %v1184, 16
      %v1294 = vor.u32 %v1292, %v1290
      %v1296 = vshll.u32 %v1185, 16
      %v1298 = vrot.slane %v1296, 1
      %v1299 = vsel %vm1191, %v1294, %v1298
      %v1300 = vshrl.u32 %v1185, 16
      %v1302 = vor.u32 %v1300, %v1298
      %v1304 = vshll.u32 %v1186, 16
      %v1306 = vrot.slane %v1304, 1
      %v1307 = vsel %vm1191, %v1302, %v1306
      %v1308 = vshrl.u32 %v1186, 16
      %v1310 = vor.u32 %v1308, %v1306
      %v1312 = vshll.u32 %v1187, 16
      %v1314 = vrot.slane %v1312, 1
      %v1315 = vsel %vm1191, %v1310, %v1314
      %v1316 = vshrl.u32 %v1187, 16
      %v1318 = vor.u32 %v1316, %v1314
      %v1320 = vshll.u32 %v1188, 16
      %v1322 = vrot.slane %v1320, 1
      %v1323 = vsel %vm1191, %v1318, %v1322
      %v1324 = vshrl.u32 %v1188, 16
      %v1326 = vor.u32 %v1324, %v1322
      %v1328 = vshll.u32 %v1189, 16
      %v1330 = vrot.slane %v1328, 1
      %v1331 = vsel %vm1191, %v1326, %v1330
      %v1332 = vshrl.u32 %v1189, 16
      %v1334 = vor.u32 %v1332, %v1330
      %v1336 = vshll.u32 %v1190, 16
      %v1338 = vrot.slane %v1336, 1
      %v1339 = vsel %vm1191, %v1334, %v1338
      %v1342 = vunpack.c.l.b16 %v1096
      %v1343 = vunpack.c.l.b16 %v1097
      %v1344 = vpack.c.b16 %v1343, %v1342
      %v1347 = vsel %vm499, %v1203, 0
      %v1350 = vsel %vm499, %v1211, 0
      %v1353 = vsel %vm499, %v1219, 0
      %v1356 = vsel %vm499, %v1227, 0
      %v1359 = vsel %vm499, %v1235, 0
      %v1362 = vsel %vm499, %v1243, 0
      %v1365 = vsel %vm499, %v1251, 0
      %v1368 = vsel %vm499, %v1259, 0
      %v1371 = vsel %vm499, %v1267, 0
      %v1374 = vsel %vm499, %v1275, 0
      %v1377 = vsel %vm499, %v1283, 0
      %v1380 = vsel %vm499, %v1291, 0
      %v1383 = vsel %vm499, %v1299, 0
      %v1386 = vsel %vm499, %v1307, 0
      %v1389 = vsel %vm499, %v1315, 0
      %v1392 = vsel %vm499, %v1323, 0
      %v1395 = vsel %vm499, %v1331, 0
      %v1398 = vsel %vm499, %v1339, 0
      %1400 = vmatprep.subr.bf16.mxu0 0
      %1401 = vmatpush1.bf16.msra.mxu0 %v1344
      %1402 = vmatprep.subr.bf16.mxu0 0
      %1403 = vmatpush1.bf16.msra.mxu0 0
      %1404 = vmatprep.subr.bf16.mxu0 0
      %1405 = vmatpush1.bf16.msra.mxu0 0
      %1406 = vmatprep.subr.bf16.mxu0 0
      %1407 = vmatpush1.bf16.msra.mxu0 0
      %1408 = vmatprep.subr.bf16.mxu0 0
      %1409 = vmatpush1.bf16.msra.mxu0 0
      %1410 = vmatprep.subr.bf16.mxu0 0
      %1411 = vmatpush1.bf16.msra.mxu0 0
      %1412 = vmatprep.subr.bf16.mxu0 0
      %1413 = vmatpush1.bf16.msra.mxu0 0
      %1414 = vmatprep.subr.bf16.mxu0 0
      %1415 = vmatpush1.bf16.msra.mxu0 0
      %1416 = vmatprep.subr.bf16.mxu0 0
      %1417 = vmatpush1.bf16.msra.mxu0 0
      %1418 = vmatprep.subr.bf16.mxu0 0
      %1419 = vmatpush1.bf16.msra.mxu0 0
      %1420 = vmatprep.subr.bf16.mxu0 0
      %1421 = vmatpush1.bf16.msra.mxu0 0
      %1422 = vmatprep.subr.bf16.mxu0 0
      %1423 = vmatpush1.bf16.msra.mxu0 0
      %1424 = vmatprep.subr.bf16.mxu0 0
      %1425 = vmatpush1.bf16.msra.mxu0 0
      %1426 = vmatprep.subr.bf16.mxu0 0
      %1427 = vmatpush1.bf16.msra.mxu0 0
      %1428 = vmatprep.subr.bf16.mxu0 0
      %1429 = vmatpush1.bf16.msra.mxu0 0
      %1430 = vmatprep.subr.bf16.mxu0 0
      %1431 = vmatpush1.bf16.msra.mxu0 0
      %1432 = vmatprep.mubr.bf16.mxu0 0
      %1433 = vmatmul.mubr.bf16.gmra.mrb[0].mxu0 %v1347
      %v1434 = vpop.f32.mrb[0].mxu0
      %v1435 = vadd.f32 0.0, %v1434
      %v1436 = vpop.f32.mrb[0].mxu0
      %v1437 = vpop.f32.mrb[0].mxu0
      %v1438 = vadd.f32 0.0, %v1437
      %v1439 = vpop.f32.mrb[0].mxu0
      %1440 = vmatprep.mubr.bf16.mxu0 0
      %1441 = vmatmul.mubr.bf16.gmra.mrb[0].mxu0 %v1350
      %v1442 = vpop.f32.mrb[0].mxu0
      %v1443 = vadd.f32 0.0, %v1442
      %v1444 = vpop.f32.mrb[0].mxu0
      %v1445 = vpop.f32.mrb[0].mxu0
      %v1446 = vadd.f32 0.0, %v1445
      %v1447 = vpop.f32.mrb[0].mxu0
      %1448 = vmatprep.mubr.bf16.mxu0 0
      %1449 = vmatmul.mubr.bf16.gmra.mrb[0].mxu0 %v1353
      %v1450 = vpop.f32.mrb[0].mxu0
      %v1451 = vadd.f32 0.0, %v1450
      %v1452 = vpop.f32.mrb[0].mxu0
      %v1453 = vpop.f32.mrb[0].mxu0
      %v1454 = vadd.f32 0.0, %v1453
      %v1455 = vpop.f32.mrb[0].mxu0
      %1456 = vmatprep.mubr.bf16.mxu0 0
      %1457 = vmatmul.mubr.bf16.gmra.mrb[0].mxu0 %v1356
      %v1458 = vpop.f32.mrb[0].mxu0
      %v1459 = vadd.f32 0.0, %v1458
      %v1460 = vpop.f32.mrb[0].mxu0
      %v1461 = vpop.f32.mrb[0].mxu0
      %v1462 = vadd.f32 0.0, %v1461
      %v1463 = vpop.f32.mrb[0].mxu0
      %1464 = vmatprep.mubr.bf16.mxu0 0
      %1465 = vmatmul.mubr.bf16.gmra.mrb[0].mxu0 %v1359
      %v1466 = vpop.f32.mrb[0].mxu0
      %v1467 = vadd.f32 0.0, %v1466
      %v1468 = vpop.f32.mrb[0].mxu0
      %v1469 = vpop.f32.mrb[0].mxu0
      %v1470 = vadd.f32 0.0, %v1469
      %v1471 = vpop.f32.mrb[0].mxu0
      %1472 = vmatprep.mubr.bf16.mxu0 0
      %1473 = vmatmul.mubr.bf16.gmra.mrb[0].mxu0 %v1362
      %v1474 = vpop.f32.mrb[0].mxu0
      %v1475 = vadd.f32 0.0, %v1474
      %v1476 = vpop.f32.mrb[0].mxu0
      %v1477 = vpop.f32.mrb[0].mxu0
      %v1478 = vadd.f32 0.0, %v1477
      %v1479 = vpop.f32.mrb[0].mxu0
      %1480 = vmatprep.mubr.bf16.mxu0 0
      %1481 = vmatmul.mubr.bf16.gmra.mrb[0].mxu0 %v1365
      %v1482 = vpop.f32.mrb[0].mxu0
      %v1483 = vadd.f32 0.0, %v1482
      %v1484 = vpop.f32.mrb[0].mxu0
      %v1485 = vpop.f32.mrb[0].mxu0
      %v1486 = vadd.f32 0.0, %v1485
      %v1487 = vpop.f32.mrb[0].mxu0
      %1488 = vmatprep.mubr.bf16.mxu0 0
      %1489 = vmatmul.mubr.bf16.gmra.mrb[0].mxu0 %v1368
      %v1490 = vpop.f32.mrb[0].mxu0
      %v1491 = vadd.f32 0.0, %v1490
      %v1492 = vpop.f32.mrb[0].mxu0
      %v1493 = vpop.f32.mrb[0].mxu0
      %v1494 = vadd.f32 0.0, %v1493
      %v1495 = vpop.f32.mrb[0].mxu0
      %1496 = vmatprep.mubr.bf16.mxu0 0
      %1497 = vmatmul.mubr.bf16.gmra.mrb[0].mxu0 %v1371
      %v1498 = vpop.f32.mrb[0].mxu0
      %v1499 = vadd.f32 0.0, %v1498
      %v1500 = vpop.f32.mrb[0].mxu0
      %v1501 = vpop.f32.mrb[0].mxu0
      %v1502 = vadd.f32 0.0, %v1501
      %v1503 = vpop.f32.mrb[0].mxu0
      %1504 = vmatprep.mubr.bf16.mxu0 0
      %1505 = vmatmul.mubr.bf16.gmra.mrb[0].mxu0 %v1374
      %v1506 = vpop.f32.mrb[0].mxu0
      %v1507 = vadd.f32 0.0, %v1506
      %v1508 = vpop.f32.mrb[0].mxu0
      %v1509 = vpop.f32.mrb[0].mxu0
      %v1510 = vadd.f32 0.0, %v1509
      %v1511 = vpop.f32.mrb[0].mxu0
      %1512 = vmatprep.mubr.bf16.mxu0 0
      %1513 = vmatmul.mubr.bf16.gmra.mrb[0].mxu0 %v1377
      %v1514 = vpop.f32.mrb[0].mxu0
      %v1515 = vadd.f32 0.0, %v1514
      %v1516 = vpop.f32.mrb[0].mxu0
      %v1517 = vpop.f32.mrb[0].mxu0
      %v1518 = vadd.f32 0.0, %v1517
      %v1519 = vpop.f32.mrb[0].mxu0
      %1520 = vmatprep.mubr.bf16.mxu0 0
      %1521 = vmatmul.mubr.bf16.gmra.mrb[0].mxu0 %v1380
      %v1522 = vpop.f32.mrb[0].mxu0
      %v1523 = vadd.f32 0.0, %v1522
      %v1524 = vpop.f32.mrb[0].mxu0
      %v1525 = vpop.f32.mrb[0].mxu0
      %v1526 = vadd.f32 0.0, %v1525
      %v1527 = vpop.f32.mrb[0].mxu0
      %1528 = vmatprep.mubr.bf16.mxu0 0
      %1529 = vmatmul.mubr.bf16.gmra.mrb[0].mxu0 %v1383
      %v1530 = vpop.f32.mrb[0].mxu0
      %v1531 = vadd.f32 0.0, %v1530
      %v1532 = vpop.f32.mrb[0].mxu0
      %v1533 = vpop.f32.mrb[0].mxu0
      %v1534 = vadd.f32 0.0, %v1533
      %v1535 = vpop.f32.mrb[0].mxu0
      %1536 = vmatprep.mubr.bf16.mxu0 0
      %1537 = vmatmul.mubr.bf16.gmra.mrb[0].mxu0 %v1386
      %v1538 = vpop.f32.mrb[0].mxu0
      %v1539 = vadd.f32 0.0, %v1538
      %v1540 = vpop.f32.mrb[0].mxu0
      %v1541 = vpop.f32.mrb[0].mxu0
      %v1542 = vadd.f32 0.0, %v1541
      %v1543 = vpop.f32.mrb[0].mxu0
      %1544 = vmatprep.mubr.bf16.mxu0 0
      %1545 = vmatmul.mubr.bf16.gmra.mrb[0].mxu0 %v1389
      %v1546 = vpop.f32.mrb[0].mxu0
      %v1547 = vadd.f32 0.0, %v1546
      %v1548 = vpop.f32.mrb[0].mxu0
      %v1549 = vpop.f32.mrb[0].mxu0
      %v1550 = vadd.f32 0.0, %v1549
      %v1551 = vpop.f32.mrb[0].mxu0
      %1552 = vmatprep.mubr.bf16.mxu0 0
      %1553 = vmatmul.mubr.bf16.gmra.mrb[0].mxu0 %v1392
      %v1554 = vpop.f32.mrb[0].mxu0
      %v1555 = vadd.f32 0.0, %v1554
      %v1556 = vpop.f32.mrb[0].mxu0
      %v1557 = vpop.f32.mrb[0].mxu0
      %v1558 = vadd.f32 0.0, %v1557
      %v1559 = vpop.f32.mrb[0].mxu0
      %1560 = vmatprep.mubr.bf16.mxu0 0
      %1561 = vmatmul.mubr.bf16.gmra.mrb[0].mxu0 %v1395
      %v1562 = vpop.f32.mrb[0].mxu0
      %v1563 = vadd.f32 0.0, %v1562
      %v1564 = vpop.f32.mrb[0].mxu0
      %v1565 = vpop.f32.mrb[0].mxu0
      %v1566 = vadd.f32 0.0, %v1565
      %v1567 = vpop.f32.mrb[0].mxu0
      %1568 = vmatprep.mubr.bf16.mxu0 0
      %1569 = vmatmul.mubr.bf16.gmra.mrb[0].mxu0 %v1398
      %v1570 = vpop.f32.mrb[0].mxu0
      %v1571 = vadd.f32 0.0, %v1570
      %v1572 = vpop.f32.mrb[0].mxu0
      %v1573 = vpop.f32.mrb[0].mxu0
      %v1574 = vadd.f32 0.0, %v1573
      %v1575 = vpop.f32.mrb[0].mxu0
      %1576 = vdwg.mxu0
      %v1577 = vadd.f32 %v916, %v1435
      %v1578 = vadd.f32 %v919, %v1438
      %v1579 = vadd.f32 %v924, %v1443
      %v1580 = vadd.f32 %v927, %v1446
      %v1581 = vadd.f32 %v932, %v1451
      %v1582 = vadd.f32 %v935, %v1454
      %v1583 = vadd.f32 %v940, %v1459
      %v1584 = vadd.f32 %v943, %v1462
      %v1585 = vadd.f32 %v948, %v1467
      %v1586 = vadd.f32 %v951, %v1470
      %v1587 = vadd.f32 %v956, %v1475
      %v1588 = vadd.f32 %v959, %v1478
      %v1589 = vadd.f32 %v964, %v1483
      %v1590 = vadd.f32 %v967, %v1486
      %v1591 = vadd.f32 %v972, %v1491
      %v1592 = vadd.f32 %v975, %v1494
      %v1593 = vadd.f32 %v980, %v1499
      %v1594 = vadd.f32 %v983, %v1502
      %v1595 = vadd.f32 %v988, %v1507
      %v1596 = vadd.f32 %v991, %v1510
      %v1597 = vadd.f32 %v996, %v1515
      %v1598 = vadd.f32 %v999, %v1518
      %v1599 = vadd.f32 %v1004, %v1523
      %v1600 = vadd.f32 %v1007, %v1526
      %v1601 = vadd.f32 %v1012, %v1531
      %v1602 = vadd.f32 %v1015, %v1534
      %v1603 = vadd.f32 %v1020, %v1539
      %v1604 = vadd.f32 %v1023, %v1542
      %v1605 = vadd.f32 %v1028, %v1547
      %v1606 = vadd.f32 %v1031, %v1550
      %v1607 = vadd.f32 %v1036, %v1555
      %v1608 = vadd.f32 %v1039, %v1558
      %v1609 = vadd.f32 %v1044, %v1563
      %v1610 = vadd.f32 %v1047, %v1566
      %v1611 = vadd.f32 %v1052, %v1571
      %v1612 = vadd.f32 %v1055, %v1574
      %v1613 = vld [vmem:[%s320] sm:$0xf]
      %v1614 = vld [vmem:[%s320 + $0x4] sm:$0xf]
      %v1615 = vld [vmem:[%s320 + $0x8] sm:$0xf]
      %v1616 = vld [vmem:[%s320 + $0xc] sm:$0xf]
      %v1617 = vld [vmem:[%s320 + $0x10] sm:$0xf]
      %v1618 = vld [vmem:[%s320 + $0x14] sm:$0xf]
      %v1619 = vld [vmem:[%s320 + $0x18] sm:$0xf]
      %v1620 = vld [vmem:[%s320 + $0x1c] sm:$0xf]
      %v1621 = vld [vmem:[%s320 + $0x20] sm:$0xf]
      %v1622 = vld [vmem:[%s320 + $0x24] sm:$0xf]
      %v1623 = vld [vmem:[%s320 + $0x28] sm:$0xf]
      %v1624 = vld [vmem:[%s320 + $0x2c] sm:$0xf]
      %v1625 = vld [vmem:[%s320 + $0x30] sm:$0xf]
      %v1626 = vld [vmem:[%s320 + $0x34] sm:$0xf]
      %v1627 = vld [vmem:[%s320 + $0x38] sm:$0xf]
      %v1628 = vld [vmem:[%s320 + $0x3c] sm:$0xf]
      %v1629 = vld [vmem:[%s320 + $0x40] sm:$0xf]
      %v1630 = vld [vmem:[%s320 + $0x44] sm:$0xf]
      %v1631 = vld [vmem:[%s320 + $0x48] sm:$0xf]
      %v1632 = vld [vmem:[%s320 + $0x4c] sm:$0xf]
      %v1633 = vld [vmem:[%s320 + $0x50] sm:$0xf]
      %v1634 = vld [vmem:[%s320 + $0x54] sm:$0xf]
      %v1635 = vld [vmem:[%s320 + $0x58] sm:$0xf]
      %v1636 = vld [vmem:[%s320 + $0x5c] sm:$0xf]
      %v1637 = vld [vmem:[%s320 + $0x60] sm:$0xf]
      %v1638 = vld [vmem:[%s320 + $0x64] sm:$0xf]
      %v1639 = vld [vmem:[%s320 + $0x68] sm:$0xf]
      %v1640 = vld [vmem:[%s320 + $0x6c] sm:$0xf]
      %v1641 = vld [vmem:[%s320 + $0x70] sm:$0xf]
      %v1642 = vld [vmem:[%s320 + $0x74] sm:$0xf]
      %v1643 = vld [vmem:[%s320 + $0x78] sm:$0xf]
      %v1644 = vld [vmem:[%s320 + $0x7c] sm:$0xf]
      %v1645 = vld [vmem:[%s320 + $0x80] sm:$0xf]
      %v1646 = vld [vmem:[%s320 + $0x84] sm:$0xf]
      %v1647 = vld [vmem:[%s320 + $0x88] sm:$0xf]
      %v1648 = vld [vmem:[%s320 + $0x8c] sm:$0xf]
      %v1649 = vld [vmem:[%s320 + $0x90] sm:$0x1]
      %s1650 = scalar_lea.vmem %s3, 8
      %v1651 = vld [vmem:[%s1650] sm:$0xf]
      %v1652 = vld [vmem:[%s1650 + $0x4] sm:$0xf]
      %v1690 = vunpack.c.l.b16 %v1613
      %v1691 = vunpack.c.l.b16 %v1614
      %v1692 = vunpack.c.l.b16 %v1615
      %v1693 = vunpack.c.l.b16 %v1616
      %v1694 = vunpack.c.l.b16 %v1617
      %v1695 = vunpack.c.l.b16 %v1618
      %v1696 = vunpack.c.l.b16 %v1619
      %v1697 = vunpack.c.l.b16 %v1620
      %v1698 = vunpack.c.l.b16 %v1621
      %v1699 = vunpack.c.l.b16 %v1622
      %v1700 = vunpack.c.l.b16 %v1623
      %v1701 = vunpack.c.l.b16 %v1624
      %v1702 = vunpack.c.l.b16 %v1625
      %v1703 = vunpack.c.l.b16 %v1626
      %v1704 = vunpack.c.l.b16 %v1627
      %v1705 = vunpack.c.l.b16 %v1628
      %v1706 = vunpack.c.l.b16 %v1629
      %v1707 = vunpack.c.l.b16 %v1630
      %v1708 = vunpack.c.l.b16 %v1631
      %v1709 = vunpack.c.l.b16 %v1632
      %v1710 = vunpack.c.l.b16 %v1633
      %v1711 = vunpack.c.l.b16 %v1634
      %v1712 = vunpack.c.l.b16 %v1635
      %v1713 = vunpack.c.l.b16 %v1636
      %v1714 = vunpack.c.l.b16 %v1637
      %v1715 = vunpack.c.l.b16 %v1638
      %v1716 = vunpack.c.l.b16 %v1639
      %v1717 = vunpack.c.l.b16 %v1640
      %v1718 = vunpack.c.l.b16 %v1641
      %v1719 = vunpack.c.l.b16 %v1642
      %v1720 = vunpack.c.l.b16 %v1643
      %v1721 = vunpack.c.l.b16 %v1644
      %v1722 = vunpack.c.l.b16 %v1645
      %v1723 = vunpack.c.l.b16 %v1646
      %v1724 = vunpack.c.l.b16 %v1647
      %v1725 = vunpack.c.l.b16 %v1648
      %v1726 = vunpack.c.l.b16 %v1649
      %v1727 = vpack.c.b16 %v1691, %v1690
      %v1728 = vpack.c.b16 %v1693, %v1692
      %v1729 = vpack.c.b16 %v1695, %v1694
      %v1730 = vpack.c.b16 %v1697, %v1696
      %v1731 = vpack.c.b16 %v1699, %v1698
      %v1732 = vpack.c.b16 %v1701, %v1700
      %v1733 = vpack.c.b16 %v1703, %v1702
      %v1734 = vpack.c.b16 %v1705, %v1704
      %v1735 = vpack.c.b16 %v1707, %v1706
      %v1736 = vpack.c.b16 %v1709, %v1708
      %v1737 = vpack.c.b16 %v1711, %v1710
      %v1738 = vpack.c.b16 %v1713, %v1712
      %v1739 = vpack.c.b16 %v1715, %v1714
      %v1740 = vpack.c.b16 %v1717, %v1716
      %v1741 = vpack.c.b16 %v1719, %v1718
      %v1742 = vpack.c.b16 %v1721, %v1720
      %v1743 = vpack.c.b16 %v1723, %v1722
      %v1744 = vpack.c.b16 %v1725, %v1724
      %v1745 = vpack.c.b16 %v1726, %v1726
      %v1747 = vshrl.u32 %v1727, 16
      %v1749 = vshll.u32 %v1727, 16
      %v1751 = vrot.slane %v1749, 1
      %v1752 = vor.u32 %v1747, %v1751
      %v1754 = vshll.u32 %v1728, 16
      %v1756 = vrot.slane %v1754, 1
      %v1757 = vsel %vm1191, %v1752, %v1756
      %v1758 = vshrl.u32 %v1728, 16
      %v1760 = vor.u32 %v1758, %v1756
      %v1762 = vshll.u32 %v1729, 16
      %v1764 = vrot.slane %v1762, 1
      %v1765 = vsel %vm1191, %v1760, %v1764
      %v1766 = vshrl.u32 %v1729, 16
      %v1768 = vor.u32 %v1766, %v1764
      %v1770 = vshll.u32 %v1730, 16
      %v1772 = vrot.slane %v1770, 1
      %v1773 = vsel %vm1191, %v1768, %v1772
      %v1774 = vshrl.u32 %v1730, 16
      %v1776 = vor.u32 %v1774, %v1772
      %v1778 = vshll.u32 %v1731, 16
      %v1780 = vrot.slane %v1778, 1
      %v1781 = vsel %vm1191, %v1776, %v1780
      %v1782 = vshrl.u32 %v1731, 16
      %v1784 = vor.u32 %v1782, %v1780
      %v1786 = vshll.u32 %v1732, 16
      %v1788 = vrot.slane %v1786, 1
      %v1789 = vsel %vm1191, %v1784, %v1788
      %v1790 = vshrl.u32 %v1732, 16
      %v1792 = vor.u32 %v1790, %v1788
      %v1794 = vshll.u32 %v1733, 16
      %v1796 = vrot.slane %v1794, 1
      %v1797 = vsel %vm1191, %v1792, %v1796
      %v1798 = vshrl.u32 %v1733, 16
      %v1800 = vor.u32 %v1798, %v1796
      %v1802 = vshll.u32 %v1734, 16
      %v1804 = vrot.slane %v1802, 1
      %v1805 = vsel %vm1191, %v1800, %v1804
      %v1806 = vshrl.u32 %v1734, 16
      %v1808 = vor.u32 %v1806, %v1804
      %v1810 = vshll.u32 %v1735, 16
      %v1812 = vrot.slane %v1810, 1
      %v1813 = vsel %vm1191, %v1808, %v1812
      %v1814 = vshrl.u32 %v1735, 16
      %v1816 = vor.u32 %v1814, %v1812
      %v1818 = vshll.u32 %v1736, 16
      %v1820 = vrot.slane %v1818, 1
      %v1821 = vsel %vm1191, %v1816, %v1820
      %v1822 = vshrl.u32 %v1736, 16
      %v1824 = vor.u32 %v1822, %v1820
      %v1826 = vshll.u32 %v1737, 16
      %v1828 = vrot.slane %v1826, 1
      %v1829 = vsel %vm1191, %v1824, %v1828
      %v1830 = vshrl.u32 %v1737, 16
      %v1832 = vor.u32 %v1830, %v1828
      %v1834 = vshll.u32 %v1738, 16
      %v1836 = vrot.slane %v1834, 1
      %v1837 = vsel %vm1191, %v1832, %v1836
      %v1838 = vshrl.u32 %v1738, 16
      %v1840 = vor.u32 %v1838, %v1836
      %v1842 = vshll.u32 %v1739, 16
      %v1844 = vrot.slane %v1842, 1
      %v1845 = vsel %vm1191, %v1840, %v1844
      %v1846 = vshrl.u32 %v1739, 16
      %v1848 = vor.u32 %v1846, %v1844
      %v1850 = vshll.u32 %v1740, 16
      %v1852 = vrot.slane %v1850, 1
      %v1853 = vsel %vm1191, %v1848, %v1852
      %v1854 = vshrl.u32 %v1740, 16
      %v1856 = vor.u32 %v1854, %v1852
      %v1858 = vshll.u32 %v1741, 16
      %v1860 = vrot.slane %v1858, 1
      %v1861 = vsel %vm1191, %v1856, %v1860
      %v1862 = vshrl.u32 %v1741, 16
      %v1864 = vor.u32 %v1862, %v1860
      %v1866 = vshll.u32 %v1742, 16
      %v1868 = vrot.slane %v1866, 1
      %v1869 = vsel %vm1191, %v1864, %v1868
      %v1870 = vshrl.u32 %v1742, 16
      %v1872 = vor.u32 %v1870, %v1868
      %v1874 = vshll.u32 %v1743, 16
      %v1876 = vrot.slane %v1874, 1
      %v1877 = vsel %vm1191, %v1872, %v1876
      %v1878 = vshrl.u32 %v1743, 16
      %v1880 = vor.u32 %v1878, %v1876
      %v1882 = vshll.u32 %v1744, 16
      %v1884 = vrot.slane %v1882, 1
      %v1885 = vsel %vm1191, %v1880, %v1884
      %v1886 = vshrl.u32 %v1744, 16
      %v1888 = vor.u32 %v1886, %v1884
      %v1890 = vshll.u32 %v1745, 16
      %v1892 = vrot.slane %v1890, 1
      %v1893 = vsel %vm1191, %v1888, %v1892
      %v1896 = vunpack.c.l.b16 %v1651
      %v1897 = vunpack.c.l.b16 %v1652
      %v1898 = vpack.c.b16 %v1897, %v1896
      %v1901 = vsel %vm499, %v1757, 0
      %v1904 = vsel %vm499, %v1765, 0
      %v1907 = vsel %vm499, %v1773, 0
      %v1910 = vsel %vm499, %v1781, 0
      %v1913 = vsel %vm499, %v1789, 0
      %v1916 = vsel %vm499, %v1797, 0
      %v1919 = vsel %vm499, %v1805, 0
      %v1922 = vsel %vm499, %v1813, 0
      %v1925 = vsel %vm499, %v1821, 0
      %v1928 = vsel %vm499, %v1829, 0
      %v1931 = vsel %vm499, %v1837, 0
      %v1934 = vsel %vm499, %v1845, 0
      %v1937 = vsel %vm499, %v1853, 0
      %v1940 = vsel %vm499, %v1861, 0
      %v1943 = vsel %vm499, %v1869, 0
      %v1946 = vsel %vm499, %v1877, 0
      %v1949 = vsel %vm499, %v1885, 0
      %v1952 = vsel %vm499, %v1893, 0
      %1954 = vmatprep.subr.bf16.mxu0 0
      %1955 = vmatpush1.bf16.msra.mxu0 %v1898
      %1956 = vmatprep.subr.bf16.mxu0 0
      %1957 = vmatpush1.bf16.msra.mxu0 0
      %1958 = vmatprep.subr.bf16.mxu0 0
      %1959 = vmatpush1.bf16.msra.mxu0 0
      %1960 = vmatprep.subr.bf16.mxu0 0
      %1961 = vmatpush1.bf16.msra.mxu0 0
      %1962 = vmatprep.subr.bf16.mxu0 0
      %1963 = vmatpush1.bf16.msra.mxu0 0
      %1964 = vmatprep.subr.bf16.mxu0 0
      %1965 = vmatpush1.bf16.msra.mxu0 0
      %1966 = vmatprep.subr.bf16.mxu0 0
      %1967 = vmatpush1.bf16.msra.mxu0 0
      %1968 = vmatprep.subr.bf16.mxu0 0
      %1969 = vmatpush1.bf16.msra.mxu0 0
      %1970 = vmatprep.subr.bf16.mxu0 0
      %1971 = vmatpush1.bf16.msra.mxu0 0
      %1972 = vmatprep.subr.bf16.mxu0 0
      %1973 = vmatpush1.bf16.msra.mxu0 0
      %1974 = vmatprep.subr.bf16.mxu0 0
      %1975 = vmatpush1.bf16.msra.mxu0 0
      %1976 = vmatprep.subr.bf16.mxu0 0
      %1977 = vmatpush1.bf16.msra.mxu0 0
      %1978 = vmatprep.subr.bf16.mxu0 0
      %1979 = vmatpush1.bf16.msra.mxu0 0
      %1980 = vmatprep.subr.bf16.mxu0 0
      %1981 = vmatpush1.bf16.msra.mxu0 0
      %1982 = vmatprep.subr.bf16.mxu0 0
      %1983 = vmatpush1.bf16.msra.mxu0 0
      %1984 = vmatprep.subr.bf16.mxu0 0
      %1985 = vmatpush1.bf16.msra.mxu0 0
      %1986 = vmatprep.mubr.bf16.mxu0 0
      %1987 = vmatmul.mubr.bf16.gmra.mrb[0].mxu0 %v1901
      %v1988 = vpop.f32.mrb[0].mxu0
      %v1989 = vadd.f32 0.0, %v1988
      %v1990 = vpop.f32.mrb[0].mxu0
      %v1991 = vpop.f32.mrb[0].mxu0
      %v1992 = vadd.f32 0.0, %v1991
      %v1993 = vpop.f32.mrb[0].mxu0
      %1994 = vmatprep.mubr.bf16.mxu0 0
      %1995 = vmatmul.mubr.bf16.gmra.mrb[0].mxu0 %v1904
      %v1996 = vpop.f32.mrb[0].mxu0
      %v1997 = vadd.f32 0.0, %v1996
      %v1998 = vpop.f32.mrb[0].mxu0
      %v1999 = vpop.f32.mrb[0].mxu0
      %v2000 = vadd.f32 0.0, %v1999
      %v2001 = vpop.f32.mrb[0].mxu0
      %2002 = vmatprep.mubr.bf16.mxu0 0
      %2003 = vmatmul.mubr.bf16.gmra.mrb[0].mxu0 %v1907
      %v2004 = vpop.f32.mrb[0].mxu0
      %v2005 = vadd.f32 0.0, %v2004
      %v2006 = vpop.f32.mrb[0].mxu0
      %v2007 = vpop.f32.mrb[0].mxu0
      %v2008 = vadd.f32 0.0, %v2007
      %v2009 = vpop.f32.mrb[0].mxu0
      %2010 = vmatprep.mubr.bf16.mxu0 0
      %2011 = vmatmul.mubr.bf16.gmra.mrb[0].mxu0 %v1910
      %v2012 = vpop.f32.mrb[0].mxu0
      %v2013 = vadd.f32 0.0, %v2012
      %v2014 = vpop.f32.mrb[0].mxu0
      %v2015 = vpop.f32.mrb[0].mxu0
      %v2016 = vadd.f32 0.0, %v2015
      %v2017 = vpop.f32.mrb[0].mxu0
      %2018 = vmatprep.mubr.bf16.mxu0 0
      %2019 = vmatmul.mubr.bf16.gmra.mrb[0].mxu0 %v1913
      %v2020 = vpop.f32.mrb[0].mxu0
      %v2021 = vadd.f32 0.0, %v2020
      %v2022 = vpop.f32.mrb[0].mxu0
      %v2023 = vpop.f32.mrb[0].mxu0
      %v2024 = vadd.f32 0.0, %v2023
      %v2025 = vpop.f32.mrb[0].mxu0
      %2026 = vmatprep.mubr.bf16.mxu0 0
      %2027 = vmatmul.mubr.bf16.gmra.mrb[0].mxu0 %v1916
      %v2028 = vpop.f32.mrb[0].mxu0
      %v2029 = vadd.f32 0.0, %v2028
      %v2030 = vpop.f32.mrb[0].mxu0
      %v2031 = vpop.f32.mrb[0].mxu0
      %v2032 = vadd.f32 0.0, %v2031
      %v2033 = vpop.f32.mrb[0].mxu0
      %2034 = vmatprep.mubr.bf16.mxu0 0
      %2035 = vmatmul.mubr.bf16.gmra.mrb[0].mxu0 %v1919
      %v2036 = vpop.f32.mrb[0].mxu0
      %v2037 = vadd.f32 0.0, %v2036
      %v2038 = vpop.f32.mrb[0].mxu0
      %v2039 = vpop.f32.mrb[0].mxu0
      %v2040 = vadd.f32 0.0, %v2039
      %v2041 = vpop.f32.mrb[0].mxu0
      %2042 = vmatprep.mubr.bf16.mxu0 0
      %2043 = vmatmul.mubr.bf16.gmra.mrb[0].mxu0 %v1922
      %v2044 = vpop.f32.mrb[0].mxu0
      %v2045 = vadd.f32 0.0, %v2044
      %v2046 = vpop.f32.mrb[0].mxu0
      %v2047 = vpop.f32.mrb[0].mxu0
      %v2048 = vadd.f32 0.0, %v2047
      %v2049 = vpop.f32.mrb[0].mxu0
      %2050 = vmatprep.mubr.bf16.mxu0 0
      %2051 = vmatmul.mubr.bf16.gmra.mrb[0].mxu0 %v1925
      %v2052 = vpop.f32.mrb[0].mxu0
      %v2053 = vadd.f32 0.0, %v2052
      %v2054 = vpop.f32.mrb[0].mxu0
      %v2055 = vpop.f32.mrb[0].mxu0
      %v2056 = vadd.f32 0.0, %v2055
      %v2057 = vpop.f32.mrb[0].mxu0
      %2058 = vmatprep.mubr.bf16.mxu0 0
      %2059 = vmatmul.mubr.bf16.gmra.mrb[0].mxu0 %v1928
      %v2060 = vpop.f32.mrb[0].mxu0
      %v2061 = vadd.f32 0.0, %v2060
      %v2062 = vpop.f32.mrb[0].mxu0
      %v2063 = vpop.f32.mrb[0].mxu0
      %v2064 = vadd.f32 0.0, %v2063
      %v2065 = vpop.f32.mrb[0].mxu0
      %2066 = vmatprep.mubr.bf16.mxu0 0
      %2067 = vmatmul.mubr.bf16.gmra.mrb[0].mxu0 %v1931
      %v2068 = vpop.f32.mrb[0].mxu0
      %v2069 = vadd.f32 0.0, %v2068
      %v2070 = vpop.f32.mrb[0].mxu0
      %v2071 = vpop.f32.mrb[0].mxu0
      %v2072 = vadd.f32 0.0, %v2071
      %v2073 = vpop.f32.mrb[0].mxu0
      %2074 = vmatprep.mubr.bf16.mxu0 0
      %2075 = vmatmul.mubr.bf16.gmra.mrb[0].mxu0 %v1934
      %v2076 = vpop.f32.mrb[0].mxu0
      %v2077 = vadd.f32 0.0, %v2076
      %v2078 = vpop.f32.mrb[0].mxu0
      %v2079 = vpop.f32.mrb[0].mxu0
      %v2080 = vadd.f32 0.0, %v2079
      %v2081 = vpop.f32.mrb[0].mxu0
      %2082 = vmatprep.mubr.bf16.mxu0 0
      %2083 = vmatmul.mubr.bf16.gmra.mrb[0].mxu0 %v1937
      %v2084 = vpop.f32.mrb[0].mxu0
      %v2085 = vadd.f32 0.0, %v2084
      %v2086 = vpop.f32.mrb[0].mxu0
      %v2087 = vpop.f32.mrb[0].mxu0
      %v2088 = vadd.f32 0.0, %v2087
      %v2089 = vpop.f32.mrb[0].mxu0
      %2090 = vmatprep.mubr.bf16.mxu0 0
      %2091 = vmatmul.mubr.bf16.gmra.mrb[0].mxu0 %v1940
      %v2092 = vpop.f32.mrb[0].mxu0
      %v2093 = vadd.f32 0.0, %v2092
      %v2094 = vpop.f32.mrb[0].mxu0
      %v2095 = vpop.f32.mrb[0].mxu0
      %v2096 = vadd.f32 0.0, %v2095
      %v2097 = vpop.f32.mrb[0].mxu0
      %2098 = vmatprep.mubr.bf16.mxu0 0
      %2099 = vmatmul.mubr.bf16.gmra.mrb[0].mxu0 %v1943
      %v2100 = vpop.f32.mrb[0].mxu0
      %v2101 = vadd.f32 0.0, %v2100
      %v2102 = vpop.f32.mrb[0].mxu0
      %v2103 = vpop.f32.mrb[0].mxu0
      %v2104 = vadd.f32 0.0, %v2103
      %v2105 = vpop.f32.mrb[0].mxu0
      %2106 = vmatprep.mubr.bf16.mxu0 0
      %2107 = vmatmul.mubr.bf16.gmra.mrb[0].mxu0 %v1946
      %v2108 = vpop.f32.mrb[0].mxu0
      %v2109 = vadd.f32 0.0, %v2108
      %v2110 = vpop.f32.mrb[0].mxu0
      %v2111 = vpop.f32.mrb[0].mxu0
      %v2112 = vadd.f32 0.0, %v2111
      %v2113 = vpop.f32.mrb[0].mxu0
      %2114 = vmatprep.mubr.bf16.mxu0 0
      %2115 = vmatmul.mubr.bf16.gmra.mrb[0].mxu0 %v1949
      %v2116 = vpop.f32.mrb[0].mxu0
      %v2117 = vadd.f32 0.0, %v2116
      %v2118 = vpop.f32.mrb[0].mxu0
      %v2119 = vpop.f32.mrb[0].mxu0
      %v2120 = vadd.f32 0.0, %v2119
      %v2121 = vpop.f32.mrb[0].mxu0
      %2122 = vmatprep.mubr.bf16.mxu0 0
      %2123 = vmatmul.mubr.bf16.gmra.mrb[0].mxu0 %v1952
      %v2124 = vpop.f32.mrb[0].mxu0
      %v2125 = vadd.f32 0.0, %v2124
      %v2126 = vpop.f32.mrb[0].mxu0
      %v2127 = vpop.f32.mrb[0].mxu0
      %v2128 = vadd.f32 0.0, %v2127
      %v2129 = vpop.f32.mrb[0].mxu0
      %2130 = vdwg.mxu0
      %v2131 = vadd.f32 %v1577, %v1989
      %v2132 = vadd.f32 %v1578, %v1992
      %v2133 = vadd.f32 %v1579, %v1997
      %v2134 = vadd.f32 %v1580, %v2000
      %v2135 = vadd.f32 %v1581, %v2005
      %v2136 = vadd.f32 %v1582, %v2008
      %v2137 = vadd.f32 %v1583, %v2013
      %v2138 = vadd.f32 %v1584, %v2016
      %v2139 = vadd.f32 %v1585, %v2021
      %v2140 = vadd.f32 %v1586, %v2024
      %v2141 = vadd.f32 %v1587, %v2029
      %v2142 = vadd.f32 %v1588, %v2032
      %v2143 = vadd.f32 %v1589, %v2037
      %v2144 = vadd.f32 %v1590, %v2040
      %v2145 = vadd.f32 %v1591, %v2045
      %v2146 = vadd.f32 %v1592, %v2048
      %v2147 = vadd.f32 %v1593, %v2053
      %v2148 = vadd.f32 %v1594, %v2056
      %v2149 = vadd.f32 %v1595, %v2061
      %v2150 = vadd.f32 %v1596, %v2064
      %v2151 = vadd.f32 %v1597, %v2069
      %v2152 = vadd.f32 %v1598, %v2072
      %v2153 = vadd.f32 %v1599, %v2077
      %v2154 = vadd.f32 %v1600, %v2080
      %v2155 = vadd.f32 %v1601, %v2085
      %v2156 = vadd.f32 %v1602, %v2088
      %v2157 = vadd.f32 %v1603, %v2093
      %v2158 = vadd.f32 %v1604, %v2096
      %v2159 = vadd.f32 %v1605, %v2101
      %v2160 = vadd.f32 %v1606, %v2104
      %v2161 = vadd.f32 %v1607, %v2109
      %v2162 = vadd.f32 %v1608, %v2112
      %v2163 = vadd.f32 %v1609, %v2117
      %v2164 = vadd.f32 %v1610, %v2120
      %v2165 = vadd.f32 %v1611, %v2125
      %v2166 = vadd.f32 %v1612, %v2128
      %v2167 = vld [vmem:[%s315] sm:$0xe]
      %s2168 = scalar_lea.vmem %s2, 16
      %v2169 = vld [vmem:[%s2168] sm:$0xf]
      %v2170 = vld [vmem:[%s2168 + $0x4] sm:$0xf]
      %v2172 = vunpack.c.l.b16 %v2167
      %v2173 = vpack.c.b16 %v1136, %v2172
      %vm2174 = vcmask 1046528
      %v2175 = vrot.slane %v2173, 1
      %v2176 = vrot.slane %v1173, 1
      %v2177 = vsel %vm2174, %v2175, %v2176
      %v2178 = vrot.slane %v1174, 1
      %v2179 = vsel %vm2174, %v2176, %v2178
      %v2180 = vrot.slane %v1175, 1
      %v2181 = vsel %vm2174, %v2178, %v2180
      %v2182 = vrot.slane %v1176, 1
      %v2183 = vsel %vm2174, %v2180, %v2182
      %v2184 = vrot.slane %v1177, 1
      %v2185 = vsel %vm2174, %v2182, %v2184
      %v2186 = vrot.slane %v1178, 1
      %v2187 = vsel %vm2174, %v2184, %v2186
      %v2188 = vrot.slane %v1179, 1
      %v2189 = vsel %vm2174, %v2186, %v2188
      %v2190 = vrot.slane %v1180, 1
      %v2191 = vsel %vm2174, %v2188, %v2190
      %v2192 = vrot.slane %v1181, 1
      %v2193 = vsel %vm2174, %v2190, %v2192
      %v2194 = vrot.slane %v1182, 1
      %v2195 = vsel %vm2174, %v2192, %v2194
      %v2196 = vrot.slane %v1183, 1
      %v2197 = vsel %vm2174, %v2194, %v2196
      %v2198 = vrot.slane %v1184, 1
      %v2199 = vsel %vm2174, %v2196, %v2198
      %v2200 = vrot.slane %v1185, 1
      %v2201 = vsel %vm2174, %v2198, %v2200
      %v2202 = vrot.slane %v1186, 1
      %v2203 = vsel %vm2174, %v2200, %v2202
      %v2204 = vrot.slane %v1187, 1
      %v2205 = vsel %vm2174, %v2202, %v2204
      %v2206 = vrot.slane %v1188, 1
      %v2207 = vsel %vm2174, %v2204, %v2206
      %v2208 = vrot.slane %v1189, 1
      %v2209 = vsel %vm2174, %v2206, %v2208
      %v2210 = vrot.slane %v1190, 1
      %v2211 = vsel %vm2174, %v2208, %v2210
      %v2214 = vunpack.c.l.b16 %v2169
      %v2215 = vunpack.c.l.b16 %v2170
      %v2216 = vpack.c.b16 %v2215, %v2214
      %v2219 = vsel %vm499, %v2177, 0
      %v2222 = vsel %vm499, %v2179, 0
      %v2225 = vsel %vm499, %v2181, 0
      %v2228 = vsel %vm499, %v2183, 0
      %v2231 = vsel %vm499, %v2185, 0
      %v2234 = vsel %vm499, %v2187, 0
      %v2237 = vsel %vm499, %v2189, 0
      %v2240 = vsel %vm499, %v2191, 0
      %v2243 = vsel %vm499, %v2193, 0
      %v2246 = vsel %vm499, %v2195, 0
      %v2249 = vsel %vm499, %v2197, 0
      %v2252 = vsel %vm499, %v2199, 0
      %v2255 = vsel %vm499, %v2201, 0
      %v2258 = vsel %vm499, %v2203, 0
      %v2261 = vsel %vm499, %v2205, 0
      %v2264 = vsel %vm499, %v2207, 0
      %v2267 = vsel %vm499, %v2209, 0
      %v2270 = vsel %vm499, %v2211, 0
      %2272 = vmatprep.subr.bf16.mxu0 0
      %2273 = vmatpush1.bf16.msra.mxu0 %v2216
      %2274 = vmatprep.subr.bf16.mxu0 0
      %2275 = vmatpush1.bf16.msra.mxu0 0
      %2276 = vmatprep.subr.bf16.mxu0 0
      %2277 = vmatpush1.bf16.msra.mxu0 0
      %2278 = vmatprep.subr.bf16.mxu0 0
      %2279 = vmatpush1.bf16.msra.mxu0 0
      %2280 = vmatprep.subr.bf16.mxu0 0
      %2281 = vmatpush1.bf16.msra.mxu0 0
      %2282 = vmatprep.subr.bf16.mxu0 0
      %2283 = vmatpush1.bf16.msra.mxu0 0
      %2284 = vmatprep.subr.bf16.mxu0 0
      %2285 = vmatpush1.bf16.msra.mxu0 0
      %2286 = vmatprep.subr.bf16.mxu0 0
      %2287 = vmatpush1.bf16.msra.mxu0 0
      %2288 = vmatprep.subr.bf16.mxu0 0
      %2289 = vmatpush1.bf16.msra.mxu0 0
      %2290 = vmatprep.subr.bf16.mxu0 0
      %2291 = vmatpush1.bf16.msra.mxu0 0
      %2292 = vmatprep.subr.bf16.mxu0 0
      %2293 = vmatpush1.bf16.msra.mxu0 0
      %2294 = vmatprep.subr.bf16.mxu0 0
      %2295 = vmatpush1.bf16.msra.mxu0 0
      %2296 = vmatprep.subr.bf16.mxu0 0
      %2297 = vmatpush1.bf16.msra.mxu0 0
      %2298 = vmatprep.subr.bf16.mxu0 0
      %2299 = vmatpush1.bf16.msra.mxu0 0
      %2300 = vmatprep.subr.bf16.mxu0 0
      %2301 = vmatpush1.bf16.msra.mxu0 0
      %2302 = vmatprep.subr.bf16.mxu0 0
      %2303 = vmatpush1.bf16.msra.mxu0 0
      %2304 = vmatprep.mubr.bf16.mxu0 0
      %2305 = vmatmul.mubr.bf16.gmra.mrb[0].mxu0 %v2219
      %v2306 = vpop.f32.mrb[0].mxu0
      %v2307 = vadd.f32 0.0, %v2306
      %v2308 = vpop.f32.mrb[0].mxu0
      %v2309 = vpop.f32.mrb[0].mxu0
      %v2310 = vadd.f32 0.0, %v2309
      %v2311 = vpop.f32.mrb[0].mxu0
      %2312 = vmatprep.mubr.bf16.mxu0 0
      %2313 = vmatmul.mubr.bf16.gmra.mrb[0].mxu0 %v2222
      %v2314 = vpop.f32.mrb[0].mxu0
      %v2315 = vadd.f32 0.0, %v2314
      %v2316 = vpop.f32.mrb[0].mxu0
      %v2317 = vpop.f32.mrb[0].mxu0
      %v2318 = vadd.f32 0.0, %v2317
      %v2319 = vpop.f32.mrb[0].mxu0
      %2320 = vmatprep.mubr.bf16.mxu0 0
      %2321 = vmatmul.mubr.bf16.gmra.mrb[0].mxu0 %v2225
      %v2322 = vpop.f32.mrb[0].mxu0
      %v2323 = vadd.f32 0.0, %v2322
      %v2324 = vpop.f32.mrb[0].mxu0
      %v2325 = vpop.f32.mrb[0].mxu0
      %v2326 = vadd.f32 0.0, %v2325
      %v2327 = vpop.f32.mrb[0].mxu0
      %2328 = vmatprep.mubr.bf16.mxu0 0
      %2329 = vmatmul.mubr.bf16.gmra.mrb[0].mxu0 %v2228
      %v2330 = vpop.f32.mrb[0].mxu0
      %v2331 = vadd.f32 0.0, %v2330
      %v2332 = vpop.f32.mrb[0].mxu0
      %v2333 = vpop.f32.mrb[0].mxu0
      %v2334 = vadd.f32 0.0, %v2333
      %v2335 = vpop.f32.mrb[0].mxu0
      %2336 = vmatprep.mubr.bf16.mxu0 0
      %2337 = vmatmul.mubr.bf16.gmra.mrb[0].mxu0 %v2231
      %v2338 = vpop.f32.mrb[0].mxu0
      %v2339 = vadd.f32 0.0, %v2338
      %v2340 = vpop.f32.mrb[0].mxu0
      %v2341 = vpop.f32.mrb[0].mxu0
      %v2342 = vadd.f32 0.0, %v2341
      %v2343 = vpop.f32.mrb[0].mxu0
      %2344 = vmatprep.mubr.bf16.mxu0 0
      %2345 = vmatmul.mubr.bf16.gmra.mrb[0].mxu0 %v2234
      %v2346 = vpop.f32.mrb[0].mxu0
      %v2347 = vadd.f32 0.0, %v2346
      %v2348 = vpop.f32.mrb[0].mxu0
      %v2349 = vpop.f32.mrb[0].mxu0
      %v2350 = vadd.f32 0.0, %v2349
      %v2351 = vpop.f32.mrb[0].mxu0
      %2352 = vmatprep.mubr.bf16.mxu0 0
      %2353 = vmatmul.mubr.bf16.gmra.mrb[0].mxu0 %v2237
      %v2354 = vpop.f32.mrb[0].mxu0
      %v2355 = vadd.f32 0.0, %v2354
      %v2356 = vpop.f32.mrb[0].mxu0
      %v2357 = vpop.f32.mrb[0].mxu0
      %v2358 = vadd.f32 0.0, %v2357
      %v2359 = vpop.f32.mrb[0].mxu0
      %2360 = vmatprep.mubr.bf16.mxu0 0
      %2361 = vmatmul.mubr.bf16.gmra.mrb[0].mxu0 %v2240
      %v2362 = vpop.f32.mrb[0].mxu0
      %v2363 = vadd.f32 0.0, %v2362
      %v2364 = vpop.f32.mrb[0].mxu0
      %v2365 = vpop.f32.mrb[0].mxu0
      %v2366 = vadd.f32 0.0, %v2365
      %v2367 = vpop.f32.mrb[0].mxu0
      %2368 = vmatprep.mubr.bf16.mxu0 0
      %2369 = vmatmul.mubr.bf16.gmra.mrb[0].mxu0 %v2243
      %v2370 = vpop.f32.mrb[0].mxu0
      %v2371 = vadd.f32 0.0, %v2370
      %v2372 = vpop.f32.mrb[0].mxu0
      %v2373 = vpop.f32.mrb[0].mxu0
      %v2374 = vadd.f32 0.0, %v2373
      %v2375 = vpop.f32.mrb[0].mxu0
      %2376 = vmatprep.mubr.bf16.mxu0 0
      %2377 = vmatmul.mubr.bf16.gmra.mrb[0].mxu0 %v2246
      %v2378 = vpop.f32.mrb[0].mxu0
      %v2379 = vadd.f32 0.0, %v2378
      %v2380 = vpop.f32.mrb[0].mxu0
      %v2381 = vpop.f32.mrb[0].mxu0
      %v2382 = vadd.f32 0.0, %v2381
      %v2383 = vpop.f32.mrb[0].mxu0
      %2384 = vmatprep.mubr.bf16.mxu0 0
      %2385 = vmatmul.mubr.bf16.gmra.mrb[0].mxu0 %v2249
      %v2386 = vpop.f32.mrb[0].mxu0
      %v2387 = vadd.f32 0.0, %v2386
      %v2388 = vpop.f32.mrb[0].mxu0
      %v2389 = vpop.f32.mrb[0].mxu0
      %v2390 = vadd.f32 0.0, %v2389
      %v2391 = vpop.f32.mrb[0].mxu0
      %2392 = vmatprep.mubr.bf16.mxu0 0
      %2393 = vmatmul.mubr.bf16.gmra.mrb[0].mxu0 %v2252
      %v2394 = vpop.f32.mrb[0].mxu0
      %v2395 = vadd.f32 0.0, %v2394
      %v2396 = vpop.f32.mrb[0].mxu0
      %v2397 = vpop.f32.mrb[0].mxu0
      %v2398 = vadd.f32 0.0, %v2397
      %v2399 = vpop.f32.mrb[0].mxu0
      %2400 = vmatprep.mubr.bf16.mxu0 0
      %2401 = vmatmul.mubr.bf16.gmra.mrb[0].mxu0 %v2255
      %v2402 = vpop.f32.mrb[0].mxu0
      %v2403 = vadd.f32 0.0, %v2402
      %v2404 = vpop.f32.mrb[0].mxu0
      %v2405 = vpop.f32.mrb[0].mxu0
      %v2406 = vadd.f32 0.0, %v2405
      %v2407 = vpop.f32.mrb[0].mxu0
      %2408 = vmatprep.mubr.bf16.mxu0 0
      %2409 = vmatmul.mubr.bf16.gmra.mrb[0].mxu0 %v2258
      %v2410 = vpop.f32.mrb[0].mxu0
      %v2411 = vadd.f32 0.0, %v2410
      %v2412 = vpop.f32.mrb[0].mxu0
      %v2413 = vpop.f32.mrb[0].mxu0
      %v2414 = vadd.f32 0.0, %v2413
      %v2415 = vpop.f32.mrb[0].mxu0
      %2416 = vmatprep.mubr.bf16.mxu0 0
      %2417 = vmatmul.mubr.bf16.gmra.mrb[0].mxu0 %v2261
      %v2418 = vpop.f32.mrb[0].mxu0
      %v2419 = vadd.f32 0.0, %v2418
      %v2420 = vpop.f32.mrb[0].mxu0
      %v2421 = vpop.f32.mrb[0].mxu0
      %v2422 = vadd.f32 0.0, %v2421
      %v2423 = vpop.f32.mrb[0].mxu0
      %2424 = vmatprep.mubr.bf16.mxu0 0
      %2425 = vmatmul.mubr.bf16.gmra.mrb[0].mxu0 %v2264
      %v2426 = vpop.f32.mrb[0].mxu0
      %v2427 = vadd.f32 0.0, %v2426
      %v2428 = vpop.f32.mrb[0].mxu0
      %v2429 = vpop.f32.mrb[0].mxu0
      %v2430 = vadd.f32 0.0, %v2429
      %v2431 = vpop.f32.mrb[0].mxu0
      %2432 = vmatprep.mubr.bf16.mxu0 0
      %2433 = vmatmul.mubr.bf16.gmra.mrb[0].mxu0 %v2267
      %v2434 = vpop.f32.mrb[0].mxu0
      %v2435 = vadd.f32 0.0, %v2434
      %v2436 = vpop.f32.mrb[0].mxu0
      %v2437 = vpop.f32.mrb[0].mxu0
      %v2438 = vadd.f32 0.0, %v2437
      %v2439 = vpop.f32.mrb[0].mxu0
      %2440 = vmatprep.mubr.bf16.mxu0 0
      %2441 = vmatmul.mubr.bf16.gmra.mrb[0].mxu0 %v2270
      %v2442 = vpop.f32.mrb[0].mxu0
      %v2443 = vadd.f32 0.0, %v2442
      %v2444 = vpop.f32.mrb[0].mxu0
      %v2445 = vpop.f32.mrb[0].mxu0
      %v2446 = vadd.f32 0.0, %v2445
      %v2447 = vpop.f32.mrb[0].mxu0
      %2448 = vdwg.mxu0
      %v2449 = vadd.f32 %v2131, %v2307
      %v2450 = vadd.f32 %v2132, %v2310
      %v2451 = vadd.f32 %v2133, %v2315
      %v2452 = vadd.f32 %v2134, %v2318
      %v2453 = vadd.f32 %v2135, %v2323
      %v2454 = vadd.f32 %v2136, %v2326
      %v2455 = vadd.f32 %v2137, %v2331
      %v2456 = vadd.f32 %v2138, %v2334
      %v2457 = vadd.f32 %v2139, %v2339
      %v2458 = vadd.f32 %v2140, %v2342
      %v2459 = vadd.f32 %v2141, %v2347
      %v2460 = vadd.f32 %v2142, %v2350
      %v2461 = vadd.f32 %v2143, %v2355
      %v2462 = vadd.f32 %v2144, %v2358
      %v2463 = vadd.f32 %v2145, %v2363
      %v2464 = vadd.f32 %v2146, %v2366
      %v2465 = vadd.f32 %v2147, %v2371
      %v2466 = vadd.f32 %v2148, %v2374
      %v2467 = vadd.f32 %v2149, %v2379
      %v2468 = vadd.f32 %v2150, %v2382
      %v2469 = vadd.f32 %v2151, %v2387
      %v2470 = vadd.f32 %v2152, %v2390
      %v2471 = vadd.f32 %v2153, %v2395
      %v2472 = vadd.f32 %v2154, %v2398
      %v2473 = vadd.f32 %v2155, %v2403
      %v2474 = vadd.f32 %v2156, %v2406
      %v2475 = vadd.f32 %v2157, %v2411
      %v2476 = vadd.f32 %v2158, %v2414
      %v2477 = vadd.f32 %v2159, %v2419
      %v2478 = vadd.f32 %v2160, %v2422
      %v2479 = vadd.f32 %v2161, %v2427
      %v2480 = vadd.f32 %v2162, %v2430
      %v2481 = vadd.f32 %v2163, %v2435
      %v2482 = vadd.f32 %v2164, %v2438
      %v2483 = vadd.f32 %v2165, %v2443
      %v2484 = vadd.f32 %v2166, %v2446
      %v2485 = vld [vmem:[%s320] sm:$0xe]
      %s2486 = scalar_lea.vmem %s3, 16
      %v2487 = vld [vmem:[%s2486] sm:$0xf]
      %v2488 = vld [vmem:[%s2486 + $0x4] sm:$0xf]
      %v2490 = vunpack.c.l.b16 %v2485
      %v2491 = vpack.c.b16 %v1691, %v2490
      %v2492 = vrot.slane %v2491, 1
      %v2493 = vrot.slane %v1728, 1
      %v2494 = vsel %vm2174, %v2492, %v2493
      %v2495 = vrot.slane %v1729, 1
      %v2496 = vsel %vm2174, %v2493, %v2495
      %v2497 = vrot.slane %v1730, 1
      %v2498 = vsel %vm2174, %v2495, %v2497
      %v2499 = vrot.slane %v1731, 1
      %v2500 = vsel %vm2174, %v2497, %v2499
      %v2501 = vrot.slane %v1732, 1
      %v2502 = vsel %vm2174, %v2499, %v2501
      %v2503 = vrot.slane %v1733, 1
      %v2504 = vsel %vm2174, %v2501, %v2503
      %v2505 = vrot.slane %v1734, 1
      %v2506 = vsel %vm2174, %v2503, %v2505
      %v2507 = vrot.slane %v1735, 1
      %v2508 = vsel %vm2174, %v2505, %v2507
      %v2509 = vrot.slane %v1736, 1
      %v2510 = vsel %vm2174, %v2507, %v2509
      %v2511 = vrot.slane %v1737, 1
      %v2512 = vsel %vm2174, %v2509, %v2511
      %v2513 = vrot.slane %v1738, 1
      %v2514 = vsel %vm2174, %v2511, %v2513
      %v2515 = vrot.slane %v1739, 1
      %v2516 = vsel %vm2174, %v2513, %v2515
      %v2517 = vrot.slane %v1740, 1
      %v2518 = vsel %vm2174, %v2515, %v2517
      %v2519 = vrot.slane %v1741, 1
      %v2520 = vsel %vm2174, %v2517, %v2519
      %v2521 = vrot.slane %v1742, 1
      %v2522 = vsel %vm2174, %v2519, %v2521
      %v2523 = vrot.slane %v1743, 1
      %v2524 = vsel %vm2174, %v2521, %v2523
      %v2525 = vrot.slane %v1744, 1
      %v2526 = vsel %vm2174, %v2523, %v2525
      %v2527 = vrot.slane %v1745, 1
      %v2528 = vsel %vm2174, %v2525, %v2527
      %v2531 = vunpack.c.l.b16 %v2487
      %v2532 = vunpack.c.l.b16 %v2488
      %v2533 = vpack.c.b16 %v2532, %v2531
      %v2536 = vsel %vm499, %v2494, 0
      %v2539 = vsel %vm499, %v2496, 0
      %v2542 = vsel %vm499, %v2498, 0
      %v2545 = vsel %vm499, %v2500, 0
      %v2548 = vsel %vm499, %v2502, 0
      %v2551 = vsel %vm499, %v2504, 0
      %v2554 = vsel %vm499, %v2506, 0
      %v2557 = vsel %vm499, %v2508, 0
      %v2560 = vsel %vm499, %v2510, 0
      %v2563 = vsel %vm499, %v2512, 0
      %v2566 = vsel %vm499, %v2514, 0
      %v2569 = vsel %vm499, %v2516, 0
      %v2572 = vsel %vm499, %v2518, 0
      %v2575 = vsel %vm499, %v2520, 0
      %v2578 = vsel %vm499, %v2522, 0
      %v2581 = vsel %vm499, %v2524, 0
      %v2584 = vsel %vm499, %v2526, 0
      %v2587 = vsel %vm499, %v2528, 0
      %2589 = vmatprep.subr.bf16.mxu0 0
      %2590 = vmatpush1.bf16.msra.mxu0 %v2533
      %2591 = vmatprep.subr.bf16.mxu0 0
      %2592 = vmatpush1.bf16.msra.mxu0 0
      %2593 = vmatprep.subr.bf16.mxu0 0
      %2594 = vmatpush1.bf16.msra.mxu0 0
      %2595 = vmatprep.subr.bf16.mxu0 0
      %2596 = vmatpush1.bf16.msra.mxu0 0
      %2597 = vmatprep.subr.bf16.mxu0 0
      %2598 = vmatpush1.bf16.msra.mxu0 0
      %2599 = vmatprep.subr.bf16.mxu0 0
      %2600 = vmatpush1.bf16.msra.mxu0 0
      %2601 = vmatprep.subr.bf16.mxu0 0
      %2602 = vmatpush1.bf16.msra.mxu0 0
      %2603 = vmatprep.subr.bf16.mxu0 0
      %2604 = vmatpush1.bf16.msra.mxu0 0
      %2605 = vmatprep.subr.bf16.mxu0 0
      %2606 = vmatpush1.bf16.msra.mxu0 0
      %2607 = vmatprep.subr.bf16.mxu0 0
      %2608 = vmatpush1.bf16.msra.mxu0 0
      %2609 = vmatprep.subr.bf16.mxu0 0
      %2610 = vmatpush1.bf16.msra.mxu0 0
      %2611 = vmatprep.subr.bf16.mxu0 0
      %2612 = vmatpush1.bf16.msra.mxu0 0
      %2613 = vmatprep.subr.bf16.mxu0 0
      %2614 = vmatpush1.bf16.msra.mxu0 0
      %2615 = vmatprep.subr.bf16.mxu0 0
      %2616 = vmatpush1.bf16.msra.mxu0 0
      %2617 = vmatprep.subr.bf16.mxu0 0
      %2618 = vmatpush1.bf16.msra.mxu0 0
      %2619 = vmatprep.subr.bf16.mxu0 0
      %2620 = vmatpush1.bf16.msra.mxu0 0
      %2621 = vmatprep.mubr.bf16.mxu0 0
      %2622 = vmatmul.mubr.bf16.gmra.mrb[0].mxu0 %v2536
      %v2623 = vpop.f32.mrb[0].mxu0
      %v2624 = vadd.f32 0.0, %v2623
      %v2625 = vpop.f32.mrb[0].mxu0
      %v2626 = vpop.f32.mrb[0].mxu0
      %v2627 = vadd.f32 0.0, %v2626
      %v2628 = vpop.f32.mrb[0].mxu0
      %2629 = vmatprep.mubr.bf16.mxu0 0
      %2630 = vmatmul.mubr.bf16.gmra.mrb[0].mxu0 %v2539
      %v2631 = vpop.f32.mrb[0].mxu0
      %v2632 = vadd.f32 0.0, %v2631
      %v2633 = vpop.f32.mrb[0].mxu0
      %v2634 = vpop.f32.mrb[0].mxu0
      %v2635 = vadd.f32 0.0, %v2634
      %v2636 = vpop.f32.mrb[0].mxu0
      %2637 = vmatprep.mubr.bf16.mxu0 0
      %2638 = vmatmul.mubr.bf16.gmra.mrb[0].mxu0 %v2542
      %v2639 = vpop.f32.mrb[0].mxu0
      %v2640 = vadd.f32 0.0, %v2639
      %v2641 = vpop.f32.mrb[0].mxu0
      %v2642 = vpop.f32.mrb[0].mxu0
      %v2643 = vadd.f32 0.0, %v2642
      %v2644 = vpop.f32.mrb[0].mxu0
      %2645 = vmatprep.mubr.bf16.mxu0 0
      %2646 = vmatmul.mubr.bf16.gmra.mrb[0].mxu0 %v2545
      %v2647 = vpop.f32.mrb[0].mxu0
      %v2648 = vadd.f32 0.0, %v2647
      %v2649 = vpop.f32.mrb[0].mxu0
      %v2650 = vpop.f32.mrb[0].mxu0
      %v2651 = vadd.f32 0.0, %v2650
      %v2652 = vpop.f32.mrb[0].mxu0
      %2653 = vmatprep.mubr.bf16.mxu0 0
      %2654 = vmatmul.mubr.bf16.gmra.mrb[0].mxu0 %v2548
      %v2655 = vpop.f32.mrb[0].mxu0
      %v2656 = vadd.f32 0.0, %v2655
      %v2657 = vpop.f32.mrb[0].mxu0
      %v2658 = vpop.f32.mrb[0].mxu0
      %v2659 = vadd.f32 0.0, %v2658
      %v2660 = vpop.f32.mrb[0].mxu0
      %2661 = vmatprep.mubr.bf16.mxu0 0
      %2662 = vmatmul.mubr.bf16.gmra.mrb[0].mxu0 %v2551
      %v2663 = vpop.f32.mrb[0].mxu0
      %v2664 = vadd.f32 0.0, %v2663
      %v2665 = vpop.f32.mrb[0].mxu0
      %v2666 = vpop.f32.mrb[0].mxu0
      %v2667 = vadd.f32 0.0, %v2666
      %v2668 = vpop.f32.mrb[0].mxu0
      %2669 = vmatprep.mubr.bf16.mxu0 0
      %2670 = vmatmul.mubr.bf16.gmra.mrb[0].mxu0 %v2554
      %v2671 = vpop.f32.mrb[0].mxu0
      %v2672 = vadd.f32 0.0, %v2671
      %v2673 = vpop.f32.mrb[0].mxu0
      %v2674 = vpop.f32.mrb[0].mxu0
      %v2675 = vadd.f32 0.0, %v2674
      %v2676 = vpop.f32.mrb[0].mxu0
      %2677 = vmatprep.mubr.bf16.mxu0 0
      %2678 = vmatmul.mubr.bf16.gmra.mrb[0].mxu0 %v2557
      %v2679 = vpop.f32.mrb[0].mxu0
      %v2680 = vadd.f32 0.0, %v2679
      %v2681 = vpop.f32.mrb[0].mxu0
      %v2682 = vpop.f32.mrb[0].mxu0
      %v2683 = vadd.f32 0.0, %v2682
      %v2684 = vpop.f32.mrb[0].mxu0
      %2685 = vmatprep.mubr.bf16.mxu0 0
      %2686 = vmatmul.mubr.bf16.gmra.mrb[0].mxu0 %v2560
      %v2687 = vpop.f32.mrb[0].mxu0
      %v2688 = vadd.f32 0.0, %v2687
      %v2689 = vpop.f32.mrb[0].mxu0
      %v2690 = vpop.f32.mrb[0].mxu0
      %v2691 = vadd.f32 0.0, %v2690
      %v2692 = vpop.f32.mrb[0].mxu0
      %2693 = vmatprep.mubr.bf16.mxu0 0
      %2694 = vmatmul.mubr.bf16.gmra.mrb[0].mxu0 %v2563
      %v2695 = vpop.f32.mrb[0].mxu0
      %v2696 = vadd.f32 0.0, %v2695
      %v2697 = vpop.f32.mrb[0].mxu0
      %v2698 = vpop.f32.mrb[0].mxu0
      %v2699 = vadd.f32 0.0, %v2698
      %v2700 = vpop.f32.mrb[0].mxu0
      %2701 = vmatprep.mubr.bf16.mxu0 0
      %2702 = vmatmul.mubr.bf16.gmra.mrb[0].mxu0 %v2566
      %v2703 = vpop.f32.mrb[0].mxu0
      %v2704 = vadd.f32 0.0, %v2703
      %v2705 = vpop.f32.mrb[0].mxu0
      %v2706 = vpop.f32.mrb[0].mxu0
      %v2707 = vadd.f32 0.0, %v2706
      %v2708 = vpop.f32.mrb[0].mxu0
      %2709 = vmatprep.mubr.bf16.mxu0 0
      %2710 = vmatmul.mubr.bf16.gmra.mrb[0].mxu0 %v2569
      %v2711 = vpop.f32.mrb[0].mxu0
      %v2712 = vadd.f32 0.0, %v2711
      %v2713 = vpop.f32.mrb[0].mxu0
      %v2714 = vpop.f32.mrb[0].mxu0
      %v2715 = vadd.f32 0.0, %v2714
      %v2716 = vpop.f32.mrb[0].mxu0
      %2717 = vmatprep.mubr.bf16.mxu0 0
      %2718 = vmatmul.mubr.bf16.gmra.mrb[0].mxu0 %v2572
      %v2719 = vpop.f32.mrb[0].mxu0
      %v2720 = vadd.f32 0.0, %v2719
      %v2721 = vpop.f32.mrb[0].mxu0
      %v2722 = vpop.f32.mrb[0].mxu0
      %v2723 = vadd.f32 0.0, %v2722
      %v2724 = vpop.f32.mrb[0].mxu0
      %2725 = vmatprep.mubr.bf16.mxu0 0
      %2726 = vmatmul.mubr.bf16.gmra.mrb[0].mxu0 %v2575
      %v2727 = vpop.f32.mrb[0].mxu0
      %v2728 = vadd.f32 0.0, %v2727
      %v2729 = vpop.f32.mrb[0].mxu0
      %v2730 = vpop.f32.mrb[0].mxu0
      %v2731 = vadd.f32 0.0, %v2730
      %v2732 = vpop.f32.mrb[0].mxu0
      %2733 = vmatprep.mubr.bf16.mxu0 0
      %2734 = vmatmul.mubr.bf16.gmra.mrb[0].mxu0 %v2578
      %v2735 = vpop.f32.mrb[0].mxu0
      %v2736 = vadd.f32 0.0, %v2735
      %v2737 = vpop.f32.mrb[0].mxu0
      %v2738 = vpop.f32.mrb[0].mxu0
      %v2739 = vadd.f32 0.0, %v2738
      %v2740 = vpop.f32.mrb[0].mxu0
      %2741 = vmatprep.mubr.bf16.mxu0 0
      %2742 = vmatmul.mubr.bf16.gmra.mrb[0].mxu0 %v2581
      %v2743 = vpop.f32.mrb[0].mxu0
      %v2744 = vadd.f32 0.0, %v2743
      %v2745 = vpop.f32.mrb[0].mxu0
      %v2746 = vpop.f32.mrb[0].mxu0
      %v2747 = vadd.f32 0.0, %v2746
      %v2748 = vpop.f32.mrb[0].mxu0
      %2749 = vmatprep.mubr.bf16.mxu0 0
      %2750 = vmatmul.mubr.bf16.gmra.mrb[0].mxu0 %v2584
      %v2751 = vpop.f32.mrb[0].mxu0
      %v2752 = vadd.f32 0.0, %v2751
      %v2753 = vpop.f32.mrb[0].mxu0
      %v2754 = vpop.f32.mrb[0].mxu0
      %v2755 = vadd.f32 0.0, %v2754
      %v2756 = vpop.f32.mrb[0].mxu0
      %2757 = vmatprep.mubr.bf16.mxu0 0
      %2758 = vmatmul.mubr.bf16.gmra.mrb[0].mxu0 %v2587
      %v2759 = vpop.f32.mrb[0].mxu0
      %v2760 = vadd.f32 0.0, %v2759
      %v2761 = vpop.f32.mrb[0].mxu0
      %v2762 = vpop.f32.mrb[0].mxu0
      %v2763 = vadd.f32 0.0, %v2762
      %v2764 = vpop.f32.mrb[0].mxu0
      %2765 = vdwg.mxu0
      %v2766 = vadd.f32 %v2449, %v2624
      %v2767 = vadd.f32 %v2450, %v2627
      %v2768 = vadd.f32 %v2451, %v2632
      %v2769 = vadd.f32 %v2452, %v2635
      %v2770 = vadd.f32 %v2453, %v2640
      %v2771 = vadd.f32 %v2454, %v2643
      %v2772 = vadd.f32 %v2455, %v2648
      %v2773 = vadd.f32 %v2456, %v2651
      %v2774 = vadd.f32 %v2457, %v2656
      %v2775 = vadd.f32 %v2458, %v2659
      %v2776 = vadd.f32 %v2459, %v2664
      %v2777 = vadd.f32 %v2460, %v2667
      %v2778 = vadd.f32 %v2461, %v2672
      %v2779 = vadd.f32 %v2462, %v2675
      %v2780 = vadd.f32 %v2463, %v2680
      %v2781 = vadd.f32 %v2464, %v2683
      %v2782 = vadd.f32 %v2465, %v2688
      %v2783 = vadd.f32 %v2466, %v2691
      %v2784 = vadd.f32 %v2467, %v2696
      %v2785 = vadd.f32 %v2468, %v2699
      %v2786 = vadd.f32 %v2469, %v2704
      %v2787 = vadd.f32 %v2470, %v2707
      %v2788 = vadd.f32 %v2471, %v2712
      %v2789 = vadd.f32 %v2472, %v2715
      %v2790 = vadd.f32 %v2473, %v2720
      %v2791 = vadd.f32 %v2474, %v2723
      %v2792 = vadd.f32 %v2475, %v2728
      %v2793 = vadd.f32 %v2476, %v2731
      %v2794 = vadd.f32 %v2477, %v2736
      %v2795 = vadd.f32 %v2478, %v2739
      %v2796 = vadd.f32 %v2479, %v2744
      %v2797 = vadd.f32 %v2480, %v2747
      %v2798 = vadd.f32 %v2481, %v2752
      %v2799 = vadd.f32 %v2482, %v2755
      %v2800 = vadd.f32 %v2483, %v2760
      %v2801 = vadd.f32 %v2484, %v2763
      %v2802 = vld [vmem:[%s315 + $0x8] sm:$0xe]
      %v2803 = vld [vmem:[%s315 + $0xc] sm:$0xf]
      %v2804 = vld [vmem:[%s315 + $0x10] sm:$0xf]
      %v2805 = vld [vmem:[%s315 + $0x14] sm:$0xf]
      %v2806 = vld [vmem:[%s315 + $0x18] sm:$0xf]
      %v2807 = vld [vmem:[%s315 + $0x1c] sm:$0xf]
      %v2808 = vld [vmem:[%s315 + $0x20] sm:$0xf]
      %v2809 = vld [vmem:[%s315 + $0x24] sm:$0xf]
      %v2810 = vld [vmem:[%s315 + $0x28] sm:$0xf]
      %v2811 = vld [vmem:[%s315 + $0x2c] sm:$0xf]
      %v2812 = vld [vmem:[%s315 + $0x30] sm:$0xf]
      %v2813 = vld [vmem:[%s315 + $0x34] sm:$0xf]
      %v2814 = vld [vmem:[%s315 + $0x38] sm:$0xf]
      %v2815 = vld [vmem:[%s315 + $0x3c] sm:$0xf]
      %v2816 = vld [vmem:[%s315 + $0x40] sm:$0xf]
      %v2817 = vld [vmem:[%s315 + $0x44] sm:$0xf]
      %v2818 = vld [vmem:[%s315 + $0x48] sm:$0xf]
      %v2819 = vld [vmem:[%s315 + $0x4c] sm:$0xf]
      %v2820 = vld [vmem:[%s315 + $0x50] sm:$0xf]
      %v2821 = vld [vmem:[%s315 + $0x54] sm:$0xf]
      %v2822 = vld [vmem:[%s315 + $0x58] sm:$0xf]
      %v2823 = vld [vmem:[%s315 + $0x5c] sm:$0xf]
      %v2824 = vld [vmem:[%s315 + $0x60] sm:$0xf]
      %v2825 = vld [vmem:[%s315 + $0x64] sm:$0xf]
      %v2826 = vld [vmem:[%s315 + $0x68] sm:$0xf]
      %v2827 = vld [vmem:[%s315 + $0x6c] sm:$0xf]
      %v2828 = vld [vmem:[%s315 + $0x70] sm:$0xf]
      %v2829 = vld [vmem:[%s315 + $0x74] sm:$0xf]
      %v2830 = vld [vmem:[%s315 + $0x78] sm:$0xf]
      %v2831 = vld [vmem:[%s315 + $0x7c] sm:$0xf]
      %v2832 = vld [vmem:[%s315 + $0x80] sm:$0xf]
      %v2833 = vld [vmem:[%s315 + $0x84] sm:$0xf]
      %v2834 = vld [vmem:[%s315 + $0x88] sm:$0xf]
      %v2835 = vld [vmem:[%s315 + $0x8c] sm:$0xf]
      %v2836 = vld [vmem:[%s315 + $0x90] sm:$0xf]
      %v2837 = vld [vmem:[%s315 + $0x94] sm:$0xf]
      %v2838 = vld [vmem:[%s315 + $0x98] sm:$0x1]
      %s2839 = scalar_lea.vmem %s2, 24
      %v2840 = vld [vmem:[%s2839] sm:$0xf]
      %v2841 = vld [vmem:[%s2839 + $0x4] sm:$0xf]
      %v2879 = vunpack.c.l.b16 %v2802
      %v2880 = vunpack.c.l.b16 %v2803
      %v2881 = vunpack.c.l.b16 %v2804
      %v2882 = vunpack.c.l.b16 %v2805
      %v2883 = vunpack.c.l.b16 %v2806
      %v2884 = vunpack.c.l.b16 %v2807
      %v2885 = vunpack.c.l.b16 %v2808
      %v2886 = vunpack.c.l.b16 %v2809
      %v2887 = vunpack.c.l.b16 %v2810
      %v2888 = vunpack.c.l.b16 %v2811
      %v2889 = vunpack.c.l.b16 %v2812
      %v2890 = vunpack.c.l.b16 %v2813
      %v2891 = vunpack.c.l.b16 %v2814
      %v2892 = vunpack.c.l.b16 %v2815
      %v2893 = vunpack.c.l.b16 %v2816
      %v2894 = vunpack.c.l.b16 %v2817
      %v2895 = vunpack.c.l.b16 %v2818
      %v2896 = vunpack.c.l.b16 %v2819
      %v2897 = vunpack.c.l.b16 %v2820
      %v2898 = vunpack.c.l.b16 %v2821
      %v2899 = vunpack.c.l.b16 %v2822
      %v2900 = vunpack.c.l.b16 %v2823
      %v2901 = vunpack.c.l.b16 %v2824
      %v2902 = vunpack.c.l.b16 %v2825
      %v2903 = vunpack.c.l.b16 %v2826
      %v2904 = vunpack.c.l.b16 %v2827
      %v2905 = vunpack.c.l.b16 %v2828
      %v2906 = vunpack.c.l.b16 %v2829
      %v2907 = vunpack.c.l.b16 %v2830
      %v2908 = vunpack.c.l.b16 %v2831
      %v2909 = vunpack.c.l.b16 %v2832
      %v2910 = vunpack.c.l.b16 %v2833
      %v2911 = vunpack.c.l.b16 %v2834
      %v2912 = vunpack.c.l.b16 %v2835
      %v2913 = vunpack.c.l.b16 %v2836
      %v2914 = vunpack.c.l.b16 %v2837
      %v2915 = vunpack.c.l.b16 %v2838
      %v2916 = vpack.c.b16 %v2880, %v2879
      %v2917 = vpack.c.b16 %v2882, %v2881
      %v2918 = vpack.c.b16 %v2884, %v2883
      %v2919 = vpack.c.b16 %v2886, %v2885
      %v2920 = vpack.c.b16 %v2888, %v2887
      %v2921 = vpack.c.b16 %v2890, %v2889
      %v2922 = vpack.c.b16 %v2892, %v2891
      %v2923 = vpack.c.b16 %v2894, %v2893
      %v2924 = vpack.c.b16 %v2896, %v2895
      %v2925 = vpack.c.b16 %v2898, %v2897
      %v2926 = vpack.c.b16 %v2900, %v2899
      %v2927 = vpack.c.b16 %v2902, %v2901
      %v2928 = vpack.c.b16 %v2904, %v2903
      %v2929 = vpack.c.b16 %v2906, %v2905
      %v2930 = vpack.c.b16 %v2908, %v2907
      %v2931 = vpack.c.b16 %v2910, %v2909
      %v2932 = vpack.c.b16 %v2912, %v2911
      %v2933 = vpack.c.b16 %v2914, %v2913
      %v2934 = vpack.c.b16 %v2915, %v2915
      %v2935 = vrot.slane %v2916, 1
      %v2936 = vrot.slane %v2917, 1
      %v2937 = vsel %vm2174, %v2935, %v2936
      %v2938 = vrot.slane %v2918, 1
      %v2939 = vsel %vm2174, %v2936, %v2938
      %v2940 = vrot.slane %v2919, 1
      %v2941 = vsel %vm2174, %v2938, %v2940
      %v2942 = vrot.slane %v2920, 1
      %v2943 = vsel %vm2174, %v2940, %v2942
      %v2944 = vrot.slane %v2921, 1
      %v2945 = vsel %vm2174, %v2942, %v2944
      %v2946 = vrot.slane %v2922, 1
      %v2947 = vsel %vm2174, %v2944, %v2946
      %v2948 = vrot.slane %v2923, 1
      %v2949 = vsel %vm2174, %v2946, %v2948
      %v2950 = vrot.slane %v2924, 1
      %v2951 = vsel %vm2174, %v2948, %v2950
      %v2952 = vrot.slane %v2925, 1
      %v2953 = vsel %vm2174, %v2950, %v2952
      %v2954 = vrot.slane %v2926, 1
      %v2955 = vsel %vm2174, %v2952, %v2954
      %v2956 = vrot.slane %v2927, 1
      %v2957 = vsel %vm2174, %v2954, %v2956
      %v2958 = vrot.slane %v2928, 1
      %v2959 = vsel %vm2174, %v2956, %v2958
      %v2960 = vrot.slane %v2929, 1
      %v2961 = vsel %vm2174, %v2958, %v2960
      %v2962 = vrot.slane %v2930, 1
      %v2963 = vsel %vm2174, %v2960, %v2962
      %v2964 = vrot.slane %v2931, 1
      %v2965 = vsel %vm2174, %v2962, %v2964
      %v2966 = vrot.slane %v2932, 1
      %v2967 = vsel %vm2174, %v2964, %v2966
      %v2968 = vrot.slane %v2933, 1
      %v2969 = vsel %vm2174, %v2966, %v2968
      %v2970 = vrot.slane %v2934, 1
      %v2971 = vsel %vm2174, %v2968, %v2970
      %v2974 = vunpack.c.l.b16 %v2840
      %v2975 = vunpack.c.l.b16 %v2841
      %v2976 = vpack.c.b16 %v2975, %v2974
      %v2979 = vsel %vm499, %v2937, 0
      %v2982 = vsel %vm499, %v2939, 0
      %v2985 = vsel %vm499, %v2941, 0
      %v2988 = vsel %vm499, %v2943, 0
      %v2991 = vsel %vm499, %v2945, 0
      %v2994 = vsel %vm499, %v2947, 0
      %v2997 = vsel %vm499, %v2949, 0
      %v3000 = vsel %vm499, %v2951, 0
      %v3003 = vsel %vm499, %v2953, 0
      %v3006 = vsel %vm499, %v2955, 0
      %v3009 = vsel %vm499, %v2957, 0
      %v3012 = vsel %vm499, %v2959, 0
      %v3015 = vsel %vm499, %v2961, 0
      %v3018 = vsel %vm499, %v2963, 0
      %v3021 = vsel %vm499, %v2965, 0
      %v3024 = vsel %vm499, %v2967, 0
      %v3027 = vsel %vm499, %v2969, 0
      %v3030 = vsel %vm499, %v2971, 0
      %3032 = vmatprep.subr.bf16.mxu0 0
      %3033 = vmatpush1.bf16.msra.mxu0 %v2976
      %3034 = vmatprep.subr.bf16.mxu0 0
      %3035 = vmatpush1.bf16.msra.mxu0 0
      %3036 = vmatprep.subr.bf16.mxu0 0
      %3037 = vmatpush1.bf16.msra.mxu0 0
      %3038 = vmatprep.subr.bf16.mxu0 0
      %3039 = vmatpush1.bf16.msra.mxu0 0
      %3040 = vmatprep.subr.bf16.mxu0 0
      %3041 = vmatpush1.bf16.msra.mxu0 0
      %3042 = vmatprep.subr.bf16.mxu0 0
      %3043 = vmatpush1.bf16.msra.mxu0 0
      %3044 = vmatprep.subr.bf16.mxu0 0
      %3045 = vmatpush1.bf16.msra.mxu0 0
      %3046 = vmatprep.subr.bf16.mxu0 0
      %3047 = vmatpush1.bf16.msra.mxu0 0
      %3048 = vmatprep.subr.bf16.mxu0 0
      %3049 = vmatpush1.bf16.msra.mxu0 0
      %3050 = vmatprep.subr.bf16.mxu0 0
      %3051 = vmatpush1.bf16.msra.mxu0 0
      %3052 = vmatprep.subr.bf16.mxu0 0
      %3053 = vmatpush1.bf16.msra.mxu0 0
      %3054 = vmatprep.subr.bf16.mxu0 0
      %3055 = vmatpush1.bf16.msra.mxu0 0
      %3056 = vmatprep.subr.bf16.mxu0 0
      %3057 = vmatpush1.bf16.msra.mxu0 0
      %3058 = vmatprep.subr.bf16.mxu0 0
      %3059 = vmatpush1.bf16.msra.mxu0 0
      %3060 = vmatprep.subr.bf16.mxu0 0
      %3061 = vmatpush1.bf16.msra.mxu0 0
      %3062 = vmatprep.subr.bf16.mxu0 0
      %3063 = vmatpush1.bf16.msra.mxu0 0
      %3064 = vmatprep.mubr.bf16.mxu0 0
      %3065 = vmatmul.mubr.bf16.gmra.mrb[0].mxu0 %v2979
      %v3066 = vpop.f32.mrb[0].mxu0
      %v3067 = vadd.f32 0.0, %v3066
      %v3068 = vpop.f32.mrb[0].mxu0
      %v3069 = vpop.f32.mrb[0].mxu0
      %v3070 = vadd.f32 0.0, %v3069
      %v3071 = vpop.f32.mrb[0].mxu0
      %3072 = vmatprep.mubr.bf16.mxu0 0
      %3073 = vmatmul.mubr.bf16.gmra.mrb[0].mxu0 %v2982
      %v3074 = vpop.f32.mrb[0].mxu0
      %v3075 = vadd.f32 0.0, %v3074
      %v3076 = vpop.f32.mrb[0].mxu0
      %v3077 = vpop.f32.mrb[0].mxu0
      %v3078 = vadd.f32 0.0, %v3077
      %v3079 = vpop.f32.mrb[0].mxu0
      %3080 = vmatprep.mubr.bf16.mxu0 0
      %3081 = vmatmul.mubr.bf16.gmra.mrb[0].mxu0 %v2985
      %v3082 = vpop.f32.mrb[0].mxu0
      %v3083 = vadd.f32 0.0, %v3082
      %v3084 = vpop.f32.mrb[0].mxu0
      %v3085 = vpop.f32.mrb[0].mxu0
      %v3086 = vadd.f32 0.0, %v3085
      %v3087 = vpop.f32.mrb[0].mxu0
      %3088 = vmatprep.mubr.bf16.mxu0 0
      %3089 = vmatmul.mubr.bf16.gmra.mrb[0].mxu0 %v2988
      %v3090 = vpop.f32.mrb[0].mxu0
      %v3091 = vadd.f32 0.0, %v3090
      %v3092 = vpop.f32.mrb[0].mxu0
      %v3093 = vpop.f32.mrb[0].mxu0
      %v3094 = vadd.f32 0.0, %v3093
      %v3095 = vpop.f32.mrb[0].mxu0
      %3096 = vmatprep.mubr.bf16.mxu0 0
      %3097 = vmatmul.mubr.bf16.gmra.mrb[0].mxu0 %v2991
      %v3098 = vpop.f32.mrb[0].mxu0
      %v3099 = vadd.f32 0.0, %v3098
      %v3100 = vpop.f32.mrb[0].mxu0
      %v3101 = vpop.f32.mrb[0].mxu0
      %v3102 = vadd.f32 0.0, %v3101
      %v3103 = vpop.f32.mrb[0].mxu0
      %3104 = vmatprep.mubr.bf16.mxu0 0
      %3105 = vmatmul.mubr.bf16.gmra.mrb[0].mxu0 %v2994
      %v3106 = vpop.f32.mrb[0].mxu0
      %v3107 = vadd.f32 0.0, %v3106
      %v3108 = vpop.f32.mrb[0].mxu0
      %v3109 = vpop.f32.mrb[0].mxu0
      %v3110 = vadd.f32 0.0, %v3109
      %v3111 = vpop.f32.mrb[0].mxu0
      %3112 = vmatprep.mubr.bf16.mxu0 0
      %3113 = vmatmul.mubr.bf16.gmra.mrb[0].mxu0 %v2997
      %v3114 = vpop.f32.mrb[0].mxu0
      %v3115 = vadd.f32 0.0, %v3114
      %v3116 = vpop.f32.mrb[0].mxu0
      %v3117 = vpop.f32.mrb[0].mxu0
      %v3118 = vadd.f32 0.0, %v3117
      %v3119 = vpop.f32.mrb[0].mxu0
      %3120 = vmatprep.mubr.bf16.mxu0 0
      %3121 = vmatmul.mubr.bf16.gmra.mrb[0].mxu0 %v3000
      %v3122 = vpop.f32.mrb[0].mxu0
      %v3123 = vadd.f32 0.0, %v3122
      %v3124 = vpop.f32.mrb[0].mxu0
      %v3125 = vpop.f32.mrb[0].mxu0
      %v3126 = vadd.f32 0.0, %v3125
      %v3127 = vpop.f32.mrb[0].mxu0
      %3128 = vmatprep.mubr.bf16.mxu0 0
      %3129 = vmatmul.mubr.bf16.gmra.mrb[0].mxu0 %v3003
      %v3130 = vpop.f32.mrb[0].mxu0
      %v3131 = vadd.f32 0.0, %v3130
      %v3132 = vpop.f32.mrb[0].mxu0
      %v3133 = vpop.f32.mrb[0].mxu0
      %v3134 = vadd.f32 0.0, %v3133
      %v3135 = vpop.f32.mrb[0].mxu0
      %3136 = vmatprep.mubr.bf16.mxu0 0
      %3137 = vmatmul.mubr.bf16.gmra.mrb[0].mxu0 %v3006
      %v3138 = vpop.f32.mrb[0].mxu0
      %v3139 = vadd.f32 0.0, %v3138
      %v3140 = vpop.f32.mrb[0].mxu0
      %v3141 = vpop.f32.mrb[0].mxu0
      %v3142 = vadd.f32 0.0, %v3141
      %v3143 = vpop.f32.mrb[0].mxu0
      %3144 = vmatprep.mubr.bf16.mxu0 0
      %3145 = vmatmul.mubr.bf16.gmra.mrb[0].mxu0 %v3009
      %v3146 = vpop.f32.mrb[0].mxu0
      %v3147 = vadd.f32 0.0, %v3146
      %v3148 = vpop.f32.mrb[0].mxu0
      %v3149 = vpop.f32.mrb[0].mxu0
      %v3150 = vadd.f32 0.0, %v3149
      %v3151 = vpop.f32.mrb[0].mxu0
      %3152 = vmatprep.mubr.bf16.mxu0 0
      %3153 = vmatmul.mubr.bf16.gmra.mrb[0].mxu0 %v3012
      %v3154 = vpop.f32.mrb[0].mxu0
      %v3155 = vadd.f32 0.0, %v3154
      %v3156 = vpop.f32.mrb[0].mxu0
      %v3157 = vpop.f32.mrb[0].mxu0
      %v3158 = vadd.f32 0.0, %v3157
      %v3159 = vpop.f32.mrb[0].mxu0
      %3160 = vmatprep.mubr.bf16.mxu0 0
      %3161 = vmatmul.mubr.bf16.gmra.mrb[0].mxu0 %v3015
      %v3162 = vpop.f32.mrb[0].mxu0
      %v3163 = vadd.f32 0.0, %v3162
      %v3164 = vpop.f32.mrb[0].mxu0
      %v3165 = vpop.f32.mrb[0].mxu0
      %v3166 = vadd.f32 0.0, %v3165
      %v3167 = vpop.f32.mrb[0].mxu0
      %3168 = vmatprep.mubr.bf16.mxu0 0
      %3169 = vmatmul.mubr.bf16.gmra.mrb[0].mxu0 %v3018
      %v3170 = vpop.f32.mrb[0].mxu0
      %v3171 = vadd.f32 0.0, %v3170
      %v3172 = vpop.f32.mrb[0].mxu0
      %v3173 = vpop.f32.mrb[0].mxu0
      %v3174 = vadd.f32 0.0, %v3173
      %v3175 = vpop.f32.mrb[0].mxu0
      %3176 = vmatprep.mubr.bf16.mxu0 0
      %3177 = vmatmul.mubr.bf16.gmra.mrb[0].mxu0 %v3021
      %v3178 = vpop.f32.mrb[0].mxu0
      %v3179 = vadd.f32 0.0, %v3178
      %v3180 = vpop.f32.mrb[0].mxu0
      %v3181 = vpop.f32.mrb[0].mxu0
      %v3182 = vadd.f32 0.0, %v3181
      %v3183 = vpop.f32.mrb[0].mxu0
      %3184 = vmatprep.mubr.bf16.mxu0 0
      %3185 = vmatmul.mubr.bf16.gmra.mrb[0].mxu0 %v3024
      %v3186 = vpop.f32.mrb[0].mxu0
      %v3187 = vadd.f32 0.0, %v3186
      %v3188 = vpop.f32.mrb[0].mxu0
      %v3189 = vpop.f32.mrb[0].mxu0
      %v3190 = vadd.f32 0.0, %v3189
      %v3191 = vpop.f32.mrb[0].mxu0
      %3192 = vmatprep.mubr.bf16.mxu0 0
      %3193 = vmatmul.mubr.bf16.gmra.mrb[0].mxu0 %v3027
      %v3194 = vpop.f32.mrb[0].mxu0
      %v3195 = vadd.f32 0.0, %v3194
      %v3196 = vpop.f32.mrb[0].mxu0
      %v3197 = vpop.f32.mrb[0].mxu0
      %v3198 = vadd.f32 0.0, %v3197
      %v3199 = vpop.f32.mrb[0].mxu0
      %3200 = vmatprep.mubr.bf16.mxu0 0
      %3201 = vmatmul.mubr.bf16.gmra.mrb[0].mxu0 %v3030
      %v3202 = vpop.f32.mrb[0].mxu0
      %v3203 = vadd.f32 0.0, %v3202
      %v3204 = vpop.f32.mrb[0].mxu0
      %v3205 = vpop.f32.mrb[0].mxu0
      %v3206 = vadd.f32 0.0, %v3205
      %v3207 = vpop.f32.mrb[0].mxu0
      %3208 = vdwg.mxu0
      %v3209 = vadd.f32 %v2766, %v3067
      %v3210 = vadd.f32 %v2767, %v3070
      %v3211 = vadd.f32 %v2768, %v3075
      %v3212 = vadd.f32 %v2769, %v3078
      %v3213 = vadd.f32 %v2770, %v3083
      %v3214 = vadd.f32 %v2771, %v3086
      %v3215 = vadd.f32 %v2772, %v3091
      %v3216 = vadd.f32 %v2773, %v3094
      %v3217 = vadd.f32 %v2774, %v3099
      %v3218 = vadd.f32 %v2775, %v3102
      %v3219 = vadd.f32 %v2776, %v3107
      %v3220 = vadd.f32 %v2777, %v3110
      %v3221 = vadd.f32 %v2778, %v3115
      %v3222 = vadd.f32 %v2779, %v3118
      %v3223 = vadd.f32 %v2780, %v3123
      %v3224 = vadd.f32 %v2781, %v3126
      %v3225 = vadd.f32 %v2782, %v3131
      %v3226 = vadd.f32 %v2783, %v3134
      %v3227 = vadd.f32 %v2784, %v3139
      %v3228 = vadd.f32 %v2785, %v3142
      %v3229 = vadd.f32 %v2786, %v3147
      %v3230 = vadd.f32 %v2787, %v3150
      %v3231 = vadd.f32 %v2788, %v3155
      %v3232 = vadd.f32 %v2789, %v3158
      %v3233 = vadd.f32 %v2790, %v3163
      %v3234 = vadd.f32 %v2791, %v3166
      %v3235 = vadd.f32 %v2792, %v3171
      %v3236 = vadd.f32 %v2793, %v3174
      %v3237 = vadd.f32 %v2794, %v3179
      %v3238 = vadd.f32 %v2795, %v3182
      %v3239 = vadd.f32 %v2796, %v3187
      %v3240 = vadd.f32 %v2797, %v3190
      %v3241 = vadd.f32 %v2798, %v3195
      %v3242 = vadd.f32 %v2799, %v3198
      %v3243 = vadd.f32 %v2800, %v3203
      %v3244 = vadd.f32 %v2801, %v3206
      %v3245 = vld [vmem:[%s320 + $0x8] sm:$0xe]
      %v3246 = vld [vmem:[%s320 + $0xc] sm:$0xf]
      %v3247 = vld [vmem:[%s320 + $0x10] sm:$0xf]
      %v3248 = vld [vmem:[%s320 + $0x14] sm:$0xf]
      %v3249 = vld [vmem:[%s320 + $0x18] sm:$0xf]
      %v3250 = vld [vmem:[%s320 + $0x1c] sm:$0xf]
      %v3251 = vld [vmem:[%s320 + $0x20] sm:$0xf]
      %v3252 = vld [vmem:[%s320 + $0x24] sm:$0xf]
      %v3253 = vld [vmem:[%s320 + $0x28] sm:$0xf]
      %v3254 = vld [vmem:[%s320 + $0x2c] sm:$0xf]
      %v3255 = vld [vmem:[%s320 + $0x30] sm:$0xf]
      %v3256 = vld [vmem:[%s320 + $0x34] sm:$0xf]
      %v3257 = vld [vmem:[%s320 + $0x38] sm:$0xf]
      %v3258 = vld [vmem:[%s320 + $0x3c] sm:$0xf]
      %v3259 = vld [vmem:[%s320 + $0x40] sm:$0xf]
      %v3260 = vld [vmem:[%s320 + $0x44] sm:$0xf]
      %v3261 = vld [vmem:[%s320 + $0x48] sm:$0xf]
      %v3262 = vld [vmem:[%s320 + $0x4c] sm:$0xf]
      %v3263 = vld [vmem:[%s320 + $0x50] sm:$0xf]
      %v3264 = vld [vmem:[%s320 + $0x54] sm:$0xf]
      %v3265 = vld [vmem:[%s320 + $0x58] sm:$0xf]
      %v3266 = vld [vmem:[%s320 + $0x5c] sm:$0xf]
      %v3267 = vld [vmem:[%s320 + $0x60] sm:$0xf]
      %v3268 = vld [vmem:[%s320 + $0x64] sm:$0xf]
      %v3269 = vld [vmem:[%s320 + $0x68] sm:$0xf]
      %v3270 = vld [vmem:[%s320 + $0x6c] sm:$0xf]
      %v3271 = vld [vmem:[%s320 + $0x70] sm:$0xf]
      %v3272 = vld [vmem:[%s320 + $0x74] sm:$0xf]
      %v3273 = vld [vmem:[%s320 + $0x78] sm:$0xf]
      %v3274 = vld [vmem:[%s320 + $0x7c] sm:$0xf]
      %v3275 = vld [vmem:[%s320 + $0x80] sm:$0xf]
      %v3276 = vld [vmem:[%s320 + $0x84] sm:$0xf]
      %v3277 = vld [vmem:[%s320 + $0x88] sm:$0xf]
      %v3278 = vld [vmem:[%s320 + $0x8c] sm:$0xf]
      %v3279 = vld [vmem:[%s320 + $0x90] sm:$0xf]
      %v3280 = vld [vmem:[%s320 + $0x94] sm:$0xf]
      %v3281 = vld [vmem:[%s320 + $0x98] sm:$0x1]
      %s3282 = scalar_lea.vmem %s3, 24
      %v3283 = vld [vmem:[%s3282] sm:$0xf]
      %v3284 = vld [vmem:[%s3282 + $0x4] sm:$0xf]
      %v3322 = vunpack.c.l.b16 %v3245
      %v3323 = vunpack.c.l.b16 %v3246
      %v3324 = vunpack.c.l.b16 %v3247
      %v3325 = vunpack.c.l.b16 %v3248
      %v3326 = vunpack.c.l.b16 %v3249
      %v3327 = vunpack.c.l.b16 %v3250
      %v3328 = vunpack.c.l.b16 %v3251
      %v3329 = vunpack.c.l.b16 %v3252
      %v3330 = vunpack.c.l.b16 %v3253
      %v3331 = vunpack.c.l.b16 %v3254
      %v3332 = vunpack.c.l.b16 %v3255
      %v3333 = vunpack.c.l.b16 %v3256
      %v3334 = vunpack.c.l.b16 %v3257
      %v3335 = vunpack.c.l.b16 %v3258
      %v3336 = vunpack.c.l.b16 %v3259
      %v3337 = vunpack.c.l.b16 %v3260
      %v3338 = vunpack.c.l.b16 %v3261
      %v3339 = vunpack.c.l.b16 %v3262
      %v3340 = vunpack.c.l.b16 %v3263
      %v3341 = vunpack.c.l.b16 %v3264
      %v3342 = vunpack.c.l.b16 %v3265
      %v3343 = vunpack.c.l.b16 %v3266
      %v3344 = vunpack.c.l.b16 %v3267
      %v3345 = vunpack.c.l.b16 %v3268
      %v3346 = vunpack.c.l.b16 %v3269
      %v3347 = vunpack.c.l.b16 %v3270
      %v3348 = vunpack.c.l.b16 %v3271
      %v3349 = vunpack.c.l.b16 %v3272
      %v3350 = vunpack.c.l.b16 %v3273
      %v3351 = vunpack.c.l.b16 %v3274
      %v3352 = vunpack.c.l.b16 %v3275
      %v3353 = vunpack.c.l.b16 %v3276
      %v3354 = vunpack.c.l.b16 %v3277
      %v3355 = vunpack.c.l.b16 %v3278
      %v3356 = vunpack.c.l.b16 %v3279
      %v3357 = vunpack.c.l.b16 %v3280
      %v3358 = vunpack.c.l.b16 %v3281
      %v3359 = vpack.c.b16 %v3323, %v3322
      %v3360 = vpack.c.b16 %v3325, %v3324
      %v3361 = vpack.c.b16 %v3327, %v3326
      %v3362 = vpack.c.b16 %v3329, %v3328
      %v3363 = vpack.c.b16 %v3331, %v3330
      %v3364 = vpack.c.b16 %v3333, %v3332
      %v3365 = vpack.c.b16 %v3335, %v3334
      %v3366 = vpack.c.b16 %v3337, %v3336
      %v3367 = vpack.c.b16 %v3339, %v3338
      %v3368 = vpack.c.b16 %v3341, %v3340
      %v3369 = vpack.c.b16 %v3343, %v3342
      %v3370 = vpack.c.b16 %v3345, %v3344
      %v3371 = vpack.c.b16 %v3347, %v3346
      %v3372 = vpack.c.b16 %v3349, %v3348
      %v3373 = vpack.c.b16 %v3351, %v3350
      %v3374 = vpack.c.b16 %v3353, %v3352
      %v3375 = vpack.c.b16 %v3355, %v3354
      %v3376 = vpack.c.b16 %v3357, %v3356
      %v3377 = vpack.c.b16 %v3358, %v3358
      %v3378 = vrot.slane %v3359, 1
      %v3379 = vrot.slane %v3360, 1
      %v3380 = vsel %vm2174, %v3378, %v3379
      %v3381 = vrot.slane %v3361, 1
      %v3382 = vsel %vm2174, %v3379, %v3381
      %v3383 = vrot.slane %v3362, 1
      %v3384 = vsel %vm2174, %v3381, %v3383
      %v3385 = vrot.slane %v3363, 1
      %v3386 = vsel %vm2174, %v3383, %v3385
      %v3387 = vrot.slane %v3364, 1
      %v3388 = vsel %vm2174, %v3385, %v3387
      %v3389 = vrot.slane %v3365, 1
      %v3390 = vsel %vm2174, %v3387, %v3389
      %v3391 = vrot.slane %v3366, 1
      %v3392 = vsel %vm2174, %v3389, %v3391
      %v3393 = vrot.slane %v3367, 1
      %v3394 = vsel %vm2174, %v3391, %v3393
      %v3395 = vrot.slane %v3368, 1
      %v3396 = vsel %vm2174, %v3393, %v3395
      %v3397 = vrot.slane %v3369, 1
      %v3398 = vsel %vm2174, %v3395, %v3397
      %v3399 = vrot.slane %v3370, 1
      %v3400 = vsel %vm2174, %v3397, %v3399
      %v3401 = vrot.slane %v3371, 1
      %v3402 = vsel %vm2174, %v3399, %v3401
      %v3403 = vrot.slane %v3372, 1
      %v3404 = vsel %vm2174, %v3401, %v3403
      %v3405 = vrot.slane %v3373, 1
      %v3406 = vsel %vm2174, %v3403, %v3405
      %v3407 = vrot.slane %v3374, 1
      %v3408 = vsel %vm2174, %v3405, %v3407
      %v3409 = vrot.slane %v3375, 1
      %v3410 = vsel %vm2174, %v3407, %v3409
      %v3411 = vrot.slane %v3376, 1
      %v3412 = vsel %vm2174, %v3409, %v3411
      %v3413 = vrot.slane %v3377, 1
      %v3414 = vsel %vm2174, %v3411, %v3413
      %v3417 = vunpack.c.l.b16 %v3283
      %v3418 = vunpack.c.l.b16 %v3284
      %v3419 = vpack.c.b16 %v3418, %v3417
      %v3422 = vsel %vm499, %v3380, 0
      %v3425 = vsel %vm499, %v3382, 0
      %v3428 = vsel %vm499, %v3384, 0
      %v3431 = vsel %vm499, %v3386, 0
      %v3434 = vsel %vm499, %v3388, 0
      %v3437 = vsel %vm499, %v3390, 0
      %v3440 = vsel %vm499, %v3392, 0
      %v3443 = vsel %vm499, %v3394, 0
      %v3446 = vsel %vm499, %v3396, 0
      %v3449 = vsel %vm499, %v3398, 0
      %v3452 = vsel %vm499, %v3400, 0
      %v3455 = vsel %vm499, %v3402, 0
      %v3458 = vsel %vm499, %v3404, 0
      %v3461 = vsel %vm499, %v3406, 0
      %v3464 = vsel %vm499, %v3408, 0
      %v3467 = vsel %vm499, %v3410, 0
      %v3470 = vsel %vm499, %v3412, 0
      %v3473 = vsel %vm499, %v3414, 0
      %3475 = vmatprep.subr.bf16.mxu0 0
      %3476 = vmatpush1.bf16.msra.mxu0 %v3419
      %3477 = vmatprep.subr.bf16.mxu0 0
      %3478 = vmatpush1.bf16.msra.mxu0 0
      %3479 = vmatprep.subr.bf16.mxu0 0
      %3480 = vmatpush1.bf16.msra.mxu0 0
      %3481 = vmatprep.subr.bf16.mxu0 0
      %3482 = vmatpush1.bf16.msra.mxu0 0
      %3483 = vmatprep.subr.bf16.mxu0 0
      %3484 = vmatpush1.bf16.msra.mxu0 0
      %3485 = vmatprep.subr.bf16.mxu0 0
      %3486 = vmatpush1.bf16.msra.mxu0 0
      %3487 = vmatprep.subr.bf16.mxu0 0
      %3488 = vmatpush1.bf16.msra.mxu0 0
      %3489 = vmatprep.subr.bf16.mxu0 0
      %3490 = vmatpush1.bf16.msra.mxu0 0
      %3491 = vmatprep.subr.bf16.mxu0 0
      %3492 = vmatpush1.bf16.msra.mxu0 0
      %3493 = vmatprep.subr.bf16.mxu0 0
      %3494 = vmatpush1.bf16.msra.mxu0 0
      %3495 = vmatprep.subr.bf16.mxu0 0
      %3496 = vmatpush1.bf16.msra.mxu0 0
      %3497 = vmatprep.subr.bf16.mxu0 0
      %3498 = vmatpush1.bf16.msra.mxu0 0
      %3499 = vmatprep.subr.bf16.mxu0 0
      %3500 = vmatpush1.bf16.msra.mxu0 0
      %3501 = vmatprep.subr.bf16.mxu0 0
      %3502 = vmatpush1.bf16.msra.mxu0 0
      %3503 = vmatprep.subr.bf16.mxu0 0
      %3504 = vmatpush1.bf16.msra.mxu0 0
      %3505 = vmatprep.subr.bf16.mxu0 0
      %3506 = vmatpush1.bf16.msra.mxu0 0
      %3507 = vmatprep.mubr.bf16.mxu0 0
      %3508 = vmatmul.mubr.bf16.gmra.mrb[0].mxu0 %v3422
      %v3509 = vpop.f32.mrb[0].mxu0
      %v3510 = vadd.f32 0.0, %v3509
      %v3511 = vpop.f32.mrb[0].mxu0
      %v3512 = vpop.f32.mrb[0].mxu0
      %v3513 = vadd.f32 0.0, %v3512
      %v3514 = vpop.f32.mrb[0].mxu0
      %3515 = vmatprep.mubr.bf16.mxu0 0
      %3516 = vmatmul.mubr.bf16.gmra.mrb[0].mxu0 %v3425
      %v3517 = vpop.f32.mrb[0].mxu0
      %v3518 = vadd.f32 0.0, %v3517
      %v3519 = vpop.f32.mrb[0].mxu0
      %v3520 = vpop.f32.mrb[0].mxu0
      %v3521 = vadd.f32 0.0, %v3520
      %v3522 = vpop.f32.mrb[0].mxu0
      %3523 = vmatprep.mubr.bf16.mxu0 0
      %3524 = vmatmul.mubr.bf16.gmra.mrb[0].mxu0 %v3428
      %v3525 = vpop.f32.mrb[0].mxu0
      %v3526 = vadd.f32 0.0, %v3525
      %v3527 = vpop.f32.mrb[0].mxu0
      %v3528 = vpop.f32.mrb[0].mxu0
      %v3529 = vadd.f32 0.0, %v3528
      %v3530 = vpop.f32.mrb[0].mxu0
      %3531 = vmatprep.mubr.bf16.mxu0 0
      %3532 = vmatmul.mubr.bf16.gmra.mrb[0].mxu0 %v3431
      %v3533 = vpop.f32.mrb[0].mxu0
      %v3534 = vadd.f32 0.0, %v3533
      %v3535 = vpop.f32.mrb[0].mxu0
      %v3536 = vpop.f32.mrb[0].mxu0
      %v3537 = vadd.f32 0.0, %v3536
      %v3538 = vpop.f32.mrb[0].mxu0
      %3539 = vmatprep.mubr.bf16.mxu0 0
      %3540 = vmatmul.mubr.bf16.gmra.mrb[0].mxu0 %v3434
      %v3541 = vpop.f32.mrb[0].mxu0
      %v3542 = vadd.f32 0.0, %v3541
      %v3543 = vpop.f32.mrb[0].mxu0
      %v3544 = vpop.f32.mrb[0].mxu0
      %v3545 = vadd.f32 0.0, %v3544
      %v3546 = vpop.f32.mrb[0].mxu0
      %3547 = vmatprep.mubr.bf16.mxu0 0
      %3548 = vmatmul.mubr.bf16.gmra.mrb[0].mxu0 %v3437
      %v3549 = vpop.f32.mrb[0].mxu0
      %v3550 = vadd.f32 0.0, %v3549
      %v3551 = vpop.f32.mrb[0].mxu0
      %v3552 = vpop.f32.mrb[0].mxu0
      %v3553 = vadd.f32 0.0, %v3552
      %v3554 = vpop.f32.mrb[0].mxu0
      %3555 = vmatprep.mubr.bf16.mxu0 0
      %3556 = vmatmul.mubr.bf16.gmra.mrb[0].mxu0 %v3440
      %v3557 = vpop.f32.mrb[0].mxu0
      %v3558 = vadd.f32 0.0, %v3557
      %v3559 = vpop.f32.mrb[0].mxu0
      %v3560 = vpop.f32.mrb[0].mxu0
      %v3561 = vadd.f32 0.0, %v3560
      %v3562 = vpop.f32.mrb[0].mxu0
      %3563 = vmatprep.mubr.bf16.mxu0 0
      %3564 = vmatmul.mubr.bf16.gmra.mrb[0].mxu0 %v3443
      %v3565 = vpop.f32.mrb[0].mxu0
      %v3566 = vadd.f32 0.0, %v3565
      %v3567 = vpop.f32.mrb[0].mxu0
      %v3568 = vpop.f32.mrb[0].mxu0
      %v3569 = vadd.f32 0.0, %v3568
      %v3570 = vpop.f32.mrb[0].mxu0
      %3571 = vmatprep.mubr.bf16.mxu0 0
      %3572 = vmatmul.mubr.bf16.gmra.mrb[0].mxu0 %v3446
      %v3573 = vpop.f32.mrb[0].mxu0
      %v3574 = vadd.f32 0.0, %v3573
      %v3575 = vpop.f32.mrb[0].mxu0
      %v3576 = vpop.f32.mrb[0].mxu0
      %v3577 = vadd.f32 0.0, %v3576
      %v3578 = vpop.f32.mrb[0].mxu0
      %3579 = vmatprep.mubr.bf16.mxu0 0
      %3580 = vmatmul.mubr.bf16.gmra.mrb[0].mxu0 %v3449
      %v3581 = vpop.f32.mrb[0].mxu0
      %v3582 = vadd.f32 0.0, %v3581
      %v3583 = vpop.f32.mrb[0].mxu0
      %v3584 = vpop.f32.mrb[0].mxu0
      %v3585 = vadd.f32 0.0, %v3584
      %v3586 = vpop.f32.mrb[0].mxu0
      %3587 = vmatprep.mubr.bf16.mxu0 0
      %3588 = vmatmul.mubr.bf16.gmra.mrb[0].mxu0 %v3452
      %v3589 = vpop.f32.mrb[0].mxu0
      %v3590 = vadd.f32 0.0, %v3589
      %v3591 = vpop.f32.mrb[0].mxu0
      %v3592 = vpop.f32.mrb[0].mxu0
      %v3593 = vadd.f32 0.0, %v3592
      %v3594 = vpop.f32.mrb[0].mxu0
      %3595 = vmatprep.mubr.bf16.mxu0 0
      %3596 = vmatmul.mubr.bf16.gmra.mrb[0].mxu0 %v3455
      %v3597 = vpop.f32.mrb[0].mxu0
      %v3598 = vadd.f32 0.0, %v3597
      %v3599 = vpop.f32.mrb[0].mxu0
      %v3600 = vpop.f32.mrb[0].mxu0
      %v3601 = vadd.f32 0.0, %v3600
      %v3602 = vpop.f32.mrb[0].mxu0
      %3603 = vmatprep.mubr.bf16.mxu0 0
      %3604 = vmatmul.mubr.bf16.gmra.mrb[0].mxu0 %v3458
      %v3605 = vpop.f32.mrb[0].mxu0
      %v3606 = vadd.f32 0.0, %v3605
      %v3607 = vpop.f32.mrb[0].mxu0
      %v3608 = vpop.f32.mrb[0].mxu0
      %v3609 = vadd.f32 0.0, %v3608
      %v3610 = vpop.f32.mrb[0].mxu0
      %3611 = vmatprep.mubr.bf16.mxu0 0
      %3612 = vmatmul.mubr.bf16.gmra.mrb[0].mxu0 %v3461
      %v3613 = vpop.f32.mrb[0].mxu0
      %v3614 = vadd.f32 0.0, %v3613
      %v3615 = vpop.f32.mrb[0].mxu0
      %v3616 = vpop.f32.mrb[0].mxu0
      %v3617 = vadd.f32 0.0, %v3616
      %v3618 = vpop.f32.mrb[0].mxu0
      %3619 = vmatprep.mubr.bf16.mxu0 0
      %3620 = vmatmul.mubr.bf16.gmra.mrb[0].mxu0 %v3464
      %v3621 = vpop.f32.mrb[0].mxu0
      %v3622 = vadd.f32 0.0, %v3621
      %v3623 = vpop.f32.mrb[0].mxu0
      %v3624 = vpop.f32.mrb[0].mxu0
      %v3625 = vadd.f32 0.0, %v3624
      %v3626 = vpop.f32.mrb[0].mxu0
      %3627 = vmatprep.mubr.bf16.mxu0 0
      %3628 = vmatmul.mubr.bf16.gmra.mrb[0].mxu0 %v3467
      %v3629 = vpop.f32.mrb[0].mxu0
      %v3630 = vadd.f32 0.0, %v3629
      %v3631 = vpop.f32.mrb[0].mxu0
      %v3632 = vpop.f32.mrb[0].mxu0
      %v3633 = vadd.f32 0.0, %v3632
      %v3634 = vpop.f32.mrb[0].mxu0
      %3635 = vmatprep.mubr.bf16.mxu0 0
      %3636 = vmatmul.mubr.bf16.gmra.mrb[0].mxu0 %v3470
      %v3637 = vpop.f32.mrb[0].mxu0
      %v3638 = vadd.f32 0.0, %v3637
      %v3639 = vpop.f32.mrb[0].mxu0
      %v3640 = vpop.f32.mrb[0].mxu0
      %v3641 = vadd.f32 0.0, %v3640
      %v3642 = vpop.f32.mrb[0].mxu0
      %3643 = vmatprep.mubr.bf16.mxu0 0
      %3644 = vmatmul.mubr.bf16.gmra.mrb[0].mxu0 %v3473
      %v3645 = vpop.f32.mrb[0].mxu0
      %v3646 = vadd.f32 0.0, %v3645
      %v3647 = vpop.f32.mrb[0].mxu0
      %v3648 = vpop.f32.mrb[0].mxu0
      %v3649 = vadd.f32 0.0, %v3648
      %v3650 = vpop.f32.mrb[0].mxu0
      %3651 = vdwg.mxu0
      %v3652 = vadd.f32 %v3209, %v3510
      %v3653 = vadd.f32 %v3210, %v3513
      %v3654 = vadd.f32 %v3211, %v3518
      %v3655 = vadd.f32 %v3212, %v3521
      %v3656 = vadd.f32 %v3213, %v3526
      %v3657 = vadd.f32 %v3214, %v3529
      %v3658 = vadd.f32 %v3215, %v3534
      %v3659 = vadd.f32 %v3216, %v3537
      %v3660 = vadd.f32 %v3217, %v3542
      %v3661 = vadd.f32 %v3218, %v3545
      %v3662 = vadd.f32 %v3219, %v3550
      %v3663 = vadd.f32 %v3220, %v3553
      %v3664 = vadd.f32 %v3221, %v3558
      %v3665 = vadd.f32 %v3222, %v3561
      %v3666 = vadd.f32 %v3223, %v3566
      %v3667 = vadd.f32 %v3224, %v3569
      %v3668 = vadd.f32 %v3225, %v3574
      %v3669 = vadd.f32 %v3226, %v3577
      %v3670 = vadd.f32 %v3227, %v3582
      %v3671 = vadd.f32 %v3228, %v3585
      %v3672 = vadd.f32 %v3229, %v3590
      %v3673 = vadd.f32 %v3230, %v3593
      %v3674 = vadd.f32 %v3231, %v3598
      %v3675 = vadd.f32 %v3232, %v3601
      %v3676 = vadd.f32 %v3233, %v3606
      %v3677 = vadd.f32 %v3234, %v3609
      %v3678 = vadd.f32 %v3235, %v3614
      %v3679 = vadd.f32 %v3236, %v3617
      %v3680 = vadd.f32 %v3237, %v3622
      %v3681 = vadd.f32 %v3238, %v3625
      %v3682 = vadd.f32 %v3239, %v3630
      %v3683 = vadd.f32 %v3240, %v3633
      %v3684 = vadd.f32 %v3241, %v3638
      %v3685 = vadd.f32 %v3242, %v3641
      %v3686 = vadd.f32 %v3243, %v3646
      %v3687 = vadd.f32 %v3244, %v3649
      %v3688 = vld [vmem:[%s315 + $0x98] sm:$0x3]
      %s3689 = scalar_lea.vmem %s2, 32
      %v3690 = vld [vmem:[%s3689] sm:$0xf]
      %v3691 = vld [vmem:[%s3689 + $0x4] sm:$0xf]
      %v3693 = vunpack.c.l.b16 %v3688
      %v3694 = vpack.c.b16 %v3693, %v3693
      %vm3695 = vsmask.f32 6400
      %v3697 = vshrl.u32 %v2916, 16
      %v3699 = vrot.slane %v3697, 1
      %v3700 = vshll.u32 %v2916, 16
      %v3702 = vrot.slane %v3700, 2
      %v3703 = vor.u32 %v3699, %v3702
      %v3705 = vshrl.u32 %v2917, 16
      %v3707 = vrot.slane %v3705, 1
      %v3708 = vshll.u32 %v2917, 16
      %v3710 = vrot.slane %v3708, 2
      %v3711 = vor.u32 %v3707, %v3710
      %v3712 = vsel %vm3695, %v3703, %v3711
      %v3714 = vshrl.u32 %v2918, 16
      %v3716 = vrot.slane %v3714, 1
      %v3717 = vshll.u32 %v2918, 16
      %v3719 = vrot.slane %v3717, 2
      %v3720 = vor.u32 %v3716, %v3719
      %v3721 = vsel %vm3695, %v3711, %v3720
      %v3723 = vshrl.u32 %v2919, 16
      %v3725 = vrot.slane %v3723, 1
      %v3726 = vshll.u32 %v2919, 16
      %v3728 = vrot.slane %v3726, 2
      %v3729 = vor.u32 %v3725, %v3728
      %v3730 = vsel %vm3695, %v3720, %v3729
      %v3732 = vshrl.u32 %v2920, 16
      %v3734 = vrot.slane %v3732, 1
      %v3735 = vshll.u32 %v2920, 16
      %v3737 = vrot.slane %v3735, 2
      %v3738 = vor.u32 %v3734, %v3737
      %v3739 = vsel %vm3695, %v3729, %v3738
      %v3741 = vshrl.u32 %v2921, 16
      %v3743 = vrot.slane %v3741, 1
      %v3744 = vshll.u32 %v2921, 16
      %v3746 = vrot.slane %v3744, 2
      %v3747 = vor.u32 %v3743, %v3746
      %v3748 = vsel %vm3695, %v3738, %v3747
      %v3750 = vshrl.u32 %v2922, 16
      %v3752 = vrot.slane %v3750, 1
      %v3753 = vshll.u32 %v2922, 16
      %v3755 = vrot.slane %v3753, 2
      %v3756 = vor.u32 %v3752, %v3755
      %v3757 = vsel %vm3695, %v3747, %v3756
      %v3759 = vshrl.u32 %v2923, 16
      %v3761 = vrot.slane %v3759, 1
      %v3762 = vshll.u32 %v2923, 16
      %v3764 = vrot.slane %v3762, 2
      %v3765 = vor.u32 %v3761, %v3764
      %v3766 = vsel %vm3695, %v3756, %v3765
      %v3768 = vshrl.u32 %v2924, 16
      %v3770 = vrot.slane %v3768, 1
      %v3771 = vshll.u32 %v2924, 16
      %v3773 = vrot.slane %v3771, 2
      %v3774 = vor.u32 %v3770, %v3773
      %v3775 = vsel %vm3695, %v3765, %v3774
      %v3777 = vshrl.u32 %v2925, 16
      %v3779 = vrot.slane %v3777, 1
      %v3780 = vshll.u32 %v2925, 16
      %v3782 = vrot.slane %v3780, 2
      %v3783 = vor.u32 %v3779, %v3782
      %v3784 = vsel %vm3695, %v3774, %v3783
      %v3786 = vshrl.u32 %v2926, 16
      %v3788 = vrot.slane %v3786, 1
      %v3789 = vshll.u32 %v2926, 16
      %v3791 = vrot.slane %v3789, 2
      %v3792 = vor.u32 %v3788, %v3791
      %v3793 = vsel %vm3695, %v3783, %v3792
      %v3795 = vshrl.u32 %v2927, 16
      %v3797 = vrot.slane %v3795, 1
      %v3798 = vshll.u32 %v2927, 16
      %v3800 = vrot.slane %v3798, 2
      %v3801 = vor.u32 %v3797, %v3800
      %v3802 = vsel %vm3695, %v3792, %v3801
      %v3804 = vshrl.u32 %v2928, 16
      %v3806 = vrot.slane %v3804, 1
      %v3807 = vshll.u32 %v2928, 16
      %v3809 = vrot.slane %v3807, 2
      %v3810 = vor.u32 %v3806, %v3809
      %v3811 = vsel %vm3695, %v3801, %v3810
      %v3813 = vshrl.u32 %v2929, 16
      %v3815 = vrot.slane %v3813, 1
      %v3816 = vshll.u32 %v2929, 16
      %v3818 = vrot.slane %v3816, 2
      %v3819 = vor.u32 %v3815, %v3818
      %v3820 = vsel %vm3695, %v3810, %v3819
      %v3822 = vshrl.u32 %v2930, 16
      %v3824 = vrot.slane %v3822, 1
      %v3825 = vshll.u32 %v2930, 16
      %v3827 = vrot.slane %v3825, 2
      %v3828 = vor.u32 %v3824, %v3827
      %v3829 = vsel %vm3695, %v3819, %v3828
      %v3831 = vshrl.u32 %v2931, 16
      %v3833 = vrot.slane %v3831, 1
      %v3834 = vshll.u32 %v2931, 16
      %v3836 = vrot.slane %v3834, 2
      %v3837 = vor.u32 %v3833, %v3836
      %v3838 = vsel %vm3695, %v3828, %v3837
      %v3840 = vshrl.u32 %v2932, 16
      %v3842 = vrot.slane %v3840, 1
      %v3843 = vshll.u32 %v2932, 16
      %v3845 = vrot.slane %v3843, 2
      %v3846 = vor.u32 %v3842, %v3845
      %v3847 = vsel %vm3695, %v3837, %v3846
      %v3849 = vshrl.u32 %v2933, 16
      %v3851 = vrot.slane %v3849, 1
      %v3852 = vshll.u32 %v2933, 16
      %v3854 = vrot.slane %v3852, 2
      %v3855 = vor.u32 %v3851, %v3854
      %v3856 = vsel %vm3695, %v3846, %v3855
      %v3858 = vshrl.u32 %v3694, 16
      %v3860 = vrot.slane %v3858, 1
      %v3861 = vshll.u32 %v3694, 16
      %v3863 = vrot.slane %v3861, 2
      %v3864 = vor.u32 %v3860, %v3863
      %v3865 = vsel %vm3695, %v3855, %v3864
      %v3868 = vunpack.c.l.b16 %v3690
      %v3869 = vunpack.c.l.b16 %v3691
      %v3870 = vpack.c.b16 %v3869, %v3868
      %v3873 = vsel %vm499, %v3712, 0
      %v3876 = vsel %vm499, %v3721, 0
      %v3879 = vsel %vm499, %v3730, 0
      %v3882 = vsel %vm499, %v3739, 0
      %v3885 = vsel %vm499, %v3748, 0
      %v3888 = vsel %vm499, %v3757, 0
      %v3891 = vsel %vm499, %v3766, 0
      %v3894 = vsel %vm499, %v3775, 0
      %v3897 = vsel %vm499, %v3784, 0
      %v3900 = vsel %vm499, %v3793, 0
      %v3903 = vsel %vm499, %v3802, 0
      %v3906 = vsel %vm499, %v3811, 0
      %v3909 = vsel %vm499, %v3820, 0
      %v3912 = vsel %vm499, %v3829, 0
      %v3915 = vsel %vm499, %v3838, 0
      %v3918 = vsel %vm499, %v3847, 0
      %v3921 = vsel %vm499, %v3856, 0
      %v3924 = vsel %vm499, %v3865, 0
      %3926 = vmatprep.subr.bf16.mxu0 0
      %3927 = vmatpush1.bf16.msra.mxu0 %v3870
      %3928 = vmatprep.subr.bf16.mxu0 0
      %3929 = vmatpush1.bf16.msra.mxu0 0
      %3930 = vmatprep.subr.bf16.mxu0 0
      %3931 = vmatpush1.bf16.msra.mxu0 0
      %3932 = vmatprep.subr.bf16.mxu0 0
      %3933 = vmatpush1.bf16.msra.mxu0 0
      %3934 = vmatprep.subr.bf16.mxu0 0
      %3935 = vmatpush1.bf16.msra.mxu0 0
      %3936 = vmatprep.subr.bf16.mxu0 0
      %3937 = vmatpush1.bf16.msra.mxu0 0
      %3938 = vmatprep.subr.bf16.mxu0 0
      %3939 = vmatpush1.bf16.msra.mxu0 0
      %3940 = vmatprep.subr.bf16.mxu0 0
      %3941 = vmatpush1.bf16.msra.mxu0 0
      %3942 = vmatprep.subr.bf16.mxu0 0
      %3943 = vmatpush1.bf16.msra.mxu0 0
      %3944 = vmatprep.subr.bf16.mxu0 0
      %3945 = vmatpush1.bf16.msra.mxu0 0
      %3946 = vmatprep.subr.bf16.mxu0 0
      %3947 = vmatpush1.bf16.msra.mxu0 0
      %3948 = vmatprep.subr.bf16.mxu0 0
      %3949 = vmatpush1.bf16.msra.mxu0 0
      %3950 = vmatprep.subr.bf16.mxu0 0
      %3951 = vmatpush1.bf16.msra.mxu0 0
      %3952 = vmatprep.subr.bf16.mxu0 0
      %3953 = vmatpush1.bf16.msra.mxu0 0
      %3954 = vmatprep.subr.bf16.mxu0 0
      %3955 = vmatpush1.bf16.msra.mxu0 0
      %3956 = vmatprep.subr.bf16.mxu0 0
      %3957 = vmatpush1.bf16.msra.mxu0 0
      %3958 = vmatprep.mubr.bf16.mxu0 0
      %3959 = vmatmul.mubr.bf16.gmra.mrb[0].mxu0 %v3873
      %v3960 = vpop.f32.mrb[0].mxu0
      %v3961 = vadd.f32 0.0, %v3960
      %v3962 = vpop.f32.mrb[0].mxu0
      %v3963 = vpop.f32.mrb[0].mxu0
      %v3964 = vadd.f32 0.0, %v3963
      %v3965 = vpop.f32.mrb[0].mxu0
      %3966 = vmatprep.mubr.bf16.mxu0 0
      %3967 = vmatmul.mubr.bf16.gmra.mrb[0].mxu0 %v3876
      %v3968 = vpop.f32.mrb[0].mxu0
      %v3969 = vadd.f32 0.0, %v3968
      %v3970 = vpop.f32.mrb[0].mxu0
      %v3971 = vpop.f32.mrb[0].mxu0
      %v3972 = vadd.f32 0.0, %v3971
      %v3973 = vpop.f32.mrb[0].mxu0
      %3974 = vmatprep.mubr.bf16.mxu0 0
      %3975 = vmatmul.mubr.bf16.gmra.mrb[0].mxu0 %v3879
      %v3976 = vpop.f32.mrb[0].mxu0
      %v3977 = vadd.f32 0.0, %v3976
      %v3978 = vpop.f32.mrb[0].mxu0
      %v3979 = vpop.f32.mrb[0].mxu0
      %v3980 = vadd.f32 0.0, %v3979
      %v3981 = vpop.f32.mrb[0].mxu0
      %3982 = vmatprep.mubr.bf16.mxu0 0
      %3983 = vmatmul.mubr.bf16.gmra.mrb[0].mxu0 %v3882
      %v3984 = vpop.f32.mrb[0].mxu0
      %v3985 = vadd.f32 0.0, %v3984
      %v3986 = vpop.f32.mrb[0].mxu0
      %v3987 = vpop.f32.mrb[0].mxu0
      %v3988 = vadd.f32 0.0, %v3987
      %v3989 = vpop.f32.mrb[0].mxu0
      %3990 = vmatprep.mubr.bf16.mxu0 0
      %3991 = vmatmul.mubr.bf16.gmra.mrb[0].mxu0 %v3885
      %v3992 = vpop.f32.mrb[0].mxu0
      %v3993 = vadd.f32 0.0, %v3992
      %v3994 = vpop.f32.mrb[0].mxu0
      %v3995 = vpop.f32.mrb[0].mxu0
      %v3996 = vadd.f32 0.0, %v3995
      %v3997 = vpop.f32.mrb[0].mxu0
      %3998 = vmatprep.mubr.bf16.mxu0 0
      %3999 = vmatmul.mubr.bf16.gmra.mrb[0].mxu0 %v3888
      %v4000 = vpop.f32.mrb[0].mxu0
      %v4001 = vadd.f32 0.0, %v4000
      %v4002 = vpop.f32.mrb[0].mxu0
      %v4003 = vpop.f32.mrb[0].mxu0
      %v4004 = vadd.f32 0.0, %v4003
      %v4005 = vpop.f32.mrb[0].mxu0
      %4006 = vmatprep.mubr.bf16.mxu0 0
      %4007 = vmatmul.mubr.bf16.gmra.mrb[0].mxu0 %v3891
      %v4008 = vpop.f32.mrb[0].mxu0
      %v4009 = vadd.f32 0.0, %v4008
      %v4010 = vpop.f32.mrb[0].mxu0
      %v4011 = vpop.f32.mrb[0].mxu0
      %v4012 = vadd.f32 0.0, %v4011
      %v4013 = vpop.f32.mrb[0].mxu0
      %4014 = vmatprep.mubr.bf16.mxu0 0
      %4015 = vmatmul.mubr.bf16.gmra.mrb[0].mxu0 %v3894
      %v4016 = vpop.f32.mrb[0].mxu0
      %v4017 = vadd.f32 0.0, %v4016
      %v4018 = vpop.f32.mrb[0].mxu0
      %v4019 = vpop.f32.mrb[0].mxu0
      %v4020 = vadd.f32 0.0, %v4019
      %v4021 = vpop.f32.mrb[0].mxu0
      %4022 = vmatprep.mubr.bf16.mxu0 0
      %4023 = vmatmul.mubr.bf16.gmra.mrb[0].mxu0 %v3897
      %v4024 = vpop.f32.mrb[0].mxu0
      %v4025 = vadd.f32 0.0, %v4024
      %v4026 = vpop.f32.mrb[0].mxu0
      %v4027 = vpop.f32.mrb[0].mxu0
      %v4028 = vadd.f32 0.0, %v4027
      %v4029 = vpop.f32.mrb[0].mxu0
      %4030 = vmatprep.mubr.bf16.mxu0 0
      %4031 = vmatmul.mubr.bf16.gmra.mrb[0].mxu0 %v3900
      %v4032 = vpop.f32.mrb[0].mxu0
      %v4033 = vadd.f32 0.0, %v4032
      %v4034 = vpop.f32.mrb[0].mxu0
      %v4035 = vpop.f32.mrb[0].mxu0
      %v4036 = vadd.f32 0.0, %v4035
      %v4037 = vpop.f32.mrb[0].mxu0
      %4038 = vmatprep.mubr.bf16.mxu0 0
      %4039 = vmatmul.mubr.bf16.gmra.mrb[0].mxu0 %v3903
      %v4040 = vpop.f32.mrb[0].mxu0
      %v4041 = vadd.f32 0.0, %v4040
      %v4042 = vpop.f32.mrb[0].mxu0
      %v4043 = vpop.f32.mrb[0].mxu0
      %v4044 = vadd.f32 0.0, %v4043
      %v4045 = vpop.f32.mrb[0].mxu0
      %4046 = vmatprep.mubr.bf16.mxu0 0
      %4047 = vmatmul.mubr.bf16.gmra.mrb[0].mxu0 %v3906
      %v4048 = vpop.f32.mrb[0].mxu0
      %v4049 = vadd.f32 0.0, %v4048
      %v4050 = vpop.f32.mrb[0].mxu0
      %v4051 = vpop.f32.mrb[0].mxu0
      %v4052 = vadd.f32 0.0, %v4051
      %v4053 = vpop.f32.mrb[0].mxu0
      %4054 = vmatprep.mubr.bf16.mxu0 0
      %4055 = vmatmul.mubr.bf16.gmra.mrb[0].mxu0 %v3909
      %v4056 = vpop.f32.mrb[0].mxu0
      %v4057 = vadd.f32 0.0, %v4056
      %v4058 = vpop.f32.mrb[0].mxu0
      %v4059 = vpop.f32.mrb[0].mxu0
      %v4060 = vadd.f32 0.0, %v4059
      %v4061 = vpop.f32.mrb[0].mxu0
      %4062 = vmatprep.mubr.bf16.mxu0 0
      %4063 = vmatmul.mubr.bf16.gmra.mrb[0].mxu0 %v3912
      %v4064 = vpop.f32.mrb[0].mxu0
      %v4065 = vadd.f32 0.0, %v4064
      %v4066 = vpop.f32.mrb[0].mxu0
      %v4067 = vpop.f32.mrb[0].mxu0
      %v4068 = vadd.f32 0.0, %v4067
      %v4069 = vpop.f32.mrb[0].mxu0
      %4070 = vmatprep.mubr.bf16.mxu0 0
      %4071 = vmatmul.mubr.bf16.gmra.mrb[0].mxu0 %v3915
      %v4072 = vpop.f32.mrb[0].mxu0
      %v4073 = vadd.f32 0.0, %v4072
      %v4074 = vpop.f32.mrb[0].mxu0
      %v4075 = vpop.f32.mrb[0].mxu0
      %v4076 = vadd.f32 0.0, %v4075
      %v4077 = vpop.f32.mrb[0].mxu0
      %4078 = vmatprep.mubr.bf16.mxu0 0
      %4079 = vmatmul.mubr.bf16.gmra.mrb[0].mxu0 %v3918
      %v4080 = vpop.f32.mrb[0].mxu0
      %v4081 = vadd.f32 0.0, %v4080
      %v4082 = vpop.f32.mrb[0].mxu0
      %v4083 = vpop.f32.mrb[0].mxu0
      %v4084 = vadd.f32 0.0, %v4083
      %v4085 = vpop.f32.mrb[0].mxu0
      %4086 = vmatprep.mubr.bf16.mxu0 0
      %4087 = vmatmul.mubr.bf16.gmra.mrb[0].mxu0 %v3921
      %v4088 = vpop.f32.mrb[0].mxu0
      %v4089 = vadd.f32 0.0, %v4088
      %v4090 = vpop.f32.mrb[0].mxu0
      %v4091 = vpop.f32.mrb[0].mxu0
      %v4092 = vadd.f32 0.0, %v4091
      %v4093 = vpop.f32.mrb[0].mxu0
      %4094 = vmatprep.mubr.bf16.mxu0 0
      %4095 = vmatmul.mubr.bf16.gmra.mrb[0].mxu0 %v3924
      %v4096 = vpop.f32.mrb[0].mxu0
      %v4097 = vadd.f32 0.0, %v4096
      %v4098 = vpop.f32.mrb[0].mxu0
      %v4099 = vpop.f32.mrb[0].mxu0
      %v4100 = vadd.f32 0.0, %v4099
      %v4101 = vpop.f32.mrb[0].mxu0
      %4102 = vdwg.mxu0
      %v4103 = vadd.f32 %v3652, %v3961
      %v4104 = vadd.f32 %v3653, %v3964
      %v4105 = vadd.f32 %v3654, %v3969
      %v4106 = vadd.f32 %v3655, %v3972
      %v4107 = vadd.f32 %v3656, %v3977
      %v4108 = vadd.f32 %v3657, %v3980
      %v4109 = vadd.f32 %v3658, %v3985
      %v4110 = vadd.f32 %v3659, %v3988
      %v4111 = vadd.f32 %v3660, %v3993
      %v4112 = vadd.f32 %v3661, %v3996
      %v4113 = vadd.f32 %v3662, %v4001
      %v4114 = vadd.f32 %v3663, %v4004
      %v4115 = vadd.f32 %v3664, %v4009
      %v4116 = vadd.f32 %v3665, %v4012
      %v4117 = vadd.f32 %v3666, %v4017
      %v4118 = vadd.f32 %v3667, %v4020
      %v4119 = vadd.f32 %v3668, %v4025
      %v4120 = vadd.f32 %v3669, %v4028
      %v4121 = vadd.f32 %v3670, %v4033
      %v4122 = vadd.f32 %v3671, %v4036
      %v4123 = vadd.f32 %v3672, %v4041
      %v4124 = vadd.f32 %v3673, %v4044
      %v4125 = vadd.f32 %v3674, %v4049
      %v4126 = vadd.f32 %v3675, %v4052
      %v4127 = vadd.f32 %v3676, %v4057
      %v4128 = vadd.f32 %v3677, %v4060
      %v4129 = vadd.f32 %v3678, %v4065
      %v4130 = vadd.f32 %v3679, %v4068
      %v4131 = vadd.f32 %v3680, %v4073
      %v4132 = vadd.f32 %v3681, %v4076
      %v4133 = vadd.f32 %v3682, %v4081
      %v4134 = vadd.f32 %v3683, %v4084
      %v4135 = vadd.f32 %v3684, %v4089
      %v4136 = vadd.f32 %v3685, %v4092
      %v4137 = vadd.f32 %v3686, %v4097
      %v4138 = vadd.f32 %v3687, %v4100
      %v4139 = vld [vmem:[%s320 + $0x98] sm:$0x3]
      %s4140 = scalar_lea.vmem %s3, 32
      %v4141 = vld [vmem:[%s4140] sm:$0xf]
      %v4142 = vld [vmem:[%s4140 + $0x4] sm:$0xf]
      %v4144 = vunpack.c.l.b16 %v4139
      %v4145 = vpack.c.b16 %v4144, %v4144
      %v4147 = vshrl.u32 %v3359, 16
      %v4149 = vrot.slane %v4147, 1
      %v4150 = vshll.u32 %v3359, 16
      %v4152 = vrot.slane %v4150, 2
      %v4153 = vor.u32 %v4149, %v4152
      %v4155 = vshrl.u32 %v3360, 16
      %v4157 = vrot.slane %v4155, 1
      %v4158 = vshll.u32 %v3360, 16
      %v4160 = vrot.slane %v4158, 2
      %v4161 = vor.u32 %v4157, %v4160
      %v4162 = vsel %vm3695, %v4153, %v4161
      %v4164 = vshrl.u32 %v3361, 16
      %v4166 = vrot.slane %v4164, 1
      %v4167 = vshll.u32 %v3361, 16
      %v4169 = vrot.slane %v4167, 2
      %v4170 = vor.u32 %v4166, %v4169
      %v4171 = vsel %vm3695, %v4161, %v4170
      %v4173 = vshrl.u32 %v3362, 16
      %v4175 = vrot.slane %v4173, 1
      %v4176 = vshll.u32 %v3362, 16
      %v4178 = vrot.slane %v4176, 2
      %v4179 = vor.u32 %v4175, %v4178
      %v4180 = vsel %vm3695, %v4170, %v4179
      %v4182 = vshrl.u32 %v3363, 16
      %v4184 = vrot.slane %v4182, 1
      %v4185 = vshll.u32 %v3363, 16
      %v4187 = vrot.slane %v4185, 2
      %v4188 = vor.u32 %v4184, %v4187
      %v4189 = vsel %vm3695, %v4179, %v4188
      %v4191 = vshrl.u32 %v3364, 16
      %v4193 = vrot.slane %v4191, 1
      %v4194 = vshll.u32 %v3364, 16
      %v4196 = vrot.slane %v4194, 2
      %v4197 = vor.u32 %v4193, %v4196
      %v4198 = vsel %vm3695, %v4188, %v4197
      %v4200 = vshrl.u32 %v3365, 16
      %v4202 = vrot.slane %v4200, 1
      %v4203 = vshll.u32 %v3365, 16
      %v4205 = vrot.slane %v4203, 2
      %v4206 = vor.u32 %v4202, %v4205
      %v4207 = vsel %vm3695, %v4197, %v4206
      %v4209 = vshrl.u32 %v3366, 16
      %v4211 = vrot.slane %v4209, 1
      %v4212 = vshll.u32 %v3366, 16
      %v4214 = vrot.slane %v4212, 2
      %v4215 = vor.u32 %v4211, %v4214
      %v4216 = vsel %vm3695, %v4206, %v4215
      %v4218 = vshrl.u32 %v3367, 16
      %v4220 = vrot.slane %v4218, 1
      %v4221 = vshll.u32 %v3367, 16
      %v4223 = vrot.slane %v4221, 2
      %v4224 = vor.u32 %v4220, %v4223
      %v4225 = vsel %vm3695, %v4215, %v4224
      %v4227 = vshrl.u32 %v3368, 16
      %v4229 = vrot.slane %v4227, 1
      %v4230 = vshll.u32 %v3368, 16
      %v4232 = vrot.slane %v4230, 2
      %v4233 = vor.u32 %v4229, %v4232
      %v4234 = vsel %vm3695, %v4224, %v4233
      %v4236 = vshrl.u32 %v3369, 16
      %v4238 = vrot.slane %v4236, 1
      %v4239 = vshll.u32 %v3369, 16
      %v4241 = vrot.slane %v4239, 2
      %v4242 = vor.u32 %v4238, %v4241
      %v4243 = vsel %vm3695, %v4233, %v4242
      %v4245 = vshrl.u32 %v3370, 16
      %v4247 = vrot.slane %v4245, 1
      %v4248 = vshll.u32 %v3370, 16
      %v4250 = vrot.slane %v4248, 2
      %v4251 = vor.u32 %v4247, %v4250
      %v4252 = vsel %vm3695, %v4242, %v4251
      %v4254 = vshrl.u32 %v3371, 16
      %v4256 = vrot.slane %v4254, 1
      %v4257 = vshll.u32 %v3371, 16
      %v4259 = vrot.slane %v4257, 2
      %v4260 = vor.u32 %v4256, %v4259
      %v4261 = vsel %vm3695, %v4251, %v4260
      %v4263 = vshrl.u32 %v3372, 16
      %v4265 = vrot.slane %v4263, 1
      %v4266 = vshll.u32 %v3372, 16
      %v4268 = vrot.slane %v4266, 2
      %v4269 = vor.u32 %v4265, %v4268
      %v4270 = vsel %vm3695, %v4260, %v4269
      %v4272 = vshrl.u32 %v3373, 16
      %v4274 = vrot.slane %v4272, 1
      %v4275 = vshll.u32 %v3373, 16
      %v4277 = vrot.slane %v4275, 2
      %v4278 = vor.u32 %v4274, %v4277
      %v4279 = vsel %vm3695, %v4269, %v4278
      %v4281 = vshrl.u32 %v3374, 16
      %v4283 = vrot.slane %v4281, 1
      %v4284 = vshll.u32 %v3374, 16
      %v4286 = vrot.slane %v4284, 2
      %v4287 = vor.u32 %v4283, %v4286
      %v4288 = vsel %vm3695, %v4278, %v4287
      %v4290 = vshrl.u32 %v3375, 16
      %v4292 = vrot.slane %v4290, 1
      %v4293 = vshll.u32 %v3375, 16
      %v4295 = vrot.slane %v4293, 2
      %v4296 = vor.u32 %v4292, %v4295
      %v4297 = vsel %vm3695, %v4287, %v4296
      %v4299 = vshrl.u32 %v3376, 16
      %v4301 = vrot.slane %v4299, 1
      %v4302 = vshll.u32 %v3376, 16
      %v4304 = vrot.slane %v4302, 2
      %v4305 = vor.u32 %v4301, %v4304
      %v4306 = vsel %vm3695, %v4296, %v4305
      %v4308 = vshrl.u32 %v4145, 16
      %v4310 = vrot.slane %v4308, 1
      %v4311 = vshll.u32 %v4145, 16
      %v4313 = vrot.slane %v4311, 2
      %v4314 = vor.u32 %v4310, %v4313
      %v4315 = vsel %vm3695, %v4305, %v4314
      %v4318 = vunpack.c.l.b16 %v4141
      %v4319 = vunpack.c.l.b16 %v4142
      %v4320 = vpack.c.b16 %v4319, %v4318
      %v4323 = vsel %vm499, %v4162, 0
      %v4326 = vsel %vm499, %v4171, 0
      %v4329 = vsel %vm499, %v4180, 0
      %v4332 = vsel %vm499, %v4189, 0
      %v4335 = vsel %vm499, %v4198, 0
      %v4338 = vsel %vm499, %v4207, 0
      %v4341 = vsel %vm499, %v4216, 0
      %v4344 = vsel %vm499, %v4225, 0
      %v4347 = vsel %vm499, %v4234, 0
      %v4350 = vsel %vm499, %v4243, 0
      %v4353 = vsel %vm499, %v4252, 0
      %v4356 = vsel %vm499, %v4261, 0
      %v4359 = vsel %vm499, %v4270, 0
      %v4362 = vsel %vm499, %v4279, 0
      %v4365 = vsel %vm499, %v4288, 0
      %v4368 = vsel %vm499, %v4297, 0
      %v4371 = vsel %vm499, %v4306, 0
      %v4374 = vsel %vm499, %v4315, 0
      %4376 = vmatprep.subr.bf16.mxu0 0
      %4377 = vmatpush1.bf16.msra.mxu0 %v4320
      %4378 = vmatprep.subr.bf16.mxu0 0
      %4379 = vmatpush1.bf16.msra.mxu0 0
      %4380 = vmatprep.subr.bf16.mxu0 0
      %4381 = vmatpush1.bf16.msra.mxu0 0
      %4382 = vmatprep.subr.bf16.mxu0 0
      %4383 = vmatpush1.bf16.msra.mxu0 0
      %4384 = vmatprep.subr.bf16.mxu0 0
      %4385 = vmatpush1.bf16.msra.mxu0 0
      %4386 = vmatprep.subr.bf16.mxu0 0
      %4387 = vmatpush1.bf16.msra.mxu0 0
      %4388 = vmatprep.subr.bf16.mxu0 0
      %4389 = vmatpush1.bf16.msra.mxu0 0
      %4390 = vmatprep.subr.bf16.mxu0 0
      %4391 = vmatpush1.bf16.msra.mxu0 0
      %4392 = vmatprep.subr.bf16.mxu0 0
      %4393 = vmatpush1.bf16.msra.mxu0 0
      %4394 = vmatprep.subr.bf16.mxu0 0
      %4395 = vmatpush1.bf16.msra.mxu0 0
      %4396 = vmatprep.subr.bf16.mxu0 0
      %4397 = vmatpush1.bf16.msra.mxu0 0
      %4398 = vmatprep.subr.bf16.mxu0 0
      %4399 = vmatpush1.bf16.msra.mxu0 0
      %4400 = vmatprep.subr.bf16.mxu0 0
      %4401 = vmatpush1.bf16.msra.mxu0 0
      %4402 = vmatprep.subr.bf16.mxu0 0
      %4403 = vmatpush1.bf16.msra.mxu0 0
      %4404 = vmatprep.subr.bf16.mxu0 0
      %4405 = vmatpush1.bf16.msra.mxu0 0
      %4406 = vmatprep.subr.bf16.mxu0 0
      %4407 = vmatpush1.bf16.msra.mxu0 0
      %4408 = vmatprep.mubr.bf16.mxu0 0
      %4409 = vmatmul.mubr.bf16.gmra.mrb[0].mxu0 %v4323
      %v4410 = vpop.f32.mrb[0].mxu0
      %v4411 = vadd.f32 0.0, %v4410
      %v4412 = vpop.f32.mrb[0].mxu0
      %v4413 = vpop.f32.mrb[0].mxu0
      %v4414 = vadd.f32 0.0, %v4413
      %v4415 = vpop.f32.mrb[0].mxu0
      %4416 = vmatprep.mubr.bf16.mxu0 0
      %4417 = vmatmul.mubr.bf16.gmra.mrb[0].mxu0 %v4326
      %v4418 = vpop.f32.mrb[0].mxu0
      %v4419 = vadd.f32 0.0, %v4418
      %v4420 = vpop.f32.mrb[0].mxu0
      %v4421 = vpop.f32.mrb[0].mxu0
      %v4422 = vadd.f32 0.0, %v4421
      %v4423 = vpop.f32.mrb[0].mxu0
      %4424 = vmatprep.mubr.bf16.mxu0 0
      %4425 = vmatmul.mubr.bf16.gmra.mrb[0].mxu0 %v4329
      %v4426 = vpop.f32.mrb[0].mxu0
      %v4427 = vadd.f32 0.0, %v4426
      %v4428 = vpop.f32.mrb[0].mxu0
      %v4429 = vpop.f32.mrb[0].mxu0
      %v4430 = vadd.f32 0.0, %v4429
      %v4431 = vpop.f32.mrb[0].mxu0
      %4432 = vmatprep.mubr.bf16.mxu0 0
      %4433 = vmatmul.mubr.bf16.gmra.mrb[0].mxu0 %v4332
      %v4434 = vpop.f32.mrb[0].mxu0
      %v4435 = vadd.f32 0.0, %v4434
      %v4436 = vpop.f32.mrb[0].mxu0
      %v4437 = vpop.f32.mrb[0].mxu0
      %v4438 = vadd.f32 0.0, %v4437
      %v4439 = vpop.f32.mrb[0].mxu0
      %4440 = vmatprep.mubr.bf16.mxu0 0
      %4441 = vmatmul.mubr.bf16.gmra.mrb[0].mxu0 %v4335
      %v4442 = vpop.f32.mrb[0].mxu0
      %v4443 = vadd.f32 0.0, %v4442
      %v4444 = vpop.f32.mrb[0].mxu0
      %v4445 = vpop.f32.mrb[0].mxu0
      %v4446 = vadd.f32 0.0, %v4445
      %v4447 = vpop.f32.mrb[0].mxu0
      %4448 = vmatprep.mubr.bf16.mxu0 0
      %4449 = vmatmul.mubr.bf16.gmra.mrb[0].mxu0 %v4338
      %v4450 = vpop.f32.mrb[0].mxu0
      %v4451 = vadd.f32 0.0, %v4450
      %v4452 = vpop.f32.mrb[0].mxu0
      %v4453 = vpop.f32.mrb[0].mxu0
      %v4454 = vadd.f32 0.0, %v4453
      %v4455 = vpop.f32.mrb[0].mxu0
      %4456 = vmatprep.mubr.bf16.mxu0 0
      %4457 = vmatmul.mubr.bf16.gmra.mrb[0].mxu0 %v4341
      %v4458 = vpop.f32.mrb[0].mxu0
      %v4459 = vadd.f32 0.0, %v4458
      %v4460 = vpop.f32.mrb[0].mxu0
      %v4461 = vpop.f32.mrb[0].mxu0
      %v4462 = vadd.f32 0.0, %v4461
      %v4463 = vpop.f32.mrb[0].mxu0
      %4464 = vmatprep.mubr.bf16.mxu0 0
      %4465 = vmatmul.mubr.bf16.gmra.mrb[0].mxu0 %v4344
      %v4466 = vpop.f32.mrb[0].mxu0
      %v4467 = vadd.f32 0.0, %v4466
      %v4468 = vpop.f32.mrb[0].mxu0
      %v4469 = vpop.f32.mrb[0].mxu0
      %v4470 = vadd.f32 0.0, %v4469
      %v4471 = vpop.f32.mrb[0].mxu0
      %4472 = vmatprep.mubr.bf16.mxu0 0
      %4473 = vmatmul.mubr.bf16.gmra.mrb[0].mxu0 %v4347
      %v4474 = vpop.f32.mrb[0].mxu0
      %v4475 = vadd.f32 0.0, %v4474
      %v4476 = vpop.f32.mrb[0].mxu0
      %v4477 = vpop.f32.mrb[0].mxu0
      %v4478 = vadd.f32 0.0, %v4477
      %v4479 = vpop.f32.mrb[0].mxu0
      %4480 = vmatprep.mubr.bf16.mxu0 0
      %4481 = vmatmul.mubr.bf16.gmra.mrb[0].mxu0 %v4350
      %v4482 = vpop.f32.mrb[0].mxu0
      %v4483 = vadd.f32 0.0, %v4482
      %v4484 = vpop.f32.mrb[0].mxu0
      %v4485 = vpop.f32.mrb[0].mxu0
      %v4486 = vadd.f32 0.0, %v4485
      %v4487 = vpop.f32.mrb[0].mxu0
      %4488 = vmatprep.mubr.bf16.mxu0 0
      %4489 = vmatmul.mubr.bf16.gmra.mrb[0].mxu0 %v4353
      %v4490 = vpop.f32.mrb[0].mxu0
      %v4491 = vadd.f32 0.0, %v4490
      %v4492 = vpop.f32.mrb[0].mxu0
      %v4493 = vpop.f32.mrb[0].mxu0
      %v4494 = vadd.f32 0.0, %v4493
      %v4495 = vpop.f32.mrb[0].mxu0
      %4496 = vmatprep.mubr.bf16.mxu0 0
      %4497 = vmatmul.mubr.bf16.gmra.mrb[0].mxu0 %v4356
      %v4498 = vpop.f32.mrb[0].mxu0
      %v4499 = vadd.f32 0.0, %v4498
      %v4500 = vpop.f32.mrb[0].mxu0
      %v4501 = vpop.f32.mrb[0].mxu0
      %v4502 = vadd.f32 0.0, %v4501
      %v4503 = vpop.f32.mrb[0].mxu0
      %4504 = vmatprep.mubr.bf16.mxu0 0
      %4505 = vmatmul.mubr.bf16.gmra.mrb[0].mxu0 %v4359
      %v4506 = vpop.f32.mrb[0].mxu0
      %v4507 = vadd.f32 0.0, %v4506
      %v4508 = vpop.f32.mrb[0].mxu0
      %v4509 = vpop.f32.mrb[0].mxu0
      %v4510 = vadd.f32 0.0, %v4509
      %v4511 = vpop.f32.mrb[0].mxu0
      %4512 = vmatprep.mubr.bf16.mxu0 0
      %4513 = vmatmul.mubr.bf16.gmra.mrb[0].mxu0 %v4362
      %v4514 = vpop.f32.mrb[0].mxu0
      %v4515 = vadd.f32 0.0, %v4514
      %v4516 = vpop.f32.mrb[0].mxu0
      %v4517 = vpop.f32.mrb[0].mxu0
      %v4518 = vadd.f32 0.0, %v4517
      %v4519 = vpop.f32.mrb[0].mxu0
      %4520 = vmatprep.mubr.bf16.mxu0 0
      %4521 = vmatmul.mubr.bf16.gmra.mrb[0].mxu0 %v4365
      %v4522 = vpop.f32.mrb[0].mxu0
      %v4523 = vadd.f32 0.0, %v4522
      %v4524 = vpop.f32.mrb[0].mxu0
      %v4525 = vpop.f32.mrb[0].mxu0
      %v4526 = vadd.f32 0.0, %v4525
      %v4527 = vpop.f32.mrb[0].mxu0
      %4528 = vmatprep.mubr.bf16.mxu0 0
      %4529 = vmatmul.mubr.bf16.gmra.mrb[0].mxu0 %v4368
      %v4530 = vpop.f32.mrb[0].mxu0
      %v4531 = vadd.f32 0.0, %v4530
      %v4532 = vpop.f32.mrb[0].mxu0
      %v4533 = vpop.f32.mrb[0].mxu0
      %v4534 = vadd.f32 0.0, %v4533
      %v4535 = vpop.f32.mrb[0].mxu0
      %4536 = vmatprep.mubr.bf16.mxu0 0
      %4537 = vmatmul.mubr.bf16.gmra.mrb[0].mxu0 %v4371
      %v4538 = vpop.f32.mrb[0].mxu0
      %v4539 = vadd.f32 0.0, %v4538
      %v4540 = vpop.f32.mrb[0].mxu0
      %v4541 = vpop.f32.mrb[0].mxu0
      %v4542 = vadd.f32 0.0, %v4541
      %v4543 = vpop.f32.mrb[0].mxu0
      %4544 = vmatprep.mubr.bf16.mxu0 0
      %4545 = vmatmul.mubr.bf16.gmra.mrb[0].mxu0 %v4374
      %v4546 = vpop.f32.mrb[0].mxu0
      %v4547 = vadd.f32 0.0, %v4546
      %v4548 = vpop.f32.mrb[0].mxu0
      %v4549 = vpop.f32.mrb[0].mxu0
      %v4550 = vadd.f32 0.0, %v4549
      %v4551 = vpop.f32.mrb[0].mxu0
      %4552 = vdwg.mxu0
      %v4553 = vadd.f32 %v4103, %v4411
      %v4554 = vadd.f32 %v4104, %v4414
      %v4555 = vadd.f32 %v4105, %v4419
      %v4556 = vadd.f32 %v4106, %v4422
      %v4557 = vadd.f32 %v4107, %v4427
      %v4558 = vadd.f32 %v4108, %v4430
      %v4559 = vadd.f32 %v4109, %v4435
      %v4560 = vadd.f32 %v4110, %v4438
      %v4561 = vadd.f32 %v4111, %v4443
      %v4562 = vadd.f32 %v4112, %v4446
      %v4563 = vadd.f32 %v4113, %v4451
      %v4564 = vadd.f32 %v4114, %v4454
      %v4565 = vadd.f32 %v4115, %v4459
      %v4566 = vadd.f32 %v4116, %v4462
      %v4567 = vadd.f32 %v4117, %v4467
      %v4568 = vadd.f32 %v4118, %v4470
      %v4569 = vadd.f32 %v4119, %v4475
      %v4570 = vadd.f32 %v4120, %v4478
      %v4571 = vadd.f32 %v4121, %v4483
      %v4572 = vadd.f32 %v4122, %v4486
      %v4573 = vadd.f32 %v4123, %v4491
      %v4574 = vadd.f32 %v4124, %v4494
      %v4575 = vadd.f32 %v4125, %v4499
      %v4576 = vadd.f32 %v4126, %v4502
      %v4577 = vadd.f32 %v4127, %v4507
      %v4578 = vadd.f32 %v4128, %v4510
      %v4579 = vadd.f32 %v4129, %v4515
      %v4580 = vadd.f32 %v4130, %v4518
      %v4581 = vadd.f32 %v4131, %v4523
      %v4582 = vadd.f32 %v4132, %v4526
      %v4583 = vadd.f32 %v4133, %v4531
      %v4584 = vadd.f32 %v4134, %v4534
      %v4585 = vadd.f32 %v4135, %v4539
      %v4586 = vadd.f32 %v4136, %v4542
      %v4587 = vadd.f32 %v4137, %v4547
      %v4588 = vadd.f32 %v4138, %v4550
      %v4589 = vld [vmem:[%s315 + $0x8] sm:$0xc]
      %s4590 = scalar_lea.vmem %s2, 40
      %v4591 = vld [vmem:[%s4590] sm:$0xf]
      %v4592 = vld [vmem:[%s4590 + $0x4] sm:$0xf]
      %v4594 = vunpack.c.l.b16 %v4589
      %v4595 = vpack.c.b16 %v2880, %v4594
      %vm4596 = vcmask 1045504
      %v4597 = vrot.slane %v4595, 2
      %v4598 = vrot.slane %v2917, 2
      %v4599 = vsel %vm4596, %v4597, %v4598
      %v4600 = vrot.slane %v2918, 2
      %v4601 = vsel %vm4596, %v4598, %v4600
      %v4602 = vrot.slane %v2919, 2
      %v4603 = vsel %vm4596, %v4600, %v4602
      %v4604 = vrot.slane %v2920, 2
      %v4605 = vsel %vm4596, %v4602, %v4604
      %v4606 = vrot.slane %v2921, 2
      %v4607 = vsel %vm4596, %v4604, %v4606
      %v4608 = vrot.slane %v2922, 2
      %v4609 = vsel %vm4596, %v4606, %v4608
      %v4610 = vrot.slane %v2923, 2
      %v4611 = vsel %vm4596, %v4608, %v4610
      %v4612 = vrot.slane %v2924, 2
      %v4613 = vsel %vm4596, %v4610, %v4612
      %v4614 = vrot.slane %v2925, 2
      %v4615 = vsel %vm4596, %v4612, %v4614
      %v4616 = vrot.slane %v2926, 2
      %v4617 = vsel %vm4596, %v4614, %v4616
      %v4618 = vrot.slane %v2927, 2
      %v4619 = vsel %vm4596, %v4616, %v4618
      %v4620 = vrot.slane %v2928, 2
      %v4621 = vsel %vm4596, %v4618, %v4620
      %v4622 = vrot.slane %v2929, 2
      %v4623 = vsel %vm4596, %v4620, %v4622
      %v4624 = vrot.slane %v2930, 2
      %v4625 = vsel %vm4596, %v4622, %v4624
      %v4626 = vrot.slane %v2931, 2
      %v4627 = vsel %vm4596, %v4624, %v4626
      %v4628 = vrot.slane %v2932, 2
      %v4629 = vsel %vm4596, %v4626, %v4628
      %v4630 = vrot.slane %v2933, 2
      %v4631 = vsel %vm4596, %v4628, %v4630
      %v4632 = vrot.slane %v3694, 2
      %v4633 = vsel %vm4596, %v4630, %v4632
      %v4636 = vunpack.c.l.b16 %v4591
      %v4637 = vunpack.c.l.b16 %v4592
      %v4638 = vpack.c.b16 %v4637, %v4636
      %v4641 = vsel %vm499, %v4599, 0
      %v4644 = vsel %vm499, %v4601, 0
      %v4647 = vsel %vm499, %v4603, 0
      %v4650 = vsel %vm499, %v4605, 0
      %v4653 = vsel %vm499, %v4607, 0
      %v4656 = vsel %vm499, %v4609, 0
      %v4659 = vsel %vm499, %v4611, 0
      %v4662 = vsel %vm499, %v4613, 0
      %v4665 = vsel %vm499, %v4615, 0
      %v4668 = vsel %vm499, %v4617, 0
      %v4671 = vsel %vm499, %v4619, 0
      %v4674 = vsel %vm499, %v4621, 0
      %v4677 = vsel %vm499, %v4623, 0
      %v4680 = vsel %vm499, %v4625, 0
      %v4683 = vsel %vm499, %v4627, 0
      %v4686 = vsel %vm499, %v4629, 0
      %v4689 = vsel %vm499, %v4631, 0
      %v4692 = vsel %vm499, %v4633, 0
      %4694 = vmatprep.subr.bf16.mxu0 0
      %4695 = vmatpush1.bf16.msra.mxu0 %v4638
      %4696 = vmatprep.subr.bf16.mxu0 0
      %4697 = vmatpush1.bf16.msra.mxu0 0
      %4698 = vmatprep.subr.bf16.mxu0 0
      %4699 = vmatpush1.bf16.msra.mxu0 0
      %4700 = vmatprep.subr.bf16.mxu0 0
      %4701 = vmatpush1.bf16.msra.mxu0 0
      %4702 = vmatprep.subr.bf16.mxu0 0
      %4703 = vmatpush1.bf16.msra.mxu0 0
      %4704 = vmatprep.subr.bf16.mxu0 0
      %4705 = vmatpush1.bf16.msra.mxu0 0
      %4706 = vmatprep.subr.bf16.mxu0 0
      %4707 = vmatpush1.bf16.msra.mxu0 0
      %4708 = vmatprep.subr.bf16.mxu0 0
      %4709 = vmatpush1.bf16.msra.mxu0 0
      %4710 = vmatprep.subr.bf16.mxu0 0
      %4711 = vmatpush1.bf16.msra.mxu0 0
      %4712 = vmatprep.subr.bf16.mxu0 0
      %4713 = vmatpush1.bf16.msra.mxu0 0
      %4714 = vmatprep.subr.bf16.mxu0 0
      %4715 = vmatpush1.bf16.msra.mxu0 0
      %4716 = vmatprep.subr.bf16.mxu0 0
      %4717 = vmatpush1.bf16.msra.mxu0 0
      %4718 = vmatprep.subr.bf16.mxu0 0
      %4719 = vmatpush1.bf16.msra.mxu0 0
      %4720 = vmatprep.subr.bf16.mxu0 0
      %4721 = vmatpush1.bf16.msra.mxu0 0
      %4722 = vmatprep.subr.bf16.mxu0 0
      %4723 = vmatpush1.bf16.msra.mxu0 0
      %4724 = vmatprep.subr.bf16.mxu0 0
      %4725 = vmatpush1.bf16.msra.mxu0 0
      %4726 = vmatprep.mubr.bf16.mxu0 0
      %4727 = vmatmul.mubr.bf16.gmra.mrb[0].mxu0 %v4641
      %v4728 = vpop.f32.mrb[0].mxu0
      %v4729 = vadd.f32 0.0, %v4728
      %v4730 = vpop.f32.mrb[0].mxu0
      %v4731 = vpop.f32.mrb[0].mxu0
      %v4732 = vadd.f32 0.0, %v4731
      %v4733 = vpop.f32.mrb[0].mxu0
      %4734 = vmatprep.mubr.bf16.mxu0 0
      %4735 = vmatmul.mubr.bf16.gmra.mrb[0].mxu0 %v4644
      %v4736 = vpop.f32.mrb[0].mxu0
      %v4737 = vadd.f32 0.0, %v4736
      %v4738 = vpop.f32.mrb[0].mxu0
      %v4739 = vpop.f32.mrb[0].mxu0
      %v4740 = vadd.f32 0.0, %v4739
      %v4741 = vpop.f32.mrb[0].mxu0
      %4742 = vmatprep.mubr.bf16.mxu0 0
      %4743 = vmatmul.mubr.bf16.gmra.mrb[0].mxu0 %v4647
      %v4744 = vpop.f32.mrb[0].mxu0
      %v4745 = vadd.f32 0.0, %v4744
      %v4746 = vpop.f32.mrb[0].mxu0
      %v4747 = vpop.f32.mrb[0].mxu0
      %v4748 = vadd.f32 0.0, %v4747
      %v4749 = vpop.f32.mrb[0].mxu0
      %4750 = vmatprep.mubr.bf16.mxu0 0
      %4751 = vmatmul.mubr.bf16.gmra.mrb[0].mxu0 %v4650
      %v4752 = vpop.f32.mrb[0].mxu0
      %v4753 = vadd.f32 0.0, %v4752
      %v4754 = vpop.f32.mrb[0].mxu0
      %v4755 = vpop.f32.mrb[0].mxu0
      %v4756 = vadd.f32 0.0, %v4755
      %v4757 = vpop.f32.mrb[0].mxu0
      %4758 = vmatprep.mubr.bf16.mxu0 0
      %4759 = vmatmul.mubr.bf16.gmra.mrb[0].mxu0 %v4653
      %v4760 = vpop.f32.mrb[0].mxu0
      %v4761 = vadd.f32 0.0, %v4760
      %v4762 = vpop.f32.mrb[0].mxu0
      %v4763 = vpop.f32.mrb[0].mxu0
      %v4764 = vadd.f32 0.0, %v4763
      %v4765 = vpop.f32.mrb[0].mxu0
      %4766 = vmatprep.mubr.bf16.mxu0 0
      %4767 = vmatmul.mubr.bf16.gmra.mrb[0].mxu0 %v4656
      %v4768 = vpop.f32.mrb[0].mxu0
      %v4769 = vadd.f32 0.0, %v4768
      %v4770 = vpop.f32.mrb[0].mxu0
      %v4771 = vpop.f32.mrb[0].mxu0
      %v4772 = vadd.f32 0.0, %v4771
      %v4773 = vpop.f32.mrb[0].mxu0
      %4774 = vmatprep.mubr.bf16.mxu0 0
      %4775 = vmatmul.mubr.bf16.gmra.mrb[0].mxu0 %v4659
      %v4776 = vpop.f32.mrb[0].mxu0
      %v4777 = vadd.f32 0.0, %v4776
      %v4778 = vpop.f32.mrb[0].mxu0
      %v4779 = vpop.f32.mrb[0].mxu0
      %v4780 = vadd.f32 0.0, %v4779
      %v4781 = vpop.f32.mrb[0].mxu0
      %4782 = vmatprep.mubr.bf16.mxu0 0
      %4783 = vmatmul.mubr.bf16.gmra.mrb[0].mxu0 %v4662
      %v4784 = vpop.f32.mrb[0].mxu0
      %v4785 = vadd.f32 0.0, %v4784
      %v4786 = vpop.f32.mrb[0].mxu0
      %v4787 = vpop.f32.mrb[0].mxu0
      %v4788 = vadd.f32 0.0, %v4787
      %v4789 = vpop.f32.mrb[0].mxu0
      %4790 = vmatprep.mubr.bf16.mxu0 0
      %4791 = vmatmul.mubr.bf16.gmra.mrb[0].mxu0 %v4665
      %v4792 = vpop.f32.mrb[0].mxu0
      %v4793 = vadd.f32 0.0, %v4792
      %v4794 = vpop.f32.mrb[0].mxu0
      %v4795 = vpop.f32.mrb[0].mxu0
      %v4796 = vadd.f32 0.0, %v4795
      %v4797 = vpop.f32.mrb[0].mxu0
      %4798 = vmatprep.mubr.bf16.mxu0 0
      %4799 = vmatmul.mubr.bf16.gmra.mrb[0].mxu0 %v4668
      %v4800 = vpop.f32.mrb[0].mxu0
      %v4801 = vadd.f32 0.0, %v4800
      %v4802 = vpop.f32.mrb[0].mxu0
      %v4803 = vpop.f32.mrb[0].mxu0
      %v4804 = vadd.f32 0.0, %v4803
      %v4805 = vpop.f32.mrb[0].mxu0
      %4806 = vmatprep.mubr.bf16.mxu0 0
      %4807 = vmatmul.mubr.bf16.gmra.mrb[0].mxu0 %v4671
      %v4808 = vpop.f32.mrb[0].mxu0
      %v4809 = vadd.f32 0.0, %v4808
      %v4810 = vpop.f32.mrb[0].mxu0
      %v4811 = vpop.f32.mrb[0].mxu0
      %v4812 = vadd.f32 0.0, %v4811
      %v4813 = vpop.f32.mrb[0].mxu0
      %4814 = vmatprep.mubr.bf16.mxu0 0
      %4815 = vmatmul.mubr.bf16.gmra.mrb[0].mxu0 %v4674
      %v4816 = vpop.f32.mrb[0].mxu0
      %v4817 = vadd.f32 0.0, %v4816
      %v4818 = vpop.f32.mrb[0].mxu0
      %v4819 = vpop.f32.mrb[0].mxu0
      %v4820 = vadd.f32 0.0, %v4819
      %v4821 = vpop.f32.mrb[0].mxu0
      %4822 = vmatprep.mubr.bf16.mxu0 0
      %4823 = vmatmul.mubr.bf16.gmra.mrb[0].mxu0 %v4677
      %v4824 = vpop.f32.mrb[0].mxu0
      %v4825 = vadd.f32 0.0, %v4824
      %v4826 = vpop.f32.mrb[0].mxu0
      %v4827 = vpop.f32.mrb[0].mxu0
      %v4828 = vadd.f32 0.0, %v4827
      %v4829 = vpop.f32.mrb[0].mxu0
      %4830 = vmatprep.mubr.bf16.mxu0 0
      %4831 = vmatmul.mubr.bf16.gmra.mrb[0].mxu0 %v4680
      %v4832 = vpop.f32.mrb[0].mxu0
      %v4833 = vadd.f32 0.0, %v4832
      %v4834 = vpop.f32.mrb[0].mxu0
      %v4835 = vpop.f32.mrb[0].mxu0
      %v4836 = vadd.f32 0.0, %v4835
      %v4837 = vpop.f32.mrb[0].mxu0
      %4838 = vmatprep.mubr.bf16.mxu0 0
      %4839 = vmatmul.mubr.bf16.gmra.mrb[0].mxu0 %v4683
      %v4840 = vpop.f32.mrb[0].mxu0
      %v4841 = vadd.f32 0.0, %v4840
      %v4842 = vpop.f32.mrb[0].mxu0
      %v4843 = vpop.f32.mrb[0].mxu0
      %v4844 = vadd.f32 0.0, %v4843
      %v4845 = vpop.f32.mrb[0].mxu0
      %4846 = vmatprep.mubr.bf16.mxu0 0
      %4847 = vmatmul.mubr.bf16.gmra.mrb[0].mxu0 %v4686
      %v4848 = vpop.f32.mrb[0].mxu0
      %v4849 = vadd.f32 0.0, %v4848
      %v4850 = vpop.f32.mrb[0].mxu0
      %v4851 = vpop.f32.mrb[0].mxu0
      %v4852 = vadd.f32 0.0, %v4851
      %v4853 = vpop.f32.mrb[0].mxu0
      %4854 = vmatprep.mubr.bf16.mxu0 0
      %4855 = vmatmul.mubr.bf16.gmra.mrb[0].mxu0 %v4689
      %v4856 = vpop.f32.mrb[0].mxu0
      %v4857 = vadd.f32 0.0, %v4856
      %v4858 = vpop.f32.mrb[0].mxu0
      %v4859 = vpop.f32.mrb[0].mxu0
      %v4860 = vadd.f32 0.0, %v4859
      %v4861 = vpop.f32.mrb[0].mxu0
      %4862 = vmatprep.mubr.bf16.mxu0 0
      %4863 = vmatmul.mubr.bf16.gmra.mrb[0].mxu0 %v4692
      %v4864 = vpop.f32.mrb[0].mxu0
      %v4865 = vadd.f32 0.0, %v4864
      %v4866 = vpop.f32.mrb[0].mxu0
      %v4867 = vpop.f32.mrb[0].mxu0
      %v4868 = vadd.f32 0.0, %v4867
      %v4869 = vpop.f32.mrb[0].mxu0
      %4870 = vdwg.mxu0
      %v4871 = vadd.f32 %v4553, %v4729
      %v4872 = vadd.f32 %v4554, %v4732
      %v4873 = vadd.f32 %v4555, %v4737
      %v4874 = vadd.f32 %v4556, %v4740
      %v4875 = vadd.f32 %v4557, %v4745
      %v4876 = vadd.f32 %v4558, %v4748
      %v4877 = vadd.f32 %v4559, %v4753
      %v4878 = vadd.f32 %v4560, %v4756
      %v4879 = vadd.f32 %v4561, %v4761
      %v4880 = vadd.f32 %v4562, %v4764
      %v4881 = vadd.f32 %v4563, %v4769
      %v4882 = vadd.f32 %v4564, %v4772
      %v4883 = vadd.f32 %v4565, %v4777
      %v4884 = vadd.f32 %v4566, %v4780
      %v4885 = vadd.f32 %v4567, %v4785
      %v4886 = vadd.f32 %v4568, %v4788
      %v4887 = vadd.f32 %v4569, %v4793
      %v4888 = vadd.f32 %v4570, %v4796
      %v4889 = vadd.f32 %v4571, %v4801
      %v4890 = vadd.f32 %v4572, %v4804
      %v4891 = vadd.f32 %v4573, %v4809
      %v4892 = vadd.f32 %v4574, %v4812
      %v4893 = vadd.f32 %v4575, %v4817
      %v4894 = vadd.f32 %v4576, %v4820
      %v4895 = vadd.f32 %v4577, %v4825
      %v4896 = vadd.f32 %v4578, %v4828
      %v4897 = vadd.f32 %v4579, %v4833
      %v4898 = vadd.f32 %v4580, %v4836
      %v4899 = vadd.f32 %v4581, %v4841
      %v4900 = vadd.f32 %v4582, %v4844
      %v4901 = vadd.f32 %v4583, %v4849
      %v4902 = vadd.f32 %v4584, %v4852
      %v4903 = vadd.f32 %v4585, %v4857
      %v4904 = vadd.f32 %v4586, %v4860
      %v4905 = vadd.f32 %v4587, %v4865
      %v4906 = vadd.f32 %v4588, %v4868
      %v4907 = vld [vmem:[%s320 + $0x8] sm:$0xc]
      %s4908 = scalar_lea.vmem %s3, 40
      %v4909 = vld [vmem:[%s4908] sm:$0xf]
      %v4910 = vld [vmem:[%s4908 + $0x4] sm:$0xf]
      %v4912 = vunpack.c.l.b16 %v4907
      %v4913 = vpack.c.b16 %v3323, %v4912
      %v4914 = vrot.slane %v4913, 2
      %v4915 = vrot.slane %v3360, 2
      %v4916 = vsel %vm4596, %v4914, %v4915
      %v4917 = vrot.slane %v3361, 2
      %v4918 = vsel %vm4596, %v4915, %v4917
      %v4919 = vrot.slane %v3362, 2
      %v4920 = vsel %vm4596, %v4917, %v4919
      %v4921 = vrot.slane %v3363, 2
      %v4922 = vsel %vm4596, %v4919, %v4921
      %v4923 = vrot.slane %v3364, 2
      %v4924 = vsel %vm4596, %v4921, %v4923
      %v4925 = vrot.slane %v3365, 2
      %v4926 = vsel %vm4596, %v4923, %v4925
      %v4927 = vrot.slane %v3366, 2
      %v4928 = vsel %vm4596, %v4925, %v4927
      %v4929 = vrot.slane %v3367, 2
      %v4930 = vsel %vm4596, %v4927, %v4929
      %v4931 = vrot.slane %v3368, 2
      %v4932 = vsel %vm4596, %v4929, %v4931
      %v4933 = vrot.slane %v3369, 2
      %v4934 = vsel %vm4596, %v4931, %v4933
      %v4935 = vrot.slane %v3370, 2
      %v4936 = vsel %vm4596, %v4933, %v4935
      %v4937 = vrot.slane %v3371, 2
      %v4938 = vsel %vm4596, %v4935, %v4937
      %v4939 = vrot.slane %v3372, 2
      %v4940 = vsel %vm4596, %v4937, %v4939
      %v4941 = vrot.slane %v3373, 2
      %v4942 = vsel %vm4596, %v4939, %v4941
      %v4943 = vrot.slane %v3374, 2
      %v4944 = vsel %vm4596, %v4941, %v4943
      %v4945 = vrot.slane %v3375, 2
      %v4946 = vsel %vm4596, %v4943, %v4945
      %v4947 = vrot.slane %v3376, 2
      %v4948 = vsel %vm4596, %v4945, %v4947
      %v4949 = vrot.slane %v4145, 2
      %v4950 = vsel %vm4596, %v4947, %v4949
      %v4953 = vunpack.c.l.b16 %v4909
      %v4954 = vunpack.c.l.b16 %v4910
      %v4955 = vpack.c.b16 %v4954, %v4953
      %v4958 = vsel %vm499, %v4916, 0
      %v4961 = vsel %vm499, %v4918, 0
      %v4964 = vsel %vm499, %v4920, 0
      %v4967 = vsel %vm499, %v4922, 0
      %v4970 = vsel %vm499, %v4924, 0
      %v4973 = vsel %vm499, %v4926, 0
      %v4976 = vsel %vm499, %v4928, 0
      %v4979 = vsel %vm499, %v4930, 0
      %v4982 = vsel %vm499, %v4932, 0
      %v4985 = vsel %vm499, %v4934, 0
      %v4988 = vsel %vm499, %v4936, 0
      %v4991 = vsel %vm499, %v4938, 0
      %v4994 = vsel %vm499, %v4940, 0
      %v4997 = vsel %vm499, %v4942, 0
      %v5000 = vsel %vm499, %v4944, 0
      %v5003 = vsel %vm499, %v4946, 0
      %v5006 = vsel %vm499, %v4948, 0
      %v5009 = vsel %vm499, %v4950, 0
      %5011 = vmatprep.subr.bf16.mxu0 0
      %5012 = vmatpush1.bf16.msra.mxu0 %v4955
      %5013 = vmatprep.subr.bf16.mxu0 0
      %5014 = vmatpush1.bf16.msra.mxu0 0
      %5015 = vmatprep.subr.bf16.mxu0 0
      %5016 = vmatpush1.bf16.msra.mxu0 0
      %5017 = vmatprep.subr.bf16.mxu0 0
      %5018 = vmatpush1.bf16.msra.mxu0 0
      %5019 = vmatprep.subr.bf16.mxu0 0
      %5020 = vmatpush1.bf16.msra.mxu0 0
      %5021 = vmatprep.subr.bf16.mxu0 0
      %5022 = vmatpush1.bf16.msra.mxu0 0
      %5023 = vmatprep.subr.bf16.mxu0 0
      %5024 = vmatpush1.bf16.msra.mxu0 0
      %5025 = vmatprep.subr.bf16.mxu0 0
      %5026 = vmatpush1.bf16.msra.mxu0 0
      %5027 = vmatprep.subr.bf16.mxu0 0
      %5028 = vmatpush1.bf16.msra.mxu0 0
      %5029 = vmatprep.subr.bf16.mxu0 0
      %5030 = vmatpush1.bf16.msra.mxu0 0
      %5031 = vmatprep.subr.bf16.mxu0 0
      %5032 = vmatpush1.bf16.msra.mxu0 0
      %5033 = vmatprep.subr.bf16.mxu0 0
      %5034 = vmatpush1.bf16.msra.mxu0 0
      %5035 = vmatprep.subr.bf16.mxu0 0
      %5036 = vmatpush1.bf16.msra.mxu0 0
      %5037 = vmatprep.subr.bf16.mxu0 0
      %5038 = vmatpush1.bf16.msra.mxu0 0
      %5039 = vmatprep.subr.bf16.mxu0 0
      %5040 = vmatpush1.bf16.msra.mxu0 0
      %5041 = vmatprep.subr.bf16.mxu0 0
      %5042 = vmatpush1.bf16.msra.mxu0 0
      %5043 = vmatprep.mubr.bf16.mxu0 0
      %5044 = vmatmul.mubr.bf16.gmra.mrb[0].mxu0 %v4958
      %v5045 = vpop.f32.mrb[0].mxu0
      %v5046 = vadd.f32 0.0, %v5045
      %v5047 = vpop.f32.mrb[0].mxu0
      %v5048 = vpop.f32.mrb[0].mxu0
      %v5049 = vadd.f32 0.0, %v5048
      %v5050 = vpop.f32.mrb[0].mxu0
      %5051 = vmatprep.mubr.bf16.mxu0 0
      %5052 = vmatmul.mubr.bf16.gmra.mrb[0].mxu0 %v4961
      %v5053 = vpop.f32.mrb[0].mxu0
      %v5054 = vadd.f32 0.0, %v5053
      %v5055 = vpop.f32.mrb[0].mxu0
      %v5056 = vpop.f32.mrb[0].mxu0
      %v5057 = vadd.f32 0.0, %v5056
      %v5058 = vpop.f32.mrb[0].mxu0
      %5059 = vmatprep.mubr.bf16.mxu0 0
      %5060 = vmatmul.mubr.bf16.gmra.mrb[0].mxu0 %v4964
      %v5061 = vpop.f32.mrb[0].mxu0
      %v5062 = vadd.f32 0.0, %v5061
      %v5063 = vpop.f32.mrb[0].mxu0
      %v5064 = vpop.f32.mrb[0].mxu0
      %v5065 = vadd.f32 0.0, %v5064
      %v5066 = vpop.f32.mrb[0].mxu0
      %5067 = vmatprep.mubr.bf16.mxu0 0
      %5068 = vmatmul.mubr.bf16.gmra.mrb[0].mxu0 %v4967
      %v5069 = vpop.f32.mrb[0].mxu0
      %v5070 = vadd.f32 0.0, %v5069
      %v5071 = vpop.f32.mrb[0].mxu0
      %v5072 = vpop.f32.mrb[0].mxu0
      %v5073 = vadd.f32 0.0, %v5072
      %v5074 = vpop.f32.mrb[0].mxu0
      %5075 = vmatprep.mubr.bf16.mxu0 0
      %5076 = vmatmul.mubr.bf16.gmra.mrb[0].mxu0 %v4970
      %v5077 = vpop.f32.mrb[0].mxu0
      %v5078 = vadd.f32 0.0, %v5077
      %v5079 = vpop.f32.mrb[0].mxu0
      %v5080 = vpop.f32.mrb[0].mxu0
      %v5081 = vadd.f32 0.0, %v5080
      %v5082 = vpop.f32.mrb[0].mxu0
      %5083 = vmatprep.mubr.bf16.mxu0 0
      %5084 = vmatmul.mubr.bf16.gmra.mrb[0].mxu0 %v4973
      %v5085 = vpop.f32.mrb[0].mxu0
      %v5086 = vadd.f32 0.0, %v5085
      %v5087 = vpop.f32.mrb[0].mxu0
      %v5088 = vpop.f32.mrb[0].mxu0
      %v5089 = vadd.f32 0.0, %v5088
      %v5090 = vpop.f32.mrb[0].mxu0
      %5091 = vmatprep.mubr.bf16.mxu0 0
      %5092 = vmatmul.mubr.bf16.gmra.mrb[0].mxu0 %v4976
      %v5093 = vpop.f32.mrb[0].mxu0
      %v5094 = vadd.f32 0.0, %v5093
      %v5095 = vpop.f32.mrb[0].mxu0
      %v5096 = vpop.f32.mrb[0].mxu0
      %v5097 = vadd.f32 0.0, %v5096
      %v5098 = vpop.f32.mrb[0].mxu0
      %5099 = vmatprep.mubr.bf16.mxu0 0
      %5100 = vmatmul.mubr.bf16.gmra.mrb[0].mxu0 %v4979
      %v5101 = vpop.f32.mrb[0].mxu0
      %v5102 = vadd.f32 0.0, %v5101
      %v5103 = vpop.f32.mrb[0].mxu0
      %v5104 = vpop.f32.mrb[0].mxu0
      %v5105 = vadd.f32 0.0, %v5104
      %v5106 = vpop.f32.mrb[0].mxu0
      %5107 = vmatprep.mubr.bf16.mxu0 0
      %5108 = vmatmul.mubr.bf16.gmra.mrb[0].mxu0 %v4982
      %v5109 = vpop.f32.mrb[0].mxu0
      %v5110 = vadd.f32 0.0, %v5109
      %v5111 = vpop.f32.mrb[0].mxu0
      %v5112 = vpop.f32.mrb[0].mxu0
      %v5113 = vadd.f32 0.0, %v5112
      %v5114 = vpop.f32.mrb[0].mxu0
      %5115 = vmatprep.mubr.bf16.mxu0 0
      %5116 = vmatmul.mubr.bf16.gmra.mrb[0].mxu0 %v4985
      %v5117 = vpop.f32.mrb[0].mxu0
      %v5118 = vadd.f32 0.0, %v5117
      %v5119 = vpop.f32.mrb[0].mxu0
      %v5120 = vpop.f32.mrb[0].mxu0
      %v5121 = vadd.f32 0.0, %v5120
      %v5122 = vpop.f32.mrb[0].mxu0
      %5123 = vmatprep.mubr.bf16.mxu0 0
      %5124 = vmatmul.mubr.bf16.gmra.mrb[0].mxu0 %v4988
      %v5125 = vpop.f32.mrb[0].mxu0
      %v5126 = vadd.f32 0.0, %v5125
      %v5127 = vpop.f32.mrb[0].mxu0
      %v5128 = vpop.f32.mrb[0].mxu0
      %v5129 = vadd.f32 0.0, %v5128
      %v5130 = vpop.f32.mrb[0].mxu0
      %5131 = vmatprep.mubr.bf16.mxu0 0
      %5132 = vmatmul.mubr.bf16.gmra.mrb[0].mxu0 %v4991
      %v5133 = vpop.f32.mrb[0].mxu0
      %v5134 = vadd.f32 0.0, %v5133
      %v5135 = vpop.f32.mrb[0].mxu0
      %v5136 = vpop.f32.mrb[0].mxu0
      %v5137 = vadd.f32 0.0, %v5136
      %v5138 = vpop.f32.mrb[0].mxu0
      %5139 = vmatprep.mubr.bf16.mxu0 0
      %5140 = vmatmul.mubr.bf16.gmra.mrb[0].mxu0 %v4994
      %v5141 = vpop.f32.mrb[0].mxu0
      %v5142 = vadd.f32 0.0, %v5141
      %v5143 = vpop.f32.mrb[0].mxu0
      %v5144 = vpop.f32.mrb[0].mxu0
      %v5145 = vadd.f32 0.0, %v5144
      %v5146 = vpop.f32.mrb[0].mxu0
      %5147 = vmatprep.mubr.bf16.mxu0 0
      %5148 = vmatmul.mubr.bf16.gmra.mrb[0].mxu0 %v4997
      %v5149 = vpop.f32.mrb[0].mxu0
      %v5150 = vadd.f32 0.0, %v5149
      %v5151 = vpop.f32.mrb[0].mxu0
      %v5152 = vpop.f32.mrb[0].mxu0
      %v5153 = vadd.f32 0.0, %v5152
      %v5154 = vpop.f32.mrb[0].mxu0
      %5155 = vmatprep.mubr.bf16.mxu0 0
      %5156 = vmatmul.mubr.bf16.gmra.mrb[0].mxu0 %v5000
      %v5157 = vpop.f32.mrb[0].mxu0
      %v5158 = vadd.f32 0.0, %v5157
      %v5159 = vpop.f32.mrb[0].mxu0
      %v5160 = vpop.f32.mrb[0].mxu0
      %v5161 = vadd.f32 0.0, %v5160
      %v5162 = vpop.f32.mrb[0].mxu0
      %5163 = vmatprep.mubr.bf16.mxu0 0
      %5164 = vmatmul.mubr.bf16.gmra.mrb[0].mxu0 %v5003
      %v5165 = vpop.f32.mrb[0].mxu0
      %v5166 = vadd.f32 0.0, %v5165
      %v5167 = vpop.f32.mrb[0].mxu0
      %v5168 = vpop.f32.mrb[0].mxu0
      %v5169 = vadd.f32 0.0, %v5168
      %v5170 = vpop.f32.mrb[0].mxu0
      %5171 = vmatprep.mubr.bf16.mxu0 0
      %5172 = vmatmul.mubr.bf16.gmra.mrb[0].mxu0 %v5006
      %v5173 = vpop.f32.mrb[0].mxu0
      %v5174 = vadd.f32 0.0, %v5173
      %v5175 = vpop.f32.mrb[0].mxu0
      %v5176 = vpop.f32.mrb[0].mxu0
      %v5177 = vadd.f32 0.0, %v5176
      %v5178 = vpop.f32.mrb[0].mxu0
      %5179 = vmatprep.mubr.bf16.mxu0 0
      %5180 = vmatmul.mubr.bf16.gmra.mrb[0].mxu0 %v5009
      %v5181 = vpop.f32.mrb[0].mxu0
      %v5182 = vadd.f32 0.0, %v5181
      %v5183 = vpop.f32.mrb[0].mxu0
      %v5184 = vpop.f32.mrb[0].mxu0
      %v5185 = vadd.f32 0.0, %v5184
      %v5186 = vpop.f32.mrb[0].mxu0
      %5187 = vdwg.mxu0
      %v5188 = vadd.f32 %v4871, %v5046
      %v5189 = vadd.f32 %v4872, %v5049
      %v5190 = vadd.f32 %v4873, %v5054
      %v5191 = vadd.f32 %v4874, %v5057
      %v5192 = vadd.f32 %v4875, %v5062
      %v5193 = vadd.f32 %v4876, %v5065
      %v5194 = vadd.f32 %v4877, %v5070
      %v5195 = vadd.f32 %v4878, %v5073
      %v5196 = vadd.f32 %v4879, %v5078
      %v5197 = vadd.f32 %v4880, %v5081
      %v5198 = vadd.f32 %v4881, %v5086
      %v5199 = vadd.f32 %v4882, %v5089
      %v5200 = vadd.f32 %v4883, %v5094
      %v5201 = vadd.f32 %v4884, %v5097
      %v5202 = vadd.f32 %v4885, %v5102
      %v5203 = vadd.f32 %v4886, %v5105
      %v5204 = vadd.f32 %v4887, %v5110
      %v5205 = vadd.f32 %v4888, %v5113
      %v5206 = vadd.f32 %v4889, %v5118
      %v5207 = vadd.f32 %v4890, %v5121
      %v5208 = vadd.f32 %v4891, %v5126
      %v5209 = vadd.f32 %v4892, %v5129
      %v5210 = vadd.f32 %v4893, %v5134
      %v5211 = vadd.f32 %v4894, %v5137
      %v5212 = vadd.f32 %v4895, %v5142
      %v5213 = vadd.f32 %v4896, %v5145
      %v5214 = vadd.f32 %v4897, %v5150
      %v5215 = vadd.f32 %v4898, %v5153
      %v5216 = vadd.f32 %v4899, %v5158
      %v5217 = vadd.f32 %v4900, %v5161
      %v5218 = vadd.f32 %v4901, %v5166
      %v5219 = vadd.f32 %v4902, %v5169
      %v5220 = vadd.f32 %v4903, %v5174
      %v5221 = vadd.f32 %v4904, %v5177
      %v5222 = vadd.f32 %v4905, %v5182
      %v5223 = vadd.f32 %v4906, %v5185
      %v5224 = vld [vmem:[%s315 + $0x10] sm:$0xc]
      %v5225 = vld [vmem:[%s315 + $0x14] sm:$0xf]
      %v5226 = vld [vmem:[%s315 + $0x18] sm:$0xf]
      %v5227 = vld [vmem:[%s315 + $0x1c] sm:$0xf]
      %v5228 = vld [vmem:[%s315 + $0x20] sm:$0xf]
      %v5229 = vld [vmem:[%s315 + $0x24] sm:$0xf]
      %v5230 = vld [vmem:[%s315 + $0x28] sm:$0xf]
      %v5231 = vld [vmem:[%s315 + $0x2c] sm:$0xf]
      %v5232 = vld [vmem:[%s315 + $0x30] sm:$0xf]
      %v5233 = vld [vmem:[%s315 + $0x34] sm:$0xf]
      %v5234 = vld [vmem:[%s315 + $0x38] sm:$0xf]
      %v5235 = vld [vmem:[%s315 + $0x3c] sm:$0xf]
      %v5236 = vld [vmem:[%s315 + $0x40] sm:$0xf]
      %v5237 = vld [vmem:[%s315 + $0x44] sm:$0xf]
      %v5238 = vld [vmem:[%s315 + $0x48] sm:$0xf]
      %v5239 = vld [vmem:[%s315 + $0x4c] sm:$0xf]
      %v5240 = vld [vmem:[%s315 + $0x50] sm:$0xf]
      %v5241 = vld [vmem:[%s315 + $0x54] sm:$0xf]
      %v5242 = vld [vmem:[%s315 + $0x58] sm:$0xf]
      %v5243 = vld [vmem:[%s315 + $0x5c] sm:$0xf]
      %v5244 = vld [vmem:[%s315 + $0x60] sm:$0xf]
      %v5245 = vld [vmem:[%s315 + $0x64] sm:$0xf]
      %v5246 = vld [vmem:[%s315 + $0x68] sm:$0xf]
      %v5247 = vld [vmem:[%s315 + $0x6c] sm:$0xf]
      %v5248 = vld [vmem:[%s315 + $0x70] sm:$0xf]
      %v5249 = vld [vmem:[%s315 + $0x74] sm:$0xf]
      %v5250 = vld [vmem:[%s315 + $0x78] sm:$0xf]
      %v5251 = vld [vmem:[%s315 + $0x7c] sm:$0xf]
      %v5252 = vld [vmem:[%s315 + $0x80] sm:$0xf]
      %v5253 = vld [vmem:[%s315 + $0x84] sm:$0xf]
      %v5254 = vld [vmem:[%s315 + $0x88] sm:$0xf]
      %v5255 = vld [vmem:[%s315 + $0x8c] sm:$0xf]
      %v5256 = vld [vmem:[%s315 + $0x90] sm:$0xf]
      %v5257 = vld [vmem:[%s315 + $0x94] sm:$0xf]
      %v5258 = vld [vmem:[%s315 + $0x98] sm:$0xf]
      %v5259 = vld [vmem:[%s315 + $0x9c] sm:$0xf]
      %v5260 = vld [vmem:[%s315 + $0xa0] sm:$0x3]
      %s5261 = scalar_lea.vmem %s2, 48
      %v5262 = vld [vmem:[%s5261] sm:$0xf]
      %v5263 = vld [vmem:[%s5261 + $0x4] sm:$0xf]
      %v5301 = vunpack.c.l.b16 %v5224
      %v5302 = vunpack.c.l.b16 %v5225
      %v5303 = vunpack.c.l.b16 %v5226
      %v5304 = vunpack.c.l.b16 %v5227
      %v5305 = vunpack.c.l.b16 %v5228
      %v5306 = vunpack.c.l.b16 %v5229
      %v5307 = vunpack.c.l.b16 %v5230
      %v5308 = vunpack.c.l.b16 %v5231
      %v5309 = vunpack.c.l.b16 %v5232
      %v5310 = vunpack.c.l.b16 %v5233
      %v5311 = vunpack.c.l.b16 %v5234
      %v5312 = vunpack.c.l.b16 %v5235
      %v5313 = vunpack.c.l.b16 %v5236
      %v5314 = vunpack.c.l.b16 %v5237
      %v5315 = vunpack.c.l.b16 %v5238
      %v5316 = vunpack.c.l.b16 %v5239
      %v5317 = vunpack.c.l.b16 %v5240
      %v5318 = vunpack.c.l.b16 %v5241
      %v5319 = vunpack.c.l.b16 %v5242
      %v5320 = vunpack.c.l.b16 %v5243
      %v5321 = vunpack.c.l.b16 %v5244
      %v5322 = vunpack.c.l.b16 %v5245
      %v5323 = vunpack.c.l.b16 %v5246
      %v5324 = vunpack.c.l.b16 %v5247
      %v5325 = vunpack.c.l.b16 %v5248
      %v5326 = vunpack.c.l.b16 %v5249
      %v5327 = vunpack.c.l.b16 %v5250
      %v5328 = vunpack.c.l.b16 %v5251
      %v5329 = vunpack.c.l.b16 %v5252
      %v5330 = vunpack.c.l.b16 %v5253
      %v5331 = vunpack.c.l.b16 %v5254
      %v5332 = vunpack.c.l.b16 %v5255
      %v5333 = vunpack.c.l.b16 %v5256
      %v5334 = vunpack.c.l.b16 %v5257
      %v5335 = vunpack.c.l.b16 %v5258
      %v5336 = vunpack.c.l.b16 %v5259
      %v5337 = vunpack.c.l.b16 %v5260
      %v5338 = vpack.c.b16 %v5302, %v5301
      %v5339 = vpack.c.b16 %v5304, %v5303
      %v5340 = vpack.c.b16 %v5306, %v5305
      %v5341 = vpack.c.b16 %v5308, %v5307
      %v5342 = vpack.c.b16 %v5310, %v5309
      %v5343 = vpack.c.b16 %v5312, %v5311
      %v5344 = vpack.c.b16 %v5314, %v5313
      %v5345 = vpack.c.b16 %v5316, %v5315
      %v5346 = vpack.c.b16 %v5318, %v5317
      %v5347 = vpack.c.b16 %v5320, %v5319
      %v5348 = vpack.c.b16 %v5322, %v5321
      %v5349 = vpack.c.b16 %v5324, %v5323
      %v5350 = vpack.c.b16 %v5326, %v5325
      %v5351 = vpack.c.b16 %v5328, %v5327
      %v5352 = vpack.c.b16 %v5330, %v5329
      %v5353 = vpack.c.b16 %v5332, %v5331
      %v5354 = vpack.c.b16 %v5334, %v5333
      %v5355 = vpack.c.b16 %v5336, %v5335
      %v5356 = vpack.c.b16 %v5337, %v5337
      %v5357 = vrot.slane %v5338, 2
      %v5358 = vrot.slane %v5339, 2
      %v5359 = vsel %vm4596, %v5357, %v5358
      %v5360 = vrot.slane %v5340, 2
      %v5361 = vsel %vm4596, %v5358, %v5360
      %v5362 = vrot.slane %v5341, 2
      %v5363 = vsel %vm4596, %v5360, %v5362
      %v5364 = vrot.slane %v5342, 2
      %v5365 = vsel %vm4596, %v5362, %v5364
      %v5366 = vrot.slane %v5343, 2
      %v5367 = vsel %vm4596, %v5364, %v5366
      %v5368 = vrot.slane %v5344, 2
      %v5369 = vsel %vm4596, %v5366, %v5368
      %v5370 = vrot.slane %v5345, 2
      %v5371 = vsel %vm4596, %v5368, %v5370
      %v5372 = vrot.slane %v5346, 2
      %v5373 = vsel %vm4596, %v5370, %v5372
      %v5374 = vrot.slane %v5347, 2
      %v5375 = vsel %vm4596, %v5372, %v5374
      %v5376 = vrot.slane %v5348, 2
      %v5377 = vsel %vm4596, %v5374, %v5376
      %v5378 = vrot.slane %v5349, 2
      %v5379 = vsel %vm4596, %v5376, %v5378
      %v5380 = vrot.slane %v5350, 2
      %v5381 = vsel %vm4596, %v5378, %v5380
      %v5382 = vrot.slane %v5351, 2
      %v5383 = vsel %vm4596, %v5380, %v5382
      %v5384 = vrot.slane %v5352, 2
      %v5385 = vsel %vm4596, %v5382, %v5384
      %v5386 = vrot.slane %v5353, 2
      %v5387 = vsel %vm4596, %v5384, %v5386
      %v5388 = vrot.slane %v5354, 2
      %v5389 = vsel %vm4596, %v5386, %v5388
      %v5390 = vrot.slane %v5355, 2
      %v5391 = vsel %vm4596, %v5388, %v5390
      %v5392 = vrot.slane %v5356, 2
      %v5393 = vsel %vm4596, %v5390, %v5392
      %v5396 = vunpack.c.l.b16 %v5262
      %v5397 = vunpack.c.l.b16 %v5263
      %v5398 = vpack.c.b16 %v5397, %v5396
      %v5401 = vsel %vm499, %v5359, 0
      %v5404 = vsel %vm499, %v5361, 0
      %v5407 = vsel %vm499, %v5363, 0
      %v5410 = vsel %vm499, %v5365, 0
      %v5413 = vsel %vm499, %v5367, 0
      %v5416 = vsel %vm499, %v5369, 0
      %v5419 = vsel %vm499, %v5371, 0
      %v5422 = vsel %vm499, %v5373, 0
      %v5425 = vsel %vm499, %v5375, 0
      %v5428 = vsel %vm499, %v5377, 0
      %v5431 = vsel %vm499, %v5379, 0
      %v5434 = vsel %vm499, %v5381, 0
      %v5437 = vsel %vm499, %v5383, 0
      %v5440 = vsel %vm499, %v5385, 0
      %v5443 = vsel %vm499, %v5387, 0
      %v5446 = vsel %vm499, %v5389, 0
      %v5449 = vsel %vm499, %v5391, 0
      %v5452 = vsel %vm499, %v5393, 0
      %5454 = vmatprep.subr.bf16.mxu0 0
      %5455 = vmatpush1.bf16.msra.mxu0 %v5398
      %5456 = vmatprep.subr.bf16.mxu0 0
      %5457 = vmatpush1.bf16.msra.mxu0 0
      %5458 = vmatprep.subr.bf16.mxu0 0
      %5459 = vmatpush1.bf16.msra.mxu0 0
      %5460 = vmatprep.subr.bf16.mxu0 0
      %5461 = vmatpush1.bf16.msra.mxu0 0
      %5462 = vmatprep.subr.bf16.mxu0 0
      %5463 = vmatpush1.bf16.msra.mxu0 0
      %5464 = vmatprep.subr.bf16.mxu0 0
      %5465 = vmatpush1.bf16.msra.mxu0 0
      %5466 = vmatprep.subr.bf16.mxu0 0
      %5467 = vmatpush1.bf16.msra.mxu0 0
      %5468 = vmatprep.subr.bf16.mxu0 0
      %5469 = vmatpush1.bf16.msra.mxu0 0
      %5470 = vmatprep.subr.bf16.mxu0 0
      %5471 = vmatpush1.bf16.msra.mxu0 0
      %5472 = vmatprep.subr.bf16.mxu0 0
      %5473 = vmatpush1.bf16.msra.mxu0 0
      %5474 = vmatprep.subr.bf16.mxu0 0
      %5475 = vmatpush1.bf16.msra.mxu0 0
      %5476 = vmatprep.subr.bf16.mxu0 0
      %5477 = vmatpush1.bf16.msra.mxu0 0
      %5478 = vmatprep.subr.bf16.mxu0 0
      %5479 = vmatpush1.bf16.msra.mxu0 0
      %5480 = vmatprep.subr.bf16.mxu0 0
      %5481 = vmatpush1.bf16.msra.mxu0 0
      %5482 = vmatprep.subr.bf16.mxu0 0
      %5483 = vmatpush1.bf16.msra.mxu0 0
      %5484 = vmatprep.subr.bf16.mxu0 0
      %5485 = vmatpush1.bf16.msra.mxu0 0
      %5486 = vmatprep.mubr.bf16.mxu0 0
      %5487 = vmatmul.mubr.bf16.gmra.mrb[0].mxu0 %v5401
      %v5488 = vpop.f32.mrb[0].mxu0
      %v5489 = vadd.f32 0.0, %v5488
      %v5490 = vpop.f32.mrb[0].mxu0
      %v5491 = vpop.f32.mrb[0].mxu0
      %v5492 = vadd.f32 0.0, %v5491
      %v5493 = vpop.f32.mrb[0].mxu0
      %5494 = vmatprep.mubr.bf16.mxu0 0
      %5495 = vmatmul.mubr.bf16.gmra.mrb[0].mxu0 %v5404
      %v5496 = vpop.f32.mrb[0].mxu0
      %v5497 = vadd.f32 0.0, %v5496
      %v5498 = vpop.f32.mrb[0].mxu0
      %v5499 = vpop.f32.mrb[0].mxu0
      %v5500 = vadd.f32 0.0, %v5499
      %v5501 = vpop.f32.mrb[0].mxu0
      %5502 = vmatprep.mubr.bf16.mxu0 0
      %5503 = vmatmul.mubr.bf16.gmra.mrb[0].mxu0 %v5407
      %v5504 = vpop.f32.mrb[0].mxu0
      %v5505 = vadd.f32 0.0, %v5504
      %v5506 = vpop.f32.mrb[0].mxu0
      %v5507 = vpop.f32.mrb[0].mxu0
      %v5508 = vadd.f32 0.0, %v5507
      %v5509 = vpop.f32.mrb[0].mxu0
      %5510 = vmatprep.mubr.bf16.mxu0 0
      %5511 = vmatmul.mubr.bf16.gmra.mrb[0].mxu0 %v5410
      %v5512 = vpop.f32.mrb[0].mxu0
      %v5513 = vadd.f32 0.0, %v5512
      %v5514 = vpop.f32.mrb[0].mxu0
      %v5515 = vpop.f32.mrb[0].mxu0
      %v5516 = vadd.f32 0.0, %v5515
      %v5517 = vpop.f32.mrb[0].mxu0
      %5518 = vmatprep.mubr.bf16.mxu0 0
      %5519 = vmatmul.mubr.bf16.gmra.mrb[0].mxu0 %v5413
      %v5520 = vpop.f32.mrb[0].mxu0
      %v5521 = vadd.f32 0.0, %v5520
      %v5522 = vpop.f32.mrb[0].mxu0
      %v5523 = vpop.f32.mrb[0].mxu0
      %v5524 = vadd.f32 0.0, %v5523
      %v5525 = vpop.f32.mrb[0].mxu0
      %5526 = vmatprep.mubr.bf16.mxu0 0
      %5527 = vmatmul.mubr.bf16.gmra.mrb[0].mxu0 %v5416
      %v5528 = vpop.f32.mrb[0].mxu0
      %v5529 = vadd.f32 0.0, %v5528
      %v5530 = vpop.f32.mrb[0].mxu0
      %v5531 = vpop.f32.mrb[0].mxu0
      %v5532 = vadd.f32 0.0, %v5531
      %v5533 = vpop.f32.mrb[0].mxu0
      %5534 = vmatprep.mubr.bf16.mxu0 0
      %5535 = vmatmul.mubr.bf16.gmra.mrb[0].mxu0 %v5419
      %v5536 = vpop.f32.mrb[0].mxu0
      %v5537 = vadd.f32 0.0, %v5536
      %v5538 = vpop.f32.mrb[0].mxu0
      %v5539 = vpop.f32.mrb[0].mxu0
      %v5540 = vadd.f32 0.0, %v5539
      %v5541 = vpop.f32.mrb[0].mxu0
      %5542 = vmatprep.mubr.bf16.mxu0 0
      %5543 = vmatmul.mubr.bf16.gmra.mrb[0].mxu0 %v5422
      %v5544 = vpop.f32.mrb[0].mxu0
      %v5545 = vadd.f32 0.0, %v5544
      %v5546 = vpop.f32.mrb[0].mxu0
      %v5547 = vpop.f32.mrb[0].mxu0
      %v5548 = vadd.f32 0.0, %v5547
      %v5549 = vpop.f32.mrb[0].mxu0
      %5550 = vmatprep.mubr.bf16.mxu0 0
      %5551 = vmatmul.mubr.bf16.gmra.mrb[0].mxu0 %v5425
      %v5552 = vpop.f32.mrb[0].mxu0
      %v5553 = vadd.f32 0.0, %v5552
      %v5554 = vpop.f32.mrb[0].mxu0
      %v5555 = vpop.f32.mrb[0].mxu0
      %v5556 = vadd.f32 0.0, %v5555
      %v5557 = vpop.f32.mrb[0].mxu0
      %5558 = vmatprep.mubr.bf16.mxu0 0
      %5559 = vmatmul.mubr.bf16.gmra.mrb[0].mxu0 %v5428
      %v5560 = vpop.f32.mrb[0].mxu0
      %v5561 = vadd.f32 0.0, %v5560
      %v5562 = vpop.f32.mrb[0].mxu0
      %v5563 = vpop.f32.mrb[0].mxu0
      %v5564 = vadd.f32 0.0, %v5563
      %v5565 = vpop.f32.mrb[0].mxu0
      %5566 = vmatprep.mubr.bf16.mxu0 0
      %5567 = vmatmul.mubr.bf16.gmra.mrb[0].mxu0 %v5431
      %v5568 = vpop.f32.mrb[0].mxu0
      %v5569 = vadd.f32 0.0, %v5568
      %v5570 = vpop.f32.mrb[0].mxu0
      %v5571 = vpop.f32.mrb[0].mxu0
      %v5572 = vadd.f32 0.0, %v5571
      %v5573 = vpop.f32.mrb[0].mxu0
      %5574 = vmatprep.mubr.bf16.mxu0 0
      %5575 = vmatmul.mubr.bf16.gmra.mrb[0].mxu0 %v5434
      %v5576 = vpop.f32.mrb[0].mxu0
      %v5577 = vadd.f32 0.0, %v5576
      %v5578 = vpop.f32.mrb[0].mxu0
      %v5579 = vpop.f32.mrb[0].mxu0
      %v5580 = vadd.f32 0.0, %v5579
      %v5581 = vpop.f32.mrb[0].mxu0
      %5582 = vmatprep.mubr.bf16.mxu0 0
      %5583 = vmatmul.mubr.bf16.gmra.mrb[0].mxu0 %v5437
      %v5584 = vpop.f32.mrb[0].mxu0
      %v5585 = vadd.f32 0.0, %v5584
      %v5586 = vpop.f32.mrb[0].mxu0
      %v5587 = vpop.f32.mrb[0].mxu0
      %v5588 = vadd.f32 0.0, %v5587
      %v5589 = vpop.f32.mrb[0].mxu0
      %5590 = vmatprep.mubr.bf16.mxu0 0
      %5591 = vmatmul.mubr.bf16.gmra.mrb[0].mxu0 %v5440
      %v5592 = vpop.f32.mrb[0].mxu0
      %v5593 = vadd.f32 0.0, %v5592
      %v5594 = vpop.f32.mrb[0].mxu0
      %v5595 = vpop.f32.mrb[0].mxu0
      %v5596 = vadd.f32 0.0, %v5595
      %v5597 = vpop.f32.mrb[0].mxu0
      %5598 = vmatprep.mubr.bf16.mxu0 0
      %5599 = vmatmul.mubr.bf16.gmra.mrb[0].mxu0 %v5443
      %v5600 = vpop.f32.mrb[0].mxu0
      %v5601 = vadd.f32 0.0, %v5600
      %v5602 = vpop.f32.mrb[0].mxu0
      %v5603 = vpop.f32.mrb[0].mxu0
      %v5604 = vadd.f32 0.0, %v5603
      %v5605 = vpop.f32.mrb[0].mxu0
      %5606 = vmatprep.mubr.bf16.mxu0 0
      %5607 = vmatmul.mubr.bf16.gmra.mrb[0].mxu0 %v5446
      %v5608 = vpop.f32.mrb[0].mxu0
      %v5609 = vadd.f32 0.0, %v5608
      %v5610 = vpop.f32.mrb[0].mxu0
      %v5611 = vpop.f32.mrb[0].mxu0
      %v5612 = vadd.f32 0.0, %v5611
      %v5613 = vpop.f32.mrb[0].mxu0
      %5614 = vmatprep.mubr.bf16.mxu0 0
      %5615 = vmatmul.mubr.bf16.gmra.mrb[0].mxu0 %v5449
      %v5616 = vpop.f32.mrb[0].mxu0
      %v5617 = vadd.f32 0.0, %v5616
      %v5618 = vpop.f32.mrb[0].mxu0
      %v5619 = vpop.f32.mrb[0].mxu0
      %v5620 = vadd.f32 0.0, %v5619
      %v5621 = vpop.f32.mrb[0].mxu0
      %5622 = vmatprep.mubr.bf16.mxu0 0
      %5623 = vmatmul.mubr.bf16.gmra.mrb[0].mxu0 %v5452
      %v5624 = vpop.f32.mrb[0].mxu0
      %v5625 = vadd.f32 0.0, %v5624
      %v5626 = vpop.f32.mrb[0].mxu0
      %v5627 = vpop.f32.mrb[0].mxu0
      %v5628 = vadd.f32 0.0, %v5627
      %v5629 = vpop.f32.mrb[0].mxu0
      %5630 = vdwg.mxu0
      %v5631 = vadd.f32 %v5188, %v5489
      %v5632 = vadd.f32 %v5189, %v5492
      %v5633 = vadd.f32 %v5190, %v5497
      %v5634 = vadd.f32 %v5191, %v5500
      %v5635 = vadd.f32 %v5192, %v5505
      %v5636 = vadd.f32 %v5193, %v5508
      %v5637 = vadd.f32 %v5194, %v5513
      %v5638 = vadd.f32 %v5195, %v5516
      %v5639 = vadd.f32 %v5196, %v5521
      %v5640 = vadd.f32 %v5197, %v5524
      %v5641 = vadd.f32 %v5198, %v5529
      %v5642 = vadd.f32 %v5199, %v5532
      %v5643 = vadd.f32 %v5200, %v5537
      %v5644 = vadd.f32 %v5201, %v5540
      %v5645 = vadd.f32 %v5202, %v5545
      %v5646 = vadd.f32 %v5203, %v5548
      %v5647 = vadd.f32 %v5204, %v5553
      %v5648 = vadd.f32 %v5205, %v5556
      %v5649 = vadd.f32 %v5206, %v5561
      %v5650 = vadd.f32 %v5207, %v5564
      %v5651 = vadd.f32 %v5208, %v5569
      %v5652 = vadd.f32 %v5209, %v5572
      %v5653 = vadd.f32 %v5210, %v5577
      %v5654 = vadd.f32 %v5211, %v5580
      %v5655 = vadd.f32 %v5212, %v5585
      %v5656 = vadd.f32 %v5213, %v5588
      %v5657 = vadd.f32 %v5214, %v5593
      %v5658 = vadd.f32 %v5215, %v5596
      %v5659 = vadd.f32 %v5216, %v5601
      %v5660 = vadd.f32 %v5217, %v5604
      %v5661 = vadd.f32 %v5218, %v5609
      %v5662 = vadd.f32 %v5219, %v5612
      %v5663 = vadd.f32 %v5220, %v5617
      %v5664 = vadd.f32 %v5221, %v5620
      %v5665 = vadd.f32 %v5222, %v5625
      %v5666 = vadd.f32 %v5223, %v5628
      %v5667 = vld [vmem:[%s320 + $0x10] sm:$0xc]
      %v5668 = vld [vmem:[%s320 + $0x14] sm:$0xf]
      %v5669 = vld [vmem:[%s320 + $0x18] sm:$0xf]
      %v5670 = vld [vmem:[%s320 + $0x1c] sm:$0xf]
      %v5671 = vld [vmem:[%s320 + $0x20] sm:$0xf]
      %v5672 = vld [vmem:[%s320 + $0x24] sm:$0xf]
      %v5673 = vld [vmem:[%s320 + $0x28] sm:$0xf]
      %v5674 = vld [vmem:[%s320 + $0x2c] sm:$0xf]
      %v5675 = vld [vmem:[%s320 + $0x30] sm:$0xf]
      %v5676 = vld [vmem:[%s320 + $0x34] sm:$0xf]
      %v5677 = vld [vmem:[%s320 + $0x38] sm:$0xf]
      %v5678 = vld [vmem:[%s320 + $0x3c] sm:$0xf]
      %v5679 = vld [vmem:[%s320 + $0x40] sm:$0xf]
      %v5680 = vld [vmem:[%s320 + $0x44] sm:$0xf]
      %v5681 = vld [vmem:[%s320 + $0x48] sm:$0xf]
      %v5682 = vld [vmem:[%s320 + $0x4c] sm:$0xf]
      %v5683 = vld [vmem:[%s320 + $0x50] sm:$0xf]
      %v5684 = vld [vmem:[%s320 + $0x54] sm:$0xf]
      %v5685 = vld [vmem:[%s320 + $0x58] sm:$0xf]
      %v5686 = vld [vmem:[%s320 + $0x5c] sm:$0xf]
      %v5687 = vld [vmem:[%s320 + $0x60] sm:$0xf]
      %v5688 = vld [vmem:[%s320 + $0x64] sm:$0xf]
      %v5689 = vld [vmem:[%s320 + $0x68] sm:$0xf]
      %v5690 = vld [vmem:[%s320 + $0x6c] sm:$0xf]
      %v5691 = vld [vmem:[%s320 + $0x70] sm:$0xf]
      %v5692 = vld [vmem:[%s320 + $0x74] sm:$0xf]
      %v5693 = vld [vmem:[%s320 + $0x78] sm:$0xf]
      %v5694 = vld [vmem:[%s320 + $0x7c] sm:$0xf]
      %v5695 = vld [vmem:[%s320 + $0x80] sm:$0xf]
      %v5696 = vld [vmem:[%s320 + $0x84] sm:$0xf]
      %v5697 = vld [vmem:[%s320 + $0x88] sm:$0xf]
      %v5698 = vld [vmem:[%s320 + $0x8c] sm:$0xf]
      %v5699 = vld [vmem:[%s320 + $0x90] sm:$0xf]
      %v5700 = vld [vmem:[%s320 + $0x94] sm:$0xf]
      %v5701 = vld [vmem:[%s320 + $0x98] sm:$0xf]
      %v5702 = vld [vmem:[%s320 + $0x9c] sm:$0xf]
      %v5703 = vld [vmem:[%s320 + $0xa0] sm:$0x3]
      %s5704 = scalar_lea.vmem %s3, 48
      %v5705 = vld [vmem:[%s5704] sm:$0xf]
      %v5706 = vld [vmem:[%s5704 + $0x4] sm:$0xf]
      %v5744 = vunpack.c.l.b16 %v5667
      %v5745 = vunpack.c.l.b16 %v5668
      %v5746 = vunpack.c.l.b16 %v5669
      %v5747 = vunpack.c.l.b16 %v5670
      %v5748 = vunpack.c.l.b16 %v5671
      %v5749 = vunpack.c.l.b16 %v5672
      %v5750 = vunpack.c.l.b16 %v5673
      %v5751 = vunpack.c.l.b16 %v5674
      %v5752 = vunpack.c.l.b16 %v5675
      %v5753 = vunpack.c.l.b16 %v5676
      %v5754 = vunpack.c.l.b16 %v5677
      %v5755 = vunpack.c.l.b16 %v5678
      %v5756 = vunpack.c.l.b16 %v5679
      %v5757 = vunpack.c.l.b16 %v5680
      %v5758 = vunpack.c.l.b16 %v5681
      %v5759 = vunpack.c.l.b16 %v5682
      %v5760 = vunpack.c.l.b16 %v5683
      %v5761 = vunpack.c.l.b16 %v5684
      %v5762 = vunpack.c.l.b16 %v5685
      %v5763 = vunpack.c.l.b16 %v5686
      %v5764 = vunpack.c.l.b16 %v5687
      %v5765 = vunpack.c.l.b16 %v5688
      %v5766 = vunpack.c.l.b16 %v5689
      %v5767 = vunpack.c.l.b16 %v5690
      %v5768 = vunpack.c.l.b16 %v5691
      %v5769 = vunpack.c.l.b16 %v5692
      %v5770 = vunpack.c.l.b16 %v5693
      %v5771 = vunpack.c.l.b16 %v5694
      %v5772 = vunpack.c.l.b16 %v5695
      %v5773 = vunpack.c.l.b16 %v5696
      %v5774 = vunpack.c.l.b16 %v5697
      %v5775 = vunpack.c.l.b16 %v5698
      %v5776 = vunpack.c.l.b16 %v5699
      %v5777 = vunpack.c.l.b16 %v5700
      %v5778 = vunpack.c.l.b16 %v5701
      %v5779 = vunpack.c.l.b16 %v5702
      %v5780 = vunpack.c.l.b16 %v5703
      %v5781 = vpack.c.b16 %v5745, %v5744
      %v5782 = vpack.c.b16 %v5747, %v5746
      %v5783 = vpack.c.b16 %v5749, %v5748
      %v5784 = vpack.c.b16 %v5751, %v5750
      %v5785 = vpack.c.b16 %v5753, %v5752
      %v5786 = vpack.c.b16 %v5755, %v5754
      %v5787 = vpack.c.b16 %v5757, %v5756
      %v5788 = vpack.c.b16 %v5759, %v5758
      %v5789 = vpack.c.b16 %v5761, %v5760
      %v5790 = vpack.c.b16 %v5763, %v5762
      %v5791 = vpack.c.b16 %v5765, %v5764
      %v5792 = vpack.c.b16 %v5767, %v5766
      %v5793 = vpack.c.b16 %v5769, %v5768
      %v5794 = vpack.c.b16 %v5771, %v5770
      %v5795 = vpack.c.b16 %v5773, %v5772
      %v5796 = vpack.c.b16 %v5775, %v5774
      %v5797 = vpack.c.b16 %v5777, %v5776
      %v5798 = vpack.c.b16 %v5779, %v5778
      %v5799 = vpack.c.b16 %v5780, %v5780
      %v5800 = vrot.slane %v5781, 2
      %v5801 = vrot.slane %v5782, 2
      %v5802 = vsel %vm4596, %v5800, %v5801
      %v5803 = vrot.slane %v5783, 2
      %v5804 = vsel %vm4596, %v5801, %v5803
      %v5805 = vrot.slane %v5784, 2
      %v5806 = vsel %vm4596, %v5803, %v5805
      %v5807 = vrot.slane %v5785, 2
      %v5808 = vsel %vm4596, %v5805, %v5807
      %v5809 = vrot.slane %v5786, 2
      %v5810 = vsel %vm4596, %v5807, %v5809
      %v5811 = vrot.slane %v5787, 2
      %v5812 = vsel %vm4596, %v5809, %v5811
      %v5813 = vrot.slane %v5788, 2
      %v5814 = vsel %vm4596, %v5811, %v5813
      %v5815 = vrot.slane %v5789, 2
      %v5816 = vsel %vm4596, %v5813, %v5815
      %v5817 = vrot.slane %v5790, 2
      %v5818 = vsel %vm4596, %v5815, %v5817
      %v5819 = vrot.slane %v5791, 2
      %v5820 = vsel %vm4596, %v5817, %v5819
      %v5821 = vrot.slane %v5792, 2
      %v5822 = vsel %vm4596, %v5819, %v5821
      %v5823 = vrot.slane %v5793, 2
      %v5824 = vsel %vm4596, %v5821, %v5823
      %v5825 = vrot.slane %v5794, 2
      %v5826 = vsel %vm4596, %v5823, %v5825
      %v5827 = vrot.slane %v5795, 2
      %v5828 = vsel %vm4596, %v5825, %v5827
      %v5829 = vrot.slane %v5796, 2
      %v5830 = vsel %vm4596, %v5827, %v5829
      %v5831 = vrot.slane %v5797, 2
      %v5832 = vsel %vm4596, %v5829, %v5831
      %v5833 = vrot.slane %v5798, 2
      %v5834 = vsel %vm4596, %v5831, %v5833
      %v5835 = vrot.slane %v5799, 2
      %v5836 = vsel %vm4596, %v5833, %v5835
      %v5839 = vunpack.c.l.b16 %v5705
      %v5840 = vunpack.c.l.b16 %v5706
      %v5841 = vpack.c.b16 %v5840, %v5839
      %v5844 = vsel %vm499, %v5802, 0
      %v5847 = vsel %vm499, %v5804, 0
      %v5850 = vsel %vm499, %v5806, 0
      %v5853 = vsel %vm499, %v5808, 0
      %v5856 = vsel %vm499, %v5810, 0
      %v5859 = vsel %vm499, %v5812, 0
      %v5862 = vsel %vm499, %v5814, 0
      %v5865 = vsel %vm499, %v5816, 0
      %v5868 = vsel %vm499, %v5818, 0
      %v5871 = vsel %vm499, %v5820, 0
      %v5874 = vsel %vm499, %v5822, 0
      %v5877 = vsel %vm499, %v5824, 0
      %v5880 = vsel %vm499, %v5826, 0
      %v5883 = vsel %vm499, %v5828, 0
      %v5886 = vsel %vm499, %v5830, 0
      %v5889 = vsel %vm499, %v5832, 0
      %v5892 = vsel %vm499, %v5834, 0
      %v5895 = vsel %vm499, %v5836, 0
      %5897 = vmatprep.subr.bf16.mxu0 0
      %5898 = vmatpush1.bf16.msra.mxu0 %v5841
      %5899 = vmatprep.subr.bf16.mxu0 0
      %5900 = vmatpush1.bf16.msra.mxu0 0
      %5901 = vmatprep.subr.bf16.mxu0 0
      %5902 = vmatpush1.bf16.msra.mxu0 0
      %5903 = vmatprep.subr.bf16.mxu0 0
      %5904 = vmatpush1.bf16.msra.mxu0 0
      %5905 = vmatprep.subr.bf16.mxu0 0
      %5906 = vmatpush1.bf16.msra.mxu0 0
      %5907 = vmatprep.subr.bf16.mxu0 0
      %5908 = vmatpush1.bf16.msra.mxu0 0
      %5909 = vmatprep.subr.bf16.mxu0 0
      %5910 = vmatpush1.bf16.msra.mxu0 0
      %5911 = vmatprep.subr.bf16.mxu0 0
      %5912 = vmatpush1.bf16.msra.mxu0 0
      %5913 = vmatprep.subr.bf16.mxu0 0
      %5914 = vmatpush1.bf16.msra.mxu0 0
      %5915 = vmatprep.subr.bf16.mxu0 0
      %5916 = vmatpush1.bf16.msra.mxu0 0
      %5917 = vmatprep.subr.bf16.mxu0 0
      %5918 = vmatpush1.bf16.msra.mxu0 0
      %5919 = vmatprep.subr.bf16.mxu0 0
      %5920 = vmatpush1.bf16.msra.mxu0 0
      %5921 = vmatprep.subr.bf16.mxu0 0
      %5922 = vmatpush1.bf16.msra.mxu0 0
      %5923 = vmatprep.subr.bf16.mxu0 0
      %5924 = vmatpush1.bf16.msra.mxu0 0
      %5925 = vmatprep.subr.bf16.mxu0 0
      %5926 = vmatpush1.bf16.msra.mxu0 0
      %5927 = vmatprep.subr.bf16.mxu0 0
      %5928 = vmatpush1.bf16.msra.mxu0 0
      %5929 = vmatprep.mubr.bf16.mxu0 0
      %5930 = vmatmul.mubr.bf16.gmra.mrb[0].mxu0 %v5844
      %v5931 = vpop.f32.mrb[0].mxu0
      %v5932 = vadd.f32 0.0, %v5931
      %v5933 = vpop.f32.mrb[0].mxu0
      %v5934 = vpop.f32.mrb[0].mxu0
      %v5935 = vadd.f32 0.0, %v5934
      %v5936 = vpop.f32.mrb[0].mxu0
      %5937 = vmatprep.mubr.bf16.mxu0 0
      %5938 = vmatmul.mubr.bf16.gmra.mrb[0].mxu0 %v5847
      %v5939 = vpop.f32.mrb[0].mxu0
      %v5940 = vadd.f32 0.0, %v5939
      %v5941 = vpop.f32.mrb[0].mxu0
      %v5942 = vpop.f32.mrb[0].mxu0
      %v5943 = vadd.f32 0.0, %v5942
      %v5944 = vpop.f32.mrb[0].mxu0
      %5945 = vmatprep.mubr.bf16.mxu0 0
      %5946 = vmatmul.mubr.bf16.gmra.mrb[0].mxu0 %v5850
      %v5947 = vpop.f32.mrb[0].mxu0
      %v5948 = vadd.f32 0.0, %v5947
      %v5949 = vpop.f32.mrb[0].mxu0
      %v5950 = vpop.f32.mrb[0].mxu0
      %v5951 = vadd.f32 0.0, %v5950
      %v5952 = vpop.f32.mrb[0].mxu0
      %5953 = vmatprep.mubr.bf16.mxu0 0
      %5954 = vmatmul.mubr.bf16.gmra.mrb[0].mxu0 %v5853
      %v5955 = vpop.f32.mrb[0].mxu0
      %v5956 = vadd.f32 0.0, %v5955
      %v5957 = vpop.f32.mrb[0].mxu0
      %v5958 = vpop.f32.mrb[0].mxu0
      %v5959 = vadd.f32 0.0, %v5958
      %v5960 = vpop.f32.mrb[0].mxu0
      %5961 = vmatprep.mubr.bf16.mxu0 0
      %5962 = vmatmul.mubr.bf16.gmra.mrb[0].mxu0 %v5856
      %v5963 = vpop.f32.mrb[0].mxu0
      %v5964 = vadd.f32 0.0, %v5963
      %v5965 = vpop.f32.mrb[0].mxu0
      %v5966 = vpop.f32.mrb[0].mxu0
      %v5967 = vadd.f32 0.0, %v5966
      %v5968 = vpop.f32.mrb[0].mxu0
      %5969 = vmatprep.mubr.bf16.mxu0 0
      %5970 = vmatmul.mubr.bf16.gmra.mrb[0].mxu0 %v5859
      %v5971 = vpop.f32.mrb[0].mxu0
      %v5972 = vadd.f32 0.0, %v5971
      %v5973 = vpop.f32.mrb[0].mxu0
      %v5974 = vpop.f32.mrb[0].mxu0
      %v5975 = vadd.f32 0.0, %v5974
      %v5976 = vpop.f32.mrb[0].mxu0
      %5977 = vmatprep.mubr.bf16.mxu0 0
      %5978 = vmatmul.mubr.bf16.gmra.mrb[0].mxu0 %v5862
      %v5979 = vpop.f32.mrb[0].mxu0
      %v5980 = vadd.f32 0.0, %v5979
      %v5981 = vpop.f32.mrb[0].mxu0
      %v5982 = vpop.f32.mrb[0].mxu0
      %v5983 = vadd.f32 0.0, %v5982
      %v5984 = vpop.f32.mrb[0].mxu0
      %5985 = vmatprep.mubr.bf16.mxu0 0
      %5986 = vmatmul.mubr.bf16.gmra.mrb[0].mxu0 %v5865
      %v5987 = vpop.f32.mrb[0].mxu0
      %v5988 = vadd.f32 0.0, %v5987
      %v5989 = vpop.f32.mrb[0].mxu0
      %v5990 = vpop.f32.mrb[0].mxu0
      %v5991 = vadd.f32 0.0, %v5990
      %v5992 = vpop.f32.mrb[0].mxu0
      %5993 = vmatprep.mubr.bf16.mxu0 0
      %5994 = vmatmul.mubr.bf16.gmra.mrb[0].mxu0 %v5868
      %v5995 = vpop.f32.mrb[0].mxu0
      %v5996 = vadd.f32 0.0, %v5995
      %v5997 = vpop.f32.mrb[0].mxu0
      %v5998 = vpop.f32.mrb[0].mxu0
      %v5999 = vadd.f32 0.0, %v5998
      %v6000 = vpop.f32.mrb[0].mxu0
      %6001 = vmatprep.mubr.bf16.mxu0 0
      %6002 = vmatmul.mubr.bf16.gmra.mrb[0].mxu0 %v5871
      %v6003 = vpop.f32.mrb[0].mxu0
      %v6004 = vadd.f32 0.0, %v6003
      %v6005 = vpop.f32.mrb[0].mxu0
      %v6006 = vpop.f32.mrb[0].mxu0
      %v6007 = vadd.f32 0.0, %v6006
      %v6008 = vpop.f32.mrb[0].mxu0
      %6009 = vmatprep.mubr.bf16.mxu0 0
      %6010 = vmatmul.mubr.bf16.gmra.mrb[0].mxu0 %v5874
      %v6011 = vpop.f32.mrb[0].mxu0
      %v6012 = vadd.f32 0.0, %v6011
      %v6013 = vpop.f32.mrb[0].mxu0
      %v6014 = vpop.f32.mrb[0].mxu0
      %v6015 = vadd.f32 0.0, %v6014
      %v6016 = vpop.f32.mrb[0].mxu0
      %6017 = vmatprep.mubr.bf16.mxu0 0
      %6018 = vmatmul.mubr.bf16.gmra.mrb[0].mxu0 %v5877
      %v6019 = vpop.f32.mrb[0].mxu0
      %v6020 = vadd.f32 0.0, %v6019
      %v6021 = vpop.f32.mrb[0].mxu0
      %v6022 = vpop.f32.mrb[0].mxu0
      %v6023 = vadd.f32 0.0, %v6022
      %v6024 = vpop.f32.mrb[0].mxu0
      %6025 = vmatprep.mubr.bf16.mxu0 0
      %6026 = vmatmul.mubr.bf16.gmra.mrb[0].mxu0 %v5880
      %v6027 = vpop.f32.mrb[0].mxu0
      %v6028 = vadd.f32 0.0, %v6027
      %v6029 = vpop.f32.mrb[0].mxu0
      %v6030 = vpop.f32.mrb[0].mxu0
      %v6031 = vadd.f32 0.0, %v6030
      %v6032 = vpop.f32.mrb[0].mxu0
      %6033 = vmatprep.mubr.bf16.mxu0 0
      %6034 = vmatmul.mubr.bf16.gmra.mrb[0].mxu0 %v5883
      %v6035 = vpop.f32.mrb[0].mxu0
      %v6036 = vadd.f32 0.0, %v6035
      %v6037 = vpop.f32.mrb[0].mxu0
      %v6038 = vpop.f32.mrb[0].mxu0
      %v6039 = vadd.f32 0.0, %v6038
      %v6040 = vpop.f32.mrb[0].mxu0
      %6041 = vmatprep.mubr.bf16.mxu0 0
      %6042 = vmatmul.mubr.bf16.gmra.mrb[0].mxu0 %v5886
      %v6043 = vpop.f32.mrb[0].mxu0
      %v6044 = vadd.f32 0.0, %v6043
      %v6045 = vpop.f32.mrb[0].mxu0
      %v6046 = vpop.f32.mrb[0].mxu0
      %v6047 = vadd.f32 0.0, %v6046
      %v6048 = vpop.f32.mrb[0].mxu0
      %6049 = vmatprep.mubr.bf16.mxu0 0
      %6050 = vmatmul.mubr.bf16.gmra.mrb[0].mxu0 %v5889
      %v6051 = vpop.f32.mrb[0].mxu0
      %v6052 = vadd.f32 0.0, %v6051
      %v6053 = vpop.f32.mrb[0].mxu0
      %v6054 = vpop.f32.mrb[0].mxu0
      %v6055 = vadd.f32 0.0, %v6054
      %v6056 = vpop.f32.mrb[0].mxu0
      %6057 = vmatprep.mubr.bf16.mxu0 0
      %6058 = vmatmul.mubr.bf16.gmra.mrb[0].mxu0 %v5892
      %v6059 = vpop.f32.mrb[0].mxu0
      %v6060 = vadd.f32 0.0, %v6059
      %v6061 = vpop.f32.mrb[0].mxu0
      %v6062 = vpop.f32.mrb[0].mxu0
      %v6063 = vadd.f32 0.0, %v6062
      %v6064 = vpop.f32.mrb[0].mxu0
      %6065 = vmatprep.mubr.bf16.mxu0 0
      %6066 = vmatmul.mubr.bf16.gmra.mrb[0].mxu0 %v5895
      %v6067 = vpop.f32.mrb[0].mxu0
      %v6068 = vadd.f32 0.0, %v6067
      %v6069 = vpop.f32.mrb[0].mxu0
      %v6070 = vpop.f32.mrb[0].mxu0
      %v6071 = vadd.f32 0.0, %v6070
      %v6072 = vpop.f32.mrb[0].mxu0
      %6073 = vdwg.mxu0
      %v6074 = vadd.f32 %v5631, %v5932
      %v6075 = vadd.f32 %v5632, %v5935
      %v6076 = vadd.f32 %v5633, %v5940
      %v6077 = vadd.f32 %v5634, %v5943
      %v6078 = vadd.f32 %v5635, %v5948
      %v6079 = vadd.f32 %v5636, %v5951
      %v6080 = vadd.f32 %v5637, %v5956
      %v6081 = vadd.f32 %v5638, %v5959
      %v6082 = vadd.f32 %v5639, %v5964
      %v6083 = vadd.f32 %v5640, %v5967
      %v6084 = vadd.f32 %v5641, %v5972
      %v6085 = vadd.f32 %v5642, %v5975
      %v6086 = vadd.f32 %v5643, %v5980
      %v6087 = vadd.f32 %v5644, %v5983
      %v6088 = vadd.f32 %v5645, %v5988
      %v6089 = vadd.f32 %v5646, %v5991
      %v6090 = vadd.f32 %v5647, %v5996
      %v6091 = vadd.f32 %v5648, %v5999
      %v6092 = vadd.f32 %v5649, %v6004
      %v6093 = vadd.f32 %v5650, %v6007
      %v6094 = vadd.f32 %v5651, %v6012
      %v6095 = vadd.f32 %v5652, %v6015
      %v6096 = vadd.f32 %v5653, %v6020
      %v6097 = vadd.f32 %v5654, %v6023
      %v6098 = vadd.f32 %v5655, %v6028
      %v6099 = vadd.f32 %v5656, %v6031
      %v6100 = vadd.f32 %v5657, %v6036
      %v6101 = vadd.f32 %v5658, %v6039
      %v6102 = vadd.f32 %v5659, %v6044
      %v6103 = vadd.f32 %v5660, %v6047
      %v6104 = vadd.f32 %v5661, %v6052
      %v6105 = vadd.f32 %v5662, %v6055
      %v6106 = vadd.f32 %v5663, %v6060
      %v6107 = vadd.f32 %v5664, %v6063
      %v6108 = vadd.f32 %v5665, %v6068
      %v6109 = vadd.f32 %v5666, %v6071
      %v6110 = vld [vmem:[%s315 + $0xa0] sm:$0x7]
      %s6111 = scalar_lea.vmem %s2, 56
      %v6112 = vld [vmem:[%s6111] sm:$0xf]
      %v6113 = vld [vmem:[%s6111 + $0x4] sm:$0xf]
      %v6115 = vunpack.c.l.b16 %v6110
      %v6116 = vpack.c.b16 %v6115, %v6115
      %vm6117 = vsmask.f32 5376
      %v6119 = vshrl.u32 %v5338, 16
      %v6121 = vrot.slane %v6119, 2
      %v6122 = vshll.u32 %v5338, 16
      %v6124 = vrot.slane %v6122, 3
      %v6125 = vor.u32 %v6121, %v6124
      %v6127 = vshrl.u32 %v5339, 16
      %v6129 = vrot.slane %v6127, 2
      %v6130 = vshll.u32 %v5339, 16
      %v6132 = vrot.slane %v6130, 3
      %v6133 = vor.u32 %v6129, %v6132
      %v6134 = vsel %vm6117, %v6125, %v6133
      %v6136 = vshrl.u32 %v5340, 16
      %v6138 = vrot.slane %v6136, 2
      %v6139 = vshll.u32 %v5340, 16
      %v6141 = vrot.slane %v6139, 3
      %v6142 = vor.u32 %v6138, %v6141
      %v6143 = vsel %vm6117, %v6133, %v6142
      %v6145 = vshrl.u32 %v5341, 16
      %v6147 = vrot.slane %v6145, 2
      %v6148 = vshll.u32 %v5341, 16
      %v6150 = vrot.slane %v6148, 3
      %v6151 = vor.u32 %v6147, %v6150
      %v6152 = vsel %vm6117, %v6142, %v6151
      %v6154 = vshrl.u32 %v5342, 16
      %v6156 = vrot.slane %v6154, 2
      %v6157 = vshll.u32 %v5342, 16
      %v6159 = vrot.slane %v6157, 3
      %v6160 = vor.u32 %v6156, %v6159
      %v6161 = vsel %vm6117, %v6151, %v6160
      %v6163 = vshrl.u32 %v5343, 16
      %v6165 = vrot.slane %v6163, 2
      %v6166 = vshll.u32 %v5343, 16
      %v6168 = vrot.slane %v6166, 3
      %v6169 = vor.u32 %v6165, %v6168
      %v6170 = vsel %vm6117, %v6160, %v6169
      %v6172 = vshrl.u32 %v5344, 16
      %v6174 = vrot.slane %v6172, 2
      %v6175 = vshll.u32 %v5344, 16
      %v6177 = vrot.slane %v6175, 3
      %v6178 = vor.u32 %v6174, %v6177
      %v6179 = vsel %vm6117, %v6169, %v6178
      %v6181 = vshrl.u32 %v5345, 16
      %v6183 = vrot.slane %v6181, 2
      %v6184 = vshll.u32 %v5345, 16
      %v6186 = vrot.slane %v6184, 3
      %v6187 = vor.u32 %v6183, %v6186
      %v6188 = vsel %vm6117, %v6178, %v6187
      %v6190 = vshrl.u32 %v5346, 16
      %v6192 = vrot.slane %v6190, 2
      %v6193 = vshll.u32 %v5346, 16
      %v6195 = vrot.slane %v6193, 3
      %v6196 = vor.u32 %v6192, %v6195
      %v6197 = vsel %vm6117, %v6187, %v6196
      %v6199 = vshrl.u32 %v5347, 16
      %v6201 = vrot.slane %v6199, 2
      %v6202 = vshll.u32 %v5347, 16
      %v6204 = vrot.slane %v6202, 3
      %v6205 = vor.u32 %v6201, %v6204
      %v6206 = vsel %vm6117, %v6196, %v6205
      %v6208 = vshrl.u32 %v5348, 16
      %v6210 = vrot.slane %v6208, 2
      %v6211 = vshll.u32 %v5348, 16
      %v6213 = vrot.slane %v6211, 3
      %v6214 = vor.u32 %v6210, %v6213
      %v6215 = vsel %vm6117, %v6205, %v6214
      %v6217 = vshrl.u32 %v5349, 16
      %v6219 = vrot.slane %v6217, 2
      %v6220 = vshll.u32 %v5349, 16
      %v6222 = vrot.slane %v6220, 3
      %v6223 = vor.u32 %v6219, %v6222
      %v6224 = vsel %vm6117, %v6214, %v6223
      %v6226 = vshrl.u32 %v5350, 16
      %v6228 = vrot.slane %v6226, 2
      %v6229 = vshll.u32 %v5350, 16
      %v6231 = vrot.slane %v6229, 3
      %v6232 = vor.u32 %v6228, %v6231
      %v6233 = vsel %vm6117, %v6223, %v6232
      %v6235 = vshrl.u32 %v5351, 16
      %v6237 = vrot.slane %v6235, 2
      %v6238 = vshll.u32 %v5351, 16
      %v6240 = vrot.slane %v6238, 3
      %v6241 = vor.u32 %v6237, %v6240
      %v6242 = vsel %vm6117, %v6232, %v6241
      %v6244 = vshrl.u32 %v5352, 16
      %v6246 = vrot.slane %v6244, 2
      %v6247 = vshll.u32 %v5352, 16
      %v6249 = vrot.slane %v6247, 3
      %v6250 = vor.u32 %v6246, %v6249
      %v6251 = vsel %vm6117, %v6241, %v6250
      %v6253 = vshrl.u32 %v5353, 16
      %v6255 = vrot.slane %v6253, 2
      %v6256 = vshll.u32 %v5353, 16
      %v6258 = vrot.slane %v6256, 3
      %v6259 = vor.u32 %v6255, %v6258
      %v6260 = vsel %vm6117, %v6250, %v6259
      %v6262 = vshrl.u32 %v5354, 16
      %v6264 = vrot.slane %v6262, 2
      %v6265 = vshll.u32 %v5354, 16
      %v6267 = vrot.slane %v6265, 3
      %v6268 = vor.u32 %v6264, %v6267
      %v6269 = vsel %vm6117, %v6259, %v6268
      %v6271 = vshrl.u32 %v5355, 16
      %v6273 = vrot.slane %v6271, 2
      %v6274 = vshll.u32 %v5355, 16
      %v6276 = vrot.slane %v6274, 3
      %v6277 = vor.u32 %v6273, %v6276
      %v6278 = vsel %vm6117, %v6268, %v6277
      %v6280 = vshrl.u32 %v6116, 16
      %v6282 = vrot.slane %v6280, 2
      %v6283 = vshll.u32 %v6116, 16
      %v6285 = vrot.slane %v6283, 3
      %v6286 = vor.u32 %v6282, %v6285
      %v6287 = vsel %vm6117, %v6277, %v6286
      %v6290 = vunpack.c.l.b16 %v6112
      %v6291 = vunpack.c.l.b16 %v6113
      %v6292 = vpack.c.b16 %v6291, %v6290
      %v6295 = vsel %vm499, %v6134, 0
      %v6298 = vsel %vm499, %v6143, 0
      %v6301 = vsel %vm499, %v6152, 0
      %v6304 = vsel %vm499, %v6161, 0
      %v6307 = vsel %vm499, %v6170, 0
      %v6310 = vsel %vm499, %v6179, 0
      %v6313 = vsel %vm499, %v6188, 0
      %v6316 = vsel %vm499, %v6197, 0
      %v6319 = vsel %vm499, %v6206, 0
      %v6322 = vsel %vm499, %v6215, 0
      %v6325 = vsel %vm499, %v6224, 0
      %v6328 = vsel %vm499, %v6233, 0
      %v6331 = vsel %vm499, %v6242, 0
      %v6334 = vsel %vm499, %v6251, 0
      %v6337 = vsel %vm499, %v6260, 0
      %v6340 = vsel %vm499, %v6269, 0
      %v6343 = vsel %vm499, %v6278, 0
      %v6346 = vsel %vm499, %v6287, 0
      %6348 = vmatprep.subr.bf16.mxu0 0
      %6349 = vmatpush1.bf16.msra.mxu0 %v6292
      %6350 = vmatprep.subr.bf16.mxu0 0
      %6351 = vmatpush1.bf16.msra.mxu0 0
      %6352 = vmatprep.subr.bf16.mxu0 0
      %6353 = vmatpush1.bf16.msra.mxu0 0
      %6354 = vmatprep.subr.bf16.mxu0 0
      %6355 = vmatpush1.bf16.msra.mxu0 0
      %6356 = vmatprep.subr.bf16.mxu0 0
      %6357 = vmatpush1.bf16.msra.mxu0 0
      %6358 = vmatprep.subr.bf16.mxu0 0
      %6359 = vmatpush1.bf16.msra.mxu0 0
      %6360 = vmatprep.subr.bf16.mxu0 0
      %6361 = vmatpush1.bf16.msra.mxu0 0
      %6362 = vmatprep.subr.bf16.mxu0 0
      %6363 = vmatpush1.bf16.msra.mxu0 0
      %6364 = vmatprep.subr.bf16.mxu0 0
      %6365 = vmatpush1.bf16.msra.mxu0 0
      %6366 = vmatprep.subr.bf16.mxu0 0
      %6367 = vmatpush1.bf16.msra.mxu0 0
      %6368 = vmatprep.subr.bf16.mxu0 0
      %6369 = vmatpush1.bf16.msra.mxu0 0
      %6370 = vmatprep.subr.bf16.mxu0 0
      %6371 = vmatpush1.bf16.msra.mxu0 0
      %6372 = vmatprep.subr.bf16.mxu0 0
      %6373 = vmatpush1.bf16.msra.mxu0 0
      %6374 = vmatprep.subr.bf16.mxu0 0
      %6375 = vmatpush1.bf16.msra.mxu0 0
      %6376 = vmatprep.subr.bf16.mxu0 0
      %6377 = vmatpush1.bf16.msra.mxu0 0
      %6378 = vmatprep.subr.bf16.mxu0 0
      %6379 = vmatpush1.bf16.msra.mxu0 0
      %6380 = vmatprep.mubr.bf16.mxu0 0
      %6381 = vmatmul.mubr.bf16.gmra.mrb[0].mxu0 %v6295
      %v6382 = vpop.f32.mrb[0].mxu0
      %v6383 = vadd.f32 0.0, %v6382
      %v6384 = vpop.f32.mrb[0].mxu0
      %v6385 = vpop.f32.mrb[0].mxu0
      %v6386 = vadd.f32 0.0, %v6385
      %v6387 = vpop.f32.mrb[0].mxu0
      %6388 = vmatprep.mubr.bf16.mxu0 0
      %6389 = vmatmul.mubr.bf16.gmra.mrb[0].mxu0 %v6298
      %v6390 = vpop.f32.mrb[0].mxu0
      %v6391 = vadd.f32 0.0, %v6390
      %v6392 = vpop.f32.mrb[0].mxu0
      %v6393 = vpop.f32.mrb[0].mxu0
      %v6394 = vadd.f32 0.0, %v6393
      %v6395 = vpop.f32.mrb[0].mxu0
      %6396 = vmatprep.mubr.bf16.mxu0 0
      %6397 = vmatmul.mubr.bf16.gmra.mrb[0].mxu0 %v6301
      %v6398 = vpop.f32.mrb[0].mxu0
      %v6399 = vadd.f32 0.0, %v6398
      %v6400 = vpop.f32.mrb[0].mxu0
      %v6401 = vpop.f32.mrb[0].mxu0
      %v6402 = vadd.f32 0.0, %v6401
      %v6403 = vpop.f32.mrb[0].mxu0
      %6404 = vmatprep.mubr.bf16.mxu0 0
      %6405 = vmatmul.mubr.bf16.gmra.mrb[0].mxu0 %v6304
      %v6406 = vpop.f32.mrb[0].mxu0
      %v6407 = vadd.f32 0.0, %v6406
      %v6408 = vpop.f32.mrb[0].mxu0
      %v6409 = vpop.f32.mrb[0].mxu0
      %v6410 = vadd.f32 0.0, %v6409
      %v6411 = vpop.f32.mrb[0].mxu0
      %6412 = vmatprep.mubr.bf16.mxu0 0
      %6413 = vmatmul.mubr.bf16.gmra.mrb[0].mxu0 %v6307
      %v6414 = vpop.f32.mrb[0].mxu0
      %v6415 = vadd.f32 0.0, %v6414
      %v6416 = vpop.f32.mrb[0].mxu0
      %v6417 = vpop.f32.mrb[0].mxu0
      %v6418 = vadd.f32 0.0, %v6417
      %v6419 = vpop.f32.mrb[0].mxu0
      %6420 = vmatprep.mubr.bf16.mxu0 0
      %6421 = vmatmul.mubr.bf16.gmra.mrb[0].mxu0 %v6310
      %v6422 = vpop.f32.mrb[0].mxu0
      %v6423 = vadd.f32 0.0, %v6422
      %v6424 = vpop.f32.mrb[0].mxu0
      %v6425 = vpop.f32.mrb[0].mxu0
      %v6426 = vadd.f32 0.0, %v6425
      %v6427 = vpop.f32.mrb[0].mxu0
      %6428 = vmatprep.mubr.bf16.mxu0 0
      %6429 = vmatmul.mubr.bf16.gmra.mrb[0].mxu0 %v6313
      %v6430 = vpop.f32.mrb[0].mxu0
      %v6431 = vadd.f32 0.0, %v6430
      %v6432 = vpop.f32.mrb[0].mxu0
      %v6433 = vpop.f32.mrb[0].mxu0
      %v6434 = vadd.f32 0.0, %v6433
      %v6435 = vpop.f32.mrb[0].mxu0
      %6436 = vmatprep.mubr.bf16.mxu0 0
      %6437 = vmatmul.mubr.bf16.gmra.mrb[0].mxu0 %v6316
      %v6438 = vpop.f32.mrb[0].mxu0
      %v6439 = vadd.f32 0.0, %v6438
      %v6440 = vpop.f32.mrb[0].mxu0
      %v6441 = vpop.f32.mrb[0].mxu0
      %v6442 = vadd.f32 0.0, %v6441
      %v6443 = vpop.f32.mrb[0].mxu0
      %6444 = vmatprep.mubr.bf16.mxu0 0
      %6445 = vmatmul.mubr.bf16.gmra.mrb[0].mxu0 %v6319
      %v6446 = vpop.f32.mrb[0].mxu0
      %v6447 = vadd.f32 0.0, %v6446
      %v6448 = vpop.f32.mrb[0].mxu0
      %v6449 = vpop.f32.mrb[0].mxu0
      %v6450 = vadd.f32 0.0, %v6449
      %v6451 = vpop.f32.mrb[0].mxu0
      %6452 = vmatprep.mubr.bf16.mxu0 0
      %6453 = vmatmul.mubr.bf16.gmra.mrb[0].mxu0 %v6322
      %v6454 = vpop.f32.mrb[0].mxu0
      %v6455 = vadd.f32 0.0, %v6454
      %v6456 = vpop.f32.mrb[0].mxu0
      %v6457 = vpop.f32.mrb[0].mxu0
      %v6458 = vadd.f32 0.0, %v6457
      %v6459 = vpop.f32.mrb[0].mxu0
      %6460 = vmatprep.mubr.bf16.mxu0 0
      %6461 = vmatmul.mubr.bf16.gmra.mrb[0].mxu0 %v6325
      %v6462 = vpop.f32.mrb[0].mxu0
      %v6463 = vadd.f32 0.0, %v6462
      %v6464 = vpop.f32.mrb[0].mxu0
      %v6465 = vpop.f32.mrb[0].mxu0
      %v6466 = vadd.f32 0.0, %v6465
      %v6467 = vpop.f32.mrb[0].mxu0
      %6468 = vmatprep.mubr.bf16.mxu0 0
      %6469 = vmatmul.mubr.bf16.gmra.mrb[0].mxu0 %v6328
      %v6470 = vpop.f32.mrb[0].mxu0
      %v6471 = vadd.f32 0.0, %v6470
      %v6472 = vpop.f32.mrb[0].mxu0
      %v6473 = vpop.f32.mrb[0].mxu0
      %v6474 = vadd.f32 0.0, %v6473
      %v6475 = vpop.f32.mrb[0].mxu0
      %6476 = vmatprep.mubr.bf16.mxu0 0
      %6477 = vmatmul.mubr.bf16.gmra.mrb[0].mxu0 %v6331
      %v6478 = vpop.f32.mrb[0].mxu0
      %v6479 = vadd.f32 0.0, %v6478
      %v6480 = vpop.f32.mrb[0].mxu0
      %v6481 = vpop.f32.mrb[0].mxu0
      %v6482 = vadd.f32 0.0, %v6481
      %v6483 = vpop.f32.mrb[0].mxu0
      %6484 = vmatprep.mubr.bf16.mxu0 0
      %6485 = vmatmul.mubr.bf16.gmra.mrb[0].mxu0 %v6334
      %v6486 = vpop.f32.mrb[0].mxu0
      %v6487 = vadd.f32 0.0, %v6486
      %v6488 = vpop.f32.mrb[0].mxu0
      %v6489 = vpop.f32.mrb[0].mxu0
      %v6490 = vadd.f32 0.0, %v6489
      %v6491 = vpop.f32.mrb[0].mxu0
      %6492 = vmatprep.mubr.bf16.mxu0 0
      %6493 = vmatmul.mubr.bf16.gmra.mrb[0].mxu0 %v6337
      %v6494 = vpop.f32.mrb[0].mxu0
      %v6495 = vadd.f32 0.0, %v6494
      %v6496 = vpop.f32.mrb[0].mxu0
      %v6497 = vpop.f32.mrb[0].mxu0
      %v6498 = vadd.f32 0.0, %v6497
      %v6499 = vpop.f32.mrb[0].mxu0
      %6500 = vmatprep.mubr.bf16.mxu0 0
      %6501 = vmatmul.mubr.bf16.gmra.mrb[0].mxu0 %v6340
      %v6502 = vpop.f32.mrb[0].mxu0
      %v6503 = vadd.f32 0.0, %v6502
      %v6504 = vpop.f32.mrb[0].mxu0
      %v6505 = vpop.f32.mrb[0].mxu0
      %v6506 = vadd.f32 0.0, %v6505
      %v6507 = vpop.f32.mrb[0].mxu0
      %6508 = vmatprep.mubr.bf16.mxu0 0
      %6509 = vmatmul.mubr.bf16.gmra.mrb[0].mxu0 %v6343
      %v6510 = vpop.f32.mrb[0].mxu0
      %v6511 = vadd.f32 0.0, %v6510
      %v6512 = vpop.f32.mrb[0].mxu0
      %v6513 = vpop.f32.mrb[0].mxu0
      %v6514 = vadd.f32 0.0, %v6513
      %v6515 = vpop.f32.mrb[0].mxu0
      %6516 = vmatprep.mubr.bf16.mxu0 0
      %6517 = vmatmul.mubr.bf16.gmra.mrb[0].mxu0 %v6346
      %v6518 = vpop.f32.mrb[0].mxu0
      %v6519 = vadd.f32 0.0, %v6518
      %v6520 = vpop.f32.mrb[0].mxu0
      %v6521 = vpop.f32.mrb[0].mxu0
      %v6522 = vadd.f32 0.0, %v6521
      %v6523 = vpop.f32.mrb[0].mxu0
      %6524 = vdwg.mxu0
      %v6525 = vadd.f32 %v6074, %v6383
      %v6526 = vadd.f32 %v6075, %v6386
      %v6527 = vadd.f32 %v6076, %v6391
      %v6528 = vadd.f32 %v6077, %v6394
      %v6529 = vadd.f32 %v6078, %v6399
      %v6530 = vadd.f32 %v6079, %v6402
      %v6531 = vadd.f32 %v6080, %v6407
      %v6532 = vadd.f32 %v6081, %v6410
      %v6533 = vadd.f32 %v6082, %v6415
      %v6534 = vadd.f32 %v6083, %v6418
      %v6535 = vadd.f32 %v6084, %v6423
      %v6536 = vadd.f32 %v6085, %v6426
      %v6537 = vadd.f32 %v6086, %v6431
      %v6538 = vadd.f32 %v6087, %v6434
      %v6539 = vadd.f32 %v6088, %v6439
      %v6540 = vadd.f32 %v6089, %v6442
      %v6541 = vadd.f32 %v6090, %v6447
      %v6542 = vadd.f32 %v6091, %v6450
      %v6543 = vadd.f32 %v6092, %v6455
      %v6544 = vadd.f32 %v6093, %v6458
      %v6545 = vadd.f32 %v6094, %v6463
      %v6546 = vadd.f32 %v6095, %v6466
      %v6547 = vadd.f32 %v6096, %v6471
      %v6548 = vadd.f32 %v6097, %v6474
      %v6549 = vadd.f32 %v6098, %v6479
      %v6550 = vadd.f32 %v6099, %v6482
      %v6551 = vadd.f32 %v6100, %v6487
      %v6552 = vadd.f32 %v6101, %v6490
      %v6553 = vadd.f32 %v6102, %v6495
      %v6554 = vadd.f32 %v6103, %v6498
      %v6555 = vadd.f32 %v6104, %v6503
      %v6556 = vadd.f32 %v6105, %v6506
      %v6557 = vadd.f32 %v6106, %v6511
      %v6558 = vadd.f32 %v6107, %v6514
      %v6559 = vadd.f32 %v6108, %v6519
      %v6560 = vadd.f32 %v6109, %v6522
      %v6561 = vld [vmem:[%s320 + $0xa0] sm:$0x7]
      %s6562 = scalar_lea.vmem %s3, 56
      %v6563 = vld [vmem:[%s6562] sm:$0xf]
      %v6564 = vld [vmem:[%s6562 + $0x4] sm:$0xf]
      %v6566 = vunpack.c.l.b16 %v6561
      %v6567 = vpack.c.b16 %v6566, %v6566
      %v6569 = vshrl.u32 %v5781, 16
      %v6571 = vrot.slane %v6569, 2
      %v6572 = vshll.u32 %v5781, 16
      %v6574 = vrot.slane %v6572, 3
      %v6575 = vor.u32 %v6571, %v6574
      %v6577 = vshrl.u32 %v5782, 16
      %v6579 = vrot.slane %v6577, 2
      %v6580 = vshll.u32 %v5782, 16
      %v6582 = vrot.slane %v6580, 3
      %v6583 = vor.u32 %v6579, %v6582
      %v6584 = vsel %vm6117, %v6575, %v6583
      %v6586 = vshrl.u32 %v5783, 16
      %v6588 = vrot.slane %v6586, 2
      %v6589 = vshll.u32 %v5783, 16
      %v6591 = vrot.slane %v6589, 3
      %v6592 = vor.u32 %v6588, %v6591
      %v6593 = vsel %vm6117, %v6583, %v6592
      %v6595 = vshrl.u32 %v5784, 16
      %v6597 = vrot.slane %v6595, 2
      %v6598 = vshll.u32 %v5784, 16
      %v6600 = vrot.slane %v6598, 3
      %v6601 = vor.u32 %v6597, %v6600
      %v6602 = vsel %vm6117, %v6592, %v6601
      %v6604 = vshrl.u32 %v5785, 16
      %v6606 = vrot.slane %v6604, 2
      %v6607 = vshll.u32 %v5785, 16
      %v6609 = vrot.slane %v6607, 3
      %v6610 = vor.u32 %v6606, %v6609
      %v6611 = vsel %vm6117, %v6601, %v6610
      %v6613 = vshrl.u32 %v5786, 16
      %v6615 = vrot.slane %v6613, 2
      %v6616 = vshll.u32 %v5786, 16
      %v6618 = vrot.slane %v6616, 3
      %v6619 = vor.u32 %v6615, %v6618
      %v6620 = vsel %vm6117, %v6610, %v6619
      %v6622 = vshrl.u32 %v5787, 16
      %v6624 = vrot.slane %v6622, 2
      %v6625 = vshll.u32 %v5787, 16
      %v6627 = vrot.slane %v6625, 3
      %v6628 = vor.u32 %v6624, %v6627
      %v6629 = vsel %vm6117, %v6619, %v6628
      %v6631 = vshrl.u32 %v5788, 16
      %v6633 = vrot.slane %v6631, 2
      %v6634 = vshll.u32 %v5788, 16
      %v6636 = vrot.slane %v6634, 3
      %v6637 = vor.u32 %v6633, %v6636
      %v6638 = vsel %vm6117, %v6628, %v6637
      %v6640 = vshrl.u32 %v5789, 16
      %v6642 = vrot.slane %v6640, 2
      %v6643 = vshll.u32 %v5789, 16
      %v6645 = vrot.slane %v6643, 3
      %v6646 = vor.u32 %v6642, %v6645
      %v6647 = vsel %vm6117, %v6637, %v6646
      %v6649 = vshrl.u32 %v5790, 16
      %v6651 = vrot.slane %v6649, 2
      %v6652 = vshll.u32 %v5790, 16
      %v6654 = vrot.slane %v6652, 3
      %v6655 = vor.u32 %v6651, %v6654
      %v6656 = vsel %vm6117, %v6646, %v6655
      %v6658 = vshrl.u32 %v5791, 16
      %v6660 = vrot.slane %v6658, 2
      %v6661 = vshll.u32 %v5791, 16
      %v6663 = vrot.slane %v6661, 3
      %v6664 = vor.u32 %v6660, %v6663
      %v6665 = vsel %vm6117, %v6655, %v6664
      %v6667 = vshrl.u32 %v5792, 16
      %v6669 = vrot.slane %v6667, 2
      %v6670 = vshll.u32 %v5792, 16
      %v6672 = vrot.slane %v6670, 3
      %v6673 = vor.u32 %v6669, %v6672
      %v6674 = vsel %vm6117, %v6664, %v6673
      %v6676 = vshrl.u32 %v5793, 16
      %v6678 = vrot.slane %v6676, 2
      %v6679 = vshll.u32 %v5793, 16
      %v6681 = vrot.slane %v6679, 3
      %v6682 = vor.u32 %v6678, %v6681
      %v6683 = vsel %vm6117, %v6673, %v6682
      %v6685 = vshrl.u32 %v5794, 16
      %v6687 = vrot.slane %v6685, 2
      %v6688 = vshll.u32 %v5794, 16
      %v6690 = vrot.slane %v6688, 3
      %v6691 = vor.u32 %v6687, %v6690
      %v6692 = vsel %vm6117, %v6682, %v6691
      %v6694 = vshrl.u32 %v5795, 16
      %v6696 = vrot.slane %v6694, 2
      %v6697 = vshll.u32 %v5795, 16
      %v6699 = vrot.slane %v6697, 3
      %v6700 = vor.u32 %v6696, %v6699
      %v6701 = vsel %vm6117, %v6691, %v6700
      %v6703 = vshrl.u32 %v5796, 16
      %v6705 = vrot.slane %v6703, 2
      %v6706 = vshll.u32 %v5796, 16
      %v6708 = vrot.slane %v6706, 3
      %v6709 = vor.u32 %v6705, %v6708
      %v6710 = vsel %vm6117, %v6700, %v6709
      %v6712 = vshrl.u32 %v5797, 16
      %v6714 = vrot.slane %v6712, 2
      %v6715 = vshll.u32 %v5797, 16
      %v6717 = vrot.slane %v6715, 3
      %v6718 = vor.u32 %v6714, %v6717
      %v6719 = vsel %vm6117, %v6709, %v6718
      %v6721 = vshrl.u32 %v5798, 16
      %v6723 = vrot.slane %v6721, 2
      %v6724 = vshll.u32 %v5798, 16
      %v6726 = vrot.slane %v6724, 3
      %v6727 = vor.u32 %v6723, %v6726
      %v6728 = vsel %vm6117, %v6718, %v6727
      %v6730 = vshrl.u32 %v6567, 16
      %v6732 = vrot.slane %v6730, 2
      %v6733 = vshll.u32 %v6567, 16
      %v6735 = vrot.slane %v6733, 3
      %v6736 = vor.u32 %v6732, %v6735
      %v6737 = vsel %vm6117, %v6727, %v6736
      %v6740 = vunpack.c.l.b16 %v6563
      %v6741 = vunpack.c.l.b16 %v6564
      %v6742 = vpack.c.b16 %v6741, %v6740
      %v6745 = vsel %vm499, %v6584, 0
      %v6748 = vsel %vm499, %v6593, 0
      %v6751 = vsel %vm499, %v6602, 0
      %v6754 = vsel %vm499, %v6611, 0
      %v6757 = vsel %vm499, %v6620, 0
      %v6760 = vsel %vm499, %v6629, 0
      %v6763 = vsel %vm499, %v6638, 0
      %v6766 = vsel %vm499, %v6647, 0
      %v6769 = vsel %vm499, %v6656, 0
      %v6772 = vsel %vm499, %v6665, 0
      %v6775 = vsel %vm499, %v6674, 0
      %v6778 = vsel %vm499, %v6683, 0
      %v6781 = vsel %vm499, %v6692, 0
      %v6784 = vsel %vm499, %v6701, 0
      %v6787 = vsel %vm499, %v6710, 0
      %v6790 = vsel %vm499, %v6719, 0
      %v6793 = vsel %vm499, %v6728, 0
      %v6796 = vsel %vm499, %v6737, 0
      %6798 = vmatprep.subr.bf16.mxu0 0
      %6799 = vmatpush1.bf16.msra.mxu0 %v6742
      %6800 = vmatprep.subr.bf16.mxu0 0
      %6801 = vmatpush1.bf16.msra.mxu0 0
      %6802 = vmatprep.subr.bf16.mxu0 0
      %6803 = vmatpush1.bf16.msra.mxu0 0
      %6804 = vmatprep.subr.bf16.mxu0 0
      %6805 = vmatpush1.bf16.msra.mxu0 0
      %6806 = vmatprep.subr.bf16.mxu0 0
      %6807 = vmatpush1.bf16.msra.mxu0 0
      %6808 = vmatprep.subr.bf16.mxu0 0
      %6809 = vmatpush1.bf16.msra.mxu0 0
      %6810 = vmatprep.subr.bf16.mxu0 0
      %6811 = vmatpush1.bf16.msra.mxu0 0
      %6812 = vmatprep.subr.bf16.mxu0 0
      %6813 = vmatpush1.bf16.msra.mxu0 0
      %6814 = vmatprep.subr.bf16.mxu0 0
      %6815 = vmatpush1.bf16.msra.mxu0 0
      %6816 = vmatprep.subr.bf16.mxu0 0
      %6817 = vmatpush1.bf16.msra.mxu0 0
      %6818 = vmatprep.subr.bf16.mxu0 0
      %6819 = vmatpush1.bf16.msra.mxu0 0
      %6820 = vmatprep.subr.bf16.mxu0 0
      %6821 = vmatpush1.bf16.msra.mxu0 0
      %6822 = vmatprep.subr.bf16.mxu0 0
      %6823 = vmatpush1.bf16.msra.mxu0 0
      %6824 = vmatprep.subr.bf16.mxu0 0
      %6825 = vmatpush1.bf16.msra.mxu0 0
      %6826 = vmatprep.subr.bf16.mxu0 0
      %6827 = vmatpush1.bf16.msra.mxu0 0
      %6828 = vmatprep.subr.bf16.mxu0 0
      %6829 = vmatpush1.bf16.msra.mxu0 0
      %6830 = vmatprep.mubr.bf16.mxu0 0
      %6831 = vmatmul.mubr.bf16.gmra.mrb[0].mxu0 %v6745
      %v6832 = vpop.f32.mrb[0].mxu0
      %v6833 = vadd.f32 0.0, %v6832
      %v6834 = vpop.f32.mrb[0].mxu0
      %v6835 = vpop.f32.mrb[0].mxu0
      %v6836 = vadd.f32 0.0, %v6835
      %v6837 = vpop.f32.mrb[0].mxu0
      %6838 = vmatprep.mubr.bf16.mxu0 0
      %6839 = vmatmul.mubr.bf16.gmra.mrb[0].mxu0 %v6748
      %v6840 = vpop.f32.mrb[0].mxu0
      %v6841 = vadd.f32 0.0, %v6840
      %v6842 = vpop.f32.mrb[0].mxu0
      %v6843 = vpop.f32.mrb[0].mxu0
      %v6844 = vadd.f32 0.0, %v6843
      %v6845 = vpop.f32.mrb[0].mxu0
      %6846 = vmatprep.mubr.bf16.mxu0 0
      %6847 = vmatmul.mubr.bf16.gmra.mrb[0].mxu0 %v6751
      %v6848 = vpop.f32.mrb[0].mxu0
      %v6849 = vadd.f32 0.0, %v6848
      %v6850 = vpop.f32.mrb[0].mxu0
      %v6851 = vpop.f32.mrb[0].mxu0
      %v6852 = vadd.f32 0.0, %v6851
      %v6853 = vpop.f32.mrb[0].mxu0
      %6854 = vmatprep.mubr.bf16.mxu0 0
      %6855 = vmatmul.mubr.bf16.gmra.mrb[0].mxu0 %v6754
      %v6856 = vpop.f32.mrb[0].mxu0
      %v6857 = vadd.f32 0.0, %v6856
      %v6858 = vpop.f32.mrb[0].mxu0
      %v6859 = vpop.f32.mrb[0].mxu0
      %v6860 = vadd.f32 0.0, %v6859
      %v6861 = vpop.f32.mrb[0].mxu0
      %6862 = vmatprep.mubr.bf16.mxu0 0
      %6863 = vmatmul.mubr.bf16.gmra.mrb[0].mxu0 %v6757
      %v6864 = vpop.f32.mrb[0].mxu0
      %v6865 = vadd.f32 0.0, %v6864
      %v6866 = vpop.f32.mrb[0].mxu0
      %v6867 = vpop.f32.mrb[0].mxu0
      %v6868 = vadd.f32 0.0, %v6867
      %v6869 = vpop.f32.mrb[0].mxu0
      %6870 = vmatprep.mubr.bf16.mxu0 0
      %6871 = vmatmul.mubr.bf16.gmra.mrb[0].mxu0 %v6760
      %v6872 = vpop.f32.mrb[0].mxu0
      %v6873 = vadd.f32 0.0, %v6872
      %v6874 = vpop.f32.mrb[0].mxu0
      %v6875 = vpop.f32.mrb[0].mxu0
      %v6876 = vadd.f32 0.0, %v6875
      %v6877 = vpop.f32.mrb[0].mxu0
      %6878 = vmatprep.mubr.bf16.mxu0 0
      %6879 = vmatmul.mubr.bf16.gmra.mrb[0].mxu0 %v6763
      %v6880 = vpop.f32.mrb[0].mxu0
      %v6881 = vadd.f32 0.0, %v6880
      %v6882 = vpop.f32.mrb[0].mxu0
      %v6883 = vpop.f32.mrb[0].mxu0
      %v6884 = vadd.f32 0.0, %v6883
      %v6885 = vpop.f32.mrb[0].mxu0
      %6886 = vmatprep.mubr.bf16.mxu0 0
      %6887 = vmatmul.mubr.bf16.gmra.mrb[0].mxu0 %v6766
      %v6888 = vpop.f32.mrb[0].mxu0
      %v6889 = vadd.f32 0.0, %v6888
      %v6890 = vpop.f32.mrb[0].mxu0
      %v6891 = vpop.f32.mrb[0].mxu0
      %v6892 = vadd.f32 0.0, %v6891
      %v6893 = vpop.f32.mrb[0].mxu0
      %6894 = vmatprep.mubr.bf16.mxu0 0
      %6895 = vmatmul.mubr.bf16.gmra.mrb[0].mxu0 %v6769
      %v6896 = vpop.f32.mrb[0].mxu0
      %v6897 = vadd.f32 0.0, %v6896
      %v6898 = vpop.f32.mrb[0].mxu0
      %v6899 = vpop.f32.mrb[0].mxu0
      %v6900 = vadd.f32 0.0, %v6899
      %v6901 = vpop.f32.mrb[0].mxu0
      %6902 = vmatprep.mubr.bf16.mxu0 0
      %6903 = vmatmul.mubr.bf16.gmra.mrb[0].mxu0 %v6772
      %v6904 = vpop.f32.mrb[0].mxu0
      %v6905 = vadd.f32 0.0, %v6904
      %v6906 = vpop.f32.mrb[0].mxu0
      %v6907 = vpop.f32.mrb[0].mxu0
      %v6908 = vadd.f32 0.0, %v6907
      %v6909 = vpop.f32.mrb[0].mxu0
      %6910 = vmatprep.mubr.bf16.mxu0 0
      %6911 = vmatmul.mubr.bf16.gmra.mrb[0].mxu0 %v6775
      %v6912 = vpop.f32.mrb[0].mxu0
      %v6913 = vadd.f32 0.0, %v6912
      %v6914 = vpop.f32.mrb[0].mxu0
      %v6915 = vpop.f32.mrb[0].mxu0
      %v6916 = vadd.f32 0.0, %v6915
      %v6917 = vpop.f32.mrb[0].mxu0
      %6918 = vmatprep.mubr.bf16.mxu0 0
      %6919 = vmatmul.mubr.bf16.gmra.mrb[0].mxu0 %v6778
      %v6920 = vpop.f32.mrb[0].mxu0
      %v6921 = vadd.f32 0.0, %v6920
      %v6922 = vpop.f32.mrb[0].mxu0
      %v6923 = vpop.f32.mrb[0].mxu0
      %v6924 = vadd.f32 0.0, %v6923
      %v6925 = vpop.f32.mrb[0].mxu0
      %6926 = vmatprep.mubr.bf16.mxu0 0
      %6927 = vmatmul.mubr.bf16.gmra.mrb[0].mxu0 %v6781
      %v6928 = vpop.f32.mrb[0].mxu0
      %v6929 = vadd.f32 0.0, %v6928
      %v6930 = vpop.f32.mrb[0].mxu0
      %v6931 = vpop.f32.mrb[0].mxu0
      %v6932 = vadd.f32 0.0, %v6931
      %v6933 = vpop.f32.mrb[0].mxu0
      %6934 = vmatprep.mubr.bf16.mxu0 0
      %6935 = vmatmul.mubr.bf16.gmra.mrb[0].mxu0 %v6784
      %v6936 = vpop.f32.mrb[0].mxu0
      %v6937 = vadd.f32 0.0, %v6936
      %v6938 = vpop.f32.mrb[0].mxu0
      %v6939 = vpop.f32.mrb[0].mxu0
      %v6940 = vadd.f32 0.0, %v6939
      %v6941 = vpop.f32.mrb[0].mxu0
      %6942 = vmatprep.mubr.bf16.mxu0 0
      %6943 = vmatmul.mubr.bf16.gmra.mrb[0].mxu0 %v6787
      %v6944 = vpop.f32.mrb[0].mxu0
      %v6945 = vadd.f32 0.0, %v6944
      %v6946 = vpop.f32.mrb[0].mxu0
      %v6947 = vpop.f32.mrb[0].mxu0
      %v6948 = vadd.f32 0.0, %v6947
      %v6949 = vpop.f32.mrb[0].mxu0
      %6950 = vmatprep.mubr.bf16.mxu0 0
      %6951 = vmatmul.mubr.bf16.gmra.mrb[0].mxu0 %v6790
      %v6952 = vpop.f32.mrb[0].mxu0
      %v6953 = vadd.f32 0.0, %v6952
      %v6954 = vpop.f32.mrb[0].mxu0
      %v6955 = vpop.f32.mrb[0].mxu0
      %v6956 = vadd.f32 0.0, %v6955
      %v6957 = vpop.f32.mrb[0].mxu0
      %6958 = vmatprep.mubr.bf16.mxu0 0
      %6959 = vmatmul.mubr.bf16.gmra.mrb[0].mxu0 %v6793
      %v6960 = vpop.f32.mrb[0].mxu0
      %v6961 = vadd.f32 0.0, %v6960
      %v6962 = vpop.f32.mrb[0].mxu0
      %v6963 = vpop.f32.mrb[0].mxu0
      %v6964 = vadd.f32 0.0, %v6963
      %v6965 = vpop.f32.mrb[0].mxu0
      %6966 = vmatprep.mubr.bf16.mxu0 0
      %6967 = vmatmul.mubr.bf16.gmra.mrb[0].mxu0 %v6796
      %v6968 = vpop.f32.mrb[0].mxu0
      %v6969 = vadd.f32 0.0, %v6968
      %v6970 = vpop.f32.mrb[0].mxu0
      %v6971 = vpop.f32.mrb[0].mxu0
      %v6972 = vadd.f32 0.0, %v6971
      %v6973 = vpop.f32.mrb[0].mxu0
      %6974 = vdwg.mxu0
      %v6975 = vadd.f32 %v6525, %v6833
      %v6976 = vadd.f32 %v6526, %v6836
      %v6977 = vadd.f32 %v6527, %v6841
      %v6978 = vadd.f32 %v6528, %v6844
      %v6979 = vadd.f32 %v6529, %v6849
      %v6980 = vadd.f32 %v6530, %v6852
      %v6981 = vadd.f32 %v6531, %v6857
      %v6982 = vadd.f32 %v6532, %v6860
      %v6983 = vadd.f32 %v6533, %v6865
      %v6984 = vadd.f32 %v6534, %v6868
      %v6985 = vadd.f32 %v6535, %v6873
      %v6986 = vadd.f32 %v6536, %v6876
      %v6987 = vadd.f32 %v6537, %v6881
      %v6988 = vadd.f32 %v6538, %v6884
      %v6989 = vadd.f32 %v6539, %v6889
      %v6990 = vadd.f32 %v6540, %v6892
      %v6991 = vadd.f32 %v6541, %v6897
      %v6992 = vadd.f32 %v6542, %v6900
      %v6993 = vadd.f32 %v6543, %v6905
      %v6994 = vadd.f32 %v6544, %v6908
      %v6995 = vadd.f32 %v6545, %v6913
      %v6996 = vadd.f32 %v6546, %v6916
      %v6997 = vadd.f32 %v6547, %v6921
      %v6998 = vadd.f32 %v6548, %v6924
      %v6999 = vadd.f32 %v6549, %v6929
      %v7000 = vadd.f32 %v6550, %v6932
      %v7001 = vadd.f32 %v6551, %v6937
      %v7002 = vadd.f32 %v6552, %v6940
      %v7003 = vadd.f32 %v6553, %v6945
      %v7004 = vadd.f32 %v6554, %v6948
      %v7005 = vadd.f32 %v6555, %v6953
      %v7006 = vadd.f32 %v6556, %v6956
      %v7007 = vadd.f32 %v6557, %v6961
      %v7008 = vadd.f32 %v6558, %v6964
      %v7009 = vadd.f32 %v6559, %v6969
      %v7010 = vadd.f32 %v6560, %v6972
      %v7011 = vld [vmem:[%s315 + $0x10] sm:$0x8]
      %s7012 = scalar_lea.vmem %s2, 64
      %v7013 = vld [vmem:[%s7012] sm:$0xf]
      %v7014 = vld [vmem:[%s7012 + $0x4] sm:$0xf]
      %v7016 = vunpack.c.l.b16 %v7011
      %v7017 = vpack.c.b16 %v5302, %v7016
      %vm7018 = vcmask 1044480
      %v7019 = vrot.slane %v7017, 3
      %v7020 = vrot.slane %v5339, 3
      %v7021 = vsel %vm7018, %v7019, %v7020
      %v7022 = vrot.slane %v5340, 3
      %v7023 = vsel %vm7018, %v7020, %v7022
      %v7024 = vrot.slane %v5341, 3
      %v7025 = vsel %vm7018, %v7022, %v7024
      %v7026 = vrot.slane %v5342, 3
      %v7027 = vsel %vm7018, %v7024, %v7026
      %v7028 = vrot.slane %v5343, 3
      %v7029 = vsel %vm7018, %v7026, %v7028
      %v7030 = vrot.slane %v5344, 3
      %v7031 = vsel %vm7018, %v7028, %v7030
      %v7032 = vrot.slane %v5345, 3
      %v7033 = vsel %vm7018, %v7030, %v7032
      %v7034 = vrot.slane %v5346, 3
      %v7035 = vsel %vm7018, %v7032, %v7034
      %v7036 = vrot.slane %v5347, 3
      %v7037 = vsel %vm7018, %v7034, %v7036
      %v7038 = vrot.slane %v5348, 3
      %v7039 = vsel %vm7018, %v7036, %v7038
      %v7040 = vrot.slane %v5349, 3
      %v7041 = vsel %vm7018, %v7038, %v7040
      %v7042 = vrot.slane %v5350, 3
      %v7043 = vsel %vm7018, %v7040, %v7042
      %v7044 = vrot.slane %v5351, 3
      %v7045 = vsel %vm7018, %v7042, %v7044
      %v7046 = vrot.slane %v5352, 3
      %v7047 = vsel %vm7018, %v7044, %v7046
      %v7048 = vrot.slane %v5353, 3
      %v7049 = vsel %vm7018, %v7046, %v7048
      %v7050 = vrot.slane %v5354, 3
      %v7051 = vsel %vm7018, %v7048, %v7050
      %v7052 = vrot.slane %v5355, 3
      %v7053 = vsel %vm7018, %v7050, %v7052
      %v7054 = vrot.slane %v6116, 3
      %v7055 = vsel %vm7018, %v7052, %v7054
      %v7058 = vunpack.c.l.b16 %v7013
      %v7059 = vunpack.c.l.b16 %v7014
      %v7060 = vpack.c.b16 %v7059, %v7058
      %v7063 = vsel %vm499, %v7021, 0
      %v7066 = vsel %vm499, %v7023, 0
      %v7069 = vsel %vm499, %v7025, 0
      %v7072 = vsel %vm499, %v7027, 0
      %v7075 = vsel %vm499, %v7029, 0
      %v7078 = vsel %vm499, %v7031, 0
      %v7081 = vsel %vm499, %v7033, 0
      %v7084 = vsel %vm499, %v7035, 0
      %v7087 = vsel %vm499, %v7037, 0
      %v7090 = vsel %vm499, %v7039, 0
      %v7093 = vsel %vm499, %v7041, 0
      %v7096 = vsel %vm499, %v7043, 0
      %v7099 = vsel %vm499, %v7045, 0
      %v7102 = vsel %vm499, %v7047, 0
      %v7105 = vsel %vm499, %v7049, 0
      %v7108 = vsel %vm499, %v7051, 0
      %v7111 = vsel %vm499, %v7053, 0
      %v7114 = vsel %vm499, %v7055, 0
      %7116 = vmatprep.subr.bf16.mxu0 0
      %7117 = vmatpush1.bf16.msra.mxu0 %v7060
      %7118 = vmatprep.subr.bf16.mxu0 0
      %7119 = vmatpush1.bf16.msra.mxu0 0
      %7120 = vmatprep.subr.bf16.mxu0 0
      %7121 = vmatpush1.bf16.msra.mxu0 0
      %7122 = vmatprep.subr.bf16.mxu0 0
      %7123 = vmatpush1.bf16.msra.mxu0 0
      %7124 = vmatprep.subr.bf16.mxu0 0
      %7125 = vmatpush1.bf16.msra.mxu0 0
      %7126 = vmatprep.subr.bf16.mxu0 0
      %7127 = vmatpush1.bf16.msra.mxu0 0
      %7128 = vmatprep.subr.bf16.mxu0 0
      %7129 = vmatpush1.bf16.msra.mxu0 0
      %7130 = vmatprep.subr.bf16.mxu0 0
      %7131 = vmatpush1.bf16.msra.mxu0 0
      %7132 = vmatprep.subr.bf16.mxu0 0
      %7133 = vmatpush1.bf16.msra.mxu0 0
      %7134 = vmatprep.subr.bf16.mxu0 0
      %7135 = vmatpush1.bf16.msra.mxu0 0
      %7136 = vmatprep.subr.bf16.mxu0 0
      %7137 = vmatpush1.bf16.msra.mxu0 0
      %7138 = vmatprep.subr.bf16.mxu0 0
      %7139 = vmatpush1.bf16.msra.mxu0 0
      %7140 = vmatprep.subr.bf16.mxu0 0
      %7141 = vmatpush1.bf16.msra.mxu0 0
      %7142 = vmatprep.subr.bf16.mxu0 0
      %7143 = vmatpush1.bf16.msra.mxu0 0
      %7144 = vmatprep.subr.bf16.mxu0 0
      %7145 = vmatpush1.bf16.msra.mxu0 0
      %7146 = vmatprep.subr.bf16.mxu0 0
      %7147 = vmatpush1.bf16.msra.mxu0 0
      %7148 = vmatprep.mubr.bf16.mxu0 0
      %7149 = vmatmul.mubr.bf16.gmra.mrb[0].mxu0 %v7063
      %v7150 = vpop.f32.mrb[0].mxu0
      %v7151 = vadd.f32 0.0, %v7150
      %v7152 = vpop.f32.mrb[0].mxu0
      %v7153 = vpop.f32.mrb[0].mxu0
      %v7154 = vadd.f32 0.0, %v7153
      %v7155 = vpop.f32.mrb[0].mxu0
      %7156 = vmatprep.mubr.bf16.mxu0 0
      %7157 = vmatmul.mubr.bf16.gmra.mrb[0].mxu0 %v7066
      %v7158 = vpop.f32.mrb[0].mxu0
      %v7159 = vadd.f32 0.0, %v7158
      %v7160 = vpop.f32.mrb[0].mxu0
      %v7161 = vpop.f32.mrb[0].mxu0
      %v7162 = vadd.f32 0.0, %v7161
      %v7163 = vpop.f32.mrb[0].mxu0
      %7164 = vmatprep.mubr.bf16.mxu0 0
      %7165 = vmatmul.mubr.bf16.gmra.mrb[0].mxu0 %v7069
      %v7166 = vpop.f32.mrb[0].mxu0
      %v7167 = vadd.f32 0.0, %v7166
      %v7168 = vpop.f32.mrb[0].mxu0
      %v7169 = vpop.f32.mrb[0].mxu0
      %v7170 = vadd.f32 0.0, %v7169
      %v7171 = vpop.f32.mrb[0].mxu0
      %7172 = vmatprep.mubr.bf16.mxu0 0
      %7173 = vmatmul.mubr.bf16.gmra.mrb[0].mxu0 %v7072
      %v7174 = vpop.f32.mrb[0].mxu0
      %v7175 = vadd.f32 0.0, %v7174
      %v7176 = vpop.f32.mrb[0].mxu0
      %v7177 = vpop.f32.mrb[0].mxu0
      %v7178 = vadd.f32 0.0, %v7177
      %v7179 = vpop.f32.mrb[0].mxu0
      %7180 = vmatprep.mubr.bf16.mxu0 0
      %7181 = vmatmul.mubr.bf16.gmra.mrb[0].mxu0 %v7075
      %v7182 = vpop.f32.mrb[0].mxu0
      %v7183 = vadd.f32 0.0, %v7182
      %v7184 = vpop.f32.mrb[0].mxu0
      %v7185 = vpop.f32.mrb[0].mxu0
      %v7186 = vadd.f32 0.0, %v7185
      %v7187 = vpop.f32.mrb[0].mxu0
      %7188 = vmatprep.mubr.bf16.mxu0 0
      %7189 = vmatmul.mubr.bf16.gmra.mrb[0].mxu0 %v7078
      %v7190 = vpop.f32.mrb[0].mxu0
      %v7191 = vadd.f32 0.0, %v7190
      %v7192 = vpop.f32.mrb[0].mxu0
      %v7193 = vpop.f32.mrb[0].mxu0
      %v7194 = vadd.f32 0.0, %v7193
      %v7195 = vpop.f32.mrb[0].mxu0
      %7196 = vmatprep.mubr.bf16.mxu0 0
      %7197 = vmatmul.mubr.bf16.gmra.mrb[0].mxu0 %v7081
      %v7198 = vpop.f32.mrb[0].mxu0
      %v7199 = vadd.f32 0.0, %v7198
      %v7200 = vpop.f32.mrb[0].mxu0
      %v7201 = vpop.f32.mrb[0].mxu0
      %v7202 = vadd.f32 0.0, %v7201
      %v7203 = vpop.f32.mrb[0].mxu0
      %7204 = vmatprep.mubr.bf16.mxu0 0
      %7205 = vmatmul.mubr.bf16.gmra.mrb[0].mxu0 %v7084
      %v7206 = vpop.f32.mrb[0].mxu0
      %v7207 = vadd.f32 0.0, %v7206
      %v7208 = vpop.f32.mrb[0].mxu0
      %v7209 = vpop.f32.mrb[0].mxu0
      %v7210 = vadd.f32 0.0, %v7209
      %v7211 = vpop.f32.mrb[0].mxu0
      %7212 = vmatprep.mubr.bf16.mxu0 0
      %7213 = vmatmul.mubr.bf16.gmra.mrb[0].mxu0 %v7087
      %v7214 = vpop.f32.mrb[0].mxu0
      %v7215 = vadd.f32 0.0, %v7214
      %v7216 = vpop.f32.mrb[0].mxu0
      %v7217 = vpop.f32.mrb[0].mxu0
      %v7218 = vadd.f32 0.0, %v7217
      %v7219 = vpop.f32.mrb[0].mxu0
      %7220 = vmatprep.mubr.bf16.mxu0 0
      %7221 = vmatmul.mubr.bf16.gmra.mrb[0].mxu0 %v7090
      %v7222 = vpop.f32.mrb[0].mxu0
      %v7223 = vadd.f32 0.0, %v7222
      %v7224 = vpop.f32.mrb[0].mxu0
      %v7225 = vpop.f32.mrb[0].mxu0
      %v7226 = vadd.f32 0.0, %v7225
      %v7227 = vpop.f32.mrb[0].mxu0
      %7228 = vmatprep.mubr.bf16.mxu0 0
      %7229 = vmatmul.mubr.bf16.gmra.mrb[0].mxu0 %v7093
      %v7230 = vpop.f32.mrb[0].mxu0
      %v7231 = vadd.f32 0.0, %v7230
      %v7232 = vpop.f32.mrb[0].mxu0
      %v7233 = vpop.f32.mrb[0].mxu0
      %v7234 = vadd.f32 0.0, %v7233
      %v7235 = vpop.f32.mrb[0].mxu0
      %7236 = vmatprep.mubr.bf16.mxu0 0
      %7237 = vmatmul.mubr.bf16.gmra.mrb[0].mxu0 %v7096
      %v7238 = vpop.f32.mrb[0].mxu0
      %v7239 = vadd.f32 0.0, %v7238
      %v7240 = vpop.f32.mrb[0].mxu0
      %v7241 = vpop.f32.mrb[0].mxu0
      %v7242 = vadd.f32 0.0, %v7241
      %v7243 = vpop.f32.mrb[0].mxu0
      %7244 = vmatprep.mubr.bf16.mxu0 0
      %7245 = vmatmul.mubr.bf16.gmra.mrb[0].mxu0 %v7099
      %v7246 = vpop.f32.mrb[0].mxu0
      %v7247 = vadd.f32 0.0, %v7246
      %v7248 = vpop.f32.mrb[0].mxu0
      %v7249 = vpop.f32.mrb[0].mxu0
      %v7250 = vadd.f32 0.0, %v7249
      %v7251 = vpop.f32.mrb[0].mxu0
      %7252 = vmatprep.mubr.bf16.mxu0 0
      %7253 = vmatmul.mubr.bf16.gmra.mrb[0].mxu0 %v7102
      %v7254 = vpop.f32.mrb[0].mxu0
      %v7255 = vadd.f32 0.0, %v7254
      %v7256 = vpop.f32.mrb[0].mxu0
      %v7257 = vpop.f32.mrb[0].mxu0
      %v7258 = vadd.f32 0.0, %v7257
      %v7259 = vpop.f32.mrb[0].mxu0
      %7260 = vmatprep.mubr.bf16.mxu0 0
      %7261 = vmatmul.mubr.bf16.gmra.mrb[0].mxu0 %v7105
      %v7262 = vpop.f32.mrb[0].mxu0
      %v7263 = vadd.f32 0.0, %v7262
      %v7264 = vpop.f32.mrb[0].mxu0
      %v7265 = vpop.f32.mrb[0].mxu0
      %v7266 = vadd.f32 0.0, %v7265
      %v7267 = vpop.f32.mrb[0].mxu0
      %7268 = vmatprep.mubr.bf16.mxu0 0
      %7269 = vmatmul.mubr.bf16.gmra.mrb[0].mxu0 %v7108
      %v7270 = vpop.f32.mrb[0].mxu0
      %v7271 = vadd.f32 0.0, %v7270
      %v7272 = vpop.f32.mrb[0].mxu0
      %v7273 = vpop.f32.mrb[0].mxu0
      %v7274 = vadd.f32 0.0, %v7273
      %v7275 = vpop.f32.mrb[0].mxu0
      %7276 = vmatprep.mubr.bf16.mxu0 0
      %7277 = vmatmul.mubr.bf16.gmra.mrb[0].mxu0 %v7111
      %v7278 = vpop.f32.mrb[0].mxu0
      %v7279 = vadd.f32 0.0, %v7278
      %v7280 = vpop.f32.mrb[0].mxu0
      %v7281 = vpop.f32.mrb[0].mxu0
      %v7282 = vadd.f32 0.0, %v7281
      %v7283 = vpop.f32.mrb[0].mxu0
      %7284 = vmatprep.mubr.bf16.mxu0 0
      %7285 = vmatmul.mubr.bf16.gmra.mrb[0].mxu0 %v7114
      %v7286 = vpop.f32.mrb[0].mxu0
      %v7287 = vadd.f32 0.0, %v7286
      %v7288 = vpop.f32.mrb[0].mxu0
      %v7289 = vpop.f32.mrb[0].mxu0
      %v7290 = vadd.f32 0.0, %v7289
      %v7291 = vpop.f32.mrb[0].mxu0
      %7292 = vdwg.mxu0
      %v7293 = vadd.f32 %v6975, %v7151
      %v7294 = vadd.f32 %v6976, %v7154
      %v7295 = vadd.f32 %v6977, %v7159
      %v7296 = vadd.f32 %v6978, %v7162
      %v7297 = vadd.f32 %v6979, %v7167
      %v7298 = vadd.f32 %v6980, %v7170
      %v7299 = vadd.f32 %v6981, %v7175
      %v7300 = vadd.f32 %v6982, %v7178
      %v7301 = vadd.f32 %v6983, %v7183
      %v7302 = vadd.f32 %v6984, %v7186
      %v7303 = vadd.f32 %v6985, %v7191
      %v7304 = vadd.f32 %v6986, %v7194
      %v7305 = vadd.f32 %v6987, %v7199
      %v7306 = vadd.f32 %v6988, %v7202
      %v7307 = vadd.f32 %v6989, %v7207
      %v7308 = vadd.f32 %v6990, %v7210
      %v7309 = vadd.f32 %v6991, %v7215
      %v7310 = vadd.f32 %v6992, %v7218
      %v7311 = vadd.f32 %v6993, %v7223
      %v7312 = vadd.f32 %v6994, %v7226
      %v7313 = vadd.f32 %v6995, %v7231
      %v7314 = vadd.f32 %v6996, %v7234
      %v7315 = vadd.f32 %v6997, %v7239
      %v7316 = vadd.f32 %v6998, %v7242
      %v7317 = vadd.f32 %v6999, %v7247
      %v7318 = vadd.f32 %v7000, %v7250
      %v7319 = vadd.f32 %v7001, %v7255
      %v7320 = vadd.f32 %v7002, %v7258
      %v7321 = vadd.f32 %v7003, %v7263
      %v7322 = vadd.f32 %v7004, %v7266
      %v7323 = vadd.f32 %v7005, %v7271
      %v7324 = vadd.f32 %v7006, %v7274
      %v7325 = vadd.f32 %v7007, %v7279
      %v7326 = vadd.f32 %v7008, %v7282
      %v7327 = vadd.f32 %v7009, %v7287
      %v7328 = vadd.f32 %v7010, %v7290
      %v7329 = vld [vmem:[%s320 + $0x10] sm:$0x8]
      %s7330 = scalar_lea.vmem %s3, 64
      %v7331 = vld [vmem:[%s7330] sm:$0xf]
      %v7332 = vld [vmem:[%s7330 + $0x4] sm:$0xf]
      %v7334 = vunpack.c.l.b16 %v7329
      %v7335 = vpack.c.b16 %v5745, %v7334
      %v7336 = vrot.slane %v7335, 3
      %v7337 = vrot.slane %v5782, 3
      %v7338 = vsel %vm7018, %v7336, %v7337
      %v7339 = vrot.slane %v5783, 3
      %v7340 = vsel %vm7018, %v7337, %v7339
      %v7341 = vrot.slane %v5784, 3
      %v7342 = vsel %vm7018, %v7339, %v7341
      %v7343 = vrot.slane %v5785, 3
      %v7344 = vsel %vm7018, %v7341, %v7343
      %v7345 = vrot.slane %v5786, 3
      %v7346 = vsel %vm7018, %v7343, %v7345
      %v7347 = vrot.slane %v5787, 3
      %v7348 = vsel %vm7018, %v7345, %v7347
      %v7349 = vrot.slane %v5788, 3
      %v7350 = vsel %vm7018, %v7347, %v7349
      %v7351 = vrot.slane %v5789, 3
      %v7352 = vsel %vm7018, %v7349, %v7351
      %v7353 = vrot.slane %v5790, 3
      %v7354 = vsel %vm7018, %v7351, %v7353
      %v7355 = vrot.slane %v5791, 3
      %v7356 = vsel %vm7018, %v7353, %v7355
      %v7357 = vrot.slane %v5792, 3
      %v7358 = vsel %vm7018, %v7355, %v7357
      %v7359 = vrot.slane %v5793, 3
      %v7360 = vsel %vm7018, %v7357, %v7359
      %v7361 = vrot.slane %v5794, 3
      %v7362 = vsel %vm7018, %v7359, %v7361
      %v7363 = vrot.slane %v5795, 3
      %v7364 = vsel %vm7018, %v7361, %v7363
      %v7365 = vrot.slane %v5796, 3
      %v7366 = vsel %vm7018, %v7363, %v7365
      %v7367 = vrot.slane %v5797, 3
      %v7368 = vsel %vm7018, %v7365, %v7367
      %v7369 = vrot.slane %v5798, 3
      %v7370 = vsel %vm7018, %v7367, %v7369
      %v7371 = vrot.slane %v6567, 3
      %v7372 = vsel %vm7018, %v7369, %v7371
      %v7375 = vunpack.c.l.b16 %v7331
      %v7376 = vunpack.c.l.b16 %v7332
      %v7377 = vpack.c.b16 %v7376, %v7375
      %v7380 = vsel %vm499, %v7338, 0
      %v7383 = vsel %vm499, %v7340, 0
      %v7386 = vsel %vm499, %v7342, 0
      %v7389 = vsel %vm499, %v7344, 0
      %v7392 = vsel %vm499, %v7346, 0
      %v7395 = vsel %vm499, %v7348, 0
      %v7398 = vsel %vm499, %v7350, 0
      %v7401 = vsel %vm499, %v7352, 0
      %v7404 = vsel %vm499, %v7354, 0
      %v7407 = vsel %vm499, %v7356, 0
      %v7410 = vsel %vm499, %v7358, 0
      %v7413 = vsel %vm499, %v7360, 0
      %v7416 = vsel %vm499, %v7362, 0
      %v7419 = vsel %vm499, %v7364, 0
      %v7422 = vsel %vm499, %v7366, 0
      %v7425 = vsel %vm499, %v7368, 0
      %v7428 = vsel %vm499, %v7370, 0
      %v7431 = vsel %vm499, %v7372, 0
      %7433 = vmatprep.subr.bf16.mxu0 0
      %7434 = vmatpush1.bf16.msra.mxu0 %v7377
      %7435 = vmatprep.subr.bf16.mxu0 0
      %7436 = vmatpush1.bf16.msra.mxu0 0
      %7437 = vmatprep.subr.bf16.mxu0 0
      %7438 = vmatpush1.bf16.msra.mxu0 0
      %7439 = vmatprep.subr.bf16.mxu0 0
      %7440 = vmatpush1.bf16.msra.mxu0 0
      %7441 = vmatprep.subr.bf16.mxu0 0
      %7442 = vmatpush1.bf16.msra.mxu0 0
      %7443 = vmatprep.subr.bf16.mxu0 0
      %7444 = vmatpush1.bf16.msra.mxu0 0
      %7445 = vmatprep.subr.bf16.mxu0 0
      %7446 = vmatpush1.bf16.msra.mxu0 0
      %7447 = vmatprep.subr.bf16.mxu0 0
      %7448 = vmatpush1.bf16.msra.mxu0 0
      %7449 = vmatprep.subr.bf16.mxu0 0
      %7450 = vmatpush1.bf16.msra.mxu0 0
      %7451 = vmatprep.subr.bf16.mxu0 0
      %7452 = vmatpush1.bf16.msra.mxu0 0
      %7453 = vmatprep.subr.bf16.mxu0 0
      %7454 = vmatpush1.bf16.msra.mxu0 0
      %7455 = vmatprep.subr.bf16.mxu0 0
      %7456 = vmatpush1.bf16.msra.mxu0 0
      %7457 = vmatprep.subr.bf16.mxu0 0
      %7458 = vmatpush1.bf16.msra.mxu0 0
      %7459 = vmatprep.subr.bf16.mxu0 0
      %7460 = vmatpush1.bf16.msra.mxu0 0
      %7461 = vmatprep.subr.bf16.mxu0 0
      %7462 = vmatpush1.bf16.msra.mxu0 0
      %7463 = vmatprep.subr.bf16.mxu0 0
      %7464 = vmatpush1.bf16.msra.mxu0 0
      %7465 = vmatprep.mubr.bf16.mxu0 0
      %7466 = vmatmul.mubr.bf16.gmra.mrb[0].mxu0 %v7380
      %v7467 = vpop.f32.mrb[0].mxu0
      %v7468 = vadd.f32 0.0, %v7467
      %v7469 = vpop.f32.mrb[0].mxu0
      %v7470 = vpop.f32.mrb[0].mxu0
      %v7471 = vadd.f32 0.0, %v7470
      %v7472 = vpop.f32.mrb[0].mxu0
      %7473 = vmatprep.mubr.bf16.mxu0 0
      %7474 = vmatmul.mubr.bf16.gmra.mrb[0].mxu0 %v7383
      %v7475 = vpop.f32.mrb[0].mxu0
      %v7476 = vadd.f32 0.0, %v7475
      %v7477 = vpop.f32.mrb[0].mxu0
      %v7478 = vpop.f32.mrb[0].mxu0
      %v7479 = vadd.f32 0.0, %v7478
      %v7480 = vpop.f32.mrb[0].mxu0
      %7481 = vmatprep.mubr.bf16.mxu0 0
      %7482 = vmatmul.mubr.bf16.gmra.mrb[0].mxu0 %v7386
      %v7483 = vpop.f32.mrb[0].mxu0
      %v7484 = vadd.f32 0.0, %v7483
      %v7485 = vpop.f32.mrb[0].mxu0
      %v7486 = vpop.f32.mrb[0].mxu0
      %v7487 = vadd.f32 0.0, %v7486
      %v7488 = vpop.f32.mrb[0].mxu0
      %7489 = vmatprep.mubr.bf16.mxu0 0
      %7490 = vmatmul.mubr.bf16.gmra.mrb[0].mxu0 %v7389
      %v7491 = vpop.f32.mrb[0].mxu0
      %v7492 = vadd.f32 0.0, %v7491
      %v7493 = vpop.f32.mrb[0].mxu0
      %v7494 = vpop.f32.mrb[0].mxu0
      %v7495 = vadd.f32 0.0, %v7494
      %v7496 = vpop.f32.mrb[0].mxu0
      %7497 = vmatprep.mubr.bf16.mxu0 0
      %7498 = vmatmul.mubr.bf16.gmra.mrb[0].mxu0 %v7392
      %v7499 = vpop.f32.mrb[0].mxu0
      %v7500 = vadd.f32 0.0, %v7499
      %v7501 = vpop.f32.mrb[0].mxu0
      %v7502 = vpop.f32.mrb[0].mxu0
      %v7503 = vadd.f32 0.0, %v7502
      %v7504 = vpop.f32.mrb[0].mxu0
      %7505 = vmatprep.mubr.bf16.mxu0 0
      %7506 = vmatmul.mubr.bf16.gmra.mrb[0].mxu0 %v7395
      %v7507 = vpop.f32.mrb[0].mxu0
      %v7508 = vadd.f32 0.0, %v7507
      %v7509 = vpop.f32.mrb[0].mxu0
      %v7510 = vpop.f32.mrb[0].mxu0
      %v7511 = vadd.f32 0.0, %v7510
      %v7512 = vpop.f32.mrb[0].mxu0
      %7513 = vmatprep.mubr.bf16.mxu0 0
      %7514 = vmatmul.mubr.bf16.gmra.mrb[0].mxu0 %v7398
      %v7515 = vpop.f32.mrb[0].mxu0
      %v7516 = vadd.f32 0.0, %v7515
      %v7517 = vpop.f32.mrb[0].mxu0
      %v7518 = vpop.f32.mrb[0].mxu0
      %v7519 = vadd.f32 0.0, %v7518
      %v7520 = vpop.f32.mrb[0].mxu0
      %7521 = vmatprep.mubr.bf16.mxu0 0
      %7522 = vmatmul.mubr.bf16.gmra.mrb[0].mxu0 %v7401
      %v7523 = vpop.f32.mrb[0].mxu0
      %v7524 = vadd.f32 0.0, %v7523
      %v7525 = vpop.f32.mrb[0].mxu0
      %v7526 = vpop.f32.mrb[0].mxu0
      %v7527 = vadd.f32 0.0, %v7526
      %v7528 = vpop.f32.mrb[0].mxu0
      %7529 = vmatprep.mubr.bf16.mxu0 0
      %7530 = vmatmul.mubr.bf16.gmra.mrb[0].mxu0 %v7404
      %v7531 = vpop.f32.mrb[0].mxu0
      %v7532 = vadd.f32 0.0, %v7531
      %v7533 = vpop.f32.mrb[0].mxu0
      %v7534 = vpop.f32.mrb[0].mxu0
      %v7535 = vadd.f32 0.0, %v7534
      %v7536 = vpop.f32.mrb[0].mxu0
      %7537 = vmatprep.mubr.bf16.mxu0 0
      %7538 = vmatmul.mubr.bf16.gmra.mrb[0].mxu0 %v7407
      %v7539 = vpop.f32.mrb[0].mxu0
      %v7540 = vadd.f32 0.0, %v7539
      %v7541 = vpop.f32.mrb[0].mxu0
      %v7542 = vpop.f32.mrb[0].mxu0
      %v7543 = vadd.f32 0.0, %v7542
      %v7544 = vpop.f32.mrb[0].mxu0
      %7545 = vmatprep.mubr.bf16.mxu0 0
      %7546 = vmatmul.mubr.bf16.gmra.mrb[0].mxu0 %v7410
      %v7547 = vpop.f32.mrb[0].mxu0
      %v7548 = vadd.f32 0.0, %v7547
      %v7549 = vpop.f32.mrb[0].mxu0
      %v7550 = vpop.f32.mrb[0].mxu0
      %v7551 = vadd.f32 0.0, %v7550
      %v7552 = vpop.f32.mrb[0].mxu0
      %7553 = vmatprep.mubr.bf16.mxu0 0
      %7554 = vmatmul.mubr.bf16.gmra.mrb[0].mxu0 %v7413
      %v7555 = vpop.f32.mrb[0].mxu0
      %v7556 = vadd.f32 0.0, %v7555
      %v7557 = vpop.f32.mrb[0].mxu0
      %v7558 = vpop.f32.mrb[0].mxu0
      %v7559 = vadd.f32 0.0, %v7558
      %v7560 = vpop.f32.mrb[0].mxu0
      %7561 = vmatprep.mubr.bf16.mxu0 0
      %7562 = vmatmul.mubr.bf16.gmra.mrb[0].mxu0 %v7416
      %v7563 = vpop.f32.mrb[0].mxu0
      %v7564 = vadd.f32 0.0, %v7563
      %v7565 = vpop.f32.mrb[0].mxu0
      %v7566 = vpop.f32.mrb[0].mxu0
      %v7567 = vadd.f32 0.0, %v7566
      %v7568 = vpop.f32.mrb[0].mxu0
      %7569 = vmatprep.mubr.bf16.mxu0 0
      %7570 = vmatmul.mubr.bf16.gmra.mrb[0].mxu0 %v7419
      %v7571 = vpop.f32.mrb[0].mxu0
      %v7572 = vadd.f32 0.0, %v7571
      %v7573 = vpop.f32.mrb[0].mxu0
      %v7574 = vpop.f32.mrb[0].mxu0
      %v7575 = vadd.f32 0.0, %v7574
      %v7576 = vpop.f32.mrb[0].mxu0
      %7577 = vmatprep.mubr.bf16.mxu0 0
      %7578 = vmatmul.mubr.bf16.gmra.mrb[0].mxu0 %v7422
      %v7579 = vpop.f32.mrb[0].mxu0
      %v7580 = vadd.f32 0.0, %v7579
      %v7581 = vpop.f32.mrb[0].mxu0
      %v7582 = vpop.f32.mrb[0].mxu0
      %v7583 = vadd.f32 0.0, %v7582
      %v7584 = vpop.f32.mrb[0].mxu0
      %7585 = vmatprep.mubr.bf16.mxu0 0
      %7586 = vmatmul.mubr.bf16.gmra.mrb[0].mxu0 %v7425
      %v7587 = vpop.f32.mrb[0].mxu0
      %v7588 = vadd.f32 0.0, %v7587
      %v7589 = vpop.f32.mrb[0].mxu0
      %v7590 = vpop.f32.mrb[0].mxu0
      %v7591 = vadd.f32 0.0, %v7590
      %v7592 = vpop.f32.mrb[0].mxu0
      %7593 = vmatprep.mubr.bf16.mxu0 0
      %7594 = vmatmul.mubr.bf16.gmra.mrb[0].mxu0 %v7428
      %v7595 = vpop.f32.mrb[0].mxu0
      %v7596 = vadd.f32 0.0, %v7595
      %v7597 = vpop.f32.mrb[0].mxu0
      %v7598 = vpop.f32.mrb[0].mxu0
      %v7599 = vadd.f32 0.0, %v7598
      %v7600 = vpop.f32.mrb[0].mxu0
      %7601 = vmatprep.mubr.bf16.mxu0 0
      %7602 = vmatmul.mubr.bf16.gmra.mrb[0].mxu0 %v7431
      %v7603 = vpop.f32.mrb[0].mxu0
      %v7604 = vadd.f32 0.0, %v7603
      %v7605 = vpop.f32.mrb[0].mxu0
      %v7606 = vpop.f32.mrb[0].mxu0
      %v7607 = vadd.f32 0.0, %v7606
      %v7608 = vpop.f32.mrb[0].mxu0
      %7609 = vdwg.mxu0
      %v7610 = vadd.f32 %v7293, %v7468
      %v7611 = vadd.f32 %v7294, %v7471
      %v7612 = vadd.f32 %v7295, %v7476
      %v7613 = vadd.f32 %v7296, %v7479
      %v7614 = vadd.f32 %v7297, %v7484
      %v7615 = vadd.f32 %v7298, %v7487
      %v7616 = vadd.f32 %v7299, %v7492
      %v7617 = vadd.f32 %v7300, %v7495
      %v7618 = vadd.f32 %v7301, %v7500
      %v7619 = vadd.f32 %v7302, %v7503
      %v7620 = vadd.f32 %v7303, %v7508
      %v7621 = vadd.f32 %v7304, %v7511
      %v7622 = vadd.f32 %v7305, %v7516
      %v7623 = vadd.f32 %v7306, %v7519
      %v7624 = vadd.f32 %v7307, %v7524
      %v7625 = vadd.f32 %v7308, %v7527
      %v7626 = vadd.f32 %v7309, %v7532
      %v7627 = vadd.f32 %v7310, %v7535
      %v7628 = vadd.f32 %v7311, %v7540
      %v7629 = vadd.f32 %v7312, %v7543
      %v7630 = vadd.f32 %v7313, %v7548
      %v7631 = vadd.f32 %v7314, %v7551
      %v7632 = vadd.f32 %v7315, %v7556
      %v7633 = vadd.f32 %v7316, %v7559
      %v7634 = vadd.f32 %v7317, %v7564
      %v7635 = vadd.f32 %v7318, %v7567
      %v7636 = vadd.f32 %v7319, %v7572
      %v7637 = vadd.f32 %v7320, %v7575
      %v7638 = vadd.f32 %v7321, %v7580
      %v7639 = vadd.f32 %v7322, %v7583
      %v7640 = vadd.f32 %v7323, %v7588
      %v7641 = vadd.f32 %v7324, %v7591
      %v7642 = vadd.f32 %v7325, %v7596
      %v7643 = vadd.f32 %v7326, %v7599
      %v7644 = vadd.f32 %v7327, %v7604
      %v7645 = vadd.f32 %v7328, %v7607
      %v7646 = vld [vmem:[%s4] sm:$0x1]
      %v7648 = vlaneseq
      %v7649 = vshrl.u32 %v7648, 7
      %v7650 = vsub.s32 0, %v7649
      %v7651 = vrot.slane %v7646, %v7650
      %v7653 = vmul.f32 %v7610, %v7651
      %v7654 = vmul.f32 %v7611, %v7651
      %v7655 = vmul.f32 %v7612, %v7651
      %v7656 = vmul.f32 %v7613, %v7651
      %v7657 = vmul.f32 %v7614, %v7651
      %v7658 = vmul.f32 %v7615, %v7651
      %v7659 = vmul.f32 %v7616, %v7651
      %v7660 = vmul.f32 %v7617, %v7651
      %v7661 = vmul.f32 %v7618, %v7651
      %v7662 = vmul.f32 %v7619, %v7651
      %v7663 = vmul.f32 %v7620, %v7651
      %v7664 = vmul.f32 %v7621, %v7651
      %v7665 = vmul.f32 %v7622, %v7651
      %v7666 = vmul.f32 %v7623, %v7651
      %v7667 = vmul.f32 %v7624, %v7651
      %v7668 = vmul.f32 %v7625, %v7651
      %v7669 = vmul.f32 %v7626, %v7651
      %v7670 = vmul.f32 %v7627, %v7651
      %v7671 = vmul.f32 %v7628, %v7651
      %v7672 = vmul.f32 %v7629, %v7651
      %v7673 = vmul.f32 %v7630, %v7651
      %v7674 = vmul.f32 %v7631, %v7651
      %v7675 = vmul.f32 %v7632, %v7651
      %v7676 = vmul.f32 %v7633, %v7651
      %v7677 = vmul.f32 %v7634, %v7651
      %v7678 = vmul.f32 %v7635, %v7651
      %v7679 = vmul.f32 %v7636, %v7651
      %v7680 = vmul.f32 %v7637, %v7651
      %v7681 = vmul.f32 %v7638, %v7651
      %v7682 = vmul.f32 %v7639, %v7651
      %v7683 = vmul.f32 %v7640, %v7651
      %v7684 = vmul.f32 %v7641, %v7651
      %v7685 = vmul.f32 %v7642, %v7651
      %v7686 = vmul.f32 %v7643, %v7651
      %v7687 = vmul.f32 %v7644, %v7651
      %v7688 = vmul.f32 %v7645, %v7651
      %v7689 = vld [vmem:[%s5] sm:$0x1]
      %v7691 = vlaneseq
      %v7692 = vshrl.u32 %v7691, 7
      %v7693 = vsub.s32 0, %v7692
      %v7694 = vrot.slane %v7689, %v7693
      %v7696 = vadd.f32 %v7653, %v7694
      %v7697 = vadd.f32 %v7654, %v7694
      %v7698 = vadd.f32 %v7655, %v7694
      %v7699 = vadd.f32 %v7656, %v7694
      %v7700 = vadd.f32 %v7657, %v7694
      %v7701 = vadd.f32 %v7658, %v7694
      %v7702 = vadd.f32 %v7659, %v7694
      %v7703 = vadd.f32 %v7660, %v7694
      %v7704 = vadd.f32 %v7661, %v7694
      %v7705 = vadd.f32 %v7662, %v7694
      %v7706 = vadd.f32 %v7663, %v7694
      %v7707 = vadd.f32 %v7664, %v7694
      %v7708 = vadd.f32 %v7665, %v7694
      %v7709 = vadd.f32 %v7666, %v7694
      %v7710 = vadd.f32 %v7667, %v7694
      %v7711 = vadd.f32 %v7668, %v7694
      %v7712 = vadd.f32 %v7669, %v7694
      %v7713 = vadd.f32 %v7670, %v7694
      %v7714 = vadd.f32 %v7671, %v7694
      %v7715 = vadd.f32 %v7672, %v7694
      %v7716 = vadd.f32 %v7673, %v7694
      %v7717 = vadd.f32 %v7674, %v7694
      %v7718 = vadd.f32 %v7675, %v7694
      %v7719 = vadd.f32 %v7676, %v7694
      %v7720 = vadd.f32 %v7677, %v7694
      %v7721 = vadd.f32 %v7678, %v7694
      %v7722 = vadd.f32 %v7679, %v7694
      %v7723 = vadd.f32 %v7680, %v7694
      %v7724 = vadd.f32 %v7681, %v7694
      %v7725 = vadd.f32 %v7682, %v7694
      %v7726 = vadd.f32 %v7683, %v7694
      %v7727 = vadd.f32 %v7684, %v7694
      %v7728 = vadd.f32 %v7685, %v7694
      %v7729 = vadd.f32 %v7686, %v7694
      %v7730 = vadd.f32 %v7687, %v7694
      %v7731 = vadd.f32 %v7688, %v7694
      %v7732 = vmax.f32 %v7696, 0.0
      %v7733 = vmax.f32 %v7697, 0.0
      %v7734 = vmax.f32 %v7698, 0.0
      %v7735 = vmax.f32 %v7699, 0.0
      %v7736 = vmax.f32 %v7700, 0.0
      %v7737 = vmax.f32 %v7701, 0.0
      %v7738 = vmax.f32 %v7702, 0.0
      %v7739 = vmax.f32 %v7703, 0.0
      %v7740 = vmax.f32 %v7704, 0.0
      %v7741 = vmax.f32 %v7705, 0.0
      %v7742 = vmax.f32 %v7706, 0.0
      %v7743 = vmax.f32 %v7707, 0.0
      %v7744 = vmax.f32 %v7708, 0.0
      %v7745 = vmax.f32 %v7709, 0.0
      %v7746 = vmax.f32 %v7710, 0.0
      %v7747 = vmax.f32 %v7711, 0.0
      %v7748 = vmax.f32 %v7712, 0.0
      %v7749 = vmax.f32 %v7713, 0.0
      %v7750 = vmax.f32 %v7714, 0.0
      %v7751 = vmax.f32 %v7715, 0.0
      %v7752 = vmax.f32 %v7716, 0.0
      %v7753 = vmax.f32 %v7717, 0.0
      %v7754 = vmax.f32 %v7718, 0.0
      %v7755 = vmax.f32 %v7719, 0.0
      %v7756 = vmax.f32 %v7720, 0.0
      %v7757 = vmax.f32 %v7721, 0.0
      %v7758 = vmax.f32 %v7722, 0.0
      %v7759 = vmax.f32 %v7723, 0.0
      %v7760 = vmax.f32 %v7724, 0.0
      %v7761 = vmax.f32 %v7725, 0.0
      %v7762 = vmax.f32 %v7726, 0.0
      %v7763 = vmax.f32 %v7727, 0.0
      %v7764 = vmax.f32 %v7728, 0.0
      %v7765 = vmax.f32 %v7729, 0.0
      %v7766 = vmax.f32 %v7730, 0.0
      %v7767 = vmax.f32 %v7731, 0.0
      %v7768 = vpack.c.bf16 %v7733, %v7732
      %v7769 = vpack.c.bf16 %v7735, %v7734
      %v7770 = vpack.c.bf16 %v7737, %v7736
      %v7771 = vpack.c.bf16 %v7739, %v7738
      %v7772 = vpack.c.bf16 %v7741, %v7740
      %v7773 = vpack.c.bf16 %v7743, %v7742
      %v7774 = vpack.c.bf16 %v7745, %v7744
      %v7775 = vpack.c.bf16 %v7747, %v7746
      %v7776 = vpack.c.bf16 %v7749, %v7748
      %v7777 = vpack.c.bf16 %v7751, %v7750
      %v7778 = vpack.c.bf16 %v7753, %v7752
      %v7779 = vpack.c.bf16 %v7755, %v7754
      %v7780 = vpack.c.bf16 %v7757, %v7756
      %v7781 = vpack.c.bf16 %v7759, %v7758
      %v7782 = vpack.c.bf16 %v7761, %v7760
      %v7783 = vpack.c.bf16 %v7763, %v7762
      %v7784 = vpack.c.bf16 %v7765, %v7764
      %v7785 = vpack.c.bf16 %v7767, %v7766
      %v7786 = vld [vmem:[%s6] sm:$0xf]
      %v7787 = vld [vmem:[%s6 + $0x4] sm:$0xf]
      %v7788 = vld [vmem:[%s6 + $0x8] sm:$0xf]
      %v7789 = vld [vmem:[%s6 + $0xc] sm:$0xf]
      %v7790 = vld [vmem:[%s6 + $0x10] sm:$0xf]
      %v7791 = vld [vmem:[%s6 + $0x14] sm:$0xf]
      %v7792 = vld [vmem:[%s6 + $0x18] sm:$0xf]
      %v7793 = vld [vmem:[%s6 + $0x1c] sm:$0xf]
      %v7794 = vld [vmem:[%s6 + $0x20] sm:$0xf]
      %v7795 = vld [vmem:[%s6 + $0x24] sm:$0xf]
      %v7796 = vld [vmem:[%s6 + $0x28] sm:$0xf]
      %v7797 = vld [vmem:[%s6 + $0x2c] sm:$0xf]
      %v7798 = vld [vmem:[%s6 + $0x30] sm:$0xf]
      %v7799 = vld [vmem:[%s6 + $0x34] sm:$0xf]
      %v7800 = vld [vmem:[%s6 + $0x38] sm:$0xf]
      %v7801 = vld [vmem:[%s6 + $0x3c] sm:$0xf]
      %v7802 = vld [vmem:[%s7] sm:$0x1]
      %v7804 = vlaneseq
      %v7805 = vshrl.u32 %v7804, 7
      %v7806 = vsub.s32 0, %v7805
      %v7807 = vrot.slane %v7802, %v7806
      %v7825 = vunpack.c.l.b16 %v7786
      %v7826 = vunpack.c.l.b16 %v7787
      %v7827 = vunpack.c.l.b16 %v7788
      %v7828 = vunpack.c.l.b16 %v7789
      %v7829 = vunpack.c.l.b16 %v7790
      %v7830 = vunpack.c.l.b16 %v7791
      %v7831 = vunpack.c.l.b16 %v7792
      %v7832 = vunpack.c.l.b16 %v7793
      %v7833 = vunpack.c.l.b16 %v7794
      %v7834 = vunpack.c.l.b16 %v7795
      %v7835 = vunpack.c.l.b16 %v7796
      %v7836 = vunpack.c.l.b16 %v7797
      %v7837 = vunpack.c.l.b16 %v7798
      %v7838 = vunpack.c.l.b16 %v7799
      %v7839 = vunpack.c.l.b16 %v7800
      %v7840 = vunpack.c.l.b16 %v7801
      %v7841 = vpack.c.b16 %v7826, %v7825
      %v7842 = vpack.c.b16 %v7828, %v7827
      %v7843 = vpack.c.b16 %v7830, %v7829
      %v7844 = vpack.c.b16 %v7832, %v7831
      %v7845 = vpack.c.b16 %v7834, %v7833
      %v7846 = vpack.c.b16 %v7836, %v7835
      %v7847 = vpack.c.b16 %v7838, %v7837
      %v7848 = vpack.c.b16 %v7840, %v7839
      %7857 = vmatprep.subr.bf16.mxu0 0
      %7858 = vmatpush1.bf16.msra.mxu0 %v7841
      %7859 = vmatprep.subr.bf16.mxu0 0
      %7860 = vmatpush1.bf16.msra.mxu0 %v7842
      %7861 = vmatprep.subr.bf16.mxu0 0
      %7862 = vmatpush1.bf16.msra.mxu0 %v7843
      %7863 = vmatprep.subr.bf16.mxu0 0
      %7864 = vmatpush1.bf16.msra.mxu0 %v7844
      %7865 = vmatprep.subr.bf16.mxu0 0
      %7866 = vmatpush1.bf16.msra.mxu0 %v7845
      %7867 = vmatprep.subr.bf16.mxu0 0
      %7868 = vmatpush1.bf16.msra.mxu0 %v7846
      %7869 = vmatprep.subr.bf16.mxu0 0
      %7870 = vmatpush1.bf16.msra.mxu0 %v7847
      %7871 = vmatprep.subr.bf16.mxu0 0
      %7872 = vmatpush1.bf16.msra.mxu0 %v7848
      %7873 = vmatprep.subr.bf16.mxu0 0
      %7874 = vmatpush1.bf16.msra.mxu0 0
      %7875 = vmatprep.subr.bf16.mxu0 0
      %7876 = vmatpush1.bf16.msra.mxu0 0
      %7877 = vmatprep.subr.bf16.mxu0 0
      %7878 = vmatpush1.bf16.msra.mxu0 0
      %7879 = vmatprep.subr.bf16.mxu0 0
      %7880 = vmatpush1.bf16.msra.mxu0 0
      %7881 = vmatprep.subr.bf16.mxu0 0
      %7882 = vmatpush1.bf16.msra.mxu0 0
      %7883 = vmatprep.subr.bf16.mxu0 0
      %7884 = vmatpush1.bf16.msra.mxu0 0
      %7885 = vmatprep.subr.bf16.mxu0 0
      %7886 = vmatpush1.bf16.msra.mxu0 0
      %7887 = vmatprep.subr.bf16.mxu0 0
      %7888 = vmatpush1.bf16.msra.mxu0 0
      %7889 = vmatprep.mubr.bf16.mxu0 0
      %7890 = vmatmul.mubr.bf16.gmra.mrb[0].mxu0 %v7768
      %v7891 = vpop.f32.mrb[0].mxu0
      %v7892 = vadd.f32 %v7807, %v7891
      %v7893 = vpop.f32.mrb[0].mxu0
      %v7894 = vpop.f32.mrb[0].mxu0
      %v7895 = vadd.f32 %v7807, %v7894
      %v7896 = vpop.f32.mrb[0].mxu0
      %7897 = vmatprep.mubr.bf16.mxu0 0
      %7898 = vmatmul.mubr.bf16.gmra.mrb[0].mxu0 %v7769
      %v7899 = vpop.f32.mrb[0].mxu0
      %v7900 = vadd.f32 %v7807, %v7899
      %v7901 = vpop.f32.mrb[0].mxu0
      %v7902 = vpop.f32.mrb[0].mxu0
      %v7903 = vadd.f32 %v7807, %v7902
      %v7904 = vpop.f32.mrb[0].mxu0
      %7905 = vmatprep.mubr.bf16.mxu0 0
      %7906 = vmatmul.mubr.bf16.gmra.mrb[0].mxu0 %v7770
      %v7907 = vpop.f32.mrb[0].mxu0
      %v7908 = vadd.f32 %v7807, %v7907
      %v7909 = vpop.f32.mrb[0].mxu0
      %v7910 = vpop.f32.mrb[0].mxu0
      %v7911 = vadd.f32 %v7807, %v7910
      %v7912 = vpop.f32.mrb[0].mxu0
      %7913 = vmatprep.mubr.bf16.mxu0 0
      %7914 = vmatmul.mubr.bf16.gmra.mrb[0].mxu0 %v7771
      %v7915 = vpop.f32.mrb[0].mxu0
      %v7916 = vadd.f32 %v7807, %v7915
      %v7917 = vpop.f32.mrb[0].mxu0
      %v7918 = vpop.f32.mrb[0].mxu0
      %v7919 = vadd.f32 %v7807, %v7918
      %v7920 = vpop.f32.mrb[0].mxu0
      %7921 = vmatprep.mubr.bf16.mxu0 0
      %7922 = vmatmul.mubr.bf16.gmra.mrb[0].mxu0 %v7772
      %v7923 = vpop.f32.mrb[0].mxu0
      %v7924 = vadd.f32 %v7807, %v7923
      %v7925 = vpop.f32.mrb[0].mxu0
      %v7926 = vpop.f32.mrb[0].mxu0
      %v7927 = vadd.f32 %v7807, %v7926
      %v7928 = vpop.f32.mrb[0].mxu0
      %7929 = vmatprep.mubr.bf16.mxu0 0
      %7930 = vmatmul.mubr.bf16.gmra.mrb[0].mxu0 %v7773
      %v7931 = vpop.f32.mrb[0].mxu0
      %v7932 = vadd.f32 %v7807, %v7931
      %v7933 = vpop.f32.mrb[0].mxu0
      %v7934 = vpop.f32.mrb[0].mxu0
      %v7935 = vadd.f32 %v7807, %v7934
      %v7936 = vpop.f32.mrb[0].mxu0
      %7937 = vmatprep.mubr.bf16.mxu0 0
      %7938 = vmatmul.mubr.bf16.gmra.mrb[0].mxu0 %v7774
      %v7939 = vpop.f32.mrb[0].mxu0
      %v7940 = vadd.f32 %v7807, %v7939
      %v7941 = vpop.f32.mrb[0].mxu0
      %v7942 = vpop.f32.mrb[0].mxu0
      %v7943 = vadd.f32 %v7807, %v7942
      %v7944 = vpop.f32.mrb[0].mxu0
      %7945 = vmatprep.mubr.bf16.mxu0 0
      %7946 = vmatmul.mubr.bf16.gmra.mrb[0].mxu0 %v7775
      %v7947 = vpop.f32.mrb[0].mxu0
      %v7948 = vadd.f32 %v7807, %v7947
      %v7949 = vpop.f32.mrb[0].mxu0
      %v7950 = vpop.f32.mrb[0].mxu0
      %v7951 = vadd.f32 %v7807, %v7950
      %v7952 = vpop.f32.mrb[0].mxu0
      %7953 = vmatprep.mubr.bf16.mxu0 0
      %7954 = vmatmul.mubr.bf16.gmra.mrb[0].mxu0 %v7776
      %v7955 = vpop.f32.mrb[0].mxu0
      %v7956 = vadd.f32 %v7807, %v7955
      %v7957 = vpop.f32.mrb[0].mxu0
      %v7958 = vpop.f32.mrb[0].mxu0
      %v7959 = vadd.f32 %v7807, %v7958
      %v7960 = vpop.f32.mrb[0].mxu0
      %7961 = vmatprep.mubr.bf16.mxu0 0
      %7962 = vmatmul.mubr.bf16.gmra.mrb[0].mxu0 %v7777
      %v7963 = vpop.f32.mrb[0].mxu0
      %v7964 = vadd.f32 %v7807, %v7963
      %v7965 = vpop.f32.mrb[0].mxu0
      %v7966 = vpop.f32.mrb[0].mxu0
      %v7967 = vadd.f32 %v7807, %v7966
      %v7968 = vpop.f32.mrb[0].mxu0
      %7969 = vmatprep.mubr.bf16.mxu0 0
      %7970 = vmatmul.mubr.bf16.gmra.mrb[0].mxu0 %v7778
      %v7971 = vpop.f32.mrb[0].mxu0
      %v7972 = vadd.f32 %v7807, %v7971
      %v7973 = vpop.f32.mrb[0].mxu0
      %v7974 = vpop.f32.mrb[0].mxu0
      %v7975 = vadd.f32 %v7807, %v7974
      %v7976 = vpop.f32.mrb[0].mxu0
      %7977 = vmatprep.mubr.bf16.mxu0 0
      %7978 = vmatmul.mubr.bf16.gmra.mrb[0].mxu0 %v7779
      %v7979 = vpop.f32.mrb[0].mxu0
      %v7980 = vadd.f32 %v7807, %v7979
      %v7981 = vpop.f32.mrb[0].mxu0
      %v7982 = vpop.f32.mrb[0].mxu0
      %v7983 = vadd.f32 %v7807, %v7982
      %v7984 = vpop.f32.mrb[0].mxu0
      %7985 = vmatprep.mubr.bf16.mxu0 0
      %7986 = vmatmul.mubr.bf16.gmra.mrb[0].mxu0 %v7780
      %v7987 = vpop.f32.mrb[0].mxu0
      %v7988 = vadd.f32 %v7807, %v7987
      %v7989 = vpop.f32.mrb[0].mxu0
      %v7990 = vpop.f32.mrb[0].mxu0
      %v7991 = vadd.f32 %v7807, %v7990
      %v7992 = vpop.f32.mrb[0].mxu0
      %7993 = vmatprep.mubr.bf16.mxu0 0
      %7994 = vmatmul.mubr.bf16.gmra.mrb[0].mxu0 %v7781
      %v7995 = vpop.f32.mrb[0].mxu0
      %v7996 = vadd.f32 %v7807, %v7995
      %v7997 = vpop.f32.mrb[0].mxu0
      %v7998 = vpop.f32.mrb[0].mxu0
      %v7999 = vadd.f32 %v7807, %v7998
      %v8000 = vpop.f32.mrb[0].mxu0
      %8001 = vmatprep.mubr.bf16.mxu0 0
      %8002 = vmatmul.mubr.bf16.gmra.mrb[0].mxu0 %v7782
      %v8003 = vpop.f32.mrb[0].mxu0
      %v8004 = vadd.f32 %v7807, %v8003
      %v8005 = vpop.f32.mrb[0].mxu0
      %v8006 = vpop.f32.mrb[0].mxu0
      %v8007 = vadd.f32 %v7807, %v8006
      %v8008 = vpop.f32.mrb[0].mxu0
      %8009 = vmatprep.mubr.bf16.mxu0 0
      %8010 = vmatmul.mubr.bf16.gmra.mrb[0].mxu0 %v7783
      %v8011 = vpop.f32.mrb[0].mxu0
      %v8012 = vadd.f32 %v7807, %v8011
      %v8013 = vpop.f32.mrb[0].mxu0
      %v8014 = vpop.f32.mrb[0].mxu0
      %v8015 = vadd.f32 %v7807, %v8014
      %v8016 = vpop.f32.mrb[0].mxu0
      %8017 = vmatprep.mubr.bf16.mxu0 0
      %8018 = vmatmul.mubr.bf16.gmra.mrb[0].mxu0 %v7784
      %v8019 = vpop.f32.mrb[0].mxu0
      %v8020 = vadd.f32 %v7807, %v8019
      %v8021 = vpop.f32.mrb[0].mxu0
      %v8022 = vpop.f32.mrb[0].mxu0
      %v8023 = vadd.f32 %v7807, %v8022
      %v8024 = vpop.f32.mrb[0].mxu0
      %8025 = vmatprep.mubr.bf16.mxu0 0
      %8026 = vmatmul.mubr.bf16.gmra.mrb[0].mxu0 %v7785
      %v8027 = vpop.f32.mrb[0].mxu0
      %v8028 = vadd.f32 %v7807, %v8027
      %v8029 = vpop.f32.mrb[0].mxu0
      %v8030 = vpop.f32.mrb[0].mxu0
      %v8031 = vadd.f32 %v7807, %v8030
      %v8032 = vpop.f32.mrb[0].mxu0
      %8033 = vdwg.mxu0
      %v8034 = vxor.u32 %v7892, 2147483648
      %v8035 = vxor.u32 %v7895, 2147483648
      %v8036 = vxor.u32 %v7900, 2147483648
      %v8037 = vxor.u32 %v7903, 2147483648
      %v8038 = vxor.u32 %v7908, 2147483648
      %v8039 = vxor.u32 %v7911, 2147483648
      %v8040 = vxor.u32 %v7916, 2147483648
      %v8041 = vxor.u32 %v7919, 2147483648
      %v8042 = vxor.u32 %v7924, 2147483648
      %v8043 = vxor.u32 %v7927, 2147483648
      %v8044 = vxor.u32 %v7932, 2147483648
      %v8045 = vxor.u32 %v7935, 2147483648
      %v8046 = vxor.u32 %v7940, 2147483648
      %v8047 = vxor.u32 %v7943, 2147483648
      %v8048 = vxor.u32 %v7948, 2147483648
      %v8049 = vxor.u32 %v7951, 2147483648
      %v8050 = vxor.u32 %v7956, 2147483648
      %v8051 = vxor.u32 %v7959, 2147483648
      %v8052 = vxor.u32 %v7964, 2147483648
      %v8053 = vxor.u32 %v7967, 2147483648
      %v8054 = vxor.u32 %v7972, 2147483648
      %v8055 = vxor.u32 %v7975, 2147483648
      %v8056 = vxor.u32 %v7980, 2147483648
      %v8057 = vxor.u32 %v7983, 2147483648
      %v8058 = vxor.u32 %v7988, 2147483648
      %v8059 = vxor.u32 %v7991, 2147483648
      %v8060 = vxor.u32 %v7996, 2147483648
      %v8061 = vxor.u32 %v7999, 2147483648
      %v8062 = vxor.u32 %v8004, 2147483648
      %v8063 = vxor.u32 %v8007, 2147483648
      %v8064 = vxor.u32 %v8012, 2147483648
      %v8065 = vxor.u32 %v8015, 2147483648
      %v8066 = vxor.u32 %v8020, 2147483648
      %v8067 = vxor.u32 %v8023, 2147483648
      %v8068 = vxor.u32 %v8028, 2147483648
      %v8069 = vxor.u32 %v8031, 2147483648
      %v8070 = vmul.f32 %v8034, 1.442695
      %v8071 = vpow.pop %v8070
      %v8072 = vmul.f32 %v8035, 1.442695
      %v8073 = vpow.pop %v8072
      %v8074 = vmul.f32 %v8036, 1.442695
      %v8075 = vpow.pop %v8074
      %v8076 = vmul.f32 %v8037, 1.442695
      %v8077 = vpow.pop %v8076
      %v8078 = vmul.f32 %v8038, 1.442695
      %v8079 = vpow.pop %v8078
      %v8080 = vmul.f32 %v8039, 1.442695
      %v8081 = vpow.pop %v8080
      %v8082 = vmul.f32 %v8040, 1.442695
      %v8083 = vpow.pop %v8082
      %v8084 = vmul.f32 %v8041, 1.442695
      %v8085 = vpow.pop %v8084
      %v8086 = vmul.f32 %v8042, 1.442695
      %v8087 = vpow.pop %v8086
      %v8088 = vmul.f32 %v8043, 1.442695
      %v8089 = vpow.pop %v8088
      %v8090 = vmul.f32 %v8044, 1.442695
      %v8091 = vpow.pop %v8090
      %v8092 = vmul.f32 %v8045, 1.442695
      %v8093 = vpow.pop %v8092
      %v8094 = vmul.f32 %v8046, 1.442695
      %v8095 = vpow.pop %v8094
      %v8096 = vmul.f32 %v8047, 1.442695
      %v8097 = vpow.pop %v8096
      %v8098 = vmul.f32 %v8048, 1.442695
      %v8099 = vpow.pop %v8098
      %v8100 = vmul.f32 %v8049, 1.442695
      %v8101 = vpow.pop %v8100
      %v8102 = vmul.f32 %v8050, 1.442695
      %v8103 = vpow.pop %v8102
      %v8104 = vmul.f32 %v8051, 1.442695
      %v8105 = vpow.pop %v8104
      %v8106 = vmul.f32 %v8052, 1.442695
      %v8107 = vpow.pop %v8106
      %v8108 = vmul.f32 %v8053, 1.442695
      %v8109 = vpow.pop %v8108
      %v8110 = vmul.f32 %v8054, 1.442695
      %v8111 = vpow.pop %v8110
      %v8112 = vmul.f32 %v8055, 1.442695
      %v8113 = vpow.pop %v8112
      %v8114 = vmul.f32 %v8056, 1.442695
      %v8115 = vpow.pop %v8114
      %v8116 = vmul.f32 %v8057, 1.442695
      %v8117 = vpow.pop %v8116
      %v8118 = vmul.f32 %v8058, 1.442695
      %v8119 = vpow.pop %v8118
      %v8120 = vmul.f32 %v8059, 1.442695
      %v8121 = vpow.pop %v8120
      %v8122 = vmul.f32 %v8060, 1.442695
      %v8123 = vpow.pop %v8122
      %v8124 = vmul.f32 %v8061, 1.442695
      %v8125 = vpow.pop %v8124
      %v8126 = vmul.f32 %v8062, 1.442695
      %v8127 = vpow.pop %v8126
      %v8128 = vmul.f32 %v8063, 1.442695
      %v8129 = vpow.pop %v8128
      %v8130 = vmul.f32 %v8064, 1.442695
      %v8131 = vpow.pop %v8130
      %v8132 = vmul.f32 %v8065, 1.442695
      %v8133 = vpow.pop %v8132
      %v8134 = vmul.f32 %v8066, 1.442695
      %v8135 = vpow.pop %v8134
      %v8136 = vmul.f32 %v8067, 1.442695
      %v8137 = vpow.pop %v8136
      %v8138 = vmul.f32 %v8068, 1.442695
      %v8139 = vpow.pop %v8138
      %v8140 = vmul.f32 %v8069, 1.442695
      %v8141 = vpow.pop %v8140
      %v8142 = vadd.f32 %v8071, 1.0
      %v8143 = vadd.f32 %v8073, 1.0
      %v8144 = vadd.f32 %v8075, 1.0
      %v8145 = vadd.f32 %v8077, 1.0
      %v8146 = vadd.f32 %v8079, 1.0
      %v8147 = vadd.f32 %v8081, 1.0
      %v8148 = vadd.f32 %v8083, 1.0
      %v8149 = vadd.f32 %v8085, 1.0
      %v8150 = vadd.f32 %v8087, 1.0
      %v8151 = vadd.f32 %v8089, 1.0
      %v8152 = vadd.f32 %v8091, 1.0
      %v8153 = vadd.f32 %v8093, 1.0
      %v8154 = vadd.f32 %v8095, 1.0
      %v8155 = vadd.f32 %v8097, 1.0
      %v8156 = vadd.f32 %v8099, 1.0
      %v8157 = vadd.f32 %v8101, 1.0
      %v8158 = vadd.f32 %v8103, 1.0
      %v8159 = vadd.f32 %v8105, 1.0
      %v8160 = vadd.f32 %v8107, 1.0
      %v8161 = vadd.f32 %v8109, 1.0
      %v8162 = vadd.f32 %v8111, 1.0
      %v8163 = vadd.f32 %v8113, 1.0
      %v8164 = vadd.f32 %v8115, 1.0
      %v8165 = vadd.f32 %v8117, 1.0
      %v8166 = vadd.f32 %v8119, 1.0
      %v8167 = vadd.f32 %v8121, 1.0
      %v8168 = vadd.f32 %v8123, 1.0
      %v8169 = vadd.f32 %v8125, 1.0
      %v8170 = vadd.f32 %v8127, 1.0
      %v8171 = vadd.f32 %v8129, 1.0
      %v8172 = vadd.f32 %v8131, 1.0
      %v8173 = vadd.f32 %v8133, 1.0
      %v8174 = vadd.f32 %v8135, 1.0
      %v8175 = vadd.f32 %v8137, 1.0
      %v8176 = vadd.f32 %v8139, 1.0
      %v8177 = vadd.f32 %v8141, 1.0
      %v8178 = vrcp.pop %v8142
      %v8179 = vmul.f32 1.0, %v8178
      %v8180 = vrcp.pop %v8143
      %v8181 = vmul.f32 1.0, %v8180
      %v8182 = vrcp.pop %v8144
      %v8183 = vmul.f32 1.0, %v8182
      %v8184 = vrcp.pop %v8145
      %v8185 = vmul.f32 1.0, %v8184
      %v8186 = vrcp.pop %v8146
      %v8187 = vmul.f32 1.0, %v8186
      %v8188 = vrcp.pop %v8147
      %v8189 = vmul.f32 1.0, %v8188
      %v8190 = vrcp.pop %v8148
      %v8191 = vmul.f32 1.0, %v8190
      %v8192 = vrcp.pop %v8149
      %v8193 = vmul.f32 1.0, %v8192
      %v8194 = vrcp.pop %v8150
      %v8195 = vmul.f32 1.0, %v8194
      %v8196 = vrcp.pop %v8151
      %v8197 = vmul.f32 1.0, %v8196
      %v8198 = vrcp.pop %v8152
      %v8199 = vmul.f32 1.0, %v8198
      %v8200 = vrcp.pop %v8153
      %v8201 = vmul.f32 1.0, %v8200
      %v8202 = vrcp.pop %v8154
      %v8203 = vmul.f32 1.0, %v8202
      %v8204 = vrcp.pop %v8155
      %v8205 = vmul.f32 1.0, %v8204
      %v8206 = vrcp.pop %v8156
      %v8207 = vmul.f32 1.0, %v8206
      %v8208 = vrcp.pop %v8157
      %v8209 = vmul.f32 1.0, %v8208
      %v8210 = vrcp.pop %v8158
      %v8211 = vmul.f32 1.0, %v8210
      %v8212 = vrcp.pop %v8159
      %v8213 = vmul.f32 1.0, %v8212
      %v8214 = vrcp.pop %v8160
      %v8215 = vmul.f32 1.0, %v8214
      %v8216 = vrcp.pop %v8161
      %v8217 = vmul.f32 1.0, %v8216
      %v8218 = vrcp.pop %v8162
      %v8219 = vmul.f32 1.0, %v8218
      %v8220 = vrcp.pop %v8163
      %v8221 = vmul.f32 1.0, %v8220
      %v8222 = vrcp.pop %v8164
      %v8223 = vmul.f32 1.0, %v8222
      %v8224 = vrcp.pop %v8165
      %v8225 = vmul.f32 1.0, %v8224
      %v8226 = vrcp.pop %v8166
      %v8227 = vmul.f32 1.0, %v8226
      %v8228 = vrcp.pop %v8167
      %v8229 = vmul.f32 1.0, %v8228
      %v8230 = vrcp.pop %v8168
      %v8231 = vmul.f32 1.0, %v8230
      %v8232 = vrcp.pop %v8169
      %v8233 = vmul.f32 1.0, %v8232
      %v8234 = vrcp.pop %v8170
      %v8235 = vmul.f32 1.0, %v8234
      %v8236 = vrcp.pop %v8171
      %v8237 = vmul.f32 1.0, %v8236
      %v8238 = vrcp.pop %v8172
      %v8239 = vmul.f32 1.0, %v8238
      %v8240 = vrcp.pop %v8173
      %v8241 = vmul.f32 1.0, %v8240
      %v8242 = vrcp.pop %v8174
      %v8243 = vmul.f32 1.0, %v8242
      %v8244 = vrcp.pop %v8175
      %v8245 = vmul.f32 1.0, %v8244
      %v8246 = vrcp.pop %v8176
      %v8247 = vmul.f32 1.0, %v8246
      %v8248 = vrcp.pop %v8177
      %v8249 = vmul.f32 1.0, %v8248
      %v8250 = vmul.f32 %v7732, %v8179
      %v8251 = vmul.f32 %v7733, %v8181
      %v8252 = vmul.f32 %v7734, %v8183
      %v8253 = vmul.f32 %v7735, %v8185
      %v8254 = vmul.f32 %v7736, %v8187
      %v8255 = vmul.f32 %v7737, %v8189
      %v8256 = vmul.f32 %v7738, %v8191
      %v8257 = vmul.f32 %v7739, %v8193
      %v8258 = vmul.f32 %v7740, %v8195
      %v8259 = vmul.f32 %v7741, %v8197
      %v8260 = vmul.f32 %v7742, %v8199
      %v8261 = vmul.f32 %v7743, %v8201
      %v8262 = vmul.f32 %v7744, %v8203
      %v8263 = vmul.f32 %v7745, %v8205
      %v8264 = vmul.f32 %v7746, %v8207
      %v8265 = vmul.f32 %v7747, %v8209
      %v8266 = vmul.f32 %v7748, %v8211
      %v8267 = vmul.f32 %v7749, %v8213
      %v8268 = vmul.f32 %v7750, %v8215
      %v8269 = vmul.f32 %v7751, %v8217
      %v8270 = vmul.f32 %v7752, %v8219
      %v8271 = vmul.f32 %v7753, %v8221
      %v8272 = vmul.f32 %v7754, %v8223
      %v8273 = vmul.f32 %v7755, %v8225
      %v8274 = vmul.f32 %v7756, %v8227
      %v8275 = vmul.f32 %v7757, %v8229
      %v8276 = vmul.f32 %v7758, %v8231
      %v8277 = vmul.f32 %v7759, %v8233
      %v8278 = vmul.f32 %v7760, %v8235
      %v8279 = vmul.f32 %v7761, %v8237
      %v8280 = vmul.f32 %v7762, %v8239
      %v8281 = vmul.f32 %v7763, %v8241
      %v8282 = vmul.f32 %v7764, %v8243
      %v8283 = vmul.f32 %v7765, %v8245
      %v8284 = vmul.f32 %v7766, %v8247
      %v8285 = vmul.f32 %v7767, %v8249
      %v8286 = vadd.f32 %v8250, %v7732
      %v8287 = vadd.f32 %v8251, %v7733
      %v8288 = vadd.f32 %v8252, %v7734
      %v8289 = vadd.f32 %v8253, %v7735
      %v8290 = vadd.f32 %v8254, %v7736
      %v8291 = vadd.f32 %v8255, %v7737
      %v8292 = vadd.f32 %v8256, %v7738
      %v8293 = vadd.f32 %v8257, %v7739
      %v8294 = vadd.f32 %v8258, %v7740
      %v8295 = vadd.f32 %v8259, %v7741
      %v8296 = vadd.f32 %v8260, %v7742
      %v8297 = vadd.f32 %v8261, %v7743
      %v8298 = vadd.f32 %v8262, %v7744
      %v8299 = vadd.f32 %v8263, %v7745
      %v8300 = vadd.f32 %v8264, %v7746
      %v8301 = vadd.f32 %v8265, %v7747
      %v8302 = vadd.f32 %v8266, %v7748
      %v8303 = vadd.f32 %v8267, %v7749
      %v8304 = vadd.f32 %v8268, %v7750
      %v8305 = vadd.f32 %v8269, %v7751
      %v8306 = vadd.f32 %v8270, %v7752
      %v8307 = vadd.f32 %v8271, %v7753
      %v8308 = vadd.f32 %v8272, %v7754
      %v8309 = vadd.f32 %v8273, %v7755
      %v8310 = vadd.f32 %v8274, %v7756
      %v8311 = vadd.f32 %v8275, %v7757
      %v8312 = vadd.f32 %v8276, %v7758
      %v8313 = vadd.f32 %v8277, %v7759
      %v8314 = vadd.f32 %v8278, %v7760
      %v8315 = vadd.f32 %v8279, %v7761
      %v8316 = vadd.f32 %v8280, %v7762
      %v8317 = vadd.f32 %v8281, %v7763
      %v8318 = vadd.f32 %v8282, %v7764
      %v8319 = vadd.f32 %v8283, %v7765
      %v8320 = vadd.f32 %v8284, %v7766
      %v8321 = vadd.f32 %v8285, %v7767
      %v8322 = vpack.c.bf16 %v8287, %v8286
      %v8323 = vpack.c.bf16 %v8289, %v8288
      %v8324 = vpack.c.bf16 %v8291, %v8290
      %v8325 = vpack.c.bf16 %v8293, %v8292
      %v8326 = vpack.c.bf16 %v8295, %v8294
      %v8327 = vpack.c.bf16 %v8297, %v8296
      %v8328 = vpack.c.bf16 %v8299, %v8298
      %v8329 = vpack.c.bf16 %v8301, %v8300
      %v8330 = vpack.c.bf16 %v8303, %v8302
      %v8331 = vpack.c.bf16 %v8305, %v8304
      %v8332 = vpack.c.bf16 %v8307, %v8306
      %v8333 = vpack.c.bf16 %v8309, %v8308
      %v8334 = vpack.c.bf16 %v8311, %v8310
      %v8335 = vpack.c.bf16 %v8313, %v8312
      %v8336 = vpack.c.bf16 %v8315, %v8314
      %v8337 = vpack.c.bf16 %v8317, %v8316
      %v8338 = vpack.c.bf16 %v8319, %v8318
      %v8339 = vpack.c.bf16 %v8321, %v8320
      %v8358 = vunpack.c.l.b16 %v8322
      %v8359 = vunpack.c.h.b16 %v8322
      %v8360 = vunpack.c.l.b16 %v8323
      %v8361 = vunpack.c.h.b16 %v8323
      %v8362 = vunpack.c.l.b16 %v8324
      %v8363 = vunpack.c.h.b16 %v8324
      %v8364 = vunpack.c.l.b16 %v8325
      %v8365 = vunpack.c.h.b16 %v8325
      %v8366 = vunpack.c.l.b16 %v8326
      %v8367 = vunpack.c.h.b16 %v8326
      %v8368 = vunpack.c.l.b16 %v8327
      %v8369 = vunpack.c.h.b16 %v8327
      %v8370 = vunpack.c.l.b16 %v8328
      %v8371 = vunpack.c.h.b16 %v8328
      %v8372 = vunpack.c.l.b16 %v8329
      %v8373 = vunpack.c.h.b16 %v8329
      %v8374 = vunpack.c.l.b16 %v8330
      %v8375 = vunpack.c.h.b16 %v8330
      %v8376 = vunpack.c.l.b16 %v8331
      %v8377 = vunpack.c.h.b16 %v8331
      %v8378 = vunpack.c.l.b16 %v8332
      %v8379 = vunpack.c.h.b16 %v8332
      %v8380 = vunpack.c.l.b16 %v8333
      %v8381 = vunpack.c.h.b16 %v8333
      %v8382 = vunpack.c.l.b16 %v8334
      %v8383 = vunpack.c.h.b16 %v8334
      %v8384 = vunpack.c.l.b16 %v8335
      %v8385 = vunpack.c.h.b16 %v8335
      %v8386 = vunpack.c.l.b16 %v8336
      %v8387 = vunpack.c.h.b16 %v8336
      %v8388 = vunpack.c.l.b16 %v8337
      %v8389 = vunpack.c.h.b16 %v8337
      %v8390 = vunpack.c.l.b16 %v8338
      %v8391 = vunpack.c.h.b16 %v8338
      %v8392 = vunpack.c.l.b16 %v8339
      %v8393 = vunpack.c.h.b16 %v8339
      %v8394 = vpack.c.b16 %v8358, %v8358
      %v8395 = vpack.c.b16 %v8359, %v8359
      %v8396 = vpack.c.b16 %v8360, %v8360
      %v8397 = vpack.c.b16 %v8361, %v8361
      %v8398 = vpack.c.b16 %v8362, %v8362
      %v8399 = vpack.c.b16 %v8363, %v8363
      %v8400 = vpack.c.b16 %v8364, %v8364
      %v8401 = vpack.c.b16 %v8365, %v8365
      %v8402 = vpack.c.b16 %v8366, %v8366
      %v8403 = vpack.c.b16 %v8367, %v8367
      %v8404 = vpack.c.b16 %v8368, %v8368
      %v8405 = vpack.c.b16 %v8369, %v8369
      %v8406 = vpack.c.b16 %v8370, %v8370
      %v8407 = vpack.c.b16 %v8371, %v8371
      %v8408 = vpack.c.b16 %v8372, %v8372
      %v8409 = vpack.c.b16 %v8373, %v8373
      %v8410 = vpack.c.b16 %v8374, %v8374
      %v8411 = vpack.c.b16 %v8375, %v8375
      %v8412 = vpack.c.b16 %v8376, %v8376
      %v8413 = vpack.c.b16 %v8377, %v8377
      %v8414 = vpack.c.b16 %v8378, %v8378
      %v8415 = vpack.c.b16 %v8379, %v8379
      %v8416 = vpack.c.b16 %v8380, %v8380
      %v8417 = vpack.c.b16 %v8381, %v8381
      %v8418 = vpack.c.b16 %v8382, %v8382
      %v8419 = vpack.c.b16 %v8383, %v8383
      %v8420 = vpack.c.b16 %v8384, %v8384
      %v8421 = vpack.c.b16 %v8385, %v8385
      %v8422 = vpack.c.b16 %v8386, %v8386
      %v8423 = vpack.c.b16 %v8387, %v8387
      %v8424 = vpack.c.b16 %v8388, %v8388
      %v8425 = vpack.c.b16 %v8389, %v8389
      %v8426 = vpack.c.b16 %v8390, %v8390
      %v8427 = vpack.c.b16 %v8391, %v8391
      %v8428 = vpack.c.b16 %v8392, %v8392
      %v8429 = vpack.c.b16 %v8393, %v8393
      %8466 = vst [vmem:[%s325] sm:$0xf] %v8394
      %8467 = vst [vmem:[%s325 + $0x4] sm:$0xf] %v8395
      %8468 = vst [vmem:[%s325 + $0x8] sm:$0xf] %v8396
      %8469 = vst [vmem:[%s325 + $0xc] sm:$0xf] %v8397
      %8470 = vst [vmem:[%s325 + $0x10] sm:$0xf] %v8398
      %8471 = vst [vmem:[%s325 + $0x14] sm:$0xf] %v8399
      %8472 = vst [vmem:[%s325 + $0x18] sm:$0xf] %v8400
      %8473 = vst [vmem:[%s325 + $0x1c] sm:$0xf] %v8401
      %8474 = vst [vmem:[%s325 + $0x20] sm:$0xf] %v8402
      %8475 = vst [vmem:[%s325 + $0x24] sm:$0xf] %v8403
      %8476 = vst [vmem:[%s325 + $0x28] sm:$0xf] %v8404
      %8477 = vst [vmem:[%s325 + $0x2c] sm:$0xf] %v8405
      %8478 = vst [vmem:[%s325 + $0x30] sm:$0xf] %v8406
      %8479 = vst [vmem:[%s325 + $0x34] sm:$0xf] %v8407
      %8480 = vst [vmem:[%s325 + $0x38] sm:$0xf] %v8408
      %8481 = vst [vmem:[%s325 + $0x3c] sm:$0xf] %v8409
      %8482 = vst [vmem:[%s325 + $0x40] sm:$0xf] %v8410
      %8483 = vst [vmem:[%s325 + $0x44] sm:$0xf] %v8411
      %8484 = vst [vmem:[%s325 + $0x48] sm:$0xf] %v8412
      %8485 = vst [vmem:[%s325 + $0x4c] sm:$0xf] %v8413
      %8486 = vst [vmem:[%s325 + $0x50] sm:$0xf] %v8414
      %8487 = vst [vmem:[%s325 + $0x54] sm:$0xf] %v8415
      %8488 = vst [vmem:[%s325 + $0x58] sm:$0xf] %v8416
      %8489 = vst [vmem:[%s325 + $0x5c] sm:$0xf] %v8417
      %8490 = vst [vmem:[%s325 + $0x60] sm:$0xf] %v8418
      %8491 = vst [vmem:[%s325 + $0x64] sm:$0xf] %v8419
      %8492 = vst [vmem:[%s325 + $0x68] sm:$0xf] %v8420
      %8493 = vst [vmem:[%s325 + $0x6c] sm:$0xf] %v8421
      %8494 = vst [vmem:[%s325 + $0x70] sm:$0xf] %v8422
      %8495 = vst [vmem:[%s325 + $0x74] sm:$0xf] %v8423
      %8496 = vst [vmem:[%s325 + $0x78] sm:$0xf] %v8424
      %8497 = vst [vmem:[%s325 + $0x7c] sm:$0xf] %v8425
      %8498 = vst [vmem:[%s325 + $0x80] sm:$0xf] %v8426
      %8499 = vst [vmem:[%s325 + $0x84] sm:$0xf] %v8427
      %8500 = vst [vmem:[%s325 + $0x88] sm:$0xf] %v8428
      %8501 = vst [vmem:[%s325 + $0x8c] sm:$0xf] %v8429
      %p8502 = scmp.lt.s32.totalorder %s19, 1
      %s8503 = scalar_select %p8502, %s19, 1
      %s8504 = smul.addr %s8503, 36
      %s8505 = smul.addr %s8504, 4
      %s8506 = scalar_lea.vmem %s8, %s8505
      // Predicated region
      $region53: #{ffm_forward.1} parent=51 // pred_check
        %p8507 = pneg %p215
      $region54: #{ffm_forward.1} parent=51 // pred_check_branch
        %8509 = sbr.rel (%p8507) target = $region56
      $region55: #{ffm_forward.1} parent=51 // pred_region
        _
      $region56: #{ffm_forward.1} parent=51 // pred_fallthru
        _
    $region52: #{ffm_forward.1} parent=5 // pred_fallthru
      _
    %p8510 = scmp.le.s32.totalorder 2, %s14
    // Predicated region
    $region57: #{ffm_forward.1} parent=5 // pred_check
      %p8511 = pneg %p8510
    $region58: #{ffm_forward.1} parent=5 // pred_check_branch
      %8513 = sbr.rel (%p8511) target = $region60
    $region59: #{ffm_forward.1} parent=5 // pred_region
      %s8514 = ssub.s32 %s14, 2
      // Predicated region
      $region61: #{ffm_forward.1} parent=59 // pred_check
        %p8515 = pneg %p221
      $region62: #{ffm_forward.1} parent=59 // pred_check_branch
        %8517 = sbr.rel (%p8515) target = $region64
      $region63: #{ffm_forward.1} parent=59 // pred_region
        %p8518 = scmp.lt.s32.totalorder %s20, 1
        %s8519 = scalar_select %p8518, %s20, 1
        %s8520 = smul.addr %s8519, 36
        %s8521 = smul.addr %s8520, 4
        %s8522 = scalar_lea.vmem %s8, %s8521
      $region64: #{ffm_forward.1} parent=59 // pred_fallthru
        _
    $region60: #{ffm_forward.1} parent=5 // pred_fallthru
      _
  $region6: #{ffm_forward.1} parent=0 // loop_footer
    %s18 = sadd.s32 1, %s14
  $region7: #{ffm_forward.1} parent=0 // loop_footer_branch
    %13 = sbr.rel target = $region3
  $region8: #{ffm_forward.1} parent=0 // loop_exit
    _

</llo_original>
